<compile_context>
chip_gen: v5e
topology: v5e:2x2
jax: 0.10.0
libtpu: 0.0.40
codegen_flags: <defaults>
</compile_context>

<pallas_src>
import jax
import jax.numpy as jnp
from jax import lax
from jax.experimental import pallas as pl
from jax.experimental.pallas import tpu as pltpu


# ------------------------------ fused kernel ------------------------------- #

def _discriminator_kernel(x_ref, w1_ref, b1_ref, w2_ref, b2_ref, w3_ref,
                          b3_ref, w4_ref, b4_ref, w5_ref, b5_ref,
                          out_ref, feat_ref):
    """Whole Discriminator forward for one tile of samples.

    x_ref  : [TILE_N, 28]                 (L on the lane axis)
    w*_ref : dense effective weights [Cin*Lin, Cout*Lout], channel-major cols
    b*_ref : [1, Cout*Lout]
    out_ref: [TILE_N, 1]
    feat_ref: [TILE_N, C4*L4]  (torch flatten order, lane-dense)
    """
    def dense_lrelu(h, w_ref, b_ref):
        y = jnp.dot(h, w_ref[...], preferred_element_type=jnp.float32)
        y = y + b_ref[...]
        return jnp.where(y >= 0.0, y, 0.1 * y)          # LeakyReLU(0.1)

    h = x_ref[...]                                       # [TILE_N, 28]
    h = dense_lrelu(h, w1_ref, b1_ref)                   # [TILE_N, 32*14]
    h = dense_lrelu(h, w2_ref, b2_ref)                   # [TILE_N, 64*16]
    h = dense_lrelu(h, w3_ref, b3_ref)                   # [TILE_N, 128*8]
    h = dense_lrelu(h, w4_ref, b4_ref)                   # [TILE_N, 256*4]

    feat_ref[...] = h.astype(feat_ref.dtype)             # torch flatten order

    # Last conv (Cout=1, Lout=1) == one matmul on the flattened features.
    logit = jnp.dot(h, w5_ref[...], preferred_element_type=jnp.float32)
    out_ref[...] = (logit + b5_ref[...]).astype(out_ref.dtype)


# ------------------------------ host weight fold --------------------------- #

def _fold_conv(w, b, lin, stride, pad):
    """Fold a Conv1d into one dense matmul.

    w: [Cout, Cin, K] (torch layout), b: [Cout].
    Returns Weff [Cin*Lin, Cout*Lout] (channel-major flatten on both sides,
    zero-padding & stride folded in) and beff [1, Cout*Lout].
    """
    cout, cin, k = w.shape
    lout = (lin + 2 * pad - k) // stride + 1
    li = lax.broadcasted_iota(jnp.int32, (lin, lout, k), 0)
    lo = lax.broadcasted_iota(jnp.int32, (lin, lout, k), 1)
    kk = lax.broadcasted_iota(jnp.int32, (lin, lout, k), 2)
    sel = (li == stride * lo + kk - pad).astype(w.dtype)          # [Lin,Lout,K]
    # Weff[(cin,li),(cout,lo)] = sum_k w[cout,cin,k] * sel[li,lo,k]
    weff = jnp.einsum("oik,lmk->ilom", w, sel).reshape(cin * lin, cout * lout)
    beff = jnp.repeat(b, lout).reshape(1, cout * lout)
    return weff, beff, lout


def prepare_params(p, in_len=28, weight_dtype=jnp.float32):
    """Pre-fold torch-layout params into dense per-layer matmul weights (once,
    outside jit).  weight_dtype=jnp.bfloat16 halves VMEM / speeds up the MXU
    on v6e/v7x (relax tolerances to ~1e-2 vs the f32 reference)."""
    w1, b1, l1 = _fold_conv(p["w1"], p["b1"], in_len, stride=2, pad=1)
    w2, b2, l2 = _fold_conv(p["w2"], p["b2"], l1, stride=1, pad=2)
    w3, b3, l3 = _fold_conv(p["w3"], p["b3"], l2, stride=2, pad=1)
    w4, b4, l4 = _fold_conv(p["w4"], p["b4"], l3, stride=2, pad=1)
    w5, b5, l5 = _fold_conv(p["w5"], p["b5"], l4, stride=1, pad=0)
    assert l5 == 1
    kp = {"w1": w1, "b1": b1, "w2": w2, "b2": b2, "w3": w3, "b3": b3,
          "w4": w4, "b4": b4, "w5": w5, "b5": b5}
    return {k: v.astype(weight_dtype) if k.startswith("w") else v
            for k, v in kp.items()}


# ------------------------------ forward wrapper ----------------------------- #

def discriminator_forward(x, kp, tile_n=None):
    """x: [N, 1, L] (NCW).  Returns (out [N,1,1], feature [N, 8*data_size*L4])."""
    N, _, L = x.shape
    feat_dim = kp["w4"].shape[1]                     # C4 * L4 (torch flatten)

    # Layer-1 input is Cin=1: present it as [N, L] (L on the lane axis); this
    # is a free reshape, no NCW->NWC transpose kernel.
    x2 = x.reshape(N, L)

    # Whole batch per grid step for small N (one step => no per-step overhead,
    # weights resident).  Larger batches tile the MXU M dim at 128.
    if tile_n is None:
        tile_n = N if N <= 128 else 128
    n_pad = (-N) % tile_n
    if n_pad:
        x2 = jnp.concatenate([x2, jnp.zeros((n_pad, L), x2.dtype)], axis=0)
    n_padded = x2.shape[0]
    grid = (n_padded // tile_n,)
    # TODO(synk): on v7x (2 TCs) split small batches into 2 "parallel" grid
    # steps so both TensorCores get work; pure overhead on v5e/v6e, so skipped.

    def full(a):
        return pl.BlockSpec(a.shape, lambda i: (0,) * a.ndim)

    out2d, feat = pl.pallas_call(
        _discriminator_kernel,
        grid=grid,
        in_specs=(
            pl.BlockSpec((tile_n, L), lambda i: (i, 0)),
            full(kp["w1"]), full(kp["b1"]),
            full(kp["w2"]), full(kp["b2"]),
            full(kp["w3"]), full(kp["b3"]),
            full(kp["w4"]), full(kp["b4"]),
            full(kp["w5"]), full(kp["b5"]),
        ),
        out_specs=(
            pl.BlockSpec((tile_n, 1), lambda i: (i, 0)),
            pl.BlockSpec((tile_n, feat_dim), lambda i: (i, 0)),
        ),
        out_shape=(
            jax.ShapeDtypeStruct((n_padded, 1), jnp.float32),
            jax.ShapeDtypeStruct((n_padded, feat_dim), jnp.float32),
        ),
        compiler_params=pltpu.CompilerParams(
            dimension_semantics=("parallel",),
            vmem_limit_bytes=48 * 1024 * 1024),
    )(x2, kp["w1"], kp["b1"], kp["w2"], kp["b2"], kp["w3"], kp["b3"],
      kp["w4"], kp["b4"], kp["w5"], kp["b5"])

    out = out2d[:N].reshape(N, 1, 1)
    feature = feat[:N]                               # already in torch order
    return out, feature


# ------------------------------ init & reference --------------------------- #

def init_params(key, data_size=32):
    shapes = {
        "w1": (data_size, 1, 4),                 "b1": (data_size,),
        "w2": (data_size * 2, data_size, 3),     "b2": (data_size * 2,),
        "w3": (data_size * 4, data_size * 2, 4), "b3": (data_size * 4,),
        "w4": (data_size * 8, data_size * 4, 4), "b4": (data_size * 8,),
        "w5": (1, data_size * 8, 4),             "b5": (1,),
    }
    params = {}
    for i, name in enumerate(sorted(shapes)):
        k = jax.random.fold_in(key, i)
        params[name] = 0.05 * jax.random.normal(k, shapes[name], jnp.float32)
    return params


def _conv1d_ref(x, w, b, stride, padding):
    y = lax.conv_general_dilated(
        x, w, window_strides=(stride,), padding=[(padding, padding)],
        dimension_numbers=("NCH", "OIH", "NCH"))
    return y + b[None, :, None]


def discriminator_ref(x, p):
    lrelu = lambda v: jnp.where(v >= 0, v, 0.1 * v)
    out = lrelu(_conv1d_ref(x,   p["w1"], p["b1"], 2, 1))
    out = lrelu(_conv1d_ref(out, p["w2"], p["b2"], 1, 2))
    out = lrelu(_conv1d_ref(out, p["w3"], p["b3"], 2, 1))
    out = lrelu(_conv1d_ref(out, p["w4"], p["b4"], 2, 1))
    feature = out.reshape(out.shape[0], -1)
    out = _conv1d_ref(out, p["w5"], p["b5"], 1, 0)
    return out, feature


# --------------------------------- main ------------------------------------ #

if __name__ == "__main__":
    key = jax.random.PRNGKey(0)
    kx, kparam = jax.random.split(key)

    data_size = 32
    x = jax.random.normal(kx, (2, 1, 28), jnp.float32)   # [n, 1, 28]
    params = init_params(kparam, data_size=data_size)
    kp = prepare_params(params)                           # host-side fold, once

    fwd = jax.jit(discriminator_forward)
    out, feature = fwd(x, kp)
    jax.block_until_ready((out, feature))

    assert out.shape == (2, 1, 1), out.shape
    assert feature.shape == (2, data_size * 8 * 4), feature.shape

    out_ref, feat_ref = discriminator_ref(x, params)
    assert jnp.allclose(out, out_ref, rtol=1e-4, atol=1e-4)
    assert jnp.allclose(feature, feat_ref, rtol=1e-4, atol=1e-4)

    print("KERNEL_OK")
</pallas_src>

<mosaic_0001>
module attributes {stable_mosaic.version = 11 : i64} {
  func.func @_discriminator_kernel(%arg0: i32, %arg1: memref<2x28xf32, #tpu.memory_space<vmem>>, %arg2: memref<28x448xf32, #tpu.memory_space<vmem>>, %arg3: memref<1x448xf32, #tpu.memory_space<vmem>>, %arg4: memref<448x1024xf32, #tpu.memory_space<vmem>>, %arg5: memref<1x1024xf32, #tpu.memory_space<vmem>>, %arg6: memref<1024x1024xf32, #tpu.memory_space<vmem>>, %arg7: memref<1x1024xf32, #tpu.memory_space<vmem>>, %arg8: memref<1024x1024xf32, #tpu.memory_space<vmem>>, %arg9: memref<1x1024xf32, #tpu.memory_space<vmem>>, %arg10: memref<1024x1xf32, #tpu.memory_space<vmem>>, %arg11: memref<1x1xf32, #tpu.memory_space<vmem>>, %arg12: memref<2x1xf32, #tpu.memory_space<vmem>>, %arg13: memref<2x1024xf32, #tpu.memory_space<vmem>>) attributes {dimension_semantics = [#tpu.dimension_semantics<parallel>], iteration_bounds = array<i64: 1>, scalar_prefetch = 0 : i64, scratch_operands = 0 : i64, tpu.core_type = #tpu.core_type<tc>, window_params = [{transform_indices = @transform_0, window_bounds = array<i64: 2, 28>}, {pipeline_mode = #tpu.pipeline_mode<synchronous>, transform_indices = @transform_1, window_bounds = array<i64: 28, 448>}, {pipeline_mode = #tpu.pipeline_mode<synchronous>, transform_indices = @transform_2, window_bounds = array<i64: 1, 448>}, {pipeline_mode = #tpu.pipeline_mode<synchronous>, transform_indices = @transform_3, window_bounds = array<i64: 448, 1024>}, {pipeline_mode = #tpu.pipeline_mode<synchronous>, transform_indices = @transform_4, window_bounds = array<i64: 1, 1024>}, {pipeline_mode = #tpu.pipeline_mode<synchronous>, transform_indices = @transform_5, window_bounds = array<i64: 1024, 1024>}, {pipeline_mode = #tpu.pipeline_mode<synchronous>, transform_indices = @transform_6, window_bounds = array<i64: 1, 1024>}, {pipeline_mode = #tpu.pipeline_mode<synchronous>, transform_indices = @transform_7, window_bounds = array<i64: 1024, 1024>}, {pipeline_mode = #tpu.pipeline_mode<synchronous>, transform_indices = @transform_8, window_bounds = array<i64: 1, 1024>}, {pipeline_mode = #tpu.pipeline_mode<synchronous>, transform_indices = @transform_9, window_bounds = array<i64: 1024, 1>}, {pipeline_mode = #tpu.pipeline_mode<synchronous>, transform_indices = @transform_10, window_bounds = array<i64: 1, 1>}, {transform_indices = @transform_11, window_bounds = array<i64: 2, 1>}, {transform_indices = @transform_12, window_bounds = array<i64: 2, 1024>}]} {
    %c0 = arith.constant 0 : index
    %c0_0 = arith.constant 0 : index
    %0 = vector.load %arg1[%c0, %c0_0] : memref<2x28xf32, #tpu.memory_space<vmem>>, vector<2x28xf32>
    %c0_1 = arith.constant 0 : index
    %c0_2 = arith.constant 0 : index
    %1 = vector.load %arg2[%c0_1, %c0_2] : memref<28x448xf32, #tpu.memory_space<vmem>>, vector<28x448xf32>
    %cst = arith.constant dense<0.000000e+00> : vector<2x448xf32>
    %2 = tpu.matmul %0, %1, %cst {dimension_numbers = #tpu.dot_dimension_numbers<[1], [0], [0], [1], [0, 0, 1, 1], [], []>} : vector<2x28xf32>, vector<28x448xf32>, vector<2x448xf32> -> vector<2x448xf32>
    %c0_3 = arith.constant 0 : index
    %c0_4 = arith.constant 0 : index
    %3 = vector.load %arg3[%c0_3, %c0_4] : memref<1x448xf32, #tpu.memory_space<vmem>>, vector<1x448xf32>
    %4 = vector.broadcast %3 : vector<1x448xf32> to vector<2x448xf32>
    %5 = arith.addf %2, %4 : vector<2x448xf32>
    %cst_5 = arith.constant 0.000000e+00 : f32
    %6 = vector.broadcast %cst_5 : f32 to vector<2x448xf32>
    %7 = arith.cmpf oge, %5, %6 : vector<2x448xf32>
    %cst_6 = arith.constant 1.000000e-01 : f32
    %8 = vector.broadcast %cst_6 : f32 to vector<2x448xf32>
    %9 = arith.mulf %8, %5 : vector<2x448xf32>
    %10 = arith.select %7, %5, %9 : vector<2x448xi1>, vector<2x448xf32>
    %c0_7 = arith.constant 0 : index
    %c0_8 = arith.constant 0 : index
    %11 = vector.load %arg4[%c0_7, %c0_8] : memref<448x1024xf32, #tpu.memory_space<vmem>>, vector<448x1024xf32>
    %cst_9 = arith.constant dense<0.000000e+00> : vector<2x1024xf32>
    %12 = tpu.matmul %10, %11, %cst_9 {dimension_numbers = #tpu.dot_dimension_numbers<[1], [0], [0], [1], [0, 0, 1, 1], [], []>} : vector<2x448xf32>, vector<448x1024xf32>, vector<2x1024xf32> -> vector<2x1024xf32>
    %c0_10 = arith.constant 0 : index
    %c0_11 = arith.constant 0 : index
    %13 = vector.load %arg5[%c0_10, %c0_11] : memref<1x1024xf32, #tpu.memory_space<vmem>>, vector<1x1024xf32>
    %14 = vector.broadcast %13 : vector<1x1024xf32> to vector<2x1024xf32>
    %15 = arith.addf %12, %14 : vector<2x1024xf32>
    %cst_12 = arith.constant 0.000000e+00 : f32
    %16 = vector.broadcast %cst_12 : f32 to vector<2x1024xf32>
    %17 = arith.cmpf oge, %15, %16 : vector<2x1024xf32>
    %cst_13 = arith.constant 1.000000e-01 : f32
    %18 = vector.broadcast %cst_13 : f32 to vector<2x1024xf32>
    %19 = arith.mulf %18, %15 : vector<2x1024xf32>
    %20 = arith.select %17, %15, %19 : vector<2x1024xi1>, vector<2x1024xf32>
    %c0_14 = arith.constant 0 : index
    %c0_15 = arith.constant 0 : index
    %21 = vector.load %arg6[%c0_14, %c0_15] : memref<1024x1024xf32, #tpu.memory_space<vmem>>, vector<1024x1024xf32>
    %cst_16 = arith.constant dense<0.000000e+00> : vector<2x1024xf32>
    %22 = tpu.matmul %20, %21, %cst_16 {dimension_numbers = #tpu.dot_dimension_numbers<[1], [0], [0], [1], [0, 0, 1, 1], [], []>} : vector<2x1024xf32>, vector<1024x1024xf32>, vector<2x1024xf32> -> vector<2x1024xf32>
    %c0_17 = arith.constant 0 : index
    %c0_18 = arith.constant 0 : index
    %23 = vector.load %arg7[%c0_17, %c0_18] : memref<1x1024xf32, #tpu.memory_space<vmem>>, vector<1x1024xf32>
    %24 = vector.broadcast %23 : vector<1x1024xf32> to vector<2x1024xf32>
    %25 = arith.addf %22, %24 : vector<2x1024xf32>
    %cst_19 = arith.constant 0.000000e+00 : f32
    %26 = vector.broadcast %cst_19 : f32 to vector<2x1024xf32>
    %27 = arith.cmpf oge, %25, %26 : vector<2x1024xf32>
    %cst_20 = arith.constant 1.000000e-01 : f32
    %28 = vector.broadcast %cst_20 : f32 to vector<2x1024xf32>
    %29 = arith.mulf %28, %25 : vector<2x1024xf32>
    %30 = arith.select %27, %25, %29 : vector<2x1024xi1>, vector<2x1024xf32>
    %c0_21 = arith.constant 0 : index
    %c0_22 = arith.constant 0 : index
    %31 = vector.load %arg8[%c0_21, %c0_22] : memref<1024x1024xf32, #tpu.memory_space<vmem>>, vector<1024x1024xf32>
    %cst_23 = arith.constant dense<0.000000e+00> : vector<2x1024xf32>
    %32 = tpu.matmul %30, %31, %cst_23 {dimension_numbers = #tpu.dot_dimension_numbers<[1], [0], [0], [1], [0, 0, 1, 1], [], []>} : vector<2x1024xf32>, vector<1024x1024xf32>, vector<2x1024xf32> -> vector<2x1024xf32>
    %c0_24 = arith.constant 0 : index
    %c0_25 = arith.constant 0 : index
    %33 = vector.load %arg9[%c0_24, %c0_25] : memref<1x1024xf32, #tpu.memory_space<vmem>>, vector<1x1024xf32>
    %34 = vector.broadcast %33 : vector<1x1024xf32> to vector<2x1024xf32>
    %35 = arith.addf %32, %34 : vector<2x1024xf32>
    %cst_26 = arith.constant 0.000000e+00 : f32
    %36 = vector.broadcast %cst_26 : f32 to vector<2x1024xf32>
    %37 = arith.cmpf oge, %35, %36 : vector<2x1024xf32>
    %cst_27 = arith.constant 1.000000e-01 : f32
    %38 = vector.broadcast %cst_27 : f32 to vector<2x1024xf32>
    %39 = arith.mulf %38, %35 : vector<2x1024xf32>
    %40 = arith.select %37, %35, %39 : vector<2x1024xi1>, vector<2x1024xf32>
    %c0_28 = arith.constant 0 : index
    %c0_29 = arith.constant 0 : index
    %41 = vector.load %arg13[%c0_28, %c0_29] : memref<2x1024xf32, #tpu.memory_space<vmem>>, vector<2x1024xf32>
    tpu.vector_store %arg13[%c0_28, %c0_29], %40 {strides = array<i32>} : memref<2x1024xf32, #tpu.memory_space<vmem>>, vector<2x1024xf32>,
    %c0_30 = arith.constant 0 : index
    %c0_31 = arith.constant 0 : index
    %42 = vector.load %arg10[%c0_30, %c0_31] : memref<1024x1xf32, #tpu.memory_space<vmem>>, vector<1024x1xf32>
    %cst_32 = arith.constant dense<0.000000e+00> : vector<2x1xf32>
    %43 = tpu.matmul %40, %42, %cst_32 {dimension_numbers = #tpu.dot_dimension_numbers<[1], [0], [0], [1], [0, 0, 1, 1], [], []>} : vector<2x1024xf32>, vector<1024x1xf32>, vector<2x1xf32> -> vector<2x1xf32>
    %c0_33 = arith.constant 0 : index
    %c0_34 = arith.constant 0 : index
    %44 = vector.load %arg11[%c0_33, %c0_34] : memref<1x1xf32, #tpu.memory_space<vmem>>, vector<1x1xf32>
    %45 = vector.broadcast %44 : vector<1x1xf32> to vector<2x1xf32>
    %46 = arith.addf %43, %45 : vector<2x1xf32>
    %c0_35 = arith.constant 0 : index
    %c0_36 = arith.constant 0 : index
    %47 = vector.load %arg12[%c0_35, %c0_36] : memref<2x1xf32, #tpu.memory_space<vmem>>, vector<2x1xf32>
    tpu.vector_store %arg12[%c0_35, %c0_36], %46 {strides = array<i32>} : memref<2x1xf32, #tpu.memory_space<vmem>>, vector<2x1xf32>,
    return
  }
  func.func @transform_0(%arg0: i32) -> (i32, i32) {
    %c0_i32 = arith.constant 0 : i32
    %c0_i32_0 = arith.constant 0 : i32
    return %arg0, %c0_i32 : i32, i32
  }
  func.func @transform_1(%arg0: i32) -> (i32, i32) {
    %c0_i32 = arith.constant 0 : i32
    %c0_i32_0 = arith.constant 0 : i32
    %c0_i32_1 = arith.constant 0 : i32
    return %c0_i32, %c0_i32_0 : i32, i32
  }
  func.func @transform_2(%arg0: i32) -> (i32, i32) {
    %c0_i32 = arith.constant 0 : i32
    %c0_i32_0 = arith.constant 0 : i32
    %c0_i32_1 = arith.constant 0 : i32
    return %c0_i32, %c0_i32_0 : i32, i32
  }
  func.func @transform_3(%arg0: i32) -> (i32, i32) {
    %c0_i32 = arith.constant 0 : i32
    %c0_i32_0 = arith.constant 0 : i32
    %c0_i32_1 = arith.constant 0 : i32
    return %c0_i32, %c0_i32_0 : i32, i32
  }
  func.func @transform_4(%arg0: i32) -> (i32, i32) {
    %c0_i32 = arith.constant 0 : i32
    %c0_i32_0 = arith.constant 0 : i32
    %c0_i32_1 = arith.constant 0 : i32
    return %c0_i32, %c0_i32_0 : i32, i32
  }
  func.func @transform_5(%arg0: i32) -> (i32, i32) {
    %c0_i32 = arith.constant 0 : i32
    %c0_i32_0 = arith.constant 0 : i32
    %c0_i32_1 = arith.constant 0 : i32
    return %c0_i32, %c0_i32_0 : i32, i32
  }
  func.func @transform_6(%arg0: i32) -> (i32, i32) {
    %c0_i32 = arith.constant 0 : i32
    %c0_i32_0 = arith.constant 0 : i32
    %c0_i32_1 = arith.constant 0 : i32
    return %c0_i32, %c0_i32_0 : i32, i32
  }
  func.func @transform_7(%arg0: i32) -> (i32, i32) {
    %c0_i32 = arith.constant 0 : i32
    %c0_i32_0 = arith.constant 0 : i32
    %c0_i32_1 = arith.constant 0 : i32
    return %c0_i32, %c0_i32_0 : i32, i32
  }
  func.func @transform_8(%arg0: i32) -> (i32, i32) {
    %c0_i32 = arith.constant 0 : i32
    %c0_i32_0 = arith.constant 0 : i32
    %c0_i32_1 = arith.constant 0 : i32
    return %c0_i32, %c0_i32_0 : i32, i32
  }
  func.func @transform_9(%arg0: i32) -> (i32, i32) {
    %c0_i32 = arith.constant 0 : i32
    %c0_i32_0 = arith.constant 0 : i32
    %c0_i32_1 = arith.constant 0 : i32
    return %c0_i32, %c0_i32_0 : i32, i32
  }
  func.func @transform_10(%arg0: i32) -> (i32, i32) {
    %c0_i32 = arith.constant 0 : i32
    %c0_i32_0 = arith.constant 0 : i32
    %c0_i32_1 = arith.constant 0 : i32
    return %c0_i32, %c0_i32_0 : i32, i32
  }
  func.func @transform_11(%arg0: i32) -> (i32, i32) {
    %c0_i32 = arith.constant 0 : i32
    %c0_i32_0 = arith.constant 0 : i32
    return %arg0, %c0_i32 : i32, i32
  }
  func.func @transform_12(%arg0: i32) -> (i32, i32) {
    %c0_i32 = arith.constant 0 : i32
    %c0_i32_0 = arith.constant 0 : i32
    return %arg0, %c0_i32 : i32, i32
  }
}

</mosaic_0001>

<llo_original>
// kernel: discriminator_forward.1
$region0: #{discriminator_forward.1}
  #allocation0 [shape = 'u32[]', space=smem, size = 0x4, offset = 0x4, fixed_abs, tag = 'smem constant byte address 0x4 - core index']
  #allocation1 [shape = 'u32[72,128]{1,0:T(1,128)}', space=vmem, size = 0x9000, scoped, tag = 'internal scratch']
  #allocation2 [shape = 'f32[1,1]{1,0:T(1,128)S(1)}', space=vmem, size = 0x200, scoped, tag = 'scoped memory for discriminator_forward.1']
  %s0 = inlined_call_operand.hbm [shape: f32[2,28], index: 0, kind: input, shape index: {}]
  %s1 = inlined_call_operand.hbm [shape: f32[28,448], index: 1, kind: input, shape index: {}]
  %s2 = inlined_call_operand.hbm [shape: f32[1,448], index: 2, kind: input, shape index: {}]
  %s3 = inlined_call_operand.hbm [shape: f32[448,1024], index: 3, kind: input, shape index: {}]
  %s4 = inlined_call_operand.hbm [shape: f32[1,1024], index: 4, kind: input, shape index: {}]
  %s5 = inlined_call_operand.hbm [shape: f32[1024,1024], index: 5, kind: input, shape index: {}]
  %s6 = inlined_call_operand.hbm [shape: f32[1,1024], index: 6, kind: input, shape index: {}]
  %s7 = inlined_call_operand.hbm [shape: f32[1024,1024], index: 7, kind: input, shape index: {}]
  %s8 = inlined_call_operand.hbm [shape: f32[1,1024], index: 8, kind: input, shape index: {}]
  %s9 = inlined_call_operand.vmem [shape: f32[1024,1], index: 9, kind: input, shape index: {}]
  %s10 = inlined_call_operand.<no memory space> [shape: f32[1,1], index: 10, kind: input, shape index: {}]
  %s11 = inlined_call_operand.vmem [shape: f32[2,1], index: 11, kind: output, shape index: {0}]
  %s12 = inlined_call_operand.hbm [shape: f32[2,1024], index: 12, kind: output, shape index: {1}]
  %13 = xla_tuple %s11, %s12
  %s14 = sld [smem:[#allocation0]]
  $region98: #{discriminator_forward.1} parent=0
    _
  %s16 = ssub.s32 1, %s14
  %s17 = scalar_select 0, %s16, %s14
  %v18 = vstv %s10
  %19 = vst [vmem:[#allocation2] sm:$0x1] %v18
  $region1: #{discriminator_forward.1} parent=0
    #allocation3 [shape = 'u8[1024]{0}', space=vmem, size = 0x400, scoped, tag = 'input window, operand 0, single buffered']
    #allocation4 [shape = 's32[1]{0}', space=sflag, size = 0x4, scoped, tag = 'scoped memory for discriminator_forward.1']
    #allocation5 [shape = 's32[1]{0}', space=sflag, size = 0x4, scoped, tag = 'scoped memory for discriminator_forward.1']
    #allocation6 [shape = 'u8[65536]{0}', space=vmem, size = 0x10000, scoped, tag = 'input window, operand 1, single buffered']
    #allocation7 [shape = 's32[1]{0}', space=sflag, size = 0x4, scoped, tag = 'scoped memory for discriminator_forward.1']
    #allocation8 [shape = 'u8[2048]{0}', space=vmem, size = 0x800, scoped, tag = 'input window, operand 2, single buffered']
    #allocation9 [shape = 'u8[1835008]{0}', space=vmem, size = 0x1c0000, scoped, tag = 'input window, operand 3, single buffered']
    #allocation10 [shape = 's32[1]{0}', space=sflag, size = 0x4, scoped, tag = 'scoped memory for discriminator_forward.1']
    #allocation11 [shape = 'u8[4096]{0}', space=vmem, size = 0x1000, scoped, tag = 'input window, operand 4, single buffered']
    #allocation12 [shape = 'u8[4194304]{0}', space=vmem, size = 0x400000, scoped, tag = 'input window, operand 5, single buffered']
    #allocation13 [shape = 's32[1]{0}', space=sflag, size = 0x4, scoped, tag = 'scoped memory for discriminator_forward.1']
    #allocation14 [shape = 'u8[4096]{0}', space=vmem, size = 0x1000, scoped, tag = 'input window, operand 6, single buffered']
    #allocation15 [shape = 'u8[4194304]{0}', space=vmem, size = 0x400000, scoped, tag = 'input window, operand 7, single buffered']
    #allocation16 [shape = 's32[1]{0}', space=sflag, size = 0x4, scoped, tag = 'scoped memory for discriminator_forward.1']
    #allocation17 [shape = 'u8[4096]{0}', space=vmem, size = 0x1000, scoped, tag = 'input window, operand 8, single buffered']
    #allocation18 [shape = 'u8[8192]{0}', space=vmem, size = 0x2000, scoped, tag = 'output window, operand 1, single buffered']
    %20 = vsyncpa [#allocation4], 0
    %21 = vsyncpa [#allocation7], 0
    %22 = vsyncpa [#allocation10], 0
    %23 = vsyncpa [#allocation13], 0
    %24 = vsyncpa [#allocation16], 0
    %25 = vsyncpa [#allocation5], 0
    // Predicated region
    $region2: #{discriminator_forward.1} parent=1 // pred_check
      _
    $region3: #{discriminator_forward.1} parent=1 // pred_check_branch
      %27 = sbr.rel (0) target = $region5
    $region4: #{discriminator_forward.1} parent=1 // pred_region
      %29 = vsyncadd [#allocation4], 0
      %s31 = sshll.u32 %s0, 4
      %s32 = int_to_ptr.hbm [resolvable:$true] %s31
      %s33 = sshll.u32 [#allocation3], 4
      %s34 = int_to_ptr.vmem [resolvable:$true] %s33
      %36 = dma.hbm_to_vmem [thread:$0]  %s32, 32, %s34, [#allocation4]
    $region5: #{discriminator_forward.1} parent=1 // pred_fallthru
      _
    // Predicated region
    $region6: #{discriminator_forward.1} parent=1 // pred_check
      _
    $region7: #{discriminator_forward.1} parent=1 // pred_check_branch
      %38 = sbr.rel (0) target = $region9
    $region8: #{discriminator_forward.1} parent=1 // pred_region
      %40 = vsyncadd [#allocation7], 0
      %s41 = sshll.u32 %s1, 4
      %s42 = int_to_ptr.hbm [resolvable:$true] %s41
      %s43 = sshll.u32 [#allocation6], 4
      %s44 = int_to_ptr.vmem [resolvable:$true] %s43
      %49 = dma.hbm_to_vmem [thread:$0]  %s42, 2048, %s44, [#allocation7], 512, 512, 32
    $region9: #{discriminator_forward.1} parent=1 // pred_fallthru
      _
    // Predicated region
    $region10: #{discriminator_forward.1} parent=1 // pred_check
      _
    $region11: #{discriminator_forward.1} parent=1 // pred_check_branch
      %51 = sbr.rel (0) target = $region13
    $region12: #{discriminator_forward.1} parent=1 // pred_region
      %53 = vsyncadd [#allocation7], 0
      %s55 = sshll.u32 %s2, 4
      %s56 = int_to_ptr.hbm [resolvable:$true] %s55
      %s57 = sshll.u32 [#allocation8], 4
      %s58 = int_to_ptr.vmem [resolvable:$true] %s57
      %60 = dma.hbm_to_vmem [thread:$0]  %s56, 64, %s58, [#allocation7]
    $region13: #{discriminator_forward.1} parent=1 // pred_fallthru
      _
    // Predicated region
    $region14: #{discriminator_forward.1} parent=1 // pred_check
      _
    $region15: #{discriminator_forward.1} parent=1 // pred_check_branch
      %62 = sbr.rel (0) target = $region17
    $region16: #{discriminator_forward.1} parent=1 // pred_region
      %64 = vsyncadd [#allocation10], 0
      %s65 = sshll.u32 %s3, 4
      %s66 = int_to_ptr.hbm [resolvable:$true] %s65
      %s67 = sshll.u32 [#allocation9], 4
      %s68 = int_to_ptr.vmem [resolvable:$true] %s67
      %73 = dma.hbm_to_vmem [thread:$0]  %s66, 57344, %s68, [#allocation10], 1024, 1024, 64
    $region17: #{discriminator_forward.1} parent=1 // pred_fallthru
      _
    // Predicated region
    $region18: #{discriminator_forward.1} parent=1 // pred_check
      _
    $region19: #{discriminator_forward.1} parent=1 // pred_check_branch
      %75 = sbr.rel (0) target = $region21
    $region20: #{discriminator_forward.1} parent=1 // pred_region
      %77 = vsyncadd [#allocation10], 0
      %s79 = sshll.u32 %s4, 4
      %s80 = int_to_ptr.hbm [resolvable:$true] %s79
      %s81 = sshll.u32 [#allocation11], 4
      %s82 = int_to_ptr.vmem [resolvable:$true] %s81
      %84 = dma.hbm_to_vmem [thread:$0]  %s80, 128, %s82, [#allocation10]
    $region21: #{discriminator_forward.1} parent=1 // pred_fallthru
      _
    // Predicated region
    $region22: #{discriminator_forward.1} parent=1 // pred_check
      _
    $region23: #{discriminator_forward.1} parent=1 // pred_check_branch
      %86 = sbr.rel (0) target = $region25
    $region24: #{discriminator_forward.1} parent=1 // pred_region
      %88 = vsyncadd [#allocation13], 0
      %s89 = sshll.u32 %s5, 4
      %s90 = int_to_ptr.hbm [resolvable:$true] %s89
      %s91 = sshll.u32 [#allocation12], 4
      %s92 = int_to_ptr.vmem [resolvable:$true] %s91
      %97 = dma.hbm_to_vmem [thread:$0]  %s90, 131072, %s92, [#allocation13], 1024, 1024, 64
    $region25: #{discriminator_forward.1} parent=1 // pred_fallthru
      _
    // Predicated region
    $region26: #{discriminator_forward.1} parent=1 // pred_check
      _
    $region27: #{discriminator_forward.1} parent=1 // pred_check_branch
      %99 = sbr.rel (0) target = $region29
    $region28: #{discriminator_forward.1} parent=1 // pred_region
      %101 = vsyncadd [#allocation13], 0
      %s103 = sshll.u32 %s6, 4
      %s104 = int_to_ptr.hbm [resolvable:$true] %s103
      %s105 = sshll.u32 [#allocation14], 4
      %s106 = int_to_ptr.vmem [resolvable:$true] %s105
      %108 = dma.hbm_to_vmem [thread:$0]  %s104, 128, %s106, [#allocation13]
    $region29: #{discriminator_forward.1} parent=1 // pred_fallthru
      _
    // Predicated region
    $region30: #{discriminator_forward.1} parent=1 // pred_check
      _
    $region31: #{discriminator_forward.1} parent=1 // pred_check_branch
      %110 = sbr.rel (0) target = $region33
    $region32: #{discriminator_forward.1} parent=1 // pred_region
      %112 = vsyncadd [#allocation16], 0
      %s113 = sshll.u32 %s7, 4
      %s114 = int_to_ptr.hbm [resolvable:$true] %s113
      %s115 = sshll.u32 [#allocation15], 4
      %s116 = int_to_ptr.vmem [resolvable:$true] %s115
      %121 = dma.hbm_to_vmem [thread:$0]  %s114, 131072, %s116, [#allocation16], 1024, 1024, 64
    $region33: #{discriminator_forward.1} parent=1 // pred_fallthru
      _
    // Predicated region
    $region34: #{discriminator_forward.1} parent=1 // pred_check
      _
    $region35: #{discriminator_forward.1} parent=1 // pred_check_branch
      %123 = sbr.rel (0) target = $region37
    $region36: #{discriminator_forward.1} parent=1 // pred_region
      %125 = vsyncadd [#allocation16], 0
      %s127 = sshll.u32 %s8, 4
      %s128 = int_to_ptr.hbm [resolvable:$true] %s127
      %s129 = sshll.u32 [#allocation17], 4
      %s130 = int_to_ptr.vmem [resolvable:$true] %s129
      %132 = dma.hbm_to_vmem [thread:$0]  %s128, 128, %s130, [#allocation16]
    $region37: #{discriminator_forward.1} parent=1 // pred_fallthru
      _
    // Predicated region
    $region38: #{discriminator_forward.1} parent=1 // pred_check
      _
    $region39: #{discriminator_forward.1} parent=1 // pred_check_branch
      %134 = sbr.rel (0) target = $region41
    $region40: #{discriminator_forward.1} parent=1 // pred_region
      _
    $region41: #{discriminator_forward.1} parent=1 // pred_fallthru
      _
    // Predicated region
    $region42: #{discriminator_forward.1} parent=1 // pred_check
      _
    $region43: #{discriminator_forward.1} parent=1 // pred_check_branch
      %136 = sbr.rel (0) target = $region45
    $region44: #{discriminator_forward.1} parent=1 // pred_region
      _
    $region45: #{discriminator_forward.1} parent=1 // pred_fallthru
      _
    // Predicated region
    $region46: #{discriminator_forward.1} parent=1 // pred_check
      _
    $region47: #{discriminator_forward.1} parent=1 // pred_check_branch
      %138 = sbr.rel (0) target = $region49
    $region48: #{discriminator_forward.1} parent=1 // pred_region
      %140 = dma.done [#allocation4], 32
    $region49: #{discriminator_forward.1} parent=1 // pred_fallthru
      _
    // Predicated region
    $region50: #{discriminator_forward.1} parent=1 // pred_check
      _
    $region51: #{discriminator_forward.1} parent=1 // pred_check_branch
      %142 = sbr.rel (0) target = $region53
    $region52: #{discriminator_forward.1} parent=1 // pred_region
      %144 = dma.done [#allocation7], 2048
    $region53: #{discriminator_forward.1} parent=1 // pred_fallthru
      _
    // Predicated region
    $region54: #{discriminator_forward.1} parent=1 // pred_check
      _
    $region55: #{discriminator_forward.1} parent=1 // pred_check_branch
      %146 = sbr.rel (0) target = $region57
    $region56: #{discriminator_forward.1} parent=1 // pred_region
      %148 = dma.done [#allocation7], 64
    $region57: #{discriminator_forward.1} parent=1 // pred_fallthru
      _
    // Predicated region
    $region58: #{discriminator_forward.1} parent=1 // pred_check
      _
    $region59: #{discriminator_forward.1} parent=1 // pred_check_branch
      %150 = sbr.rel (0) target = $region61
    $region60: #{discriminator_forward.1} parent=1 // pred_region
      %152 = dma.done [#allocation10], 57344
    $region61: #{discriminator_forward.1} parent=1 // pred_fallthru
      _
    // Predicated region
    $region62: #{discriminator_forward.1} parent=1 // pred_check
      _
    $region63: #{discriminator_forward.1} parent=1 // pred_check_branch
      %154 = sbr.rel (0) target = $region65
    $region64: #{discriminator_forward.1} parent=1 // pred_region
      %156 = dma.done [#allocation10], 128
    $region65: #{discriminator_forward.1} parent=1 // pred_fallthru
      _
    // Predicated region
    $region66: #{discriminator_forward.1} parent=1 // pred_check
      _
    $region67: #{discriminator_forward.1} parent=1 // pred_check_branch
      %158 = sbr.rel (0) target = $region69
    $region68: #{discriminator_forward.1} parent=1 // pred_region
      %160 = dma.done [#allocation13], 131072
    $region69: #{discriminator_forward.1} parent=1 // pred_fallthru
      _
    // Predicated region
    $region70: #{discriminator_forward.1} parent=1 // pred_check
      _
    $region71: #{discriminator_forward.1} parent=1 // pred_check_branch
      %162 = sbr.rel (0) target = $region73
    $region72: #{discriminator_forward.1} parent=1 // pred_region
      %164 = dma.done [#allocation13], 128
    $region73: #{discriminator_forward.1} parent=1 // pred_fallthru
      _
    // Predicated region
    $region74: #{discriminator_forward.1} parent=1 // pred_check
      _
    $region75: #{discriminator_forward.1} parent=1 // pred_check_branch
      %166 = sbr.rel (0) target = $region77
    $region76: #{discriminator_forward.1} parent=1 // pred_region
      %168 = dma.done [#allocation16], 131072
    $region77: #{discriminator_forward.1} parent=1 // pred_fallthru
      _
    // Predicated region
    $region78: #{discriminator_forward.1} parent=1 // pred_check
      _
    $region79: #{discriminator_forward.1} parent=1 // pred_check_branch
      %170 = sbr.rel (0) target = $region81
    $region80: #{discriminator_forward.1} parent=1 // pred_region
      %172 = dma.done [#allocation16], 128
    $region81: #{discriminator_forward.1} parent=1 // pred_fallthru
      _
    %v173 = vld [vmem:[#allocation3] sm:$0x3]
    %v174 = vld [vmem:[#allocation6] sm:$0xff]
    %v175 = vld [vmem:[#allocation6 + $0x8] sm:$0xff]
    %v176 = vld [vmem:[#allocation6 + $0x10] sm:$0xff]
    %v177 = vld [vmem:[#allocation6 + $0x18] sm:$0xff]
    %v178 = vld [vmem:[#allocation6 + $0x20] sm:$0xff]
    %v179 = vld [vmem:[#allocation6 + $0x28] sm:$0xff]
    %v180 = vld [vmem:[#allocation6 + $0x30] sm:$0xff]
    %v181 = vld [vmem:[#allocation6 + $0x38] sm:$0xff]
    %v182 = vld [vmem:[#allocation6 + $0x40] sm:$0xff]
    %v183 = vld [vmem:[#allocation6 + $0x48] sm:$0xff]
    %v184 = vld [vmem:[#allocation6 + $0x50] sm:$0xff]
    %v185 = vld [vmem:[#allocation6 + $0x58] sm:$0xff]
    %v186 = vld [vmem:[#allocation6 + $0x60] sm:$0xf]
    %v187 = vld [vmem:[#allocation6 + $0x68] sm:$0xf]
    %v188 = vld [vmem:[#allocation6 + $0x70] sm:$0xf]
    %v189 = vld [vmem:[#allocation6 + $0x78] sm:$0xf]
    %v190 = vld [vmem:[#allocation8] sm:$0xf]
    %v192 = vperm.slane %v190, 0
    %v193 = vperm.slane %v190, 1
    %v194 = vperm.slane %v190, 2
    %v195 = vperm.slane %v190, 3
    %vm200 = vcmask 228352
    %v202 = vsel %vm200, %v173, 0
    %vm204 = vcmask 1043456
    %v206 = vsel %vm204, %v186, 0
    %v209 = vsel %vm204, %v187, 0
    %v212 = vsel %vm204, %v188, 0
    %v215 = vsel %vm204, %v189, 0
    %217 = vmatpush.msra.mxu0 0.0
    %218 = vmatpush.msra.mxu0 0.0
    %219 = vmatpush.msra.mxu0 0.0
    %220 = vmatpush.msra.mxu0 0.0
    %221 = vmatpush.msra.mxu0 0.0
    %222 = vmatpush.msra.mxu0 0.0
    %223 = vmatpush.msra.mxu0 0.0
    %224 = vmatpush.msra.mxu0 0.0
    %225 = vmatpush.msra.mxu0 0.0
    %226 = vmatpush.msra.mxu0 0.0
    %227 = vmatpush.msra.mxu0 0.0
    %228 = vmatpush.msra.mxu0 0.0
    %229 = vmatpush.msra.mxu0 %v206
    %230 = vmatpush.msra.mxu0 %v182
    %231 = vmatpush.msra.mxu0 %v178
    %232 = vmatpush.msra.mxu0 %v174
    %233 = vmatmul.f32.gmra.mxu0 %v202
    %v234 = vpop.f32.mrf.mxu0
    %v235 = vadd.f32 %v192, %v234
    %236 = vdwg.mxu0
    %237 = vmatpush.msra.mxu0 0.0
    %238 = vmatpush.msra.mxu0 0.0
    %239 = vmatpush.msra.mxu0 0.0
    %240 = vmatpush.msra.mxu0 0.0
    %241 = vmatpush.msra.mxu0 0.0
    %242 = vmatpush.msra.mxu0 0.0
    %243 = vmatpush.msra.mxu0 0.0
    %244 = vmatpush.msra.mxu0 0.0
    %245 = vmatpush.msra.mxu0 0.0
    %246 = vmatpush.msra.mxu0 0.0
    %247 = vmatpush.msra.mxu0 0.0
    %248 = vmatpush.msra.mxu0 0.0
    %249 = vmatpush.msra.mxu0 %v209
    %250 = vmatpush.msra.mxu0 %v183
    %251 = vmatpush.msra.mxu0 %v179
    %252 = vmatpush.msra.mxu0 %v175
    %253 = vmatmul.f32.gmra.mxu0 %v202
    %v254 = vpop.f32.mrf.mxu0
    %v255 = vadd.f32 %v193, %v254
    %256 = vdwg.mxu0
    %257 = vmatpush.msra.mxu0 0.0
    %258 = vmatpush.msra.mxu0 0.0
    %259 = vmatpush.msra.mxu0 0.0
    %260 = vmatpush.msra.mxu0 0.0
    %261 = vmatpush.msra.mxu0 0.0
    %262 = vmatpush.msra.mxu0 0.0
    %263 = vmatpush.msra.mxu0 0.0
    %264 = vmatpush.msra.mxu0 0.0
    %265 = vmatpush.msra.mxu0 0.0
    %266 = vmatpush.msra.mxu0 0.0
    %267 = vmatpush.msra.mxu0 0.0
    %268 = vmatpush.msra.mxu0 0.0
    %269 = vmatpush.msra.mxu0 %v212
    %270 = vmatpush.msra.mxu0 %v184
    %271 = vmatpush.msra.mxu0 %v180
    %272 = vmatpush.msra.mxu0 %v176
    %273 = vmatmul.f32.gmra.mxu0 %v202
    %v274 = vpop.f32.mrf.mxu0
    %v275 = vadd.f32 %v194, %v274
    %276 = vdwg.mxu0
    %277 = vmatpush.msra.mxu0 0.0
    %278 = vmatpush.msra.mxu0 0.0
    %279 = vmatpush.msra.mxu0 0.0
    %280 = vmatpush.msra.mxu0 0.0
    %281 = vmatpush.msra.mxu0 0.0
    %282 = vmatpush.msra.mxu0 0.0
    %283 = vmatpush.msra.mxu0 0.0
    %284 = vmatpush.msra.mxu0 0.0
    %285 = vmatpush.msra.mxu0 0.0
    %286 = vmatpush.msra.mxu0 0.0
    %287 = vmatpush.msra.mxu0 0.0
    %288 = vmatpush.msra.mxu0 0.0
    %289 = vmatpush.msra.mxu0 %v215
    %290 = vmatpush.msra.mxu0 %v185
    %291 = vmatpush.msra.mxu0 %v181
    %292 = vmatpush.msra.mxu0 %v177
    %293 = vmatmul.f32.gmra.mxu0 %v202
    %v294 = vpop.f32.mrf.mxu0
    %v295 = vadd.f32 %v195, %v294
    %296 = vdwg.mxu0
    %vm297 = vcmp.ge.f32.partialorder %v235, 0.0
    %vm298 = vcmp.ge.f32.partialorder %v255, 0.0
    %vm299 = vcmp.ge.f32.partialorder %v275, 0.0
    %vm300 = vcmp.ge.f32.partialorder %v295, 0.0
    %v301 = vmul.f32 %v235, 0.1
    %v302 = vmul.f32 %v255, 0.1
    %v303 = vmul.f32 %v275, 0.1
    %v304 = vmul.f32 %v295, 0.1
    %v305 = vsel %vm297, %v235, %v301
    %v306 = vsel %vm298, %v255, %v302
    %v307 = vsel %vm299, %v275, %v303
    %v308 = vsel %vm300, %v295, %v304
    %v309 = vld [vmem:[#allocation9] sm:$0xff]
    %v310 = vld [vmem:[#allocation9 + $0x8] sm:$0xff]
    %v311 = vld [vmem:[#allocation9 + $0x10] sm:$0xff]
    %v312 = vld [vmem:[#allocation9 + $0x18] sm:$0xff]
    %v313 = vld [vmem:[#allocation9 + $0x20] sm:$0xff]
    %v314 = vld [vmem:[#allocation9 + $0x28] sm:$0xff]
    %v315 = vld [vmem:[#allocation9 + $0x30] sm:$0xff]
    %v316 = vld [vmem:[#allocation9 + $0x38] sm:$0xff]
    %v317 = vld [vmem:[#allocation9 + $0x40] sm:$0xff]
    %v318 = vld [vmem:[#allocation9 + $0x48] sm:$0xff]
    %v319 = vld [vmem:[#allocation9 + $0x50] sm:$0xff]
    %v320 = vld [vmem:[#allocation9 + $0x58] sm:$0xff]
    %v321 = vld [vmem:[#allocation9 + $0x60] sm:$0xff]
    %v322 = vld [vmem:[#allocation9 + $0x68] sm:$0xff]
    %v323 = vld [vmem:[#allocation9 + $0x70] sm:$0xff]
    %v324 = vld [vmem:[#allocation9 + $0x78] sm:$0xff]
    %v325 = vld [vmem:[#allocation9 + $0x80] sm:$0xff]
    %v326 = vld [vmem:[#allocation9 + $0x88] sm:$0xff]
    %v327 = vld [vmem:[#allocation9 + $0x90] sm:$0xff]
    %v328 = vld [vmem:[#allocation9 + $0x98] sm:$0xff]
    %v329 = vld [vmem:[#allocation9 + $0xa0] sm:$0xff]
    %v330 = vld [vmem:[#allocation9 + $0xa8] sm:$0xff]
    %v331 = vld [vmem:[#allocation9 + $0xb0] sm:$0xff]
    %v332 = vld [vmem:[#allocation9 + $0xb8] sm:$0xff]
    %v333 = vld [vmem:[#allocation9 + $0xc0] sm:$0xff]
    %v334 = vld [vmem:[#allocation9 + $0xc8] sm:$0xff]
    %v335 = vld [vmem:[#allocation9 + $0xd0] sm:$0xff]
    %v336 = vld [vmem:[#allocation9 + $0xd8] sm:$0xff]
    %v337 = vld [vmem:[#allocation9 + $0xe0] sm:$0xff]
    %v338 = vld [vmem:[#allocation9 + $0xe8] sm:$0xff]
    %v339 = vld [vmem:[#allocation9 + $0xf0] sm:$0xff]
    %v340 = vld [vmem:[#allocation9 + $0xf8] sm:$0xff]
    %v341 = vld [vmem:[#allocation9 + $0x100] sm:$0xff]
    %v342 = vld [vmem:[#allocation9 + $0x108] sm:$0xff]
    %v343 = vld [vmem:[#allocation9 + $0x110] sm:$0xff]
    %v344 = vld [vmem:[#allocation9 + $0x118] sm:$0xff]
    %v345 = vld [vmem:[#allocation9 + $0x120] sm:$0xff]
    %v346 = vld [vmem:[#allocation9 + $0x128] sm:$0xff]
    %v347 = vld [vmem:[#allocation9 + $0x130] sm:$0xff]
    %v348 = vld [vmem:[#allocation9 + $0x138] sm:$0xff]
    %v349 = vld [vmem:[#allocation9 + $0x140] sm:$0xff]
    %v350 = vld [vmem:[#allocation9 + $0x148] sm:$0xff]
    %v351 = vld [vmem:[#allocation9 + $0x150] sm:$0xff]
    %v352 = vld [vmem:[#allocation9 + $0x158] sm:$0xff]
    %v353 = vld [vmem:[#allocation9 + $0x160] sm:$0xff]
    %v354 = vld [vmem:[#allocation9 + $0x168] sm:$0xff]
    %v355 = vld [vmem:[#allocation9 + $0x170] sm:$0xff]
    %v356 = vld [vmem:[#allocation9 + $0x178] sm:$0xff]
    %v357 = vld [vmem:[#allocation9 + $0x180] sm:$0xff]
    %v358 = vld [vmem:[#allocation9 + $0x188] sm:$0xff]
    %v359 = vld [vmem:[#allocation9 + $0x190] sm:$0xff]
    %v360 = vld [vmem:[#allocation9 + $0x198] sm:$0xff]
    %v361 = vld [vmem:[#allocation9 + $0x1a0] sm:$0xff]
    %v362 = vld [vmem:[#allocation9 + $0x1a8] sm:$0xff]
    %v363 = vld [vmem:[#allocation9 + $0x1b0] sm:$0xff]
    %v364 = vld [vmem:[#allocation9 + $0x1b8] sm:$0xff]
    %v365 = vld [vmem:[#allocation9 + $0x1c0] sm:$0xff]
    %v366 = vld [vmem:[#allocation9 + $0x1c8] sm:$0xff]
    %v367 = vld [vmem:[#allocation9 + $0x1d0] sm:$0xff]
    %v368 = vld [vmem:[#allocation9 + $0x1d8] sm:$0xff]
    %v369 = vld [vmem:[#allocation9 + $0x1e0] sm:$0xff]
    %v370 = vld [vmem:[#allocation9 + $0x1e8] sm:$0xff]
    %v371 = vld [vmem:[#allocation9 + $0x1f0] sm:$0xff]
    %v372 = vld [vmem:[#allocation9 + $0x1f8] sm:$0xff]
    %v373 = vld [vmem:[#allocation9 + $0x200] sm:$0xff]
    %v374 = vld [vmem:[#allocation9 + $0x208] sm:$0xff]
    %v375 = vld [vmem:[#allocation9 + $0x210] sm:$0xff]
    %v376 = vld [vmem:[#allocation9 + $0x218] sm:$0xff]
    %v377 = vld [vmem:[#allocation9 + $0x220] sm:$0xff]
    %v378 = vld [vmem:[#allocation9 + $0x228] sm:$0xff]
    %v379 = vld [vmem:[#allocation9 + $0x230] sm:$0xff]
    %v380 = vld [vmem:[#allocation9 + $0x238] sm:$0xff]
    %v381 = vld [vmem:[#allocation9 + $0x240] sm:$0xff]
    %v382 = vld [vmem:[#allocation9 + $0x248] sm:$0xff]
    %v383 = vld [vmem:[#allocation9 + $0x250] sm:$0xff]
    %v384 = vld [vmem:[#allocation9 + $0x258] sm:$0xff]
    %v385 = vld [vmem:[#allocation9 + $0x260] sm:$0xff]
    %v386 = vld [vmem:[#allocation9 + $0x268] sm:$0xff]
    %v387 = vld [vmem:[#allocation9 + $0x270] sm:$0xff]
    %v388 = vld [vmem:[#allocation9 + $0x278] sm:$0xff]
    %v389 = vld [vmem:[#allocation9 + $0x280] sm:$0xff]
    %v390 = vld [vmem:[#allocation9 + $0x288] sm:$0xff]
    %v391 = vld [vmem:[#allocation9 + $0x290] sm:$0xff]
    %v392 = vld [vmem:[#allocation9 + $0x298] sm:$0xff]
    %v393 = vld [vmem:[#allocation9 + $0x2a0] sm:$0xff]
    %v394 = vld [vmem:[#allocation9 + $0x2a8] sm:$0xff]
    %v395 = vld [vmem:[#allocation9 + $0x2b0] sm:$0xff]
    %v396 = vld [vmem:[#allocation9 + $0x2b8] sm:$0xff]
    %v397 = vld [vmem:[#allocation9 + $0x2c0] sm:$0xff]
    %v398 = vld [vmem:[#allocation9 + $0x2c8] sm:$0xff]
    %v399 = vld [vmem:[#allocation9 + $0x2d0] sm:$0xff]
    %v400 = vld [vmem:[#allocation9 + $0x2d8] sm:$0xff]
    %v401 = vld [vmem:[#allocation9 + $0x2e0] sm:$0xff]
    %v402 = vld [vmem:[#allocation9 + $0x2e8] sm:$0xff]
    %v403 = vld [vmem:[#allocation9 + $0x2f0] sm:$0xff]
    %v404 = vld [vmem:[#allocation9 + $0x2f8] sm:$0xff]
    %v405 = vld [vmem:[#allocation9 + $0x300] sm:$0xff]
    %v406 = vld [vmem:[#allocation9 + $0x308] sm:$0xff]
    %v407 = vld [vmem:[#allocation9 + $0x310] sm:$0xff]
    %v408 = vld [vmem:[#allocation9 + $0x318] sm:$0xff]
    %v409 = vld [vmem:[#allocation9 + $0x320] sm:$0xff]
    %v410 = vld [vmem:[#allocation9 + $0x328] sm:$0xff]
    %v411 = vld [vmem:[#allocation9 + $0x330] sm:$0xff]
    %v412 = vld [vmem:[#allocation9 + $0x338] sm:$0xff]
    %v413 = vld [vmem:[#allocation9 + $0x340] sm:$0xff]
    %v414 = vld [vmem:[#allocation9 + $0x348] sm:$0xff]
    %v415 = vld [vmem:[#allocation9 + $0x350] sm:$0xff]
    %v416 = vld [vmem:[#allocation9 + $0x358] sm:$0xff]
    %v417 = vld [vmem:[#allocation9 + $0x360] sm:$0xff]
    %v418 = vld [vmem:[#allocation9 + $0x368] sm:$0xff]
    %v419 = vld [vmem:[#allocation9 + $0x370] sm:$0xff]
    %v420 = vld [vmem:[#allocation9 + $0x378] sm:$0xff]
    %v421 = vld [vmem:[#allocation9 + $0x380] sm:$0xff]
    %v422 = vld [vmem:[#allocation9 + $0x388] sm:$0xff]
    %v423 = vld [vmem:[#allocation9 + $0x390] sm:$0xff]
    %v424 = vld [vmem:[#allocation9 + $0x398] sm:$0xff]
    %v425 = vld [vmem:[#allocation9 + $0x3a0] sm:$0xff]
    %v426 = vld [vmem:[#allocation9 + $0x3a8] sm:$0xff]
    %v427 = vld [vmem:[#allocation9 + $0x3b0] sm:$0xff]
    %v428 = vld [vmem:[#allocation9 + $0x3b8] sm:$0xff]
    %v429 = vld [vmem:[#allocation9 + $0x3c0] sm:$0xff]
    %v430 = vld [vmem:[#allocation9 + $0x3c8] sm:$0xff]
    %v431 = vld [vmem:[#allocation9 + $0x3d0] sm:$0xff]
    %v432 = vld [vmem:[#allocation9 + $0x3d8] sm:$0xff]
    %v433 = vld [vmem:[#allocation9 + $0x3e0] sm:$0xff]
    %v434 = vld [vmem:[#allocation9 + $0x3e8] sm:$0xff]
    %v435 = vld [vmem:[#allocation9 + $0x3f0] sm:$0xff]
    %v436 = vld [vmem:[#allocation9 + $0x3f8] sm:$0xff]
    %v437 = vld [vmem:[#allocation9 + $0x400] sm:$0xff]
    %v438 = vld [vmem:[#allocation9 + $0x408] sm:$0xff]
    %v439 = vld [vmem:[#allocation9 + $0x410] sm:$0xff]
    %v440 = vld [vmem:[#allocation9 + $0x418] sm:$0xff]
    %v441 = vld [vmem:[#allocation9 + $0x420] sm:$0xff]
    %v442 = vld [vmem:[#allocation9 + $0x428] sm:$0xff]
    %v443 = vld [vmem:[#allocation9 + $0x430] sm:$0xff]
    %v444 = vld [vmem:[#allocation9 + $0x438] sm:$0xff]
    %v445 = vld [vmem:[#allocation9 + $0x440] sm:$0xff]
    %v446 = vld [vmem:[#allocation9 + $0x448] sm:$0xff]
    %v447 = vld [vmem:[#allocation9 + $0x450] sm:$0xff]
    %v448 = vld [vmem:[#allocation9 + $0x458] sm:$0xff]
    %v449 = vld [vmem:[#allocation9 + $0x460] sm:$0xff]
    %v450 = vld [vmem:[#allocation9 + $0x468] sm:$0xff]
    %v451 = vld [vmem:[#allocation9 + $0x470] sm:$0xff]
    %v452 = vld [vmem:[#allocation9 + $0x478] sm:$0xff]
    %v453 = vld [vmem:[#allocation9 + $0x480] sm:$0xff]
    %v454 = vld [vmem:[#allocation9 + $0x488] sm:$0xff]
    %v455 = vld [vmem:[#allocation9 + $0x490] sm:$0xff]
    %v456 = vld [vmem:[#allocation9 + $0x498] sm:$0xff]
    %v457 = vld [vmem:[#allocation9 + $0x4a0] sm:$0xff]
    %v458 = vld [vmem:[#allocation9 + $0x4a8] sm:$0xff]
    %v459 = vld [vmem:[#allocation9 + $0x4b0] sm:$0xff]
    %v460 = vld [vmem:[#allocation9 + $0x4b8] sm:$0xff]
    %v461 = vld [vmem:[#allocation9 + $0x4c0] sm:$0xff]
    %v462 = vld [vmem:[#allocation9 + $0x4c8] sm:$0xff]
    %v463 = vld [vmem:[#allocation9 + $0x4d0] sm:$0xff]
    %v464 = vld [vmem:[#allocation9 + $0x4d8] sm:$0xff]
    %v465 = vld [vmem:[#allocation9 + $0x4e0] sm:$0xff]
    %v466 = vld [vmem:[#allocation9 + $0x4e8] sm:$0xff]
    %v467 = vld [vmem:[#allocation9 + $0x4f0] sm:$0xff]
    %v468 = vld [vmem:[#allocation9 + $0x4f8] sm:$0xff]
    %v469 = vld [vmem:[#allocation9 + $0x500] sm:$0xff]
    %v470 = vld [vmem:[#allocation9 + $0x508] sm:$0xff]
    %v471 = vld [vmem:[#allocation9 + $0x510] sm:$0xff]
    %v472 = vld [vmem:[#allocation9 + $0x518] sm:$0xff]
    %v473 = vld [vmem:[#allocation9 + $0x520] sm:$0xff]
    %v474 = vld [vmem:[#allocation9 + $0x528] sm:$0xff]
    %v475 = vld [vmem:[#allocation9 + $0x530] sm:$0xff]
    %v476 = vld [vmem:[#allocation9 + $0x538] sm:$0xff]
    %v477 = vld [vmem:[#allocation9 + $0x540] sm:$0xff]
    %v478 = vld [vmem:[#allocation9 + $0x548] sm:$0xff]
    %v479 = vld [vmem:[#allocation9 + $0x550] sm:$0xff]
    %v480 = vld [vmem:[#allocation9 + $0x558] sm:$0xff]
    %v481 = vld [vmem:[#allocation9 + $0x560] sm:$0xff]
    %v482 = vld [vmem:[#allocation9 + $0x568] sm:$0xff]
    %v483 = vld [vmem:[#allocation9 + $0x570] sm:$0xff]
    %v484 = vld [vmem:[#allocation9 + $0x578] sm:$0xff]
    %v485 = vld [vmem:[#allocation9 + $0x580] sm:$0xff]
    %v486 = vld [vmem:[#allocation9 + $0x588] sm:$0xff]
    %v487 = vld [vmem:[#allocation9 + $0x590] sm:$0xff]
    %v488 = vld [vmem:[#allocation9 + $0x598] sm:$0xff]
    %v489 = vld [vmem:[#allocation9 + $0x5a0] sm:$0xff]
    %v490 = vld [vmem:[#allocation9 + $0x5a8] sm:$0xff]
    %v491 = vld [vmem:[#allocation9 + $0x5b0] sm:$0xff]
    %v492 = vld [vmem:[#allocation9 + $0x5b8] sm:$0xff]
    %v493 = vld [vmem:[#allocation9 + $0x5c0] sm:$0xff]
    %v494 = vld [vmem:[#allocation9 + $0x5c8] sm:$0xff]
    %v495 = vld [vmem:[#allocation9 + $0x5d0] sm:$0xff]
    %v496 = vld [vmem:[#allocation9 + $0x5d8] sm:$0xff]
    %v497 = vld [vmem:[#allocation9 + $0x5e0] sm:$0xff]
    %v498 = vld [vmem:[#allocation9 + $0x5e8] sm:$0xff]
    %v499 = vld [vmem:[#allocation9 + $0x5f0] sm:$0xff]
    %v500 = vld [vmem:[#allocation9 + $0x5f8] sm:$0xff]
    %v501 = vld [vmem:[#allocation9 + $0x600] sm:$0xff]
    %v502 = vld [vmem:[#allocation9 + $0x608] sm:$0xff]
    %v503 = vld [vmem:[#allocation9 + $0x610] sm:$0xff]
    %v504 = vld [vmem:[#allocation9 + $0x618] sm:$0xff]
    %v505 = vld [vmem:[#allocation9 + $0x620] sm:$0xff]
    %v506 = vld [vmem:[#allocation9 + $0x628] sm:$0xff]
    %v507 = vld [vmem:[#allocation9 + $0x630] sm:$0xff]
    %v508 = vld [vmem:[#allocation9 + $0x638] sm:$0xff]
    %v509 = vld [vmem:[#allocation9 + $0x640] sm:$0xff]
    %v510 = vld [vmem:[#allocation9 + $0x648] sm:$0xff]
    %v511 = vld [vmem:[#allocation9 + $0x650] sm:$0xff]
    %v512 = vld [vmem:[#allocation9 + $0x658] sm:$0xff]
    %v513 = vld [vmem:[#allocation9 + $0x660] sm:$0xff]
    %v514 = vld [vmem:[#allocation9 + $0x668] sm:$0xff]
    %v515 = vld [vmem:[#allocation9 + $0x670] sm:$0xff]
    %v516 = vld [vmem:[#allocation9 + $0x678] sm:$0xff]
    %v517 = vld [vmem:[#allocation9 + $0x680] sm:$0xff]
    %v518 = vld [vmem:[#allocation9 + $0x688] sm:$0xff]
    %v519 = vld [vmem:[#allocation9 + $0x690] sm:$0xff]
    %v520 = vld [vmem:[#allocation9 + $0x698] sm:$0xff]
    %v521 = vld [vmem:[#allocation9 + $0x6a0] sm:$0xff]
    %v522 = vld [vmem:[#allocation9 + $0x6a8] sm:$0xff]
    %v523 = vld [vmem:[#allocation9 + $0x6b0] sm:$0xff]
    %v524 = vld [vmem:[#allocation9 + $0x6b8] sm:$0xff]
    %v525 = vld [vmem:[#allocation9 + $0x6c0] sm:$0xff]
    %v526 = vld [vmem:[#allocation9 + $0x6c8] sm:$0xff]
    %v527 = vld [vmem:[#allocation9 + $0x6d0] sm:$0xff]
    %v528 = vld [vmem:[#allocation9 + $0x6d8] sm:$0xff]
    %v529 = vld [vmem:[#allocation9 + $0x6e0] sm:$0xff]
    %v530 = vld [vmem:[#allocation9 + $0x6e8] sm:$0xff]
    %v531 = vld [vmem:[#allocation9 + $0x6f0] sm:$0xff]
    %v532 = vld [vmem:[#allocation9 + $0x6f8] sm:$0xff]
    %v533 = vld [vmem:[#allocation9 + $0x700] sm:$0xff]
    %v534 = vld [vmem:[#allocation9 + $0x708] sm:$0xff]
    %v535 = vld [vmem:[#allocation9 + $0x710] sm:$0xff]
    %v536 = vld [vmem:[#allocation9 + $0x718] sm:$0xff]
    %v537 = vld [vmem:[#allocation9 + $0x720] sm:$0xff]
    %v538 = vld [vmem:[#allocation9 + $0x728] sm:$0xff]
    %v539 = vld [vmem:[#allocation9 + $0x730] sm:$0xff]
    %v540 = vld [vmem:[#allocation9 + $0x738] sm:$0xff]
    %v541 = vld [vmem:[#allocation9 + $0x740] sm:$0xff]
    %v542 = vld [vmem:[#allocation9 + $0x748] sm:$0xff]
    %v543 = vld [vmem:[#allocation9 + $0x750] sm:$0xff]
    %v544 = vld [vmem:[#allocation9 + $0x758] sm:$0xff]
    %v545 = vld [vmem:[#allocation9 + $0x760] sm:$0xff]
    %v546 = vld [vmem:[#allocation9 + $0x768] sm:$0xff]
    %v547 = vld [vmem:[#allocation9 + $0x770] sm:$0xff]
    %v548 = vld [vmem:[#allocation9 + $0x778] sm:$0xff]
    %v549 = vld [vmem:[#allocation9 + $0x780] sm:$0xff]
    %v550 = vld [vmem:[#allocation9 + $0x788] sm:$0xff]
    %v551 = vld [vmem:[#allocation9 + $0x790] sm:$0xff]
    %v552 = vld [vmem:[#allocation9 + $0x798] sm:$0xff]
    %v553 = vld [vmem:[#allocation9 + $0x7a0] sm:$0xff]
    %v554 = vld [vmem:[#allocation9 + $0x7a8] sm:$0xff]
    %v555 = vld [vmem:[#allocation9 + $0x7b0] sm:$0xff]
    %v556 = vld [vmem:[#allocation9 + $0x7b8] sm:$0xff]
    %v557 = vld [vmem:[#allocation9 + $0x7c0] sm:$0xff]
    %v558 = vld [vmem:[#allocation9 + $0x7c8] sm:$0xff]
    %v559 = vld [vmem:[#allocation9 + $0x7d0] sm:$0xff]
    %v560 = vld [vmem:[#allocation9 + $0x7d8] sm:$0xff]
    %v561 = vld [vmem:[#allocation9 + $0x7e0] sm:$0xff]
    %v562 = vld [vmem:[#allocation9 + $0x7e8] sm:$0xff]
    %v563 = vld [vmem:[#allocation9 + $0x7f0] sm:$0xff]
    %v564 = vld [vmem:[#allocation9 + $0x7f8] sm:$0xff]
    %v565 = vld [vmem:[#allocation9 + $0x800] sm:$0xff]
    %v566 = vld [vmem:[#allocation9 + $0x808] sm:$0xff]
    %v567 = vld [vmem:[#allocation9 + $0x810] sm:$0xff]
    %v568 = vld [vmem:[#allocation9 + $0x818] sm:$0xff]
    %v569 = vld [vmem:[#allocation9 + $0x820] sm:$0xff]
    %v570 = vld [vmem:[#allocation9 + $0x828] sm:$0xff]
    %v571 = vld [vmem:[#allocation9 + $0x830] sm:$0xff]
    %v572 = vld [vmem:[#allocation9 + $0x838] sm:$0xff]
    %v573 = vld [vmem:[#allocation9 + $0x840] sm:$0xff]
    %v574 = vld [vmem:[#allocation9 + $0x848] sm:$0xff]
    %v575 = vld [vmem:[#allocation9 + $0x850] sm:$0xff]
    %v576 = vld [vmem:[#allocation9 + $0x858] sm:$0xff]
    %v577 = vld [vmem:[#allocation9 + $0x860] sm:$0xff]
    %v578 = vld [vmem:[#allocation9 + $0x868] sm:$0xff]
    %v579 = vld [vmem:[#allocation9 + $0x870] sm:$0xff]
    %v580 = vld [vmem:[#allocation9 + $0x878] sm:$0xff]
    %v581 = vld [vmem:[#allocation9 + $0x880] sm:$0xff]
    %v582 = vld [vmem:[#allocation9 + $0x888] sm:$0xff]
    %v583 = vld [vmem:[#allocation9 + $0x890] sm:$0xff]
    %v584 = vld [vmem:[#allocation9 + $0x898] sm:$0xff]
    %v585 = vld [vmem:[#allocation9 + $0x8a0] sm:$0xff]
    %v586 = vld [vmem:[#allocation9 + $0x8a8] sm:$0xff]
    %v587 = vld [vmem:[#allocation9 + $0x8b0] sm:$0xff]
    %v588 = vld [vmem:[#allocation9 + $0x8b8] sm:$0xff]
    %v589 = vld [vmem:[#allocation9 + $0x8c0] sm:$0xff]
    %v590 = vld [vmem:[#allocation9 + $0x8c8] sm:$0xff]
    %v591 = vld [vmem:[#allocation9 + $0x8d0] sm:$0xff]
    %v592 = vld [vmem:[#allocation9 + $0x8d8] sm:$0xff]
    %v593 = vld [vmem:[#allocation9 + $0x8e0] sm:$0xff]
    %v594 = vld [vmem:[#allocation9 + $0x8e8] sm:$0xff]
    %v595 = vld [vmem:[#allocation9 + $0x8f0] sm:$0xff]
    %v596 = vld [vmem:[#allocation9 + $0x8f8] sm:$0xff]
    %v597 = vld [vmem:[#allocation9 + $0x900] sm:$0xff]
    %v598 = vld [vmem:[#allocation9 + $0x908] sm:$0xff]
    %v599 = vld [vmem:[#allocation9 + $0x910] sm:$0xff]
    %v600 = vld [vmem:[#allocation9 + $0x918] sm:$0xff]
    %v601 = vld [vmem:[#allocation9 + $0x920] sm:$0xff]
    %v602 = vld [vmem:[#allocation9 + $0x928] sm:$0xff]
    %v603 = vld [vmem:[#allocation9 + $0x930] sm:$0xff]
    %v604 = vld [vmem:[#allocation9 + $0x938] sm:$0xff]
    %v605 = vld [vmem:[#allocation9 + $0x940] sm:$0xff]
    %v606 = vld [vmem:[#allocation9 + $0x948] sm:$0xff]
    %v607 = vld [vmem:[#allocation9 + $0x950] sm:$0xff]
    %v608 = vld [vmem:[#allocation9 + $0x958] sm:$0xff]
    %v609 = vld [vmem:[#allocation9 + $0x960] sm:$0xff]
    %v610 = vld [vmem:[#allocation9 + $0x968] sm:$0xff]
    %v611 = vld [vmem:[#allocation9 + $0x970] sm:$0xff]
    %v612 = vld [vmem:[#allocation9 + $0x978] sm:$0xff]
    %v613 = vld [vmem:[#allocation9 + $0x980] sm:$0xff]
    %v614 = vld [vmem:[#allocation9 + $0x988] sm:$0xff]
    %v615 = vld [vmem:[#allocation9 + $0x990] sm:$0xff]
    %v616 = vld [vmem:[#allocation9 + $0x998] sm:$0xff]
    %v617 = vld [vmem:[#allocation9 + $0x9a0] sm:$0xff]
    %v618 = vld [vmem:[#allocation9 + $0x9a8] sm:$0xff]
    %v619 = vld [vmem:[#allocation9 + $0x9b0] sm:$0xff]
    %v620 = vld [vmem:[#allocation9 + $0x9b8] sm:$0xff]
    %v621 = vld [vmem:[#allocation9 + $0x9c0] sm:$0xff]
    %v622 = vld [vmem:[#allocation9 + $0x9c8] sm:$0xff]
    %v623 = vld [vmem:[#allocation9 + $0x9d0] sm:$0xff]
    %v624 = vld [vmem:[#allocation9 + $0x9d8] sm:$0xff]
    %v625 = vld [vmem:[#allocation9 + $0x9e0] sm:$0xff]
    %v626 = vld [vmem:[#allocation9 + $0x9e8] sm:$0xff]
    %v627 = vld [vmem:[#allocation9 + $0x9f0] sm:$0xff]
    %v628 = vld [vmem:[#allocation9 + $0x9f8] sm:$0xff]
    %v629 = vld [vmem:[#allocation9 + $0xa00] sm:$0xff]
    %v630 = vld [vmem:[#allocation9 + $0xa08] sm:$0xff]
    %v631 = vld [vmem:[#allocation9 + $0xa10] sm:$0xff]
    %v632 = vld [vmem:[#allocation9 + $0xa18] sm:$0xff]
    %v633 = vld [vmem:[#allocation9 + $0xa20] sm:$0xff]
    %v634 = vld [vmem:[#allocation9 + $0xa28] sm:$0xff]
    %v635 = vld [vmem:[#allocation9 + $0xa30] sm:$0xff]
    %v636 = vld [vmem:[#allocation9 + $0xa38] sm:$0xff]
    %v637 = vld [vmem:[#allocation9 + $0xa40] sm:$0xff]
    %v638 = vld [vmem:[#allocation9 + $0xa48] sm:$0xff]
    %v639 = vld [vmem:[#allocation9 + $0xa50] sm:$0xff]
    %v640 = vld [vmem:[#allocation9 + $0xa58] sm:$0xff]
    %v641 = vld [vmem:[#allocation9 + $0xa60] sm:$0xff]
    %v642 = vld [vmem:[#allocation9 + $0xa68] sm:$0xff]
    %v643 = vld [vmem:[#allocation9 + $0xa70] sm:$0xff]
    %v644 = vld [vmem:[#allocation9 + $0xa78] sm:$0xff]
    %v645 = vld [vmem:[#allocation9 + $0xa80] sm:$0xff]
    %v646 = vld [vmem:[#allocation9 + $0xa88] sm:$0xff]
    %v647 = vld [vmem:[#allocation9 + $0xa90] sm:$0xff]
    %v648 = vld [vmem:[#allocation9 + $0xa98] sm:$0xff]
    %v649 = vld [vmem:[#allocation9 + $0xaa0] sm:$0xff]
    %v650 = vld [vmem:[#allocation9 + $0xaa8] sm:$0xff]
    %v651 = vld [vmem:[#allocation9 + $0xab0] sm:$0xff]
    %v652 = vld [vmem:[#allocation9 + $0xab8] sm:$0xff]
    %v653 = vld [vmem:[#allocation9 + $0xac0] sm:$0xff]
    %v654 = vld [vmem:[#allocation9 + $0xac8] sm:$0xff]
    %v655 = vld [vmem:[#allocation9 + $0xad0] sm:$0xff]
    %v656 = vld [vmem:[#allocation9 + $0xad8] sm:$0xff]
    %v657 = vld [vmem:[#allocation9 + $0xae0] sm:$0xff]
    %v658 = vld [vmem:[#allocation9 + $0xae8] sm:$0xff]
    %v659 = vld [vmem:[#allocation9 + $0xaf0] sm:$0xff]
    %v660 = vld [vmem:[#allocation9 + $0xaf8] sm:$0xff]
    %v661 = vld [vmem:[#allocation9 + $0xb00] sm:$0xff]
    %v662 = vld [vmem:[#allocation9 + $0xb08] sm:$0xff]
    %v663 = vld [vmem:[#allocation9 + $0xb10] sm:$0xff]
    %v664 = vld [vmem:[#allocation9 + $0xb18] sm:$0xff]
    %v665 = vld [vmem:[#allocation9 + $0xb20] sm:$0xff]
    %v666 = vld [vmem:[#allocation9 + $0xb28] sm:$0xff]
    %v667 = vld [vmem:[#allocation9 + $0xb30] sm:$0xff]
    %v668 = vld [vmem:[#allocation9 + $0xb38] sm:$0xff]
    %v669 = vld [vmem:[#allocation9 + $0xb40] sm:$0xff]
    %v670 = vld [vmem:[#allocation9 + $0xb48] sm:$0xff]
    %v671 = vld [vmem:[#allocation9 + $0xb50] sm:$0xff]
    %v672 = vld [vmem:[#allocation9 + $0xb58] sm:$0xff]
    %v673 = vld [vmem:[#allocation9 + $0xb60] sm:$0xff]
    %v674 = vld [vmem:[#allocation9 + $0xb68] sm:$0xff]
    %v675 = vld [vmem:[#allocation9 + $0xb70] sm:$0xff]
    %v676 = vld [vmem:[#allocation9 + $0xb78] sm:$0xff]
    %v677 = vld [vmem:[#allocation9 + $0xb80] sm:$0xff]
    %v678 = vld [vmem:[#allocation9 + $0xb88] sm:$0xff]
    %v679 = vld [vmem:[#allocation9 + $0xb90] sm:$0xff]
    %v680 = vld [vmem:[#allocation9 + $0xb98] sm:$0xff]
    %v681 = vld [vmem:[#allocation9 + $0xba0] sm:$0xff]
    %v682 = vld [vmem:[#allocation9 + $0xba8] sm:$0xff]
    %v683 = vld [vmem:[#allocation9 + $0xbb0] sm:$0xff]
    %v684 = vld [vmem:[#allocation9 + $0xbb8] sm:$0xff]
    %v685 = vld [vmem:[#allocation9 + $0xbc0] sm:$0xff]
    %v686 = vld [vmem:[#allocation9 + $0xbc8] sm:$0xff]
    %v687 = vld [vmem:[#allocation9 + $0xbd0] sm:$0xff]
    %v688 = vld [vmem:[#allocation9 + $0xbd8] sm:$0xff]
    %v689 = vld [vmem:[#allocation9 + $0xbe0] sm:$0xff]
    %v690 = vld [vmem:[#allocation9 + $0xbe8] sm:$0xff]
    %v691 = vld [vmem:[#allocation9 + $0xbf0] sm:$0xff]
    %v692 = vld [vmem:[#allocation9 + $0xbf8] sm:$0xff]
    %v693 = vld [vmem:[#allocation9 + $0xc00] sm:$0xff]
    %v694 = vld [vmem:[#allocation9 + $0xc08] sm:$0xff]
    %v695 = vld [vmem:[#allocation9 + $0xc10] sm:$0xff]
    %v696 = vld [vmem:[#allocation9 + $0xc18] sm:$0xff]
    %v697 = vld [vmem:[#allocation9 + $0xc20] sm:$0xff]
    %v698 = vld [vmem:[#allocation9 + $0xc28] sm:$0xff]
    %v699 = vld [vmem:[#allocation9 + $0xc30] sm:$0xff]
    %v700 = vld [vmem:[#allocation9 + $0xc38] sm:$0xff]
    %v701 = vld [vmem:[#allocation9 + $0xc40] sm:$0xff]
    %v702 = vld [vmem:[#allocation9 + $0xc48] sm:$0xff]
    %v703 = vld [vmem:[#allocation9 + $0xc50] sm:$0xff]
    %v704 = vld [vmem:[#allocation9 + $0xc58] sm:$0xff]
    %v705 = vld [vmem:[#allocation9 + $0xc60] sm:$0xff]
    %v706 = vld [vmem:[#allocation9 + $0xc68] sm:$0xff]
    %v707 = vld [vmem:[#allocation9 + $0xc70] sm:$0xff]
    %v708 = vld [vmem:[#allocation9 + $0xc78] sm:$0xff]
    %v709 = vld [vmem:[#allocation9 + $0xc80] sm:$0xff]
    %v710 = vld [vmem:[#allocation9 + $0xc88] sm:$0xff]
    %v711 = vld [vmem:[#allocation9 + $0xc90] sm:$0xff]
    %v712 = vld [vmem:[#allocation9 + $0xc98] sm:$0xff]
    %v713 = vld [vmem:[#allocation9 + $0xca0] sm:$0xff]
    %v714 = vld [vmem:[#allocation9 + $0xca8] sm:$0xff]
    %v715 = vld [vmem:[#allocation9 + $0xcb0] sm:$0xff]
    %v716 = vld [vmem:[#allocation9 + $0xcb8] sm:$0xff]
    %v717 = vld [vmem:[#allocation9 + $0xcc0] sm:$0xff]
    %v718 = vld [vmem:[#allocation9 + $0xcc8] sm:$0xff]
    %v719 = vld [vmem:[#allocation9 + $0xcd0] sm:$0xff]
    %v720 = vld [vmem:[#allocation9 + $0xcd8] sm:$0xff]
    %v721 = vld [vmem:[#allocation9 + $0xce0] sm:$0xff]
    %v722 = vld [vmem:[#allocation9 + $0xce8] sm:$0xff]
    %v723 = vld [vmem:[#allocation9 + $0xcf0] sm:$0xff]
    %v724 = vld [vmem:[#allocation9 + $0xcf8] sm:$0xff]
    %v725 = vld [vmem:[#allocation9 + $0xd00] sm:$0xff]
    %v726 = vld [vmem:[#allocation9 + $0xd08] sm:$0xff]
    %v727 = vld [vmem:[#allocation9 + $0xd10] sm:$0xff]
    %v728 = vld [vmem:[#allocation9 + $0xd18] sm:$0xff]
    %v729 = vld [vmem:[#allocation9 + $0xd20] sm:$0xff]
    %v730 = vld [vmem:[#allocation9 + $0xd28] sm:$0xff]
    %v731 = vld [vmem:[#allocation9 + $0xd30] sm:$0xff]
    %v732 = vld [vmem:[#allocation9 + $0xd38] sm:$0xff]
    %v733 = vld [vmem:[#allocation9 + $0xd40] sm:$0xff]
    %v734 = vld [vmem:[#allocation9 + $0xd48] sm:$0xff]
    %v735 = vld [vmem:[#allocation9 + $0xd50] sm:$0xff]
    %v736 = vld [vmem:[#allocation9 + $0xd58] sm:$0xff]
    %v737 = vld [vmem:[#allocation9 + $0xd60] sm:$0xff]
    %v738 = vld [vmem:[#allocation9 + $0xd68] sm:$0xff]
    %v739 = vld [vmem:[#allocation9 + $0xd70] sm:$0xff]
    %v740 = vld [vmem:[#allocation9 + $0xd78] sm:$0xff]
    %v741 = vld [vmem:[#allocation9 + $0xd80] sm:$0xff]
    %v742 = vld [vmem:[#allocation9 + $0xd88] sm:$0xff]
    %v743 = vld [vmem:[#allocation9 + $0xd90] sm:$0xff]
    %v744 = vld [vmem:[#allocation9 + $0xd98] sm:$0xff]
    %v745 = vld [vmem:[#allocation9 + $0xda0] sm:$0xff]
    %v746 = vld [vmem:[#allocation9 + $0xda8] sm:$0xff]
    %v747 = vld [vmem:[#allocation9 + $0xdb0] sm:$0xff]
    %v748 = vld [vmem:[#allocation9 + $0xdb8] sm:$0xff]
    %v749 = vld [vmem:[#allocation9 + $0xdc0] sm:$0xff]
    %v750 = vld [vmem:[#allocation9 + $0xdc8] sm:$0xff]
    %v751 = vld [vmem:[#allocation9 + $0xdd0] sm:$0xff]
    %v752 = vld [vmem:[#allocation9 + $0xdd8] sm:$0xff]
    %v753 = vld [vmem:[#allocation9 + $0xde0] sm:$0xff]
    %v754 = vld [vmem:[#allocation9 + $0xde8] sm:$0xff]
    %v755 = vld [vmem:[#allocation9 + $0xdf0] sm:$0xff]
    %v756 = vld [vmem:[#allocation9 + $0xdf8] sm:$0xff]
    %v757 = vld [vmem:[#allocation11] sm:$0xff]
    %v759 = vperm.slane %v757, 0
    %v760 = vperm.slane %v757, 1
    %v761 = vperm.slane %v757, 2
    %v762 = vperm.slane %v757, 3
    %v763 = vperm.slane %v757, 4
    %v764 = vperm.slane %v757, 5
    %v765 = vperm.slane %v757, 6
    %v766 = vperm.slane %v757, 7
    %vm775 = vcmask 523264
    %v777 = vsel %vm775, %v308, 0
    %779 = vmatpush.msra.mxu0 %v429
    %780 = vmatpush.msra.mxu0 %v421
    %781 = vmatpush.msra.mxu0 %v413
    %782 = vmatpush.msra.mxu0 %v405
    %783 = vmatpush.msra.mxu0 %v397
    %784 = vmatpush.msra.mxu0 %v389
    %785 = vmatpush.msra.mxu0 %v381
    %786 = vmatpush.msra.mxu0 %v373
    %787 = vmatpush.msra.mxu0 %v365
    %788 = vmatpush.msra.mxu0 %v357
    %789 = vmatpush.msra.mxu0 %v349
    %790 = vmatpush.msra.mxu0 %v341
    %791 = vmatpush.msra.mxu0 %v333
    %792 = vmatpush.msra.mxu0 %v325
    %793 = vmatpush.msra.mxu0 %v317
    %794 = vmatpush.msra.mxu0 %v309
    %795 = vmatmul.f32.gmra.mxu0 %v305
    %v796 = vpop.f32.mrf.mxu0
    %v797 = vadd.f32 %v759, %v796
    %798 = vdwg.mxu0
    %799 = vmatpush.msra.mxu0 %v557
    %800 = vmatpush.msra.mxu0 %v549
    %801 = vmatpush.msra.mxu0 %v541
    %802 = vmatpush.msra.mxu0 %v533
    %803 = vmatpush.msra.mxu0 %v525
    %804 = vmatpush.msra.mxu0 %v517
    %805 = vmatpush.msra.mxu0 %v509
    %806 = vmatpush.msra.mxu0 %v501
    %807 = vmatpush.msra.mxu0 %v493
    %808 = vmatpush.msra.mxu0 %v485
    %809 = vmatpush.msra.mxu0 %v477
    %810 = vmatpush.msra.mxu0 %v469
    %811 = vmatpush.msra.mxu0 %v461
    %812 = vmatpush.msra.mxu0 %v453
    %813 = vmatpush.msra.mxu0 %v445
    %814 = vmatpush.msra.mxu0 %v437
    %815 = vmatmul.f32.gmra.mxu0 %v306
    %v816 = vpop.f32.mrf.mxu0
    %v817 = vadd.f32 %v797, %v816
    %818 = vdwg.mxu0
    %819 = vmatpush.msra.mxu0 %v685
    %820 = vmatpush.msra.mxu0 %v677
    %821 = vmatpush.msra.mxu0 %v669
    %822 = vmatpush.msra.mxu0 %v661
    %823 = vmatpush.msra.mxu0 %v653
    %824 = vmatpush.msra.mxu0 %v645
    %825 = vmatpush.msra.mxu0 %v637
    %826 = vmatpush.msra.mxu0 %v629
    %827 = vmatpush.msra.mxu0 %v621
    %828 = vmatpush.msra.mxu0 %v613
    %829 = vmatpush.msra.mxu0 %v605
    %830 = vmatpush.msra.mxu0 %v597
    %831 = vmatpush.msra.mxu0 %v589
    %832 = vmatpush.msra.mxu0 %v581
    %833 = vmatpush.msra.mxu0 %v573
    %834 = vmatpush.msra.mxu0 %v565
    %835 = vmatmul.f32.gmra.mxu0 %v307
    %v836 = vpop.f32.mrf.mxu0
    %v837 = vadd.f32 %v817, %v836
    %838 = vdwg.mxu0
    %839 = vmatpush.msra.mxu0 0.0
    %840 = vmatpush.msra.mxu0 0.0
    %841 = vmatpush.msra.mxu0 0.0
    %842 = vmatpush.msra.mxu0 0.0
    %843 = vmatpush.msra.mxu0 0.0
    %844 = vmatpush.msra.mxu0 0.0
    %845 = vmatpush.msra.mxu0 0.0
    %846 = vmatpush.msra.mxu0 0.0
    %847 = vmatpush.msra.mxu0 %v749
    %848 = vmatpush.msra.mxu0 %v741
    %849 = vmatpush.msra.mxu0 %v733
    %850 = vmatpush.msra.mxu0 %v725
    %851 = vmatpush.msra.mxu0 %v717
    %852 = vmatpush.msra.mxu0 %v709
    %853 = vmatpush.msra.mxu0 %v701
    %854 = vmatpush.msra.mxu0 %v693
    %855 = vmatmul.f32.gmra.mxu0 %v777
    %v856 = vpop.f32.mrf.mxu0
    %v857 = vadd.f32 %v837, %v856
    %858 = vdwg.mxu0
    %859 = vmatpush.msra.mxu0 %v430
    %860 = vmatpush.msra.mxu0 %v422
    %861 = vmatpush.msra.mxu0 %v414
    %862 = vmatpush.msra.mxu0 %v406
    %863 = vmatpush.msra.mxu0 %v398
    %864 = vmatpush.msra.mxu0 %v390
    %865 = vmatpush.msra.mxu0 %v382
    %866 = vmatpush.msra.mxu0 %v374
    %867 = vmatpush.msra.mxu0 %v366
    %868 = vmatpush.msra.mxu0 %v358
    %869 = vmatpush.msra.mxu0 %v350
    %870 = vmatpush.msra.mxu0 %v342
    %871 = vmatpush.msra.mxu0 %v334
    %872 = vmatpush.msra.mxu0 %v326
    %873 = vmatpush.msra.mxu0 %v318
    %874 = vmatpush.msra.mxu0 %v310
    %875 = vmatmul.f32.gmra.mxu0 %v305
    %v876 = vpop.f32.mrf.mxu0
    %v877 = vadd.f32 %v760, %v876
    %878 = vdwg.mxu0
    %879 = vmatpush.msra.mxu0 %v558
    %880 = vmatpush.msra.mxu0 %v550
    %881 = vmatpush.msra.mxu0 %v542
    %882 = vmatpush.msra.mxu0 %v534
    %883 = vmatpush.msra.mxu0 %v526
    %884 = vmatpush.msra.mxu0 %v518
    %885 = vmatpush.msra.mxu0 %v510
    %886 = vmatpush.msra.mxu0 %v502
    %887 = vmatpush.msra.mxu0 %v494
    %888 = vmatpush.msra.mxu0 %v486
    %889 = vmatpush.msra.mxu0 %v478
    %890 = vmatpush.msra.mxu0 %v470
    %891 = vmatpush.msra.mxu0 %v462
    %892 = vmatpush.msra.mxu0 %v454
    %893 = vmatpush.msra.mxu0 %v446
    %894 = vmatpush.msra.mxu0 %v438
    %895 = vmatmul.f32.gmra.mxu0 %v306
    %v896 = vpop.f32.mrf.mxu0
    %v897 = vadd.f32 %v877, %v896
    %898 = vdwg.mxu0
    %899 = vmatpush.msra.mxu0 %v686
    %900 = vmatpush.msra.mxu0 %v678
    %901 = vmatpush.msra.mxu0 %v670
    %902 = vmatpush.msra.mxu0 %v662
    %903 = vmatpush.msra.mxu0 %v654
    %904 = vmatpush.msra.mxu0 %v646
    %905 = vmatpush.msra.mxu0 %v638
    %906 = vmatpush.msra.mxu0 %v630
    %907 = vmatpush.msra.mxu0 %v622
    %908 = vmatpush.msra.mxu0 %v614
    %909 = vmatpush.msra.mxu0 %v606
    %910 = vmatpush.msra.mxu0 %v598
    %911 = vmatpush.msra.mxu0 %v590
    %912 = vmatpush.msra.mxu0 %v582
    %913 = vmatpush.msra.mxu0 %v574
    %914 = vmatpush.msra.mxu0 %v566
    %915 = vmatmul.f32.gmra.mxu0 %v307
    %v916 = vpop.f32.mrf.mxu0
    %v917 = vadd.f32 %v897, %v916
    %918 = vdwg.mxu0
    %919 = vmatpush.msra.mxu0 0.0
    %920 = vmatpush.msra.mxu0 0.0
    %921 = vmatpush.msra.mxu0 0.0
    %922 = vmatpush.msra.mxu0 0.0
    %923 = vmatpush.msra.mxu0 0.0
    %924 = vmatpush.msra.mxu0 0.0
    %925 = vmatpush.msra.mxu0 0.0
    %926 = vmatpush.msra.mxu0 0.0
    %927 = vmatpush.msra.mxu0 %v750
    %928 = vmatpush.msra.mxu0 %v742
    %929 = vmatpush.msra.mxu0 %v734
    %930 = vmatpush.msra.mxu0 %v726
    %931 = vmatpush.msra.mxu0 %v718
    %932 = vmatpush.msra.mxu0 %v710
    %933 = vmatpush.msra.mxu0 %v702
    %934 = vmatpush.msra.mxu0 %v694
    %935 = vmatmul.f32.gmra.mxu0 %v777
    %v936 = vpop.f32.mrf.mxu0
    %v937 = vadd.f32 %v917, %v936
    %938 = vdwg.mxu0
    %939 = vmatpush.msra.mxu0 %v431
    %940 = vmatpush.msra.mxu0 %v423
    %941 = vmatpush.msra.mxu0 %v415
    %942 = vmatpush.msra.mxu0 %v407
    %943 = vmatpush.msra.mxu0 %v399
    %944 = vmatpush.msra.mxu0 %v391
    %945 = vmatpush.msra.mxu0 %v383
    %946 = vmatpush.msra.mxu0 %v375
    %947 = vmatpush.msra.mxu0 %v367
    %948 = vmatpush.msra.mxu0 %v359
    %949 = vmatpush.msra.mxu0 %v351
    %950 = vmatpush.msra.mxu0 %v343
    %951 = vmatpush.msra.mxu0 %v335
    %952 = vmatpush.msra.mxu0 %v327
    %953 = vmatpush.msra.mxu0 %v319
    %954 = vmatpush.msra.mxu0 %v311
    %955 = vmatmul.f32.gmra.mxu0 %v305
    %v956 = vpop.f32.mrf.mxu0
    %v957 = vadd.f32 %v761, %v956
    %958 = vdwg.mxu0
    %959 = vmatpush.msra.mxu0 %v559
    %960 = vmatpush.msra.mxu0 %v551
    %961 = vmatpush.msra.mxu0 %v543
    %962 = vmatpush.msra.mxu0 %v535
    %963 = vmatpush.msra.mxu0 %v527
    %964 = vmatpush.msra.mxu0 %v519
    %965 = vmatpush.msra.mxu0 %v511
    %966 = vmatpush.msra.mxu0 %v503
    %967 = vmatpush.msra.mxu0 %v495
    %968 = vmatpush.msra.mxu0 %v487
    %969 = vmatpush.msra.mxu0 %v479
    %970 = vmatpush.msra.mxu0 %v471
    %971 = vmatpush.msra.mxu0 %v463
    %972 = vmatpush.msra.mxu0 %v455
    %973 = vmatpush.msra.mxu0 %v447
    %974 = vmatpush.msra.mxu0 %v439
    %975 = vmatmul.f32.gmra.mxu0 %v306
    %v976 = vpop.f32.mrf.mxu0
    %v977 = vadd.f32 %v957, %v976
    %978 = vdwg.mxu0
    %979 = vmatpush.msra.mxu0 %v687
    %980 = vmatpush.msra.mxu0 %v679
    %981 = vmatpush.msra.mxu0 %v671
    %982 = vmatpush.msra.mxu0 %v663
    %983 = vmatpush.msra.mxu0 %v655
    %984 = vmatpush.msra.mxu0 %v647
    %985 = vmatpush.msra.mxu0 %v639
    %986 = vmatpush.msra.mxu0 %v631
    %987 = vmatpush.msra.mxu0 %v623
    %988 = vmatpush.msra.mxu0 %v615
    %989 = vmatpush.msra.mxu0 %v607
    %990 = vmatpush.msra.mxu0 %v599
    %991 = vmatpush.msra.mxu0 %v591
    %992 = vmatpush.msra.mxu0 %v583
    %993 = vmatpush.msra.mxu0 %v575
    %994 = vmatpush.msra.mxu0 %v567
    %995 = vmatmul.f32.gmra.mxu0 %v307
    %v996 = vpop.f32.mrf.mxu0
    %v997 = vadd.f32 %v977, %v996
    %998 = vdwg.mxu0
    %999 = vmatpush.msra.mxu0 0.0
    %1000 = vmatpush.msra.mxu0 0.0
    %1001 = vmatpush.msra.mxu0 0.0
    %1002 = vmatpush.msra.mxu0 0.0
    %1003 = vmatpush.msra.mxu0 0.0
    %1004 = vmatpush.msra.mxu0 0.0
    %1005 = vmatpush.msra.mxu0 0.0
    %1006 = vmatpush.msra.mxu0 0.0
    %1007 = vmatpush.msra.mxu0 %v751
    %1008 = vmatpush.msra.mxu0 %v743
    %1009 = vmatpush.msra.mxu0 %v735
    %1010 = vmatpush.msra.mxu0 %v727
    %1011 = vmatpush.msra.mxu0 %v719
    %1012 = vmatpush.msra.mxu0 %v711
    %1013 = vmatpush.msra.mxu0 %v703
    %1014 = vmatpush.msra.mxu0 %v695
    %1015 = vmatmul.f32.gmra.mxu0 %v777
    %v1016 = vpop.f32.mrf.mxu0
    %v1017 = vadd.f32 %v997, %v1016
    %1018 = vdwg.mxu0
    %1019 = vmatpush.msra.mxu0 %v432
    %1020 = vmatpush.msra.mxu0 %v424
    %1021 = vmatpush.msra.mxu0 %v416
    %1022 = vmatpush.msra.mxu0 %v408
    %1023 = vmatpush.msra.mxu0 %v400
    %1024 = vmatpush.msra.mxu0 %v392
    %1025 = vmatpush.msra.mxu0 %v384
    %1026 = vmatpush.msra.mxu0 %v376
    %1027 = vmatpush.msra.mxu0 %v368
    %1028 = vmatpush.msra.mxu0 %v360
    %1029 = vmatpush.msra.mxu0 %v352
    %1030 = vmatpush.msra.mxu0 %v344
    %1031 = vmatpush.msra.mxu0 %v336
    %1032 = vmatpush.msra.mxu0 %v328
    %1033 = vmatpush.msra.mxu0 %v320
    %1034 = vmatpush.msra.mxu0 %v312
    %1035 = vmatmul.f32.gmra.mxu0 %v305
    %v1036 = vpop.f32.mrf.mxu0
    %v1037 = vadd.f32 %v762, %v1036
    %1038 = vdwg.mxu0
    %1039 = vmatpush.msra.mxu0 %v560
    %1040 = vmatpush.msra.mxu0 %v552
    %1041 = vmatpush.msra.mxu0 %v544
    %1042 = vmatpush.msra.mxu0 %v536
    %1043 = vmatpush.msra.mxu0 %v528
    %1044 = vmatpush.msra.mxu0 %v520
    %1045 = vmatpush.msra.mxu0 %v512
    %1046 = vmatpush.msra.mxu0 %v504
    %1047 = vmatpush.msra.mxu0 %v496
    %1048 = vmatpush.msra.mxu0 %v488
    %1049 = vmatpush.msra.mxu0 %v480
    %1050 = vmatpush.msra.mxu0 %v472
    %1051 = vmatpush.msra.mxu0 %v464
    %1052 = vmatpush.msra.mxu0 %v456
    %1053 = vmatpush.msra.mxu0 %v448
    %1054 = vmatpush.msra.mxu0 %v440
    %1055 = vmatmul.f32.gmra.mxu0 %v306
    %v1056 = vpop.f32.mrf.mxu0
    %v1057 = vadd.f32 %v1037, %v1056
    %1058 = vdwg.mxu0
    %1059 = vmatpush.msra.mxu0 %v688
    %1060 = vmatpush.msra.mxu0 %v680
    %1061 = vmatpush.msra.mxu0 %v672
    %1062 = vmatpush.msra.mxu0 %v664
    %1063 = vmatpush.msra.mxu0 %v656
    %1064 = vmatpush.msra.mxu0 %v648
    %1065 = vmatpush.msra.mxu0 %v640
    %1066 = vmatpush.msra.mxu0 %v632
    %1067 = vmatpush.msra.mxu0 %v624
    %1068 = vmatpush.msra.mxu0 %v616
    %1069 = vmatpush.msra.mxu0 %v608
    %1070 = vmatpush.msra.mxu0 %v600
    %1071 = vmatpush.msra.mxu0 %v592
    %1072 = vmatpush.msra.mxu0 %v584
    %1073 = vmatpush.msra.mxu0 %v576
    %1074 = vmatpush.msra.mxu0 %v568
    %1075 = vmatmul.f32.gmra.mxu0 %v307
    %v1076 = vpop.f32.mrf.mxu0
    %v1077 = vadd.f32 %v1057, %v1076
    %1078 = vdwg.mxu0
    %1079 = vmatpush.msra.mxu0 0.0
    %1080 = vmatpush.msra.mxu0 0.0
    %1081 = vmatpush.msra.mxu0 0.0
    %1082 = vmatpush.msra.mxu0 0.0
    %1083 = vmatpush.msra.mxu0 0.0
    %1084 = vmatpush.msra.mxu0 0.0
    %1085 = vmatpush.msra.mxu0 0.0
    %1086 = vmatpush.msra.mxu0 0.0
    %1087 = vmatpush.msra.mxu0 %v752
    %1088 = vmatpush.msra.mxu0 %v744
    %1089 = vmatpush.msra.mxu0 %v736
    %1090 = vmatpush.msra.mxu0 %v728
    %1091 = vmatpush.msra.mxu0 %v720
    %1092 = vmatpush.msra.mxu0 %v712
    %1093 = vmatpush.msra.mxu0 %v704
    %1094 = vmatpush.msra.mxu0 %v696
    %1095 = vmatmul.f32.gmra.mxu0 %v777
    %v1096 = vpop.f32.mrf.mxu0
    %v1097 = vadd.f32 %v1077, %v1096
    %1098 = vdwg.mxu0
    %1099 = vmatpush.msra.mxu0 %v433
    %1100 = vmatpush.msra.mxu0 %v425
    %1101 = vmatpush.msra.mxu0 %v417
    %1102 = vmatpush.msra.mxu0 %v409
    %1103 = vmatpush.msra.mxu0 %v401
    %1104 = vmatpush.msra.mxu0 %v393
    %1105 = vmatpush.msra.mxu0 %v385
    %1106 = vmatpush.msra.mxu0 %v377
    %1107 = vmatpush.msra.mxu0 %v369
    %1108 = vmatpush.msra.mxu0 %v361
    %1109 = vmatpush.msra.mxu0 %v353
    %1110 = vmatpush.msra.mxu0 %v345
    %1111 = vmatpush.msra.mxu0 %v337
    %1112 = vmatpush.msra.mxu0 %v329
    %1113 = vmatpush.msra.mxu0 %v321
    %1114 = vmatpush.msra.mxu0 %v313
    %1115 = vmatmul.f32.gmra.mxu0 %v305
    %v1116 = vpop.f32.mrf.mxu0
    %v1117 = vadd.f32 %v763, %v1116
    %1118 = vdwg.mxu0
    %1119 = vmatpush.msra.mxu0 %v561
    %1120 = vmatpush.msra.mxu0 %v553
    %1121 = vmatpush.msra.mxu0 %v545
    %1122 = vmatpush.msra.mxu0 %v537
    %1123 = vmatpush.msra.mxu0 %v529
    %1124 = vmatpush.msra.mxu0 %v521
    %1125 = vmatpush.msra.mxu0 %v513
    %1126 = vmatpush.msra.mxu0 %v505
    %1127 = vmatpush.msra.mxu0 %v497
    %1128 = vmatpush.msra.mxu0 %v489
    %1129 = vmatpush.msra.mxu0 %v481
    %1130 = vmatpush.msra.mxu0 %v473
    %1131 = vmatpush.msra.mxu0 %v465
    %1132 = vmatpush.msra.mxu0 %v457
    %1133 = vmatpush.msra.mxu0 %v449
    %1134 = vmatpush.msra.mxu0 %v441
    %1135 = vmatmul.f32.gmra.mxu0 %v306
    %v1136 = vpop.f32.mrf.mxu0
    %v1137 = vadd.f32 %v1117, %v1136
    %1138 = vdwg.mxu0
    %1139 = vmatpush.msra.mxu0 %v689
    %1140 = vmatpush.msra.mxu0 %v681
    %1141 = vmatpush.msra.mxu0 %v673
    %1142 = vmatpush.msra.mxu0 %v665
    %1143 = vmatpush.msra.mxu0 %v657
    %1144 = vmatpush.msra.mxu0 %v649
    %1145 = vmatpush.msra.mxu0 %v641
    %1146 = vmatpush.msra.mxu0 %v633
    %1147 = vmatpush.msra.mxu0 %v625
    %1148 = vmatpush.msra.mxu0 %v617
    %1149 = vmatpush.msra.mxu0 %v609
    %1150 = vmatpush.msra.mxu0 %v601
    %1151 = vmatpush.msra.mxu0 %v593
    %1152 = vmatpush.msra.mxu0 %v585
    %1153 = vmatpush.msra.mxu0 %v577
    %1154 = vmatpush.msra.mxu0 %v569
    %1155 = vmatmul.f32.gmra.mxu0 %v307
    %v1156 = vpop.f32.mrf.mxu0
    %v1157 = vadd.f32 %v1137, %v1156
    %1158 = vdwg.mxu0
    %1159 = vmatpush.msra.mxu0 0.0
    %1160 = vmatpush.msra.mxu0 0.0
    %1161 = vmatpush.msra.mxu0 0.0
    %1162 = vmatpush.msra.mxu0 0.0
    %1163 = vmatpush.msra.mxu0 0.0
    %1164 = vmatpush.msra.mxu0 0.0
    %1165 = vmatpush.msra.mxu0 0.0
    %1166 = vmatpush.msra.mxu0 0.0
    %1167 = vmatpush.msra.mxu0 %v753
    %1168 = vmatpush.msra.mxu0 %v745
    %1169 = vmatpush.msra.mxu0 %v737
    %1170 = vmatpush.msra.mxu0 %v729
    %1171 = vmatpush.msra.mxu0 %v721
    %1172 = vmatpush.msra.mxu0 %v713
    %1173 = vmatpush.msra.mxu0 %v705
    %1174 = vmatpush.msra.mxu0 %v697
    %1175 = vmatmul.f32.gmra.mxu0 %v777
    %v1176 = vpop.f32.mrf.mxu0
    %v1177 = vadd.f32 %v1157, %v1176
    %1178 = vdwg.mxu0
    %1179 = vmatpush.msra.mxu0 %v434
    %1180 = vmatpush.msra.mxu0 %v426
    %1181 = vmatpush.msra.mxu0 %v418
    %1182 = vmatpush.msra.mxu0 %v410
    %1183 = vmatpush.msra.mxu0 %v402
    %1184 = vmatpush.msra.mxu0 %v394
    %1185 = vmatpush.msra.mxu0 %v386
    %1186 = vmatpush.msra.mxu0 %v378
    %1187 = vmatpush.msra.mxu0 %v370
    %1188 = vmatpush.msra.mxu0 %v362
    %1189 = vmatpush.msra.mxu0 %v354
    %1190 = vmatpush.msra.mxu0 %v346
    %1191 = vmatpush.msra.mxu0 %v338
    %1192 = vmatpush.msra.mxu0 %v330
    %1193 = vmatpush.msra.mxu0 %v322
    %1194 = vmatpush.msra.mxu0 %v314
    %1195 = vmatmul.f32.gmra.mxu0 %v305
    %v1196 = vpop.f32.mrf.mxu0
    %v1197 = vadd.f32 %v764, %v1196
    %1198 = vdwg.mxu0
    %1199 = vmatpush.msra.mxu0 %v562
    %1200 = vmatpush.msra.mxu0 %v554
    %1201 = vmatpush.msra.mxu0 %v546
    %1202 = vmatpush.msra.mxu0 %v538
    %1203 = vmatpush.msra.mxu0 %v530
    %1204 = vmatpush.msra.mxu0 %v522
    %1205 = vmatpush.msra.mxu0 %v514
    %1206 = vmatpush.msra.mxu0 %v506
    %1207 = vmatpush.msra.mxu0 %v498
    %1208 = vmatpush.msra.mxu0 %v490
    %1209 = vmatpush.msra.mxu0 %v482
    %1210 = vmatpush.msra.mxu0 %v474
    %1211 = vmatpush.msra.mxu0 %v466
    %1212 = vmatpush.msra.mxu0 %v458
    %1213 = vmatpush.msra.mxu0 %v450
    %1214 = vmatpush.msra.mxu0 %v442
    %1215 = vmatmul.f32.gmra.mxu0 %v306
    %v1216 = vpop.f32.mrf.mxu0
    %v1217 = vadd.f32 %v1197, %v1216
    %1218 = vdwg.mxu0
    %1219 = vmatpush.msra.mxu0 %v690
    %1220 = vmatpush.msra.mxu0 %v682
    %1221 = vmatpush.msra.mxu0 %v674
    %1222 = vmatpush.msra.mxu0 %v666
    %1223 = vmatpush.msra.mxu0 %v658
    %1224 = vmatpush.msra.mxu0 %v650
    %1225 = vmatpush.msra.mxu0 %v642
    %1226 = vmatpush.msra.mxu0 %v634
    %1227 = vmatpush.msra.mxu0 %v626
    %1228 = vmatpush.msra.mxu0 %v618
    %1229 = vmatpush.msra.mxu0 %v610
    %1230 = vmatpush.msra.mxu0 %v602
    %1231 = vmatpush.msra.mxu0 %v594
    %1232 = vmatpush.msra.mxu0 %v586
    %1233 = vmatpush.msra.mxu0 %v578
    %1234 = vmatpush.msra.mxu0 %v570
    %1235 = vmatmul.f32.gmra.mxu0 %v307
    %v1236 = vpop.f32.mrf.mxu0
    %v1237 = vadd.f32 %v1217, %v1236
    %1238 = vdwg.mxu0
    %1239 = vmatpush.msra.mxu0 0.0
    %1240 = vmatpush.msra.mxu0 0.0
    %1241 = vmatpush.msra.mxu0 0.0
    %1242 = vmatpush.msra.mxu0 0.0
    %1243 = vmatpush.msra.mxu0 0.0
    %1244 = vmatpush.msra.mxu0 0.0
    %1245 = vmatpush.msra.mxu0 0.0
    %1246 = vmatpush.msra.mxu0 0.0
    %1247 = vmatpush.msra.mxu0 %v754
    %1248 = vmatpush.msra.mxu0 %v746
    %1249 = vmatpush.msra.mxu0 %v738
    %1250 = vmatpush.msra.mxu0 %v730
    %1251 = vmatpush.msra.mxu0 %v722
    %1252 = vmatpush.msra.mxu0 %v714
    %1253 = vmatpush.msra.mxu0 %v706
    %1254 = vmatpush.msra.mxu0 %v698
    %1255 = vmatmul.f32.gmra.mxu0 %v777
    %v1256 = vpop.f32.mrf.mxu0
    %v1257 = vadd.f32 %v1237, %v1256
    %1258 = vdwg.mxu0
    %1259 = vmatpush.msra.mxu0 %v435
    %1260 = vmatpush.msra.mxu0 %v427
    %1261 = vmatpush.msra.mxu0 %v419
    %1262 = vmatpush.msra.mxu0 %v411
    %1263 = vmatpush.msra.mxu0 %v403
    %1264 = vmatpush.msra.mxu0 %v395
    %1265 = vmatpush.msra.mxu0 %v387
    %1266 = vmatpush.msra.mxu0 %v379
    %1267 = vmatpush.msra.mxu0 %v371
    %1268 = vmatpush.msra.mxu0 %v363
    %1269 = vmatpush.msra.mxu0 %v355
    %1270 = vmatpush.msra.mxu0 %v347
    %1271 = vmatpush.msra.mxu0 %v339
    %1272 = vmatpush.msra.mxu0 %v331
    %1273 = vmatpush.msra.mxu0 %v323
    %1274 = vmatpush.msra.mxu0 %v315
    %1275 = vmatmul.f32.gmra.mxu0 %v305
    %v1276 = vpop.f32.mrf.mxu0
    %v1277 = vadd.f32 %v765, %v1276
    %1278 = vdwg.mxu0
    %1279 = vmatpush.msra.mxu0 %v563
    %1280 = vmatpush.msra.mxu0 %v555
    %1281 = vmatpush.msra.mxu0 %v547
    %1282 = vmatpush.msra.mxu0 %v539
    %1283 = vmatpush.msra.mxu0 %v531
    %1284 = vmatpush.msra.mxu0 %v523
    %1285 = vmatpush.msra.mxu0 %v515
    %1286 = vmatpush.msra.mxu0 %v507
    %1287 = vmatpush.msra.mxu0 %v499
    %1288 = vmatpush.msra.mxu0 %v491
    %1289 = vmatpush.msra.mxu0 %v483
    %1290 = vmatpush.msra.mxu0 %v475
    %1291 = vmatpush.msra.mxu0 %v467
    %1292 = vmatpush.msra.mxu0 %v459
    %1293 = vmatpush.msra.mxu0 %v451
    %1294 = vmatpush.msra.mxu0 %v443
    %1295 = vmatmul.f32.gmra.mxu0 %v306
    %v1296 = vpop.f32.mrf.mxu0
    %v1297 = vadd.f32 %v1277, %v1296
    %1298 = vdwg.mxu0
    %1299 = vmatpush.msra.mxu0 %v691
    %1300 = vmatpush.msra.mxu0 %v683
    %1301 = vmatpush.msra.mxu0 %v675
    %1302 = vmatpush.msra.mxu0 %v667
    %1303 = vmatpush.msra.mxu0 %v659
    %1304 = vmatpush.msra.mxu0 %v651
    %1305 = vmatpush.msra.mxu0 %v643
    %1306 = vmatpush.msra.mxu0 %v635
    %1307 = vmatpush.msra.mxu0 %v627
    %1308 = vmatpush.msra.mxu0 %v619
    %1309 = vmatpush.msra.mxu0 %v611
    %1310 = vmatpush.msra.mxu0 %v603
    %1311 = vmatpush.msra.mxu0 %v595
    %1312 = vmatpush.msra.mxu0 %v587
    %1313 = vmatpush.msra.mxu0 %v579
    %1314 = vmatpush.msra.mxu0 %v571
    %1315 = vmatmul.f32.gmra.mxu0 %v307
    %v1316 = vpop.f32.mrf.mxu0
    %v1317 = vadd.f32 %v1297, %v1316
    %1318 = vdwg.mxu0
    %1319 = vmatpush.msra.mxu0 0.0
    %1320 = vmatpush.msra.mxu0 0.0
    %1321 = vmatpush.msra.mxu0 0.0
    %1322 = vmatpush.msra.mxu0 0.0
    %1323 = vmatpush.msra.mxu0 0.0
    %1324 = vmatpush.msra.mxu0 0.0
    %1325 = vmatpush.msra.mxu0 0.0
    %1326 = vmatpush.msra.mxu0 0.0
    %1327 = vmatpush.msra.mxu0 %v755
    %1328 = vmatpush.msra.mxu0 %v747
    %1329 = vmatpush.msra.mxu0 %v739
    %1330 = vmatpush.msra.mxu0 %v731
    %1331 = vmatpush.msra.mxu0 %v723
    %1332 = vmatpush.msra.mxu0 %v715
    %1333 = vmatpush.msra.mxu0 %v707
    %1334 = vmatpush.msra.mxu0 %v699
    %1335 = vmatmul.f32.gmra.mxu0 %v777
    %v1336 = vpop.f32.mrf.mxu0
    %v1337 = vadd.f32 %v1317, %v1336
    %1338 = vdwg.mxu0
    %1339 = vmatpush.msra.mxu0 %v436
    %1340 = vmatpush.msra.mxu0 %v428
    %1341 = vmatpush.msra.mxu0 %v420
    %1342 = vmatpush.msra.mxu0 %v412
    %1343 = vmatpush.msra.mxu0 %v404
    %1344 = vmatpush.msra.mxu0 %v396
    %1345 = vmatpush.msra.mxu0 %v388
    %1346 = vmatpush.msra.mxu0 %v380
    %1347 = vmatpush.msra.mxu0 %v372
    %1348 = vmatpush.msra.mxu0 %v364
    %1349 = vmatpush.msra.mxu0 %v356
    %1350 = vmatpush.msra.mxu0 %v348
    %1351 = vmatpush.msra.mxu0 %v340
    %1352 = vmatpush.msra.mxu0 %v332
    %1353 = vmatpush.msra.mxu0 %v324
    %1354 = vmatpush.msra.mxu0 %v316
    %1355 = vmatmul.f32.gmra.mxu0 %v305
    %v1356 = vpop.f32.mrf.mxu0
    %v1357 = vadd.f32 %v766, %v1356
    %1358 = vdwg.mxu0
    %1359 = vmatpush.msra.mxu0 %v564
    %1360 = vmatpush.msra.mxu0 %v556
    %1361 = vmatpush.msra.mxu0 %v548
    %1362 = vmatpush.msra.mxu0 %v540
    %1363 = vmatpush.msra.mxu0 %v532
    %1364 = vmatpush.msra.mxu0 %v524
    %1365 = vmatpush.msra.mxu0 %v516
    %1366 = vmatpush.msra.mxu0 %v508
    %1367 = vmatpush.msra.mxu0 %v500
    %1368 = vmatpush.msra.mxu0 %v492
    %1369 = vmatpush.msra.mxu0 %v484
    %1370 = vmatpush.msra.mxu0 %v476
    %1371 = vmatpush.msra.mxu0 %v468
    %1372 = vmatpush.msra.mxu0 %v460
    %1373 = vmatpush.msra.mxu0 %v452
    %1374 = vmatpush.msra.mxu0 %v444
    %1375 = vmatmul.f32.gmra.mxu0 %v306
    %v1376 = vpop.f32.mrf.mxu0
    %v1377 = vadd.f32 %v1357, %v1376
    %1378 = vdwg.mxu0
    %1379 = vmatpush.msra.mxu0 %v692
    %1380 = vmatpush.msra.mxu0 %v684
    %1381 = vmatpush.msra.mxu0 %v676
    %1382 = vmatpush.msra.mxu0 %v668
    %1383 = vmatpush.msra.mxu0 %v660
    %1384 = vmatpush.msra.mxu0 %v652
    %1385 = vmatpush.msra.mxu0 %v644
    %1386 = vmatpush.msra.mxu0 %v636
    %1387 = vmatpush.msra.mxu0 %v628
    %1388 = vmatpush.msra.mxu0 %v620
    %1389 = vmatpush.msra.mxu0 %v612
    %1390 = vmatpush.msra.mxu0 %v604
    %1391 = vmatpush.msra.mxu0 %v596
    %1392 = vmatpush.msra.mxu0 %v588
    %1393 = vmatpush.msra.mxu0 %v580
    %1394 = vmatpush.msra.mxu0 %v572
    %1395 = vmatmul.f32.gmra.mxu0 %v307
    %v1396 = vpop.f32.mrf.mxu0
    %v1397 = vadd.f32 %v1377, %v1396
    %1398 = vdwg.mxu0
    %1399 = vmatpush.msra.mxu0 0.0
    %1400 = vmatpush.msra.mxu0 0.0
    %1401 = vmatpush.msra.mxu0 0.0
    %1402 = vmatpush.msra.mxu0 0.0
    %1403 = vmatpush.msra.mxu0 0.0
    %1404 = vmatpush.msra.mxu0 0.0
    %1405 = vmatpush.msra.mxu0 0.0
    %1406 = vmatpush.msra.mxu0 0.0
    %1407 = vmatpush.msra.mxu0 %v756
    %1408 = vmatpush.msra.mxu0 %v748
    %1409 = vmatpush.msra.mxu0 %v740
    %1410 = vmatpush.msra.mxu0 %v732
    %1411 = vmatpush.msra.mxu0 %v724
    %1412 = vmatpush.msra.mxu0 %v716
    %1413 = vmatpush.msra.mxu0 %v708
    %1414 = vmatpush.msra.mxu0 %v700
    %1415 = vmatmul.f32.gmra.mxu0 %v777
    %v1416 = vpop.f32.mrf.mxu0
    %v1417 = vadd.f32 %v1397, %v1416
    %1418 = vdwg.mxu0
    %vm1419 = vcmp.ge.f32.partialorder %v857, 0.0
    %vm1420 = vcmp.ge.f32.partialorder %v937, 0.0
    %vm1421 = vcmp.ge.f32.partialorder %v1017, 0.0
    %vm1422 = vcmp.ge.f32.partialorder %v1097, 0.0
    %vm1423 = vcmp.ge.f32.partialorder %v1177, 0.0
    %vm1424 = vcmp.ge.f32.partialorder %v1257, 0.0
    %vm1425 = vcmp.ge.f32.partialorder %v1337, 0.0
    %vm1426 = vcmp.ge.f32.partialorder %v1417, 0.0
    %v1427 = vmul.f32 %v857, 0.1
    %v1428 = vmul.f32 %v937, 0.1
    %v1429 = vmul.f32 %v1017, 0.1
    %v1430 = vmul.f32 %v1097, 0.1
    %v1431 = vmul.f32 %v1177, 0.1
    %v1432 = vmul.f32 %v1257, 0.1
    %v1433 = vmul.f32 %v1337, 0.1
    %v1434 = vmul.f32 %v1417, 0.1
    %v1435 = vsel %vm1419, %v857, %v1427
    %v1436 = vsel %vm1420, %v937, %v1428
    %v1437 = vsel %vm1421, %v1017, %v1429
    %v1438 = vsel %vm1422, %v1097, %v1430
    %v1439 = vsel %vm1423, %v1177, %v1431
    %v1440 = vsel %vm1424, %v1257, %v1432
    %v1441 = vsel %vm1425, %v1337, %v1433
    %v1442 = vsel %vm1426, %v1417, %v1434
    %v1443 = vld [vmem:[#allocation12] sm:$0xff]
    %v1444 = vld [vmem:[#allocation12 + $0x8] sm:$0xff]
    %v1445 = vld [vmem:[#allocation12 + $0x10] sm:$0xff]
    %v1446 = vld [vmem:[#allocation12 + $0x18] sm:$0xff]
    %v1447 = vld [vmem:[#allocation12 + $0x20] sm:$0xff]
    %v1448 = vld [vmem:[#allocation12 + $0x28] sm:$0xff]
    %v1449 = vld [vmem:[#allocation12 + $0x30] sm:$0xff]
    %v1450 = vld [vmem:[#allocation12 + $0x38] sm:$0xff]
    %v1451 = vld [vmem:[#allocation12 + $0x40] sm:$0xff]
    %v1452 = vld [vmem:[#allocation12 + $0x48] sm:$0xff]
    %v1453 = vld [vmem:[#allocation12 + $0x50] sm:$0xff]
    %v1454 = vld [vmem:[#allocation12 + $0x58] sm:$0xff]
    %v1455 = vld [vmem:[#allocation12 + $0x60] sm:$0xff]
    %v1456 = vld [vmem:[#allocation12 + $0x68] sm:$0xff]
    %v1457 = vld [vmem:[#allocation12 + $0x70] sm:$0xff]
    %v1458 = vld [vmem:[#allocation12 + $0x78] sm:$0xff]
    %v1459 = vld [vmem:[#allocation12 + $0x80] sm:$0xff]
    %v1460 = vld [vmem:[#allocation12 + $0x88] sm:$0xff]
    %v1461 = vld [vmem:[#allocation12 + $0x90] sm:$0xff]
    %v1462 = vld [vmem:[#allocation12 + $0x98] sm:$0xff]
    %v1463 = vld [vmem:[#allocation12 + $0xa0] sm:$0xff]
    %v1464 = vld [vmem:[#allocation12 + $0xa8] sm:$0xff]
    %v1465 = vld [vmem:[#allocation12 + $0xb0] sm:$0xff]
    %v1466 = vld [vmem:[#allocation12 + $0xb8] sm:$0xff]
    %v1467 = vld [vmem:[#allocation12 + $0xc0] sm:$0xff]
    %v1468 = vld [vmem:[#allocation12 + $0xc8] sm:$0xff]
    %v1469 = vld [vmem:[#allocation12 + $0xd0] sm:$0xff]
    %v1470 = vld [vmem:[#allocation12 + $0xd8] sm:$0xff]
    %v1471 = vld [vmem:[#allocation12 + $0xe0] sm:$0xff]
    %v1472 = vld [vmem:[#allocation12 + $0xe8] sm:$0xff]
    %v1473 = vld [vmem:[#allocation12 + $0xf0] sm:$0xff]
    %v1474 = vld [vmem:[#allocation12 + $0xf8] sm:$0xff]
    %v1475 = vld [vmem:[#allocation12 + $0x100] sm:$0xff]
    %v1476 = vld [vmem:[#allocation12 + $0x108] sm:$0xff]
    %v1477 = vld [vmem:[#allocation12 + $0x110] sm:$0xff]
    %v1478 = vld [vmem:[#allocation12 + $0x118] sm:$0xff]
    %v1479 = vld [vmem:[#allocation12 + $0x120] sm:$0xff]
    %v1480 = vld [vmem:[#allocation12 + $0x128] sm:$0xff]
    %v1481 = vld [vmem:[#allocation12 + $0x130] sm:$0xff]
    %v1482 = vld [vmem:[#allocation12 + $0x138] sm:$0xff]
    %v1483 = vld [vmem:[#allocation12 + $0x140] sm:$0xff]
    %v1484 = vld [vmem:[#allocation12 + $0x148] sm:$0xff]
    %v1485 = vld [vmem:[#allocation12 + $0x150] sm:$0xff]
    %v1486 = vld [vmem:[#allocation12 + $0x158] sm:$0xff]
    %v1487 = vld [vmem:[#allocation12 + $0x160] sm:$0xff]
    %v1488 = vld [vmem:[#allocation12 + $0x168] sm:$0xff]
    %v1489 = vld [vmem:[#allocation12 + $0x170] sm:$0xff]
    %v1490 = vld [vmem:[#allocation12 + $0x178] sm:$0xff]
    %v1491 = vld [vmem:[#allocation12 + $0x180] sm:$0xff]
    %v1492 = vld [vmem:[#allocation12 + $0x188] sm:$0xff]
    %v1493 = vld [vmem:[#allocation12 + $0x190] sm:$0xff]
    %v1494 = vld [vmem:[#allocation12 + $0x198] sm:$0xff]
    %v1495 = vld [vmem:[#allocation12 + $0x1a0] sm:$0xff]
    %v1496 = vld [vmem:[#allocation12 + $0x1a8] sm:$0xff]
    %v1497 = vld [vmem:[#allocation12 + $0x1b0] sm:$0xff]
    %v1498 = vld [vmem:[#allocation12 + $0x1b8] sm:$0xff]
    %v1499 = vld [vmem:[#allocation12 + $0x1c0] sm:$0xff]
    %v1500 = vld [vmem:[#allocation12 + $0x1c8] sm:$0xff]
    %v1501 = vld [vmem:[#allocation12 + $0x1d0] sm:$0xff]
    %v1502 = vld [vmem:[#allocation12 + $0x1d8] sm:$0xff]
    %v1503 = vld [vmem:[#allocation12 + $0x1e0] sm:$0xff]
    %v1504 = vld [vmem:[#allocation12 + $0x1e8] sm:$0xff]
    %v1505 = vld [vmem:[#allocation12 + $0x1f0] sm:$0xff]
    %v1506 = vld [vmem:[#allocation12 + $0x1f8] sm:$0xff]
    %v1507 = vld [vmem:[#allocation12 + $0x200] sm:$0xff]
    %v1508 = vld [vmem:[#allocation12 + $0x208] sm:$0xff]
    %v1509 = vld [vmem:[#allocation12 + $0x210] sm:$0xff]
    %v1510 = vld [vmem:[#allocation12 + $0x218] sm:$0xff]
    %v1511 = vld [vmem:[#allocation12 + $0x220] sm:$0xff]
    %v1512 = vld [vmem:[#allocation12 + $0x228] sm:$0xff]
    %v1513 = vld [vmem:[#allocation12 + $0x230] sm:$0xff]
    %v1514 = vld [vmem:[#allocation12 + $0x238] sm:$0xff]
    %v1515 = vld [vmem:[#allocation12 + $0x240] sm:$0xff]
    %v1516 = vld [vmem:[#allocation12 + $0x248] sm:$0xff]
    %v1517 = vld [vmem:[#allocation12 + $0x250] sm:$0xff]
    %v1518 = vld [vmem:[#allocation12 + $0x258] sm:$0xff]
    %v1519 = vld [vmem:[#allocation12 + $0x260] sm:$0xff]
    %v1520 = vld [vmem:[#allocation12 + $0x268] sm:$0xff]
    %v1521 = vld [vmem:[#allocation12 + $0x270] sm:$0xff]
    %v1522 = vld [vmem:[#allocation12 + $0x278] sm:$0xff]
    %v1523 = vld [vmem:[#allocation12 + $0x280] sm:$0xff]
    %v1524 = vld [vmem:[#allocation12 + $0x288] sm:$0xff]
    %v1525 = vld [vmem:[#allocation12 + $0x290] sm:$0xff]
    %v1526 = vld [vmem:[#allocation12 + $0x298] sm:$0xff]
    %v1527 = vld [vmem:[#allocation12 + $0x2a0] sm:$0xff]
    %v1528 = vld [vmem:[#allocation12 + $0x2a8] sm:$0xff]
    %v1529 = vld [vmem:[#allocation12 + $0x2b0] sm:$0xff]
    %v1530 = vld [vmem:[#allocation12 + $0x2b8] sm:$0xff]
    %v1531 = vld [vmem:[#allocation12 + $0x2c0] sm:$0xff]
    %v1532 = vld [vmem:[#allocation12 + $0x2c8] sm:$0xff]
    %v1533 = vld [vmem:[#allocation12 + $0x2d0] sm:$0xff]
    %v1534 = vld [vmem:[#allocation12 + $0x2d8] sm:$0xff]
    %v1535 = vld [vmem:[#allocation12 + $0x2e0] sm:$0xff]
    %v1536 = vld [vmem:[#allocation12 + $0x2e8] sm:$0xff]
    %v1537 = vld [vmem:[#allocation12 + $0x2f0] sm:$0xff]
    %v1538 = vld [vmem:[#allocation12 + $0x2f8] sm:$0xff]
    %v1539 = vld [vmem:[#allocation12 + $0x300] sm:$0xff]
    %v1540 = vld [vmem:[#allocation12 + $0x308] sm:$0xff]
    %v1541 = vld [vmem:[#allocation12 + $0x310] sm:$0xff]
    %v1542 = vld [vmem:[#allocation12 + $0x318] sm:$0xff]
    %v1543 = vld [vmem:[#allocation12 + $0x320] sm:$0xff]
    %v1544 = vld [vmem:[#allocation12 + $0x328] sm:$0xff]
    %v1545 = vld [vmem:[#allocation12 + $0x330] sm:$0xff]
    %v1546 = vld [vmem:[#allocation12 + $0x338] sm:$0xff]
    %v1547 = vld [vmem:[#allocation12 + $0x340] sm:$0xff]
    %v1548 = vld [vmem:[#allocation12 + $0x348] sm:$0xff]
    %v1549 = vld [vmem:[#allocation12 + $0x350] sm:$0xff]
    %v1550 = vld [vmem:[#allocation12 + $0x358] sm:$0xff]
    %v1551 = vld [vmem:[#allocation12 + $0x360] sm:$0xff]
    %v1552 = vld [vmem:[#allocation12 + $0x368] sm:$0xff]
    %v1553 = vld [vmem:[#allocation12 + $0x370] sm:$0xff]
    %v1554 = vld [vmem:[#allocation12 + $0x378] sm:$0xff]
    %v1555 = vld [vmem:[#allocation12 + $0x380] sm:$0xff]
    %v1556 = vld [vmem:[#allocation12 + $0x388] sm:$0xff]
    %v1557 = vld [vmem:[#allocation12 + $0x390] sm:$0xff]
    %v1558 = vld [vmem:[#allocation12 + $0x398] sm:$0xff]
    %v1559 = vld [vmem:[#allocation12 + $0x3a0] sm:$0xff]
    %v1560 = vld [vmem:[#allocation12 + $0x3a8] sm:$0xff]
    %v1561 = vld [vmem:[#allocation12 + $0x3b0] sm:$0xff]
    %v1562 = vld [vmem:[#allocation12 + $0x3b8] sm:$0xff]
    %v1563 = vld [vmem:[#allocation12 + $0x3c0] sm:$0xff]
    %v1564 = vld [vmem:[#allocation12 + $0x3c8] sm:$0xff]
    %v1565 = vld [vmem:[#allocation12 + $0x3d0] sm:$0xff]
    %v1566 = vld [vmem:[#allocation12 + $0x3d8] sm:$0xff]
    %v1567 = vld [vmem:[#allocation12 + $0x3e0] sm:$0xff]
    %v1568 = vld [vmem:[#allocation12 + $0x3e8] sm:$0xff]
    %v1569 = vld [vmem:[#allocation12 + $0x3f0] sm:$0xff]
    %v1570 = vld [vmem:[#allocation12 + $0x3f8] sm:$0xff]
    %v1571 = vld [vmem:[#allocation12 + $0x400] sm:$0xff]
    %v1572 = vld [vmem:[#allocation12 + $0x408] sm:$0xff]
    %v1573 = vld [vmem:[#allocation12 + $0x410] sm:$0xff]
    %v1574 = vld [vmem:[#allocation12 + $0x418] sm:$0xff]
    %v1575 = vld [vmem:[#allocation12 + $0x420] sm:$0xff]
    %v1576 = vld [vmem:[#allocation12 + $0x428] sm:$0xff]
    %v1577 = vld [vmem:[#allocation12 + $0x430] sm:$0xff]
    %v1578 = vld [vmem:[#allocation12 + $0x438] sm:$0xff]
    %v1579 = vld [vmem:[#allocation12 + $0x440] sm:$0xff]
    %v1580 = vld [vmem:[#allocation12 + $0x448] sm:$0xff]
    %v1581 = vld [vmem:[#allocation12 + $0x450] sm:$0xff]
    %v1582 = vld [vmem:[#allocation12 + $0x458] sm:$0xff]
    %v1583 = vld [vmem:[#allocation12 + $0x460] sm:$0xff]
    %v1584 = vld [vmem:[#allocation12 + $0x468] sm:$0xff]
    %v1585 = vld [vmem:[#allocation12 + $0x470] sm:$0xff]
    %v1586 = vld [vmem:[#allocation12 + $0x478] sm:$0xff]
    %v1587 = vld [vmem:[#allocation12 + $0x480] sm:$0xff]
    %v1588 = vld [vmem:[#allocation12 + $0x488] sm:$0xff]
    %v1589 = vld [vmem:[#allocation12 + $0x490] sm:$0xff]
    %v1590 = vld [vmem:[#allocation12 + $0x498] sm:$0xff]
    %v1591 = vld [vmem:[#allocation12 + $0x4a0] sm:$0xff]
    %v1592 = vld [vmem:[#allocation12 + $0x4a8] sm:$0xff]
    %v1593 = vld [vmem:[#allocation12 + $0x4b0] sm:$0xff]
    %v1594 = vld [vmem:[#allocation12 + $0x4b8] sm:$0xff]
    %v1595 = vld [vmem:[#allocation12 + $0x4c0] sm:$0xff]
    %v1596 = vld [vmem:[#allocation12 + $0x4c8] sm:$0xff]
    %v1597 = vld [vmem:[#allocation12 + $0x4d0] sm:$0xff]
    %v1598 = vld [vmem:[#allocation12 + $0x4d8] sm:$0xff]
    %v1599 = vld [vmem:[#allocation12 + $0x4e0] sm:$0xff]
    %v1600 = vld [vmem:[#allocation12 + $0x4e8] sm:$0xff]
    %v1601 = vld [vmem:[#allocation12 + $0x4f0] sm:$0xff]
    %v1602 = vld [vmem:[#allocation12 + $0x4f8] sm:$0xff]
    %v1603 = vld [vmem:[#allocation12 + $0x500] sm:$0xff]
    %v1604 = vld [vmem:[#allocation12 + $0x508] sm:$0xff]
    %v1605 = vld [vmem:[#allocation12 + $0x510] sm:$0xff]
    %v1606 = vld [vmem:[#allocation12 + $0x518] sm:$0xff]
    %v1607 = vld [vmem:[#allocation12 + $0x520] sm:$0xff]
    %v1608 = vld [vmem:[#allocation12 + $0x528] sm:$0xff]
    %v1609 = vld [vmem:[#allocation12 + $0x530] sm:$0xff]
    %v1610 = vld [vmem:[#allocation12 + $0x538] sm:$0xff]
    %v1611 = vld [vmem:[#allocation12 + $0x540] sm:$0xff]
    %v1612 = vld [vmem:[#allocation12 + $0x548] sm:$0xff]
    %v1613 = vld [vmem:[#allocation12 + $0x550] sm:$0xff]
    %v1614 = vld [vmem:[#allocation12 + $0x558] sm:$0xff]
    %v1615 = vld [vmem:[#allocation12 + $0x560] sm:$0xff]
    %v1616 = vld [vmem:[#allocation12 + $0x568] sm:$0xff]
    %v1617 = vld [vmem:[#allocation12 + $0x570] sm:$0xff]
    %v1618 = vld [vmem:[#allocation12 + $0x578] sm:$0xff]
    %v1619 = vld [vmem:[#allocation12 + $0x580] sm:$0xff]
    %v1620 = vld [vmem:[#allocation12 + $0x588] sm:$0xff]
    %v1621 = vld [vmem:[#allocation12 + $0x590] sm:$0xff]
    %v1622 = vld [vmem:[#allocation12 + $0x598] sm:$0xff]
    %v1623 = vld [vmem:[#allocation12 + $0x5a0] sm:$0xff]
    %v1624 = vld [vmem:[#allocation12 + $0x5a8] sm:$0xff]
    %v1625 = vld [vmem:[#allocation12 + $0x5b0] sm:$0xff]
    %v1626 = vld [vmem:[#allocation12 + $0x5b8] sm:$0xff]
    %v1627 = vld [vmem:[#allocation12 + $0x5c0] sm:$0xff]
    %v1628 = vld [vmem:[#allocation12 + $0x5c8] sm:$0xff]
    %v1629 = vld [vmem:[#allocation12 + $0x5d0] sm:$0xff]
    %v1630 = vld [vmem:[#allocation12 + $0x5d8] sm:$0xff]
    %v1631 = vld [vmem:[#allocation12 + $0x5e0] sm:$0xff]
    %v1632 = vld [vmem:[#allocation12 + $0x5e8] sm:$0xff]
    %v1633 = vld [vmem:[#allocation12 + $0x5f0] sm:$0xff]
    %v1634 = vld [vmem:[#allocation12 + $0x5f8] sm:$0xff]
    %v1635 = vld [vmem:[#allocation12 + $0x600] sm:$0xff]
    %v1636 = vld [vmem:[#allocation12 + $0x608] sm:$0xff]
    %v1637 = vld [vmem:[#allocation12 + $0x610] sm:$0xff]
    %v1638 = vld [vmem:[#allocation12 + $0x618] sm:$0xff]
    %v1639 = vld [vmem:[#allocation12 + $0x620] sm:$0xff]
    %v1640 = vld [vmem:[#allocation12 + $0x628] sm:$0xff]
    %v1641 = vld [vmem:[#allocation12 + $0x630] sm:$0xff]
    %v1642 = vld [vmem:[#allocation12 + $0x638] sm:$0xff]
    %v1643 = vld [vmem:[#allocation12 + $0x640] sm:$0xff]
    %v1644 = vld [vmem:[#allocation12 + $0x648] sm:$0xff]
    %v1645 = vld [vmem:[#allocation12 + $0x650] sm:$0xff]
    %v1646 = vld [vmem:[#allocation12 + $0x658] sm:$0xff]
    %v1647 = vld [vmem:[#allocation12 + $0x660] sm:$0xff]
    %v1648 = vld [vmem:[#allocation12 + $0x668] sm:$0xff]
    %v1649 = vld [vmem:[#allocation12 + $0x670] sm:$0xff]
    %v1650 = vld [vmem:[#allocation12 + $0x678] sm:$0xff]
    %v1651 = vld [vmem:[#allocation12 + $0x680] sm:$0xff]
    %v1652 = vld [vmem:[#allocation12 + $0x688] sm:$0xff]
    %v1653 = vld [vmem:[#allocation12 + $0x690] sm:$0xff]
    %v1654 = vld [vmem:[#allocation12 + $0x698] sm:$0xff]
    %v1655 = vld [vmem:[#allocation12 + $0x6a0] sm:$0xff]
    %v1656 = vld [vmem:[#allocation12 + $0x6a8] sm:$0xff]
    %v1657 = vld [vmem:[#allocation12 + $0x6b0] sm:$0xff]
    %v1658 = vld [vmem:[#allocation12 + $0x6b8] sm:$0xff]
    %v1659 = vld [vmem:[#allocation12 + $0x6c0] sm:$0xff]
    %v1660 = vld [vmem:[#allocation12 + $0x6c8] sm:$0xff]
    %v1661 = vld [vmem:[#allocation12 + $0x6d0] sm:$0xff]
    %v1662 = vld [vmem:[#allocation12 + $0x6d8] sm:$0xff]
    %v1663 = vld [vmem:[#allocation12 + $0x6e0] sm:$0xff]
    %v1664 = vld [vmem:[#allocation12 + $0x6e8] sm:$0xff]
    %v1665 = vld [vmem:[#allocation12 + $0x6f0] sm:$0xff]
    %v1666 = vld [vmem:[#allocation12 + $0x6f8] sm:$0xff]
    %v1667 = vld [vmem:[#allocation12 + $0x700] sm:$0xff]
    %v1668 = vld [vmem:[#allocation12 + $0x708] sm:$0xff]
    %v1669 = vld [vmem:[#allocation12 + $0x710] sm:$0xff]
    %v1670 = vld [vmem:[#allocation12 + $0x718] sm:$0xff]
    %v1671 = vld [vmem:[#allocation12 + $0x720] sm:$0xff]
    %v1672 = vld [vmem:[#allocation12 + $0x728] sm:$0xff]
    %v1673 = vld [vmem:[#allocation12 + $0x730] sm:$0xff]
    %v1674 = vld [vmem:[#allocation12 + $0x738] sm:$0xff]
    %v1675 = vld [vmem:[#allocation12 + $0x740] sm:$0xff]
    %v1676 = vld [vmem:[#allocation12 + $0x748] sm:$0xff]
    %v1677 = vld [vmem:[#allocation12 + $0x750] sm:$0xff]
    %v1678 = vld [vmem:[#allocation12 + $0x758] sm:$0xff]
    %v1679 = vld [vmem:[#allocation12 + $0x760] sm:$0xff]
    %v1680 = vld [vmem:[#allocation12 + $0x768] sm:$0xff]
    %v1681 = vld [vmem:[#allocation12 + $0x770] sm:$0xff]
    %v1682 = vld [vmem:[#allocation12 + $0x778] sm:$0xff]
    %v1683 = vld [vmem:[#allocation12 + $0x780] sm:$0xff]
    %v1684 = vld [vmem:[#allocation12 + $0x788] sm:$0xff]
    %v1685 = vld [vmem:[#allocation12 + $0x790] sm:$0xff]
    %v1686 = vld [vmem:[#allocation12 + $0x798] sm:$0xff]
    %v1687 = vld [vmem:[#allocation12 + $0x7a0] sm:$0xff]
    %v1688 = vld [vmem:[#allocation12 + $0x7a8] sm:$0xff]
    %v1689 = vld [vmem:[#allocation12 + $0x7b0] sm:$0xff]
    %v1690 = vld [vmem:[#allocation12 + $0x7b8] sm:$0xff]
    %v1691 = vld [vmem:[#allocation12 + $0x7c0] sm:$0xff]
    %v1692 = vld [vmem:[#allocation12 + $0x7c8] sm:$0xff]
    %v1693 = vld [vmem:[#allocation12 + $0x7d0] sm:$0xff]
    %v1694 = vld [vmem:[#allocation12 + $0x7d8] sm:$0xff]
    %v1695 = vld [vmem:[#allocation12 + $0x7e0] sm:$0xff]
    %v1696 = vld [vmem:[#allocation12 + $0x7e8] sm:$0xff]
    %v1697 = vld [vmem:[#allocation12 + $0x7f0] sm:$0xff]
    %v1698 = vld [vmem:[#allocation12 + $0x7f8] sm:$0xff]
    %v1699 = vld [vmem:[#allocation12 + $0x800] sm:$0xff]
    %v1700 = vld [vmem:[#allocation12 + $0x808] sm:$0xff]
    %v1701 = vld [vmem:[#allocation12 + $0x810] sm:$0xff]
    %v1702 = vld [vmem:[#allocation12 + $0x818] sm:$0xff]
    %v1703 = vld [vmem:[#allocation12 + $0x820] sm:$0xff]
    %v1704 = vld [vmem:[#allocation12 + $0x828] sm:$0xff]
    %v1705 = vld [vmem:[#allocation12 + $0x830] sm:$0xff]
    %v1706 = vld [vmem:[#allocation12 + $0x838] sm:$0xff]
    %v1707 = vld [vmem:[#allocation12 + $0x840] sm:$0xff]
    %v1708 = vld [vmem:[#allocation12 + $0x848] sm:$0xff]
    %v1709 = vld [vmem:[#allocation12 + $0x850] sm:$0xff]
    %v1710 = vld [vmem:[#allocation12 + $0x858] sm:$0xff]
    %v1711 = vld [vmem:[#allocation12 + $0x860] sm:$0xff]
    %v1712 = vld [vmem:[#allocation12 + $0x868] sm:$0xff]
    %v1713 = vld [vmem:[#allocation12 + $0x870] sm:$0xff]
    %v1714 = vld [vmem:[#allocation12 + $0x878] sm:$0xff]
    %v1715 = vld [vmem:[#allocation12 + $0x880] sm:$0xff]
    %v1716 = vld [vmem:[#allocation12 + $0x888] sm:$0xff]
    %v1717 = vld [vmem:[#allocation12 + $0x890] sm:$0xff]
    %v1718 = vld [vmem:[#allocation12 + $0x898] sm:$0xff]
    %v1719 = vld [vmem:[#allocation12 + $0x8a0] sm:$0xff]
    %v1720 = vld [vmem:[#allocation12 + $0x8a8] sm:$0xff]
    %v1721 = vld [vmem:[#allocation12 + $0x8b0] sm:$0xff]
    %v1722 = vld [vmem:[#allocation12 + $0x8b8] sm:$0xff]
    %v1723 = vld [vmem:[#allocation12 + $0x8c0] sm:$0xff]
    %v1724 = vld [vmem:[#allocation12 + $0x8c8] sm:$0xff]
    %v1725 = vld [vmem:[#allocation12 + $0x8d0] sm:$0xff]
    %v1726 = vld [vmem:[#allocation12 + $0x8d8] sm:$0xff]
    %v1727 = vld [vmem:[#allocation12 + $0x8e0] sm:$0xff]
    %v1728 = vld [vmem:[#allocation12 + $0x8e8] sm:$0xff]
    %v1729 = vld [vmem:[#allocation12 + $0x8f0] sm:$0xff]
    %v1730 = vld [vmem:[#allocation12 + $0x8f8] sm:$0xff]
    %v1731 = vld [vmem:[#allocation12 + $0x900] sm:$0xff]
    %v1732 = vld [vmem:[#allocation12 + $0x908] sm:$0xff]
    %v1733 = vld [vmem:[#allocation12 + $0x910] sm:$0xff]
    %v1734 = vld [vmem:[#allocation12 + $0x918] sm:$0xff]
    %v1735 = vld [vmem:[#allocation12 + $0x920] sm:$0xff]
    %v1736 = vld [vmem:[#allocation12 + $0x928] sm:$0xff]
    %v1737 = vld [vmem:[#allocation12 + $0x930] sm:$0xff]
    %v1738 = vld [vmem:[#allocation12 + $0x938] sm:$0xff]
    %v1739 = vld [vmem:[#allocation12 + $0x940] sm:$0xff]
    %v1740 = vld [vmem:[#allocation12 + $0x948] sm:$0xff]
    %v1741 = vld [vmem:[#allocation12 + $0x950] sm:$0xff]
    %v1742 = vld [vmem:[#allocation12 + $0x958] sm:$0xff]
    %v1743 = vld [vmem:[#allocation12 + $0x960] sm:$0xff]
    %v1744 = vld [vmem:[#allocation12 + $0x968] sm:$0xff]
    %v1745 = vld [vmem:[#allocation12 + $0x970] sm:$0xff]
    %v1746 = vld [vmem:[#allocation12 + $0x978] sm:$0xff]
    %v1747 = vld [vmem:[#allocation12 + $0x980] sm:$0xff]
    %v1748 = vld [vmem:[#allocation12 + $0x988] sm:$0xff]
    %v1749 = vld [vmem:[#allocation12 + $0x990] sm:$0xff]
    %v1750 = vld [vmem:[#allocation12 + $0x998] sm:$0xff]
    %v1751 = vld [vmem:[#allocation12 + $0x9a0] sm:$0xff]
    %v1752 = vld [vmem:[#allocation12 + $0x9a8] sm:$0xff]
    %v1753 = vld [vmem:[#allocation12 + $0x9b0] sm:$0xff]
    %v1754 = vld [vmem:[#allocation12 + $0x9b8] sm:$0xff]
    %v1755 = vld [vmem:[#allocation12 + $0x9c0] sm:$0xff]
    %v1756 = vld [vmem:[#allocation12 + $0x9c8] sm:$0xff]
    %v1757 = vld [vmem:[#allocation12 + $0x9d0] sm:$0xff]
    %v1758 = vld [vmem:[#allocation12 + $0x9d8] sm:$0xff]
    %v1759 = vld [vmem:[#allocation12 + $0x9e0] sm:$0xff]
    %v1760 = vld [vmem:[#allocation12 + $0x9e8] sm:$0xff]
    %v1761 = vld [vmem:[#allocation12 + $0x9f0] sm:$0xff]
    %v1762 = vld [vmem:[#allocation12 + $0x9f8] sm:$0xff]
    %v1763 = vld [vmem:[#allocation12 + $0xa00] sm:$0xff]
    %v1764 = vld [vmem:[#allocation12 + $0xa08] sm:$0xff]
    %v1765 = vld [vmem:[#allocation12 + $0xa10] sm:$0xff]
    %v1766 = vld [vmem:[#allocation12 + $0xa18] sm:$0xff]
    %v1767 = vld [vmem:[#allocation12 + $0xa20] sm:$0xff]
    %v1768 = vld [vmem:[#allocation12 + $0xa28] sm:$0xff]
    %v1769 = vld [vmem:[#allocation12 + $0xa30] sm:$0xff]
    %v1770 = vld [vmem:[#allocation12 + $0xa38] sm:$0xff]
    %v1771 = vld [vmem:[#allocation12 + $0xa40] sm:$0xff]
    %v1772 = vld [vmem:[#allocation12 + $0xa48] sm:$0xff]
    %v1773 = vld [vmem:[#allocation12 + $0xa50] sm:$0xff]
    %v1774 = vld [vmem:[#allocation12 + $0xa58] sm:$0xff]
    %v1775 = vld [vmem:[#allocation12 + $0xa60] sm:$0xff]
    %v1776 = vld [vmem:[#allocation12 + $0xa68] sm:$0xff]
    %v1777 = vld [vmem:[#allocation12 + $0xa70] sm:$0xff]
    %v1778 = vld [vmem:[#allocation12 + $0xa78] sm:$0xff]
    %v1779 = vld [vmem:[#allocation12 + $0xa80] sm:$0xff]
    %v1780 = vld [vmem:[#allocation12 + $0xa88] sm:$0xff]
    %v1781 = vld [vmem:[#allocation12 + $0xa90] sm:$0xff]
    %v1782 = vld [vmem:[#allocation12 + $0xa98] sm:$0xff]
    %v1783 = vld [vmem:[#allocation12 + $0xaa0] sm:$0xff]
    %v1784 = vld [vmem:[#allocation12 + $0xaa8] sm:$0xff]
    %v1785 = vld [vmem:[#allocation12 + $0xab0] sm:$0xff]
    %v1786 = vld [vmem:[#allocation12 + $0xab8] sm:$0xff]
    %v1787 = vld [vmem:[#allocation12 + $0xac0] sm:$0xff]
    %v1788 = vld [vmem:[#allocation12 + $0xac8] sm:$0xff]
    %v1789 = vld [vmem:[#allocation12 + $0xad0] sm:$0xff]
    %v1790 = vld [vmem:[#allocation12 + $0xad8] sm:$0xff]
    %v1791 = vld [vmem:[#allocation12 + $0xae0] sm:$0xff]
    %v1792 = vld [vmem:[#allocation12 + $0xae8] sm:$0xff]
    %v1793 = vld [vmem:[#allocation12 + $0xaf0] sm:$0xff]
    %v1794 = vld [vmem:[#allocation12 + $0xaf8] sm:$0xff]
    %v1795 = vld [vmem:[#allocation12 + $0xb00] sm:$0xff]
    %v1796 = vld [vmem:[#allocation12 + $0xb08] sm:$0xff]
    %v1797 = vld [vmem:[#allocation12 + $0xb10] sm:$0xff]
    %v1798 = vld [vmem:[#allocation12 + $0xb18] sm:$0xff]
    %v1799 = vld [vmem:[#allocation12 + $0xb20] sm:$0xff]
    %v1800 = vld [vmem:[#allocation12 + $0xb28] sm:$0xff]
    %v1801 = vld [vmem:[#allocation12 + $0xb30] sm:$0xff]
    %v1802 = vld [vmem:[#allocation12 + $0xb38] sm:$0xff]
    %v1803 = vld [vmem:[#allocation12 + $0xb40] sm:$0xff]
    %v1804 = vld [vmem:[#allocation12 + $0xb48] sm:$0xff]
    %v1805 = vld [vmem:[#allocation12 + $0xb50] sm:$0xff]
    %v1806 = vld [vmem:[#allocation12 + $0xb58] sm:$0xff]
    %v1807 = vld [vmem:[#allocation12 + $0xb60] sm:$0xff]
    %v1808 = vld [vmem:[#allocation12 + $0xb68] sm:$0xff]
    %v1809 = vld [vmem:[#allocation12 + $0xb70] sm:$0xff]
    %v1810 = vld [vmem:[#allocation12 + $0xb78] sm:$0xff]
    %v1811 = vld [vmem:[#allocation12 + $0xb80] sm:$0xff]
    %v1812 = vld [vmem:[#allocation12 + $0xb88] sm:$0xff]
    %v1813 = vld [vmem:[#allocation12 + $0xb90] sm:$0xff]
    %v1814 = vld [vmem:[#allocation12 + $0xb98] sm:$0xff]
    %v1815 = vld [vmem:[#allocation12 + $0xba0] sm:$0xff]
    %v1816 = vld [vmem:[#allocation12 + $0xba8] sm:$0xff]
    %v1817 = vld [vmem:[#allocation12 + $0xbb0] sm:$0xff]
    %v1818 = vld [vmem:[#allocation12 + $0xbb8] sm:$0xff]
    %v1819 = vld [vmem:[#allocation12 + $0xbc0] sm:$0xff]
    %v1820 = vld [vmem:[#allocation12 + $0xbc8] sm:$0xff]
    %v1821 = vld [vmem:[#allocation12 + $0xbd0] sm:$0xff]
    %v1822 = vld [vmem:[#allocation12 + $0xbd8] sm:$0xff]
    %v1823 = vld [vmem:[#allocation12 + $0xbe0] sm:$0xff]
    %v1824 = vld [vmem:[#allocation12 + $0xbe8] sm:$0xff]
    %v1825 = vld [vmem:[#allocation12 + $0xbf0] sm:$0xff]
    %v1826 = vld [vmem:[#allocation12 + $0xbf8] sm:$0xff]
    %v1827 = vld [vmem:[#allocation12 + $0xc00] sm:$0xff]
    %v1828 = vld [vmem:[#allocation12 + $0xc08] sm:$0xff]
    %v1829 = vld [vmem:[#allocation12 + $0xc10] sm:$0xff]
    %v1830 = vld [vmem:[#allocation12 + $0xc18] sm:$0xff]
    %v1831 = vld [vmem:[#allocation12 + $0xc20] sm:$0xff]
    %v1832 = vld [vmem:[#allocation12 + $0xc28] sm:$0xff]
    %v1833 = vld [vmem:[#allocation12 + $0xc30] sm:$0xff]
    %v1834 = vld [vmem:[#allocation12 + $0xc38] sm:$0xff]
    %v1835 = vld [vmem:[#allocation12 + $0xc40] sm:$0xff]
    %v1836 = vld [vmem:[#allocation12 + $0xc48] sm:$0xff]
    %v1837 = vld [vmem:[#allocation12 + $0xc50] sm:$0xff]
    %v1838 = vld [vmem:[#allocation12 + $0xc58] sm:$0xff]
    %v1839 = vld [vmem:[#allocation12 + $0xc60] sm:$0xff]
    %v1840 = vld [vmem:[#allocation12 + $0xc68] sm:$0xff]
    %v1841 = vld [vmem:[#allocation12 + $0xc70] sm:$0xff]
    %v1842 = vld [vmem:[#allocation12 + $0xc78] sm:$0xff]
    %v1843 = vld [vmem:[#allocation12 + $0xc80] sm:$0xff]
    %v1844 = vld [vmem:[#allocation12 + $0xc88] sm:$0xff]
    %v1845 = vld [vmem:[#allocation12 + $0xc90] sm:$0xff]
    %v1846 = vld [vmem:[#allocation12 + $0xc98] sm:$0xff]
    %v1847 = vld [vmem:[#allocation12 + $0xca0] sm:$0xff]
    %v1848 = vld [vmem:[#allocation12 + $0xca8] sm:$0xff]
    %v1849 = vld [vmem:[#allocation12 + $0xcb0] sm:$0xff]
    %v1850 = vld [vmem:[#allocation12 + $0xcb8] sm:$0xff]
    %v1851 = vld [vmem:[#allocation12 + $0xcc0] sm:$0xff]
    %v1852 = vld [vmem:[#allocation12 + $0xcc8] sm:$0xff]
    %v1853 = vld [vmem:[#allocation12 + $0xcd0] sm:$0xff]
    %v1854 = vld [vmem:[#allocation12 + $0xcd8] sm:$0xff]
    %v1855 = vld [vmem:[#allocation12 + $0xce0] sm:$0xff]
    %v1856 = vld [vmem:[#allocation12 + $0xce8] sm:$0xff]
    %v1857 = vld [vmem:[#allocation12 + $0xcf0] sm:$0xff]
    %v1858 = vld [vmem:[#allocation12 + $0xcf8] sm:$0xff]
    %v1859 = vld [vmem:[#allocation12 + $0xd00] sm:$0xff]
    %v1860 = vld [vmem:[#allocation12 + $0xd08] sm:$0xff]
    %v1861 = vld [vmem:[#allocation12 + $0xd10] sm:$0xff]
    %v1862 = vld [vmem:[#allocation12 + $0xd18] sm:$0xff]
    %v1863 = vld [vmem:[#allocation12 + $0xd20] sm:$0xff]
    %v1864 = vld [vmem:[#allocation12 + $0xd28] sm:$0xff]
    %v1865 = vld [vmem:[#allocation12 + $0xd30] sm:$0xff]
    %v1866 = vld [vmem:[#allocation12 + $0xd38] sm:$0xff]
    %v1867 = vld [vmem:[#allocation12 + $0xd40] sm:$0xff]
    %v1868 = vld [vmem:[#allocation12 + $0xd48] sm:$0xff]
    %v1869 = vld [vmem:[#allocation12 + $0xd50] sm:$0xff]
    %v1870 = vld [vmem:[#allocation12 + $0xd58] sm:$0xff]
    %v1871 = vld [vmem:[#allocation12 + $0xd60] sm:$0xff]
    %v1872 = vld [vmem:[#allocation12 + $0xd68] sm:$0xff]
    %v1873 = vld [vmem:[#allocation12 + $0xd70] sm:$0xff]
    %v1874 = vld [vmem:[#allocation12 + $0xd78] sm:$0xff]
    %v1875 = vld [vmem:[#allocation12 + $0xd80] sm:$0xff]
    %v1876 = vld [vmem:[#allocation12 + $0xd88] sm:$0xff]
    %v1877 = vld [vmem:[#allocation12 + $0xd90] sm:$0xff]
    %v1878 = vld [vmem:[#allocation12 + $0xd98] sm:$0xff]
    %v1879 = vld [vmem:[#allocation12 + $0xda0] sm:$0xff]
    %v1880 = vld [vmem:[#allocation12 + $0xda8] sm:$0xff]
    %v1881 = vld [vmem:[#allocation12 + $0xdb0] sm:$0xff]
    %v1882 = vld [vmem:[#allocation12 + $0xdb8] sm:$0xff]
    %v1883 = vld [vmem:[#allocation12 + $0xdc0] sm:$0xff]
    %v1884 = vld [vmem:[#allocation12 + $0xdc8] sm:$0xff]
    %v1885 = vld [vmem:[#allocation12 + $0xdd0] sm:$0xff]
    %v1886 = vld [vmem:[#allocation12 + $0xdd8] sm:$0xff]
    %v1887 = vld [vmem:[#allocation12 + $0xde0] sm:$0xff]
    %v1888 = vld [vmem:[#allocation12 + $0xde8] sm:$0xff]
    %v1889 = vld [vmem:[#allocation12 + $0xdf0] sm:$0xff]
    %v1890 = vld [vmem:[#allocation12 + $0xdf8] sm:$0xff]
    %v1891 = vld [vmem:[#allocation12 + $0xe00] sm:$0xff]
    %v1892 = vld [vmem:[#allocation12 + $0xe08] sm:$0xff]
    %v1893 = vld [vmem:[#allocation12 + $0xe10] sm:$0xff]
    %v1894 = vld [vmem:[#allocation12 + $0xe18] sm:$0xff]
    %v1895 = vld [vmem:[#allocation12 + $0xe20] sm:$0xff]
    %v1896 = vld [vmem:[#allocation12 + $0xe28] sm:$0xff]
    %v1897 = vld [vmem:[#allocation12 + $0xe30] sm:$0xff]
    %v1898 = vld [vmem:[#allocation12 + $0xe38] sm:$0xff]
    %v1899 = vld [vmem:[#allocation12 + $0xe40] sm:$0xff]
    %v1900 = vld [vmem:[#allocation12 + $0xe48] sm:$0xff]
    %v1901 = vld [vmem:[#allocation12 + $0xe50] sm:$0xff]
    %v1902 = vld [vmem:[#allocation12 + $0xe58] sm:$0xff]
    %v1903 = vld [vmem:[#allocation12 + $0xe60] sm:$0xff]
    %v1904 = vld [vmem:[#allocation12 + $0xe68] sm:$0xff]
    %v1905 = vld [vmem:[#allocation12 + $0xe70] sm:$0xff]
    %v1906 = vld [vmem:[#allocation12 + $0xe78] sm:$0xff]
    %v1907 = vld [vmem:[#allocation12 + $0xe80] sm:$0xff]
    %v1908 = vld [vmem:[#allocation12 + $0xe88] sm:$0xff]
    %v1909 = vld [vmem:[#allocation12 + $0xe90] sm:$0xff]
    %v1910 = vld [vmem:[#allocation12 + $0xe98] sm:$0xff]
    %v1911 = vld [vmem:[#allocation12 + $0xea0] sm:$0xff]
    %v1912 = vld [vmem:[#allocation12 + $0xea8] sm:$0xff]
    %v1913 = vld [vmem:[#allocation12 + $0xeb0] sm:$0xff]
    %v1914 = vld [vmem:[#allocation12 + $0xeb8] sm:$0xff]
    %v1915 = vld [vmem:[#allocation12 + $0xec0] sm:$0xff]
    %v1916 = vld [vmem:[#allocation12 + $0xec8] sm:$0xff]
    %v1917 = vld [vmem:[#allocation12 + $0xed0] sm:$0xff]
    %v1918 = vld [vmem:[#allocation12 + $0xed8] sm:$0xff]
    %v1919 = vld [vmem:[#allocation12 + $0xee0] sm:$0xff]
    %v1920 = vld [vmem:[#allocation12 + $0xee8] sm:$0xff]
    %v1921 = vld [vmem:[#allocation12 + $0xef0] sm:$0xff]
    %v1922 = vld [vmem:[#allocation12 + $0xef8] sm:$0xff]
    %v1923 = vld [vmem:[#allocation12 + $0xf00] sm:$0xff]
    %v1924 = vld [vmem:[#allocation12 + $0xf08] sm:$0xff]
    %v1925 = vld [vmem:[#allocation12 + $0xf10] sm:$0xff]
    %v1926 = vld [vmem:[#allocation12 + $0xf18] sm:$0xff]
    %v1927 = vld [vmem:[#allocation12 + $0xf20] sm:$0xff]
    %v1928 = vld [vmem:[#allocation12 + $0xf28] sm:$0xff]
    %v1929 = vld [vmem:[#allocation12 + $0xf30] sm:$0xff]
    %v1930 = vld [vmem:[#allocation12 + $0xf38] sm:$0xff]
    %v1931 = vld [vmem:[#allocation12 + $0xf40] sm:$0xff]
    %v1932 = vld [vmem:[#allocation12 + $0xf48] sm:$0xff]
    %v1933 = vld [vmem:[#allocation12 + $0xf50] sm:$0xff]
    %v1934 = vld [vmem:[#allocation12 + $0xf58] sm:$0xff]
    %v1935 = vld [vmem:[#allocation12 + $0xf60] sm:$0xff]
    %v1936 = vld [vmem:[#allocation12 + $0xf68] sm:$0xff]
    %v1937 = vld [vmem:[#allocation12 + $0xf70] sm:$0xff]
    %v1938 = vld [vmem:[#allocation12 + $0xf78] sm:$0xff]
    %v1939 = vld [vmem:[#allocation12 + $0xf80] sm:$0xff]
    %v1940 = vld [vmem:[#allocation12 + $0xf88] sm:$0xff]
    %v1941 = vld [vmem:[#allocation12 + $0xf90] sm:$0xff]
    %v1942 = vld [vmem:[#allocation12 + $0xf98] sm:$0xff]
    %v1943 = vld [vmem:[#allocation12 + $0xfa0] sm:$0xff]
    %v1944 = vld [vmem:[#allocation12 + $0xfa8] sm:$0xff]
    %v1945 = vld [vmem:[#allocation12 + $0xfb0] sm:$0xff]
    %v1946 = vld [vmem:[#allocation12 + $0xfb8] sm:$0xff]
    %v1947 = vld [vmem:[#allocation12 + $0xfc0] sm:$0xff]
    %v1948 = vld [vmem:[#allocation12 + $0xfc8] sm:$0xff]
    %v1949 = vld [vmem:[#allocation12 + $0xfd0] sm:$0xff]
    %v1950 = vld [vmem:[#allocation12 + $0xfd8] sm:$0xff]
    %v1951 = vld [vmem:[#allocation12 + $0xfe0] sm:$0xff]
    %v1952 = vld [vmem:[#allocation12 + $0xfe8] sm:$0xff]
    %v1953 = vld [vmem:[#allocation12 + $0xff0] sm:$0xff]
    %v1954 = vld [vmem:[#allocation12 + $0xff8] sm:$0xff]
    %v1955 = vld [vmem:[#allocation12 + $0x1000] sm:$0xff]
    %v1956 = vld [vmem:[#allocation12 + $0x1008] sm:$0xff]
    %v1957 = vld [vmem:[#allocation12 + $0x1010] sm:$0xff]
    %v1958 = vld [vmem:[#allocation12 + $0x1018] sm:$0xff]
    %v1959 = vld [vmem:[#allocation12 + $0x1020] sm:$0xff]
    %v1960 = vld [vmem:[#allocation12 + $0x1028] sm:$0xff]
    %v1961 = vld [vmem:[#allocation12 + $0x1030] sm:$0xff]
    %v1962 = vld [vmem:[#allocation12 + $0x1038] sm:$0xff]
    %v1963 = vld [vmem:[#allocation12 + $0x1040] sm:$0xff]
    %v1964 = vld [vmem:[#allocation12 + $0x1048] sm:$0xff]
    %v1965 = vld [vmem:[#allocation12 + $0x1050] sm:$0xff]
    %v1966 = vld [vmem:[#allocation12 + $0x1058] sm:$0xff]
    %v1967 = vld [vmem:[#allocation12 + $0x1060] sm:$0xff]
    %v1968 = vld [vmem:[#allocation12 + $0x1068] sm:$0xff]
    %v1969 = vld [vmem:[#allocation12 + $0x1070] sm:$0xff]
    %v1970 = vld [vmem:[#allocation12 + $0x1078] sm:$0xff]
    %v1971 = vld [vmem:[#allocation12 + $0x1080] sm:$0xff]
    %v1972 = vld [vmem:[#allocation12 + $0x1088] sm:$0xff]
    %v1973 = vld [vmem:[#allocation12 + $0x1090] sm:$0xff]
    %v1974 = vld [vmem:[#allocation12 + $0x1098] sm:$0xff]
    %v1975 = vld [vmem:[#allocation12 + $0x10a0] sm:$0xff]
    %v1976 = vld [vmem:[#allocation12 + $0x10a8] sm:$0xff]
    %v1977 = vld [vmem:[#allocation12 + $0x10b0] sm:$0xff]
    %v1978 = vld [vmem:[#allocation12 + $0x10b8] sm:$0xff]
    %v1979 = vld [vmem:[#allocation12 + $0x10c0] sm:$0xff]
    %v1980 = vld [vmem:[#allocation12 + $0x10c8] sm:$0xff]
    %v1981 = vld [vmem:[#allocation12 + $0x10d0] sm:$0xff]
    %v1982 = vld [vmem:[#allocation12 + $0x10d8] sm:$0xff]
    %v1983 = vld [vmem:[#allocation12 + $0x10e0] sm:$0xff]
    %v1984 = vld [vmem:[#allocation12 + $0x10e8] sm:$0xff]
    %v1985 = vld [vmem:[#allocation12 + $0x10f0] sm:$0xff]
    %v1986 = vld [vmem:[#allocation12 + $0x10f8] sm:$0xff]
    %v1987 = vld [vmem:[#allocation12 + $0x1100] sm:$0xff]
    %v1988 = vld [vmem:[#allocation12 + $0x1108] sm:$0xff]
    %v1989 = vld [vmem:[#allocation12 + $0x1110] sm:$0xff]
    %v1990 = vld [vmem:[#allocation12 + $0x1118] sm:$0xff]
    %v1991 = vld [vmem:[#allocation12 + $0x1120] sm:$0xff]
    %v1992 = vld [vmem:[#allocation12 + $0x1128] sm:$0xff]
    %v1993 = vld [vmem:[#allocation12 + $0x1130] sm:$0xff]
    %v1994 = vld [vmem:[#allocation12 + $0x1138] sm:$0xff]
    %v1995 = vld [vmem:[#allocation12 + $0x1140] sm:$0xff]
    %v1996 = vld [vmem:[#allocation12 + $0x1148] sm:$0xff]
    %v1997 = vld [vmem:[#allocation12 + $0x1150] sm:$0xff]
    %v1998 = vld [vmem:[#allocation12 + $0x1158] sm:$0xff]
    %v1999 = vld [vmem:[#allocation12 + $0x1160] sm:$0xff]
    %v2000 = vld [vmem:[#allocation12 + $0x1168] sm:$0xff]
    %v2001 = vld [vmem:[#allocation12 + $0x1170] sm:$0xff]
    %v2002 = vld [vmem:[#allocation12 + $0x1178] sm:$0xff]
    %v2003 = vld [vmem:[#allocation12 + $0x1180] sm:$0xff]
    %v2004 = vld [vmem:[#allocation12 + $0x1188] sm:$0xff]
    %v2005 = vld [vmem:[#allocation12 + $0x1190] sm:$0xff]
    %v2006 = vld [vmem:[#allocation12 + $0x1198] sm:$0xff]
    %v2007 = vld [vmem:[#allocation12 + $0x11a0] sm:$0xff]
    %v2008 = vld [vmem:[#allocation12 + $0x11a8] sm:$0xff]
    %v2009 = vld [vmem:[#allocation12 + $0x11b0] sm:$0xff]
    %v2010 = vld [vmem:[#allocation12 + $0x11b8] sm:$0xff]
    %v2011 = vld [vmem:[#allocation12 + $0x11c0] sm:$0xff]
    %v2012 = vld [vmem:[#allocation12 + $0x11c8] sm:$0xff]
    %v2013 = vld [vmem:[#allocation12 + $0x11d0] sm:$0xff]
    %v2014 = vld [vmem:[#allocation12 + $0x11d8] sm:$0xff]
    %v2015 = vld [vmem:[#allocation12 + $0x11e0] sm:$0xff]
    %v2016 = vld [vmem:[#allocation12 + $0x11e8] sm:$0xff]
    %v2017 = vld [vmem:[#allocation12 + $0x11f0] sm:$0xff]
    %v2018 = vld [vmem:[#allocation12 + $0x11f8] sm:$0xff]
    %v2019 = vld [vmem:[#allocation12 + $0x1200] sm:$0xff]
    %v2020 = vld [vmem:[#allocation12 + $0x1208] sm:$0xff]
    %v2021 = vld [vmem:[#allocation12 + $0x1210] sm:$0xff]
    %v2022 = vld [vmem:[#allocation12 + $0x1218] sm:$0xff]
    %v2023 = vld [vmem:[#allocation12 + $0x1220] sm:$0xff]
    %v2024 = vld [vmem:[#allocation12 + $0x1228] sm:$0xff]
    %v2025 = vld [vmem:[#allocation12 + $0x1230] sm:$0xff]
    %v2026 = vld [vmem:[#allocation12 + $0x1238] sm:$0xff]
    %v2027 = vld [vmem:[#allocation12 + $0x1240] sm:$0xff]
    %v2028 = vld [vmem:[#allocation12 + $0x1248] sm:$0xff]
    %v2029 = vld [vmem:[#allocation12 + $0x1250] sm:$0xff]
    %v2030 = vld [vmem:[#allocation12 + $0x1258] sm:$0xff]
    %v2031 = vld [vmem:[#allocation12 + $0x1260] sm:$0xff]
    %v2032 = vld [vmem:[#allocation12 + $0x1268] sm:$0xff]
    %v2033 = vld [vmem:[#allocation12 + $0x1270] sm:$0xff]
    %v2034 = vld [vmem:[#allocation12 + $0x1278] sm:$0xff]
    %v2035 = vld [vmem:[#allocation12 + $0x1280] sm:$0xff]
    %v2036 = vld [vmem:[#allocation12 + $0x1288] sm:$0xff]
    %v2037 = vld [vmem:[#allocation12 + $0x1290] sm:$0xff]
    %v2038 = vld [vmem:[#allocation12 + $0x1298] sm:$0xff]
    %v2039 = vld [vmem:[#allocation12 + $0x12a0] sm:$0xff]
    %v2040 = vld [vmem:[#allocation12 + $0x12a8] sm:$0xff]
    %v2041 = vld [vmem:[#allocation12 + $0x12b0] sm:$0xff]
    %v2042 = vld [vmem:[#allocation12 + $0x12b8] sm:$0xff]
    %v2043 = vld [vmem:[#allocation12 + $0x12c0] sm:$0xff]
    %v2044 = vld [vmem:[#allocation12 + $0x12c8] sm:$0xff]
    %v2045 = vld [vmem:[#allocation12 + $0x12d0] sm:$0xff]
    %v2046 = vld [vmem:[#allocation12 + $0x12d8] sm:$0xff]
    %v2047 = vld [vmem:[#allocation12 + $0x12e0] sm:$0xff]
    %v2048 = vld [vmem:[#allocation12 + $0x12e8] sm:$0xff]
    %v2049 = vld [vmem:[#allocation12 + $0x12f0] sm:$0xff]
    %v2050 = vld [vmem:[#allocation12 + $0x12f8] sm:$0xff]
    %v2051 = vld [vmem:[#allocation12 + $0x1300] sm:$0xff]
    %v2052 = vld [vmem:[#allocation12 + $0x1308] sm:$0xff]
    %v2053 = vld [vmem:[#allocation12 + $0x1310] sm:$0xff]
    %v2054 = vld [vmem:[#allocation12 + $0x1318] sm:$0xff]
    %v2055 = vld [vmem:[#allocation12 + $0x1320] sm:$0xff]
    %v2056 = vld [vmem:[#allocation12 + $0x1328] sm:$0xff]
    %v2057 = vld [vmem:[#allocation12 + $0x1330] sm:$0xff]
    %v2058 = vld [vmem:[#allocation12 + $0x1338] sm:$0xff]
    %v2059 = vld [vmem:[#allocation12 + $0x1340] sm:$0xff]
    %v2060 = vld [vmem:[#allocation12 + $0x1348] sm:$0xff]
    %v2061 = vld [vmem:[#allocation12 + $0x1350] sm:$0xff]
    %v2062 = vld [vmem:[#allocation12 + $0x1358] sm:$0xff]
    %v2063 = vld [vmem:[#allocation12 + $0x1360] sm:$0xff]
    %v2064 = vld [vmem:[#allocation12 + $0x1368] sm:$0xff]
    %v2065 = vld [vmem:[#allocation12 + $0x1370] sm:$0xff]
    %v2066 = vld [vmem:[#allocation12 + $0x1378] sm:$0xff]
    %v2067 = vld [vmem:[#allocation12 + $0x1380] sm:$0xff]
    %v2068 = vld [vmem:[#allocation12 + $0x1388] sm:$0xff]
    %v2069 = vld [vmem:[#allocation12 + $0x1390] sm:$0xff]
    %v2070 = vld [vmem:[#allocation12 + $0x1398] sm:$0xff]
    %v2071 = vld [vmem:[#allocation12 + $0x13a0] sm:$0xff]
    %v2072 = vld [vmem:[#allocation12 + $0x13a8] sm:$0xff]
    %v2073 = vld [vmem:[#allocation12 + $0x13b0] sm:$0xff]
    %v2074 = vld [vmem:[#allocation12 + $0x13b8] sm:$0xff]
    %v2075 = vld [vmem:[#allocation12 + $0x13c0] sm:$0xff]
    %v2076 = vld [vmem:[#allocation12 + $0x13c8] sm:$0xff]
    %v2077 = vld [vmem:[#allocation12 + $0x13d0] sm:$0xff]
    %v2078 = vld [vmem:[#allocation12 + $0x13d8] sm:$0xff]
    %v2079 = vld [vmem:[#allocation12 + $0x13e0] sm:$0xff]
    %v2080 = vld [vmem:[#allocation12 + $0x13e8] sm:$0xff]
    %v2081 = vld [vmem:[#allocation12 + $0x13f0] sm:$0xff]
    %v2082 = vld [vmem:[#allocation12 + $0x13f8] sm:$0xff]
    %v2083 = vld [vmem:[#allocation12 + $0x1400] sm:$0xff]
    %v2084 = vld [vmem:[#allocation12 + $0x1408] sm:$0xff]
    %v2085 = vld [vmem:[#allocation12 + $0x1410] sm:$0xff]
    %v2086 = vld [vmem:[#allocation12 + $0x1418] sm:$0xff]
    %v2087 = vld [vmem:[#allocation12 + $0x1420] sm:$0xff]
    %v2088 = vld [vmem:[#allocation12 + $0x1428] sm:$0xff]
    %v2089 = vld [vmem:[#allocation12 + $0x1430] sm:$0xff]
    %v2090 = vld [vmem:[#allocation12 + $0x1438] sm:$0xff]
    %v2091 = vld [vmem:[#allocation12 + $0x1440] sm:$0xff]
    %v2092 = vld [vmem:[#allocation12 + $0x1448] sm:$0xff]
    %v2093 = vld [vmem:[#allocation12 + $0x1450] sm:$0xff]
    %v2094 = vld [vmem:[#allocation12 + $0x1458] sm:$0xff]
    %v2095 = vld [vmem:[#allocation12 + $0x1460] sm:$0xff]
    %v2096 = vld [vmem:[#allocation12 + $0x1468] sm:$0xff]
    %v2097 = vld [vmem:[#allocation12 + $0x1470] sm:$0xff]
    %v2098 = vld [vmem:[#allocation12 + $0x1478] sm:$0xff]
    %v2099 = vld [vmem:[#allocation12 + $0x1480] sm:$0xff]
    %v2100 = vld [vmem:[#allocation12 + $0x1488] sm:$0xff]
    %v2101 = vld [vmem:[#allocation12 + $0x1490] sm:$0xff]
    %v2102 = vld [vmem:[#allocation12 + $0x1498] sm:$0xff]
    %v2103 = vld [vmem:[#allocation12 + $0x14a0] sm:$0xff]
    %v2104 = vld [vmem:[#allocation12 + $0x14a8] sm:$0xff]
    %v2105 = vld [vmem:[#allocation12 + $0x14b0] sm:$0xff]
    %v2106 = vld [vmem:[#allocation12 + $0x14b8] sm:$0xff]
    %v2107 = vld [vmem:[#allocation12 + $0x14c0] sm:$0xff]
    %v2108 = vld [vmem:[#allocation12 + $0x14c8] sm:$0xff]
    %v2109 = vld [vmem:[#allocation12 + $0x14d0] sm:$0xff]
    %v2110 = vld [vmem:[#allocation12 + $0x14d8] sm:$0xff]
    %v2111 = vld [vmem:[#allocation12 + $0x14e0] sm:$0xff]
    %v2112 = vld [vmem:[#allocation12 + $0x14e8] sm:$0xff]
    %v2113 = vld [vmem:[#allocation12 + $0x14f0] sm:$0xff]
    %v2114 = vld [vmem:[#allocation12 + $0x14f8] sm:$0xff]
    %v2115 = vld [vmem:[#allocation12 + $0x1500] sm:$0xff]
    %v2116 = vld [vmem:[#allocation12 + $0x1508] sm:$0xff]
    %v2117 = vld [vmem:[#allocation12 + $0x1510] sm:$0xff]
    %v2118 = vld [vmem:[#allocation12 + $0x1518] sm:$0xff]
    %v2119 = vld [vmem:[#allocation12 + $0x1520] sm:$0xff]
    %v2120 = vld [vmem:[#allocation12 + $0x1528] sm:$0xff]
    %v2121 = vld [vmem:[#allocation12 + $0x1530] sm:$0xff]
    %v2122 = vld [vmem:[#allocation12 + $0x1538] sm:$0xff]
    %v2123 = vld [vmem:[#allocation12 + $0x1540] sm:$0xff]
    %v2124 = vld [vmem:[#allocation12 + $0x1548] sm:$0xff]
    %v2125 = vld [vmem:[#allocation12 + $0x1550] sm:$0xff]
    %v2126 = vld [vmem:[#allocation12 + $0x1558] sm:$0xff]
    %v2127 = vld [vmem:[#allocation12 + $0x1560] sm:$0xff]
    %v2128 = vld [vmem:[#allocation12 + $0x1568] sm:$0xff]
    %v2129 = vld [vmem:[#allocation12 + $0x1570] sm:$0xff]
    %v2130 = vld [vmem:[#allocation12 + $0x1578] sm:$0xff]
    %v2131 = vld [vmem:[#allocation12 + $0x1580] sm:$0xff]
    %v2132 = vld [vmem:[#allocation12 + $0x1588] sm:$0xff]
    %v2133 = vld [vmem:[#allocation12 + $0x1590] sm:$0xff]
    %v2134 = vld [vmem:[#allocation12 + $0x1598] sm:$0xff]
    %v2135 = vld [vmem:[#allocation12 + $0x15a0] sm:$0xff]
    %v2136 = vld [vmem:[#allocation12 + $0x15a8] sm:$0xff]
    %v2137 = vld [vmem:[#allocation12 + $0x15b0] sm:$0xff]
    %v2138 = vld [vmem:[#allocation12 + $0x15b8] sm:$0xff]
    %v2139 = vld [vmem:[#allocation12 + $0x15c0] sm:$0xff]
    %v2140 = vld [vmem:[#allocation12 + $0x15c8] sm:$0xff]
    %v2141 = vld [vmem:[#allocation12 + $0x15d0] sm:$0xff]
    %v2142 = vld [vmem:[#allocation12 + $0x15d8] sm:$0xff]
    %v2143 = vld [vmem:[#allocation12 + $0x15e0] sm:$0xff]
    %v2144 = vld [vmem:[#allocation12 + $0x15e8] sm:$0xff]
    %v2145 = vld [vmem:[#allocation12 + $0x15f0] sm:$0xff]
    %v2146 = vld [vmem:[#allocation12 + $0x15f8] sm:$0xff]
    %v2147 = vld [vmem:[#allocation12 + $0x1600] sm:$0xff]
    %v2148 = vld [vmem:[#allocation12 + $0x1608] sm:$0xff]
    %v2149 = vld [vmem:[#allocation12 + $0x1610] sm:$0xff]
    %v2150 = vld [vmem:[#allocation12 + $0x1618] sm:$0xff]
    %v2151 = vld [vmem:[#allocation12 + $0x1620] sm:$0xff]
    %v2152 = vld [vmem:[#allocation12 + $0x1628] sm:$0xff]
    %v2153 = vld [vmem:[#allocation12 + $0x1630] sm:$0xff]
    %v2154 = vld [vmem:[#allocation12 + $0x1638] sm:$0xff]
    %v2155 = vld [vmem:[#allocation12 + $0x1640] sm:$0xff]
    %v2156 = vld [vmem:[#allocation12 + $0x1648] sm:$0xff]
    %v2157 = vld [vmem:[#allocation12 + $0x1650] sm:$0xff]
    %v2158 = vld [vmem:[#allocation12 + $0x1658] sm:$0xff]
    %v2159 = vld [vmem:[#allocation12 + $0x1660] sm:$0xff]
    %v2160 = vld [vmem:[#allocation12 + $0x1668] sm:$0xff]
    %v2161 = vld [vmem:[#allocation12 + $0x1670] sm:$0xff]
    %v2162 = vld [vmem:[#allocation12 + $0x1678] sm:$0xff]
    %v2163 = vld [vmem:[#allocation12 + $0x1680] sm:$0xff]
    %v2164 = vld [vmem:[#allocation12 + $0x1688] sm:$0xff]
    %v2165 = vld [vmem:[#allocation12 + $0x1690] sm:$0xff]
    %v2166 = vld [vmem:[#allocation12 + $0x1698] sm:$0xff]
    %v2167 = vld [vmem:[#allocation12 + $0x16a0] sm:$0xff]
    %v2168 = vld [vmem:[#allocation12 + $0x16a8] sm:$0xff]
    %v2169 = vld [vmem:[#allocation12 + $0x16b0] sm:$0xff]
    %v2170 = vld [vmem:[#allocation12 + $0x16b8] sm:$0xff]
    %v2171 = vld [vmem:[#allocation12 + $0x16c0] sm:$0xff]
    %v2172 = vld [vmem:[#allocation12 + $0x16c8] sm:$0xff]
    %v2173 = vld [vmem:[#allocation12 + $0x16d0] sm:$0xff]
    %v2174 = vld [vmem:[#allocation12 + $0x16d8] sm:$0xff]
    %v2175 = vld [vmem:[#allocation12 + $0x16e0] sm:$0xff]
    %v2176 = vld [vmem:[#allocation12 + $0x16e8] sm:$0xff]
    %v2177 = vld [vmem:[#allocation12 + $0x16f0] sm:$0xff]
    %v2178 = vld [vmem:[#allocation12 + $0x16f8] sm:$0xff]
    %v2179 = vld [vmem:[#allocation12 + $0x1700] sm:$0xff]
    %v2180 = vld [vmem:[#allocation12 + $0x1708] sm:$0xff]
    %v2181 = vld [vmem:[#allocation12 + $0x1710] sm:$0xff]
    %v2182 = vld [vmem:[#allocation12 + $0x1718] sm:$0xff]
    %v2183 = vld [vmem:[#allocation12 + $0x1720] sm:$0xff]
    %v2184 = vld [vmem:[#allocation12 + $0x1728] sm:$0xff]
    %v2185 = vld [vmem:[#allocation12 + $0x1730] sm:$0xff]
    %v2186 = vld [vmem:[#allocation12 + $0x1738] sm:$0xff]
    %v2187 = vld [vmem:[#allocation12 + $0x1740] sm:$0xff]
    %v2188 = vld [vmem:[#allocation12 + $0x1748] sm:$0xff]
    %v2189 = vld [vmem:[#allocation12 + $0x1750] sm:$0xff]
    %v2190 = vld [vmem:[#allocation12 + $0x1758] sm:$0xff]
    %v2191 = vld [vmem:[#allocation12 + $0x1760] sm:$0xff]
    %v2192 = vld [vmem:[#allocation12 + $0x1768] sm:$0xff]
    %v2193 = vld [vmem:[#allocation12 + $0x1770] sm:$0xff]
    %v2194 = vld [vmem:[#allocation12 + $0x1778] sm:$0xff]
    %v2195 = vld [vmem:[#allocation12 + $0x1780] sm:$0xff]
    %v2196 = vld [vmem:[#allocation12 + $0x1788] sm:$0xff]
    %v2197 = vld [vmem:[#allocation12 + $0x1790] sm:$0xff]
    %v2198 = vld [vmem:[#allocation12 + $0x1798] sm:$0xff]
    %v2199 = vld [vmem:[#allocation12 + $0x17a0] sm:$0xff]
    %v2200 = vld [vmem:[#allocation12 + $0x17a8] sm:$0xff]
    %v2201 = vld [vmem:[#allocation12 + $0x17b0] sm:$0xff]
    %v2202 = vld [vmem:[#allocation12 + $0x17b8] sm:$0xff]
    %v2203 = vld [vmem:[#allocation12 + $0x17c0] sm:$0xff]
    %v2204 = vld [vmem:[#allocation12 + $0x17c8] sm:$0xff]
    %v2205 = vld [vmem:[#allocation12 + $0x17d0] sm:$0xff]
    %v2206 = vld [vmem:[#allocation12 + $0x17d8] sm:$0xff]
    %v2207 = vld [vmem:[#allocation12 + $0x17e0] sm:$0xff]
    %v2208 = vld [vmem:[#allocation12 + $0x17e8] sm:$0xff]
    %v2209 = vld [vmem:[#allocation12 + $0x17f0] sm:$0xff]
    %v2210 = vld [vmem:[#allocation12 + $0x17f8] sm:$0xff]
    %v2211 = vld [vmem:[#allocation12 + $0x1800] sm:$0xff]
    %v2212 = vld [vmem:[#allocation12 + $0x1808] sm:$0xff]
    %v2213 = vld [vmem:[#allocation12 + $0x1810] sm:$0xff]
    %v2214 = vld [vmem:[#allocation12 + $0x1818] sm:$0xff]
    %v2215 = vld [vmem:[#allocation12 + $0x1820] sm:$0xff]
    %v2216 = vld [vmem:[#allocation12 + $0x1828] sm:$0xff]
    %v2217 = vld [vmem:[#allocation12 + $0x1830] sm:$0xff]
    %v2218 = vld [vmem:[#allocation12 + $0x1838] sm:$0xff]
    %v2219 = vld [vmem:[#allocation12 + $0x1840] sm:$0xff]
    %v2220 = vld [vmem:[#allocation12 + $0x1848] sm:$0xff]
    %v2221 = vld [vmem:[#allocation12 + $0x1850] sm:$0xff]
    %v2222 = vld [vmem:[#allocation12 + $0x1858] sm:$0xff]
    %v2223 = vld [vmem:[#allocation12 + $0x1860] sm:$0xff]
    %v2224 = vld [vmem:[#allocation12 + $0x1868] sm:$0xff]
    %v2225 = vld [vmem:[#allocation12 + $0x1870] sm:$0xff]
    %v2226 = vld [vmem:[#allocation12 + $0x1878] sm:$0xff]
    %v2227 = vld [vmem:[#allocation12 + $0x1880] sm:$0xff]
    %v2228 = vld [vmem:[#allocation12 + $0x1888] sm:$0xff]
    %v2229 = vld [vmem:[#allocation12 + $0x1890] sm:$0xff]
    %v2230 = vld [vmem:[#allocation12 + $0x1898] sm:$0xff]
    %v2231 = vld [vmem:[#allocation12 + $0x18a0] sm:$0xff]
    %v2232 = vld [vmem:[#allocation12 + $0x18a8] sm:$0xff]
    %v2233 = vld [vmem:[#allocation12 + $0x18b0] sm:$0xff]
    %v2234 = vld [vmem:[#allocation12 + $0x18b8] sm:$0xff]
    %v2235 = vld [vmem:[#allocation12 + $0x18c0] sm:$0xff]
    %v2236 = vld [vmem:[#allocation12 + $0x18c8] sm:$0xff]
    %v2237 = vld [vmem:[#allocation12 + $0x18d0] sm:$0xff]
    %v2238 = vld [vmem:[#allocation12 + $0x18d8] sm:$0xff]
    %v2239 = vld [vmem:[#allocation12 + $0x18e0] sm:$0xff]
    %v2240 = vld [vmem:[#allocation12 + $0x18e8] sm:$0xff]
    %v2241 = vld [vmem:[#allocation12 + $0x18f0] sm:$0xff]
    %v2242 = vld [vmem:[#allocation12 + $0x18f8] sm:$0xff]
    %v2243 = vld [vmem:[#allocation12 + $0x1900] sm:$0xff]
    %v2244 = vld [vmem:[#allocation12 + $0x1908] sm:$0xff]
    %v2245 = vld [vmem:[#allocation12 + $0x1910] sm:$0xff]
    %v2246 = vld [vmem:[#allocation12 + $0x1918] sm:$0xff]
    %v2247 = vld [vmem:[#allocation12 + $0x1920] sm:$0xff]
    %v2248 = vld [vmem:[#allocation12 + $0x1928] sm:$0xff]
    %v2249 = vld [vmem:[#allocation12 + $0x1930] sm:$0xff]
    %v2250 = vld [vmem:[#allocation12 + $0x1938] sm:$0xff]
    %v2251 = vld [vmem:[#allocation12 + $0x1940] sm:$0xff]
    %v2252 = vld [vmem:[#allocation12 + $0x1948] sm:$0xff]
    %v2253 = vld [vmem:[#allocation12 + $0x1950] sm:$0xff]
    %v2254 = vld [vmem:[#allocation12 + $0x1958] sm:$0xff]
    %v2255 = vld [vmem:[#allocation12 + $0x1960] sm:$0xff]
    %v2256 = vld [vmem:[#allocation12 + $0x1968] sm:$0xff]
    %v2257 = vld [vmem:[#allocation12 + $0x1970] sm:$0xff]
    %v2258 = vld [vmem:[#allocation12 + $0x1978] sm:$0xff]
    %v2259 = vld [vmem:[#allocation12 + $0x1980] sm:$0xff]
    %v2260 = vld [vmem:[#allocation12 + $0x1988] sm:$0xff]
    %v2261 = vld [vmem:[#allocation12 + $0x1990] sm:$0xff]
    %v2262 = vld [vmem:[#allocation12 + $0x1998] sm:$0xff]
    %v2263 = vld [vmem:[#allocation12 + $0x19a0] sm:$0xff]
    %v2264 = vld [vmem:[#allocation12 + $0x19a8] sm:$0xff]
    %v2265 = vld [vmem:[#allocation12 + $0x19b0] sm:$0xff]
    %v2266 = vld [vmem:[#allocation12 + $0x19b8] sm:$0xff]
    %v2267 = vld [vmem:[#allocation12 + $0x19c0] sm:$0xff]
    %v2268 = vld [vmem:[#allocation12 + $0x19c8] sm:$0xff]
    %v2269 = vld [vmem:[#allocation12 + $0x19d0] sm:$0xff]
    %v2270 = vld [vmem:[#allocation12 + $0x19d8] sm:$0xff]
    %v2271 = vld [vmem:[#allocation12 + $0x19e0] sm:$0xff]
    %v2272 = vld [vmem:[#allocation12 + $0x19e8] sm:$0xff]
    %v2273 = vld [vmem:[#allocation12 + $0x19f0] sm:$0xff]
    %v2274 = vld [vmem:[#allocation12 + $0x19f8] sm:$0xff]
    %v2275 = vld [vmem:[#allocation12 + $0x1a00] sm:$0xff]
    %v2276 = vld [vmem:[#allocation12 + $0x1a08] sm:$0xff]
    %v2277 = vld [vmem:[#allocation12 + $0x1a10] sm:$0xff]
    %v2278 = vld [vmem:[#allocation12 + $0x1a18] sm:$0xff]
    %v2279 = vld [vmem:[#allocation12 + $0x1a20] sm:$0xff]
    %v2280 = vld [vmem:[#allocation12 + $0x1a28] sm:$0xff]
    %v2281 = vld [vmem:[#allocation12 + $0x1a30] sm:$0xff]
    %v2282 = vld [vmem:[#allocation12 + $0x1a38] sm:$0xff]
    %v2283 = vld [vmem:[#allocation12 + $0x1a40] sm:$0xff]
    %v2284 = vld [vmem:[#allocation12 + $0x1a48] sm:$0xff]
    %v2285 = vld [vmem:[#allocation12 + $0x1a50] sm:$0xff]
    %v2286 = vld [vmem:[#allocation12 + $0x1a58] sm:$0xff]
    %v2287 = vld [vmem:[#allocation12 + $0x1a60] sm:$0xff]
    %v2288 = vld [vmem:[#allocation12 + $0x1a68] sm:$0xff]
    %v2289 = vld [vmem:[#allocation12 + $0x1a70] sm:$0xff]
    %v2290 = vld [vmem:[#allocation12 + $0x1a78] sm:$0xff]
    %v2291 = vld [vmem:[#allocation12 + $0x1a80] sm:$0xff]
    %v2292 = vld [vmem:[#allocation12 + $0x1a88] sm:$0xff]
    %v2293 = vld [vmem:[#allocation12 + $0x1a90] sm:$0xff]
    %v2294 = vld [vmem:[#allocation12 + $0x1a98] sm:$0xff]
    %v2295 = vld [vmem:[#allocation12 + $0x1aa0] sm:$0xff]
    %v2296 = vld [vmem:[#allocation12 + $0x1aa8] sm:$0xff]
    %v2297 = vld [vmem:[#allocation12 + $0x1ab0] sm:$0xff]
    %v2298 = vld [vmem:[#allocation12 + $0x1ab8] sm:$0xff]
    %v2299 = vld [vmem:[#allocation12 + $0x1ac0] sm:$0xff]
    %v2300 = vld [vmem:[#allocation12 + $0x1ac8] sm:$0xff]
    %v2301 = vld [vmem:[#allocation12 + $0x1ad0] sm:$0xff]
    %v2302 = vld [vmem:[#allocation12 + $0x1ad8] sm:$0xff]
    %v2303 = vld [vmem:[#allocation12 + $0x1ae0] sm:$0xff]
    %v2304 = vld [vmem:[#allocation12 + $0x1ae8] sm:$0xff]
    %v2305 = vld [vmem:[#allocation12 + $0x1af0] sm:$0xff]
    %v2306 = vld [vmem:[#allocation12 + $0x1af8] sm:$0xff]
    %v2307 = vld [vmem:[#allocation12 + $0x1b00] sm:$0xff]
    %v2308 = vld [vmem:[#allocation12 + $0x1b08] sm:$0xff]
    %v2309 = vld [vmem:[#allocation12 + $0x1b10] sm:$0xff]
    %v2310 = vld [vmem:[#allocation12 + $0x1b18] sm:$0xff]
    %v2311 = vld [vmem:[#allocation12 + $0x1b20] sm:$0xff]
    %v2312 = vld [vmem:[#allocation12 + $0x1b28] sm:$0xff]
    %v2313 = vld [vmem:[#allocation12 + $0x1b30] sm:$0xff]
    %v2314 = vld [vmem:[#allocation12 + $0x1b38] sm:$0xff]
    %v2315 = vld [vmem:[#allocation12 + $0x1b40] sm:$0xff]
    %v2316 = vld [vmem:[#allocation12 + $0x1b48] sm:$0xff]
    %v2317 = vld [vmem:[#allocation12 + $0x1b50] sm:$0xff]
    %v2318 = vld [vmem:[#allocation12 + $0x1b58] sm:$0xff]
    %v2319 = vld [vmem:[#allocation12 + $0x1b60] sm:$0xff]
    %v2320 = vld [vmem:[#allocation12 + $0x1b68] sm:$0xff]
    %v2321 = vld [vmem:[#allocation12 + $0x1b70] sm:$0xff]
    %v2322 = vld [vmem:[#allocation12 + $0x1b78] sm:$0xff]
    %v2323 = vld [vmem:[#allocation12 + $0x1b80] sm:$0xff]
    %v2324 = vld [vmem:[#allocation12 + $0x1b88] sm:$0xff]
    %v2325 = vld [vmem:[#allocation12 + $0x1b90] sm:$0xff]
    %v2326 = vld [vmem:[#allocation12 + $0x1b98] sm:$0xff]
    %v2327 = vld [vmem:[#allocation12 + $0x1ba0] sm:$0xff]
    %v2328 = vld [vmem:[#allocation12 + $0x1ba8] sm:$0xff]
    %v2329 = vld [vmem:[#allocation12 + $0x1bb0] sm:$0xff]
    %v2330 = vld [vmem:[#allocation12 + $0x1bb8] sm:$0xff]
    %v2331 = vld [vmem:[#allocation12 + $0x1bc0] sm:$0xff]
    %v2332 = vld [vmem:[#allocation12 + $0x1bc8] sm:$0xff]
    %v2333 = vld [vmem:[#allocation12 + $0x1bd0] sm:$0xff]
    %v2334 = vld [vmem:[#allocation12 + $0x1bd8] sm:$0xff]
    %v2335 = vld [vmem:[#allocation12 + $0x1be0] sm:$0xff]
    %v2336 = vld [vmem:[#allocation12 + $0x1be8] sm:$0xff]
    %v2337 = vld [vmem:[#allocation12 + $0x1bf0] sm:$0xff]
    %v2338 = vld [vmem:[#allocation12 + $0x1bf8] sm:$0xff]
    %v2339 = vld [vmem:[#allocation12 + $0x1c00] sm:$0xff]
    %v2340 = vld [vmem:[#allocation12 + $0x1c08] sm:$0xff]
    %v2341 = vld [vmem:[#allocation12 + $0x1c10] sm:$0xff]
    %v2342 = vld [vmem:[#allocation12 + $0x1c18] sm:$0xff]
    %v2343 = vld [vmem:[#allocation12 + $0x1c20] sm:$0xff]
    %v2344 = vld [vmem:[#allocation12 + $0x1c28] sm:$0xff]
    %v2345 = vld [vmem:[#allocation12 + $0x1c30] sm:$0xff]
    %v2346 = vld [vmem:[#allocation12 + $0x1c38] sm:$0xff]
    %v2347 = vld [vmem:[#allocation12 + $0x1c40] sm:$0xff]
    %v2348 = vld [vmem:[#allocation12 + $0x1c48] sm:$0xff]
    %v2349 = vld [vmem:[#allocation12 + $0x1c50] sm:$0xff]
    %v2350 = vld [vmem:[#allocation12 + $0x1c58] sm:$0xff]
    %v2351 = vld [vmem:[#allocation12 + $0x1c60] sm:$0xff]
    %v2352 = vld [vmem:[#allocation12 + $0x1c68] sm:$0xff]
    %v2353 = vld [vmem:[#allocation12 + $0x1c70] sm:$0xff]
    %v2354 = vld [vmem:[#allocation12 + $0x1c78] sm:$0xff]
    %v2355 = vld [vmem:[#allocation12 + $0x1c80] sm:$0xff]
    %v2356 = vld [vmem:[#allocation12 + $0x1c88] sm:$0xff]
    %v2357 = vld [vmem:[#allocation12 + $0x1c90] sm:$0xff]
    %v2358 = vld [vmem:[#allocation12 + $0x1c98] sm:$0xff]
    %v2359 = vld [vmem:[#allocation12 + $0x1ca0] sm:$0xff]
    %v2360 = vld [vmem:[#allocation12 + $0x1ca8] sm:$0xff]
    %v2361 = vld [vmem:[#allocation12 + $0x1cb0] sm:$0xff]
    %v2362 = vld [vmem:[#allocation12 + $0x1cb8] sm:$0xff]
    %v2363 = vld [vmem:[#allocation12 + $0x1cc0] sm:$0xff]
    %v2364 = vld [vmem:[#allocation12 + $0x1cc8] sm:$0xff]
    %v2365 = vld [vmem:[#allocation12 + $0x1cd0] sm:$0xff]
    %v2366 = vld [vmem:[#allocation12 + $0x1cd8] sm:$0xff]
    %v2367 = vld [vmem:[#allocation12 + $0x1ce0] sm:$0xff]
    %v2368 = vld [vmem:[#allocation12 + $0x1ce8] sm:$0xff]
    %v2369 = vld [vmem:[#allocation12 + $0x1cf0] sm:$0xff]
    %v2370 = vld [vmem:[#allocation12 + $0x1cf8] sm:$0xff]
    %v2371 = vld [vmem:[#allocation12 + $0x1d00] sm:$0xff]
    %v2372 = vld [vmem:[#allocation12 + $0x1d08] sm:$0xff]
    %v2373 = vld [vmem:[#allocation12 + $0x1d10] sm:$0xff]
    %v2374 = vld [vmem:[#allocation12 + $0x1d18] sm:$0xff]
    %v2375 = vld [vmem:[#allocation12 + $0x1d20] sm:$0xff]
    %v2376 = vld [vmem:[#allocation12 + $0x1d28] sm:$0xff]
    %v2377 = vld [vmem:[#allocation12 + $0x1d30] sm:$0xff]
    %v2378 = vld [vmem:[#allocation12 + $0x1d38] sm:$0xff]
    %v2379 = vld [vmem:[#allocation12 + $0x1d40] sm:$0xff]
    %v2380 = vld [vmem:[#allocation12 + $0x1d48] sm:$0xff]
    %v2381 = vld [vmem:[#allocation12 + $0x1d50] sm:$0xff]
    %v2382 = vld [vmem:[#allocation12 + $0x1d58] sm:$0xff]
    %v2383 = vld [vmem:[#allocation12 + $0x1d60] sm:$0xff]
    %v2384 = vld [vmem:[#allocation12 + $0x1d68] sm:$0xff]
    %v2385 = vld [vmem:[#allocation12 + $0x1d70] sm:$0xff]
    %v2386 = vld [vmem:[#allocation12 + $0x1d78] sm:$0xff]
    %v2387 = vld [vmem:[#allocation12 + $0x1d80] sm:$0xff]
    %v2388 = vld [vmem:[#allocation12 + $0x1d88] sm:$0xff]
    %v2389 = vld [vmem:[#allocation12 + $0x1d90] sm:$0xff]
    %v2390 = vld [vmem:[#allocation12 + $0x1d98] sm:$0xff]
    %v2391 = vld [vmem:[#allocation12 + $0x1da0] sm:$0xff]
    %v2392 = vld [vmem:[#allocation12 + $0x1da8] sm:$0xff]
    %v2393 = vld [vmem:[#allocation12 + $0x1db0] sm:$0xff]
    %v2394 = vld [vmem:[#allocation12 + $0x1db8] sm:$0xff]
    %v2395 = vld [vmem:[#allocation12 + $0x1dc0] sm:$0xff]
    %v2396 = vld [vmem:[#allocation12 + $0x1dc8] sm:$0xff]
    %v2397 = vld [vmem:[#allocation12 + $0x1dd0] sm:$0xff]
    %v2398 = vld [vmem:[#allocation12 + $0x1dd8] sm:$0xff]
    %v2399 = vld [vmem:[#allocation12 + $0x1de0] sm:$0xff]
    %v2400 = vld [vmem:[#allocation12 + $0x1de8] sm:$0xff]
    %v2401 = vld [vmem:[#allocation12 + $0x1df0] sm:$0xff]
    %v2402 = vld [vmem:[#allocation12 + $0x1df8] sm:$0xff]
    %v2403 = vld [vmem:[#allocation12 + $0x1e00] sm:$0xff]
    %v2404 = vld [vmem:[#allocation12 + $0x1e08] sm:$0xff]
    %v2405 = vld [vmem:[#allocation12 + $0x1e10] sm:$0xff]
    %v2406 = vld [vmem:[#allocation12 + $0x1e18] sm:$0xff]
    %v2407 = vld [vmem:[#allocation12 + $0x1e20] sm:$0xff]
    %v2408 = vld [vmem:[#allocation12 + $0x1e28] sm:$0xff]
    %v2409 = vld [vmem:[#allocation12 + $0x1e30] sm:$0xff]
    %v2410 = vld [vmem:[#allocation12 + $0x1e38] sm:$0xff]
    %v2411 = vld [vmem:[#allocation12 + $0x1e40] sm:$0xff]
    %v2412 = vld [vmem:[#allocation12 + $0x1e48] sm:$0xff]
    %v2413 = vld [vmem:[#allocation12 + $0x1e50] sm:$0xff]
    %v2414 = vld [vmem:[#allocation12 + $0x1e58] sm:$0xff]
    %v2415 = vld [vmem:[#allocation12 + $0x1e60] sm:$0xff]
    %v2416 = vld [vmem:[#allocation12 + $0x1e68] sm:$0xff]
    %v2417 = vld [vmem:[#allocation12 + $0x1e70] sm:$0xff]
    %v2418 = vld [vmem:[#allocation12 + $0x1e78] sm:$0xff]
    %v2419 = vld [vmem:[#allocation12 + $0x1e80] sm:$0xff]
    %v2420 = vld [vmem:[#allocation12 + $0x1e88] sm:$0xff]
    %v2421 = vld [vmem:[#allocation12 + $0x1e90] sm:$0xff]
    %v2422 = vld [vmem:[#allocation12 + $0x1e98] sm:$0xff]
    %v2423 = vld [vmem:[#allocation12 + $0x1ea0] sm:$0xff]
    %v2424 = vld [vmem:[#allocation12 + $0x1ea8] sm:$0xff]
    %v2425 = vld [vmem:[#allocation12 + $0x1eb0] sm:$0xff]
    %v2426 = vld [vmem:[#allocation12 + $0x1eb8] sm:$0xff]
    %v2427 = vld [vmem:[#allocation12 + $0x1ec0] sm:$0xff]
    %v2428 = vld [vmem:[#allocation12 + $0x1ec8] sm:$0xff]
    %v2429 = vld [vmem:[#allocation12 + $0x1ed0] sm:$0xff]
    %v2430 = vld [vmem:[#allocation12 + $0x1ed8] sm:$0xff]
    %v2431 = vld [vmem:[#allocation12 + $0x1ee0] sm:$0xff]
    %v2432 = vld [vmem:[#allocation12 + $0x1ee8] sm:$0xff]
    %v2433 = vld [vmem:[#allocation12 + $0x1ef0] sm:$0xff]
    %v2434 = vld [vmem:[#allocation12 + $0x1ef8] sm:$0xff]
    %v2435 = vld [vmem:[#allocation12 + $0x1f00] sm:$0xff]
    %v2436 = vld [vmem:[#allocation12 + $0x1f08] sm:$0xff]
    %v2437 = vld [vmem:[#allocation12 + $0x1f10] sm:$0xff]
    %v2438 = vld [vmem:[#allocation12 + $0x1f18] sm:$0xff]
    %v2439 = vld [vmem:[#allocation12 + $0x1f20] sm:$0xff]
    %v2440 = vld [vmem:[#allocation12 + $0x1f28] sm:$0xff]
    %v2441 = vld [vmem:[#allocation12 + $0x1f30] sm:$0xff]
    %v2442 = vld [vmem:[#allocation12 + $0x1f38] sm:$0xff]
    %v2443 = vld [vmem:[#allocation12 + $0x1f40] sm:$0xff]
    %v2444 = vld [vmem:[#allocation12 + $0x1f48] sm:$0xff]
    %v2445 = vld [vmem:[#allocation12 + $0x1f50] sm:$0xff]
    %v2446 = vld [vmem:[#allocation12 + $0x1f58] sm:$0xff]
    %v2447 = vld [vmem:[#allocation12 + $0x1f60] sm:$0xff]
    %v2448 = vld [vmem:[#allocation12 + $0x1f68] sm:$0xff]
    %v2449 = vld [vmem:[#allocation12 + $0x1f70] sm:$0xff]
    %v2450 = vld [vmem:[#allocation12 + $0x1f78] sm:$0xff]
    %v2451 = vld [vmem:[#allocation12 + $0x1f80] sm:$0xff]
    %v2452 = vld [vmem:[#allocation12 + $0x1f88] sm:$0xff]
    %v2453 = vld [vmem:[#allocation12 + $0x1f90] sm:$0xff]
    %v2454 = vld [vmem:[#allocation12 + $0x1f98] sm:$0xff]
    %v2455 = vld [vmem:[#allocation12 + $0x1fa0] sm:$0xff]
    %v2456 = vld [vmem:[#allocation12 + $0x1fa8] sm:$0xff]
    %v2457 = vld [vmem:[#allocation12 + $0x1fb0] sm:$0xff]
    %v2458 = vld [vmem:[#allocation12 + $0x1fb8] sm:$0xff]
    %v2459 = vld [vmem:[#allocation12 + $0x1fc0] sm:$0xff]
    %v2460 = vld [vmem:[#allocation12 + $0x1fc8] sm:$0xff]
    %v2461 = vld [vmem:[#allocation12 + $0x1fd0] sm:$0xff]
    %v2462 = vld [vmem:[#allocation12 + $0x1fd8] sm:$0xff]
    %v2463 = vld [vmem:[#allocation12 + $0x1fe0] sm:$0xff]
    %v2464 = vld [vmem:[#allocation12 + $0x1fe8] sm:$0xff]
    %v2465 = vld [vmem:[#allocation12 + $0x1ff0] sm:$0xff]
    %v2466 = vld [vmem:[#allocation12 + $0x1ff8] sm:$0xff]
    %v2467 = vld [vmem:[#allocation14] sm:$0xff]
    %v2469 = vperm.slane %v2467, 0
    %v2470 = vperm.slane %v2467, 1
    %v2471 = vperm.slane %v2467, 2
    %v2472 = vperm.slane %v2467, 3
    %v2473 = vperm.slane %v2467, 4
    %v2474 = vperm.slane %v2467, 5
    %v2475 = vperm.slane %v2467, 6
    %v2476 = vperm.slane %v2467, 7
    %2485 = vmatpush.msra.mxu0 %v1563
    %2486 = vmatpush.msra.mxu0 %v1555
    %2487 = vmatpush.msra.mxu0 %v1547
    %2488 = vmatpush.msra.mxu0 %v1539
    %2489 = vmatpush.msra.mxu0 %v1531
    %2490 = vmatpush.msra.mxu0 %v1523
    %2491 = vmatpush.msra.mxu0 %v1515
    %2492 = vmatpush.msra.mxu0 %v1507
    %2493 = vmatpush.msra.mxu0 %v1499
    %2494 = vmatpush.msra.mxu0 %v1491
    %2495 = vmatpush.msra.mxu0 %v1483
    %2496 = vmatpush.msra.mxu0 %v1475
    %2497 = vmatpush.msra.mxu0 %v1467
    %2498 = vmatpush.msra.mxu0 %v1459
    %2499 = vmatpush.msra.mxu0 %v1451
    %2500 = vmatpush.msra.mxu0 %v1443
    %2501 = vmatmul.f32.gmra.mxu0 %v1435
    %v2502 = vpop.f32.mrf.mxu0
    %v2503 = vadd.f32 %v2469, %v2502
    %2504 = vdwg.mxu0
    %2505 = vmatpush.msra.mxu0 %v1691
    %2506 = vmatpush.msra.mxu0 %v1683
    %2507 = vmatpush.msra.mxu0 %v1675
    %2508 = vmatpush.msra.mxu0 %v1667
    %2509 = vmatpush.msra.mxu0 %v1659
    %2510 = vmatpush.msra.mxu0 %v1651
    %2511 = vmatpush.msra.mxu0 %v1643
    %2512 = vmatpush.msra.mxu0 %v1635
    %2513 = vmatpush.msra.mxu0 %v1627
    %2514 = vmatpush.msra.mxu0 %v1619
    %2515 = vmatpush.msra.mxu0 %v1611
    %2516 = vmatpush.msra.mxu0 %v1603
    %2517 = vmatpush.msra.mxu0 %v1595
    %2518 = vmatpush.msra.mxu0 %v1587
    %2519 = vmatpush.msra.mxu0 %v1579
    %2520 = vmatpush.msra.mxu0 %v1571
    %2521 = vmatmul.f32.gmra.mxu0 %v1436
    %v2522 = vpop.f32.mrf.mxu0
    %v2523 = vadd.f32 %v2503, %v2522
    %2524 = vdwg.mxu0
    %2525 = vmatpush.msra.mxu0 %v1819
    %2526 = vmatpush.msra.mxu0 %v1811
    %2527 = vmatpush.msra.mxu0 %v1803
    %2528 = vmatpush.msra.mxu0 %v1795
    %2529 = vmatpush.msra.mxu0 %v1787
    %2530 = vmatpush.msra.mxu0 %v1779
    %2531 = vmatpush.msra.mxu0 %v1771
    %2532 = vmatpush.msra.mxu0 %v1763
    %2533 = vmatpush.msra.mxu0 %v1755
    %2534 = vmatpush.msra.mxu0 %v1747
    %2535 = vmatpush.msra.mxu0 %v1739
    %2536 = vmatpush.msra.mxu0 %v1731
    %2537 = vmatpush.msra.mxu0 %v1723
    %2538 = vmatpush.msra.mxu0 %v1715
    %2539 = vmatpush.msra.mxu0 %v1707
    %2540 = vmatpush.msra.mxu0 %v1699
    %2541 = vmatmul.f32.gmra.mxu0 %v1437
    %v2542 = vpop.f32.mrf.mxu0
    %v2543 = vadd.f32 %v2523, %v2542
    %2544 = vdwg.mxu0
    %2545 = vmatpush.msra.mxu0 %v1947
    %2546 = vmatpush.msra.mxu0 %v1939
    %2547 = vmatpush.msra.mxu0 %v1931
    %2548 = vmatpush.msra.mxu0 %v1923
    %2549 = vmatpush.msra.mxu0 %v1915
    %2550 = vmatpush.msra.mxu0 %v1907
    %2551 = vmatpush.msra.mxu0 %v1899
    %2552 = vmatpush.msra.mxu0 %v1891
    %2553 = vmatpush.msra.mxu0 %v1883
    %2554 = vmatpush.msra.mxu0 %v1875
    %2555 = vmatpush.msra.mxu0 %v1867
    %2556 = vmatpush.msra.mxu0 %v1859
    %2557 = vmatpush.msra.mxu0 %v1851
    %2558 = vmatpush.msra.mxu0 %v1843
    %2559 = vmatpush.msra.mxu0 %v1835
    %2560 = vmatpush.msra.mxu0 %v1827
    %2561 = vmatmul.f32.gmra.mxu0 %v1438
    %v2562 = vpop.f32.mrf.mxu0
    %v2563 = vadd.f32 %v2543, %v2562
    %2564 = vdwg.mxu0
    %2565 = vmatpush.msra.mxu0 %v2075
    %2566 = vmatpush.msra.mxu0 %v2067
    %2567 = vmatpush.msra.mxu0 %v2059
    %2568 = vmatpush.msra.mxu0 %v2051
    %2569 = vmatpush.msra.mxu0 %v2043
    %2570 = vmatpush.msra.mxu0 %v2035
    %2571 = vmatpush.msra.mxu0 %v2027
    %2572 = vmatpush.msra.mxu0 %v2019
    %2573 = vmatpush.msra.mxu0 %v2011
    %2574 = vmatpush.msra.mxu0 %v2003
    %2575 = vmatpush.msra.mxu0 %v1995
    %2576 = vmatpush.msra.mxu0 %v1987
    %2577 = vmatpush.msra.mxu0 %v1979
    %2578 = vmatpush.msra.mxu0 %v1971
    %2579 = vmatpush.msra.mxu0 %v1963
    %2580 = vmatpush.msra.mxu0 %v1955
    %2581 = vmatmul.f32.gmra.mxu0 %v1439
    %v2582 = vpop.f32.mrf.mxu0
    %v2583 = vadd.f32 %v2563, %v2582
    %2584 = vdwg.mxu0
    %2585 = vmatpush.msra.mxu0 %v2203
    %2586 = vmatpush.msra.mxu0 %v2195
    %2587 = vmatpush.msra.mxu0 %v2187
    %2588 = vmatpush.msra.mxu0 %v2179
    %2589 = vmatpush.msra.mxu0 %v2171
    %2590 = vmatpush.msra.mxu0 %v2163
    %2591 = vmatpush.msra.mxu0 %v2155
    %2592 = vmatpush.msra.mxu0 %v2147
    %2593 = vmatpush.msra.mxu0 %v2139
    %2594 = vmatpush.msra.mxu0 %v2131
    %2595 = vmatpush.msra.mxu0 %v2123
    %2596 = vmatpush.msra.mxu0 %v2115
    %2597 = vmatpush.msra.mxu0 %v2107
    %2598 = vmatpush.msra.mxu0 %v2099
    %2599 = vmatpush.msra.mxu0 %v2091
    %2600 = vmatpush.msra.mxu0 %v2083
    %2601 = vmatmul.f32.gmra.mxu0 %v1440
    %v2602 = vpop.f32.mrf.mxu0
    %v2603 = vadd.f32 %v2583, %v2602
    %2604 = vdwg.mxu0
    %2605 = vmatpush.msra.mxu0 %v2331
    %2606 = vmatpush.msra.mxu0 %v2323
    %2607 = vmatpush.msra.mxu0 %v2315
    %2608 = vmatpush.msra.mxu0 %v2307
    %2609 = vmatpush.msra.mxu0 %v2299
    %2610 = vmatpush.msra.mxu0 %v2291
    %2611 = vmatpush.msra.mxu0 %v2283
    %2612 = vmatpush.msra.mxu0 %v2275
    %2613 = vmatpush.msra.mxu0 %v2267
    %2614 = vmatpush.msra.mxu0 %v2259
    %2615 = vmatpush.msra.mxu0 %v2251
    %2616 = vmatpush.msra.mxu0 %v2243
    %2617 = vmatpush.msra.mxu0 %v2235
    %2618 = vmatpush.msra.mxu0 %v2227
    %2619 = vmatpush.msra.mxu0 %v2219
    %2620 = vmatpush.msra.mxu0 %v2211
    %2621 = vmatmul.f32.gmra.mxu0 %v1441
    %v2622 = vpop.f32.mrf.mxu0
    %v2623 = vadd.f32 %v2603, %v2622
    %2624 = vdwg.mxu0
    %2625 = vmatpush.msra.mxu0 %v2459
    %2626 = vmatpush.msra.mxu0 %v2451
    %2627 = vmatpush.msra.mxu0 %v2443
    %2628 = vmatpush.msra.mxu0 %v2435
    %2629 = vmatpush.msra.mxu0 %v2427
    %2630 = vmatpush.msra.mxu0 %v2419
    %2631 = vmatpush.msra.mxu0 %v2411
    %2632 = vmatpush.msra.mxu0 %v2403
    %2633 = vmatpush.msra.mxu0 %v2395
    %2634 = vmatpush.msra.mxu0 %v2387
    %2635 = vmatpush.msra.mxu0 %v2379
    %2636 = vmatpush.msra.mxu0 %v2371
    %2637 = vmatpush.msra.mxu0 %v2363
    %2638 = vmatpush.msra.mxu0 %v2355
    %2639 = vmatpush.msra.mxu0 %v2347
    %2640 = vmatpush.msra.mxu0 %v2339
    %2641 = vmatmul.f32.gmra.mxu0 %v1442
    %v2642 = vpop.f32.mrf.mxu0
    %v2643 = vadd.f32 %v2623, %v2642
    %2644 = vdwg.mxu0
    %2645 = vmatpush.msra.mxu0 %v1564
    %2646 = vmatpush.msra.mxu0 %v1556
    %2647 = vmatpush.msra.mxu0 %v1548
    %2648 = vmatpush.msra.mxu0 %v1540
    %2649 = vmatpush.msra.mxu0 %v1532
    %2650 = vmatpush.msra.mxu0 %v1524
    %2651 = vmatpush.msra.mxu0 %v1516
    %2652 = vmatpush.msra.mxu0 %v1508
    %2653 = vmatpush.msra.mxu0 %v1500
    %2654 = vmatpush.msra.mxu0 %v1492
    %2655 = vmatpush.msra.mxu0 %v1484
    %2656 = vmatpush.msra.mxu0 %v1476
    %2657 = vmatpush.msra.mxu0 %v1468
    %2658 = vmatpush.msra.mxu0 %v1460
    %2659 = vmatpush.msra.mxu0 %v1452
    %2660 = vmatpush.msra.mxu0 %v1444
    %2661 = vmatmul.f32.gmra.mxu0 %v1435
    %v2662 = vpop.f32.mrf.mxu0
    %v2663 = vadd.f32 %v2470, %v2662
    %2664 = vdwg.mxu0
    %2665 = vmatpush.msra.mxu0 %v1692
    %2666 = vmatpush.msra.mxu0 %v1684
    %2667 = vmatpush.msra.mxu0 %v1676
    %2668 = vmatpush.msra.mxu0 %v1668
    %2669 = vmatpush.msra.mxu0 %v1660
    %2670 = vmatpush.msra.mxu0 %v1652
    %2671 = vmatpush.msra.mxu0 %v1644
    %2672 = vmatpush.msra.mxu0 %v1636
    %2673 = vmatpush.msra.mxu0 %v1628
    %2674 = vmatpush.msra.mxu0 %v1620
    %2675 = vmatpush.msra.mxu0 %v1612
    %2676 = vmatpush.msra.mxu0 %v1604
    %2677 = vmatpush.msra.mxu0 %v1596
    %2678 = vmatpush.msra.mxu0 %v1588
    %2679 = vmatpush.msra.mxu0 %v1580
    %2680 = vmatpush.msra.mxu0 %v1572
    %2681 = vmatmul.f32.gmra.mxu0 %v1436
    %v2682 = vpop.f32.mrf.mxu0
    %v2683 = vadd.f32 %v2663, %v2682
    %2684 = vdwg.mxu0
    %2685 = vmatpush.msra.mxu0 %v1820
    %2686 = vmatpush.msra.mxu0 %v1812
    %2687 = vmatpush.msra.mxu0 %v1804
    %2688 = vmatpush.msra.mxu0 %v1796
    %2689 = vmatpush.msra.mxu0 %v1788
    %2690 = vmatpush.msra.mxu0 %v1780
    %2691 = vmatpush.msra.mxu0 %v1772
    %2692 = vmatpush.msra.mxu0 %v1764
    %2693 = vmatpush.msra.mxu0 %v1756
    %2694 = vmatpush.msra.mxu0 %v1748
    %2695 = vmatpush.msra.mxu0 %v1740
    %2696 = vmatpush.msra.mxu0 %v1732
    %2697 = vmatpush.msra.mxu0 %v1724
    %2698 = vmatpush.msra.mxu0 %v1716
    %2699 = vmatpush.msra.mxu0 %v1708
    %2700 = vmatpush.msra.mxu0 %v1700
    %2701 = vmatmul.f32.gmra.mxu0 %v1437
    %v2702 = vpop.f32.mrf.mxu0
    %v2703 = vadd.f32 %v2683, %v2702
    %2704 = vdwg.mxu0
    %2705 = vmatpush.msra.mxu0 %v1948
    %2706 = vmatpush.msra.mxu0 %v1940
    %2707 = vmatpush.msra.mxu0 %v1932
    %2708 = vmatpush.msra.mxu0 %v1924
    %2709 = vmatpush.msra.mxu0 %v1916
    %2710 = vmatpush.msra.mxu0 %v1908
    %2711 = vmatpush.msra.mxu0 %v1900
    %2712 = vmatpush.msra.mxu0 %v1892
    %2713 = vmatpush.msra.mxu0 %v1884
    %2714 = vmatpush.msra.mxu0 %v1876
    %2715 = vmatpush.msra.mxu0 %v1868
    %2716 = vmatpush.msra.mxu0 %v1860
    %2717 = vmatpush.msra.mxu0 %v1852
    %2718 = vmatpush.msra.mxu0 %v1844
    %2719 = vmatpush.msra.mxu0 %v1836
    %2720 = vmatpush.msra.mxu0 %v1828
    %2721 = vmatmul.f32.gmra.mxu0 %v1438
    %v2722 = vpop.f32.mrf.mxu0
    %v2723 = vadd.f32 %v2703, %v2722
    %2724 = vdwg.mxu0
    %2725 = vmatpush.msra.mxu0 %v2076
    %2726 = vmatpush.msra.mxu0 %v2068
    %2727 = vmatpush.msra.mxu0 %v2060
    %2728 = vmatpush.msra.mxu0 %v2052
    %2729 = vmatpush.msra.mxu0 %v2044
    %2730 = vmatpush.msra.mxu0 %v2036
    %2731 = vmatpush.msra.mxu0 %v2028
    %2732 = vmatpush.msra.mxu0 %v2020
    %2733 = vmatpush.msra.mxu0 %v2012
    %2734 = vmatpush.msra.mxu0 %v2004
    %2735 = vmatpush.msra.mxu0 %v1996
    %2736 = vmatpush.msra.mxu0 %v1988
    %2737 = vmatpush.msra.mxu0 %v1980
    %2738 = vmatpush.msra.mxu0 %v1972
    %2739 = vmatpush.msra.mxu0 %v1964
    %2740 = vmatpush.msra.mxu0 %v1956
    %2741 = vmatmul.f32.gmra.mxu0 %v1439
    %v2742 = vpop.f32.mrf.mxu0
    %v2743 = vadd.f32 %v2723, %v2742
    %2744 = vdwg.mxu0
    %2745 = vmatpush.msra.mxu0 %v2204
    %2746 = vmatpush.msra.mxu0 %v2196
    %2747 = vmatpush.msra.mxu0 %v2188
    %2748 = vmatpush.msra.mxu0 %v2180
    %2749 = vmatpush.msra.mxu0 %v2172
    %2750 = vmatpush.msra.mxu0 %v2164
    %2751 = vmatpush.msra.mxu0 %v2156
    %2752 = vmatpush.msra.mxu0 %v2148
    %2753 = vmatpush.msra.mxu0 %v2140
    %2754 = vmatpush.msra.mxu0 %v2132
    %2755 = vmatpush.msra.mxu0 %v2124
    %2756 = vmatpush.msra.mxu0 %v2116
    %2757 = vmatpush.msra.mxu0 %v2108
    %2758 = vmatpush.msra.mxu0 %v2100
    %2759 = vmatpush.msra.mxu0 %v2092
    %2760 = vmatpush.msra.mxu0 %v2084
    %2761 = vmatmul.f32.gmra.mxu0 %v1440
    %v2762 = vpop.f32.mrf.mxu0
    %v2763 = vadd.f32 %v2743, %v2762
    %2764 = vdwg.mxu0
    %2765 = vmatpush.msra.mxu0 %v2332
    %2766 = vmatpush.msra.mxu0 %v2324
    %2767 = vmatpush.msra.mxu0 %v2316
    %2768 = vmatpush.msra.mxu0 %v2308
    %2769 = vmatpush.msra.mxu0 %v2300
    %2770 = vmatpush.msra.mxu0 %v2292
    %2771 = vmatpush.msra.mxu0 %v2284
    %2772 = vmatpush.msra.mxu0 %v2276
    %2773 = vmatpush.msra.mxu0 %v2268
    %2774 = vmatpush.msra.mxu0 %v2260
    %2775 = vmatpush.msra.mxu0 %v2252
    %2776 = vmatpush.msra.mxu0 %v2244
    %2777 = vmatpush.msra.mxu0 %v2236
    %2778 = vmatpush.msra.mxu0 %v2228
    %2779 = vmatpush.msra.mxu0 %v2220
    %2780 = vmatpush.msra.mxu0 %v2212
    %2781 = vmatmul.f32.gmra.mxu0 %v1441
    %v2782 = vpop.f32.mrf.mxu0
    %v2783 = vadd.f32 %v2763, %v2782
    %2784 = vdwg.mxu0
    %2785 = vmatpush.msra.mxu0 %v2460
    %2786 = vmatpush.msra.mxu0 %v2452
    %2787 = vmatpush.msra.mxu0 %v2444
    %2788 = vmatpush.msra.mxu0 %v2436
    %2789 = vmatpush.msra.mxu0 %v2428
    %2790 = vmatpush.msra.mxu0 %v2420
    %2791 = vmatpush.msra.mxu0 %v2412
    %2792 = vmatpush.msra.mxu0 %v2404
    %2793 = vmatpush.msra.mxu0 %v2396
    %2794 = vmatpush.msra.mxu0 %v2388
    %2795 = vmatpush.msra.mxu0 %v2380
    %2796 = vmatpush.msra.mxu0 %v2372
    %2797 = vmatpush.msra.mxu0 %v2364
    %2798 = vmatpush.msra.mxu0 %v2356
    %2799 = vmatpush.msra.mxu0 %v2348
    %2800 = vmatpush.msra.mxu0 %v2340
    %2801 = vmatmul.f32.gmra.mxu0 %v1442
    %v2802 = vpop.f32.mrf.mxu0
    %v2803 = vadd.f32 %v2783, %v2802
    %2804 = vdwg.mxu0
    %2805 = vmatpush.msra.mxu0 %v1565
    %2806 = vmatpush.msra.mxu0 %v1557
    %2807 = vmatpush.msra.mxu0 %v1549
    %2808 = vmatpush.msra.mxu0 %v1541
    %2809 = vmatpush.msra.mxu0 %v1533
    %2810 = vmatpush.msra.mxu0 %v1525
    %2811 = vmatpush.msra.mxu0 %v1517
    %2812 = vmatpush.msra.mxu0 %v1509
    %2813 = vmatpush.msra.mxu0 %v1501
    %2814 = vmatpush.msra.mxu0 %v1493
    %2815 = vmatpush.msra.mxu0 %v1485
    %2816 = vmatpush.msra.mxu0 %v1477
    %2817 = vmatpush.msra.mxu0 %v1469
    %2818 = vmatpush.msra.mxu0 %v1461
    %2819 = vmatpush.msra.mxu0 %v1453
    %2820 = vmatpush.msra.mxu0 %v1445
    %2821 = vmatmul.f32.gmra.mxu0 %v1435
    %v2822 = vpop.f32.mrf.mxu0
    %v2823 = vadd.f32 %v2471, %v2822
    %2824 = vdwg.mxu0
    %2825 = vmatpush.msra.mxu0 %v1693
    %2826 = vmatpush.msra.mxu0 %v1685
    %2827 = vmatpush.msra.mxu0 %v1677
    %2828 = vmatpush.msra.mxu0 %v1669
    %2829 = vmatpush.msra.mxu0 %v1661
    %2830 = vmatpush.msra.mxu0 %v1653
    %2831 = vmatpush.msra.mxu0 %v1645
    %2832 = vmatpush.msra.mxu0 %v1637
    %2833 = vmatpush.msra.mxu0 %v1629
    %2834 = vmatpush.msra.mxu0 %v1621
    %2835 = vmatpush.msra.mxu0 %v1613
    %2836 = vmatpush.msra.mxu0 %v1605
    %2837 = vmatpush.msra.mxu0 %v1597
    %2838 = vmatpush.msra.mxu0 %v1589
    %2839 = vmatpush.msra.mxu0 %v1581
    %2840 = vmatpush.msra.mxu0 %v1573
    %2841 = vmatmul.f32.gmra.mxu0 %v1436
    %v2842 = vpop.f32.mrf.mxu0
    %v2843 = vadd.f32 %v2823, %v2842
    %2844 = vdwg.mxu0
    %2845 = vmatpush.msra.mxu0 %v1821
    %2846 = vmatpush.msra.mxu0 %v1813
    %2847 = vmatpush.msra.mxu0 %v1805
    %2848 = vmatpush.msra.mxu0 %v1797
    %2849 = vmatpush.msra.mxu0 %v1789
    %2850 = vmatpush.msra.mxu0 %v1781
    %2851 = vmatpush.msra.mxu0 %v1773
    %2852 = vmatpush.msra.mxu0 %v1765
    %2853 = vmatpush.msra.mxu0 %v1757
    %2854 = vmatpush.msra.mxu0 %v1749
    %2855 = vmatpush.msra.mxu0 %v1741
    %2856 = vmatpush.msra.mxu0 %v1733
    %2857 = vmatpush.msra.mxu0 %v1725
    %2858 = vmatpush.msra.mxu0 %v1717
    %2859 = vmatpush.msra.mxu0 %v1709
    %2860 = vmatpush.msra.mxu0 %v1701
    %2861 = vmatmul.f32.gmra.mxu0 %v1437
    %v2862 = vpop.f32.mrf.mxu0
    %v2863 = vadd.f32 %v2843, %v2862
    %2864 = vdwg.mxu0
    %2865 = vmatpush.msra.mxu0 %v1949
    %2866 = vmatpush.msra.mxu0 %v1941
    %2867 = vmatpush.msra.mxu0 %v1933
    %2868 = vmatpush.msra.mxu0 %v1925
    %2869 = vmatpush.msra.mxu0 %v1917
    %2870 = vmatpush.msra.mxu0 %v1909
    %2871 = vmatpush.msra.mxu0 %v1901
    %2872 = vmatpush.msra.mxu0 %v1893
    %2873 = vmatpush.msra.mxu0 %v1885
    %2874 = vmatpush.msra.mxu0 %v1877
    %2875 = vmatpush.msra.mxu0 %v1869
    %2876 = vmatpush.msra.mxu0 %v1861
    %2877 = vmatpush.msra.mxu0 %v1853
    %2878 = vmatpush.msra.mxu0 %v1845
    %2879 = vmatpush.msra.mxu0 %v1837
    %2880 = vmatpush.msra.mxu0 %v1829
    %2881 = vmatmul.f32.gmra.mxu0 %v1438
    %v2882 = vpop.f32.mrf.mxu0
    %v2883 = vadd.f32 %v2863, %v2882
    %2884 = vdwg.mxu0
    %2885 = vmatpush.msra.mxu0 %v2077
    %2886 = vmatpush.msra.mxu0 %v2069
    %2887 = vmatpush.msra.mxu0 %v2061
    %2888 = vmatpush.msra.mxu0 %v2053
    %2889 = vmatpush.msra.mxu0 %v2045
    %2890 = vmatpush.msra.mxu0 %v2037
    %2891 = vmatpush.msra.mxu0 %v2029
    %2892 = vmatpush.msra.mxu0 %v2021
    %2893 = vmatpush.msra.mxu0 %v2013
    %2894 = vmatpush.msra.mxu0 %v2005
    %2895 = vmatpush.msra.mxu0 %v1997
    %2896 = vmatpush.msra.mxu0 %v1989
    %2897 = vmatpush.msra.mxu0 %v1981
    %2898 = vmatpush.msra.mxu0 %v1973
    %2899 = vmatpush.msra.mxu0 %v1965
    %2900 = vmatpush.msra.mxu0 %v1957
    %2901 = vmatmul.f32.gmra.mxu0 %v1439
    %v2902 = vpop.f32.mrf.mxu0
    %v2903 = vadd.f32 %v2883, %v2902
    %2904 = vdwg.mxu0
    %2905 = vmatpush.msra.mxu0 %v2205
    %2906 = vmatpush.msra.mxu0 %v2197
    %2907 = vmatpush.msra.mxu0 %v2189
    %2908 = vmatpush.msra.mxu0 %v2181
    %2909 = vmatpush.msra.mxu0 %v2173
    %2910 = vmatpush.msra.mxu0 %v2165
    %2911 = vmatpush.msra.mxu0 %v2157
    %2912 = vmatpush.msra.mxu0 %v2149
    %2913 = vmatpush.msra.mxu0 %v2141
    %2914 = vmatpush.msra.mxu0 %v2133
    %2915 = vmatpush.msra.mxu0 %v2125
    %2916 = vmatpush.msra.mxu0 %v2117
    %2917 = vmatpush.msra.mxu0 %v2109
    %2918 = vmatpush.msra.mxu0 %v2101
    %2919 = vmatpush.msra.mxu0 %v2093
    %2920 = vmatpush.msra.mxu0 %v2085
    %2921 = vmatmul.f32.gmra.mxu0 %v1440
    %v2922 = vpop.f32.mrf.mxu0
    %v2923 = vadd.f32 %v2903, %v2922
    %2924 = vdwg.mxu0
    %2925 = vmatpush.msra.mxu0 %v2333
    %2926 = vmatpush.msra.mxu0 %v2325
    %2927 = vmatpush.msra.mxu0 %v2317
    %2928 = vmatpush.msra.mxu0 %v2309
    %2929 = vmatpush.msra.mxu0 %v2301
    %2930 = vmatpush.msra.mxu0 %v2293
    %2931 = vmatpush.msra.mxu0 %v2285
    %2932 = vmatpush.msra.mxu0 %v2277
    %2933 = vmatpush.msra.mxu0 %v2269
    %2934 = vmatpush.msra.mxu0 %v2261
    %2935 = vmatpush.msra.mxu0 %v2253
    %2936 = vmatpush.msra.mxu0 %v2245
    %2937 = vmatpush.msra.mxu0 %v2237
    %2938 = vmatpush.msra.mxu0 %v2229
    %2939 = vmatpush.msra.mxu0 %v2221
    %2940 = vmatpush.msra.mxu0 %v2213
    %2941 = vmatmul.f32.gmra.mxu0 %v1441
    %v2942 = vpop.f32.mrf.mxu0
    %v2943 = vadd.f32 %v2923, %v2942
    %2944 = vdwg.mxu0
    %2945 = vmatpush.msra.mxu0 %v2461
    %2946 = vmatpush.msra.mxu0 %v2453
    %2947 = vmatpush.msra.mxu0 %v2445
    %2948 = vmatpush.msra.mxu0 %v2437
    %2949 = vmatpush.msra.mxu0 %v2429
    %2950 = vmatpush.msra.mxu0 %v2421
    %2951 = vmatpush.msra.mxu0 %v2413
    %2952 = vmatpush.msra.mxu0 %v2405
    %2953 = vmatpush.msra.mxu0 %v2397
    %2954 = vmatpush.msra.mxu0 %v2389
    %2955 = vmatpush.msra.mxu0 %v2381
    %2956 = vmatpush.msra.mxu0 %v2373
    %2957 = vmatpush.msra.mxu0 %v2365
    %2958 = vmatpush.msra.mxu0 %v2357
    %2959 = vmatpush.msra.mxu0 %v2349
    %2960 = vmatpush.msra.mxu0 %v2341
    %2961 = vmatmul.f32.gmra.mxu0 %v1442
    %v2962 = vpop.f32.mrf.mxu0
    %v2963 = vadd.f32 %v2943, %v2962
    %2964 = vdwg.mxu0
    %2965 = vmatpush.msra.mxu0 %v1566
    %2966 = vmatpush.msra.mxu0 %v1558
    %2967 = vmatpush.msra.mxu0 %v1550
    %2968 = vmatpush.msra.mxu0 %v1542
    %2969 = vmatpush.msra.mxu0 %v1534
    %2970 = vmatpush.msra.mxu0 %v1526
    %2971 = vmatpush.msra.mxu0 %v1518
    %2972 = vmatpush.msra.mxu0 %v1510
    %2973 = vmatpush.msra.mxu0 %v1502
    %2974 = vmatpush.msra.mxu0 %v1494
    %2975 = vmatpush.msra.mxu0 %v1486
    %2976 = vmatpush.msra.mxu0 %v1478
    %2977 = vmatpush.msra.mxu0 %v1470
    %2978 = vmatpush.msra.mxu0 %v1462
    %2979 = vmatpush.msra.mxu0 %v1454
    %2980 = vmatpush.msra.mxu0 %v1446
    %2981 = vmatmul.f32.gmra.mxu0 %v1435
    %v2982 = vpop.f32.mrf.mxu0
    %v2983 = vadd.f32 %v2472, %v2982
    %2984 = vdwg.mxu0
    %2985 = vmatpush.msra.mxu0 %v1694
    %2986 = vmatpush.msra.mxu0 %v1686
    %2987 = vmatpush.msra.mxu0 %v1678
    %2988 = vmatpush.msra.mxu0 %v1670
    %2989 = vmatpush.msra.mxu0 %v1662
    %2990 = vmatpush.msra.mxu0 %v1654
    %2991 = vmatpush.msra.mxu0 %v1646
    %2992 = vmatpush.msra.mxu0 %v1638
    %2993 = vmatpush.msra.mxu0 %v1630
    %2994 = vmatpush.msra.mxu0 %v1622
    %2995 = vmatpush.msra.mxu0 %v1614
    %2996 = vmatpush.msra.mxu0 %v1606
    %2997 = vmatpush.msra.mxu0 %v1598
    %2998 = vmatpush.msra.mxu0 %v1590
    %2999 = vmatpush.msra.mxu0 %v1582
    %3000 = vmatpush.msra.mxu0 %v1574
    %3001 = vmatmul.f32.gmra.mxu0 %v1436
    %v3002 = vpop.f32.mrf.mxu0
    %v3003 = vadd.f32 %v2983, %v3002
    %3004 = vdwg.mxu0
    %3005 = vmatpush.msra.mxu0 %v1822
    %3006 = vmatpush.msra.mxu0 %v1814
    %3007 = vmatpush.msra.mxu0 %v1806
    %3008 = vmatpush.msra.mxu0 %v1798
    %3009 = vmatpush.msra.mxu0 %v1790
    %3010 = vmatpush.msra.mxu0 %v1782
    %3011 = vmatpush.msra.mxu0 %v1774
    %3012 = vmatpush.msra.mxu0 %v1766
    %3013 = vmatpush.msra.mxu0 %v1758
    %3014 = vmatpush.msra.mxu0 %v1750
    %3015 = vmatpush.msra.mxu0 %v1742
    %3016 = vmatpush.msra.mxu0 %v1734
    %3017 = vmatpush.msra.mxu0 %v1726
    %3018 = vmatpush.msra.mxu0 %v1718
    %3019 = vmatpush.msra.mxu0 %v1710
    %3020 = vmatpush.msra.mxu0 %v1702
    %3021 = vmatmul.f32.gmra.mxu0 %v1437
    %v3022 = vpop.f32.mrf.mxu0
    %v3023 = vadd.f32 %v3003, %v3022
    %3024 = vdwg.mxu0
    %3025 = vmatpush.msra.mxu0 %v1950
    %3026 = vmatpush.msra.mxu0 %v1942
    %3027 = vmatpush.msra.mxu0 %v1934
    %3028 = vmatpush.msra.mxu0 %v1926
    %3029 = vmatpush.msra.mxu0 %v1918
    %3030 = vmatpush.msra.mxu0 %v1910
    %3031 = vmatpush.msra.mxu0 %v1902
    %3032 = vmatpush.msra.mxu0 %v1894
    %3033 = vmatpush.msra.mxu0 %v1886
    %3034 = vmatpush.msra.mxu0 %v1878
    %3035 = vmatpush.msra.mxu0 %v1870
    %3036 = vmatpush.msra.mxu0 %v1862
    %3037 = vmatpush.msra.mxu0 %v1854
    %3038 = vmatpush.msra.mxu0 %v1846
    %3039 = vmatpush.msra.mxu0 %v1838
    %3040 = vmatpush.msra.mxu0 %v1830
    %3041 = vmatmul.f32.gmra.mxu0 %v1438
    %v3042 = vpop.f32.mrf.mxu0
    %v3043 = vadd.f32 %v3023, %v3042
    %3044 = vdwg.mxu0
    %3045 = vmatpush.msra.mxu0 %v2078
    %3046 = vmatpush.msra.mxu0 %v2070
    %3047 = vmatpush.msra.mxu0 %v2062
    %3048 = vmatpush.msra.mxu0 %v2054
    %3049 = vmatpush.msra.mxu0 %v2046
    %3050 = vmatpush.msra.mxu0 %v2038
    %3051 = vmatpush.msra.mxu0 %v2030
    %3052 = vmatpush.msra.mxu0 %v2022
    %3053 = vmatpush.msra.mxu0 %v2014
    %3054 = vmatpush.msra.mxu0 %v2006
    %3055 = vmatpush.msra.mxu0 %v1998
    %3056 = vmatpush.msra.mxu0 %v1990
    %3057 = vmatpush.msra.mxu0 %v1982
    %3058 = vmatpush.msra.mxu0 %v1974
    %3059 = vmatpush.msra.mxu0 %v1966
    %3060 = vmatpush.msra.mxu0 %v1958
    %3061 = vmatmul.f32.gmra.mxu0 %v1439
    %v3062 = vpop.f32.mrf.mxu0
    %v3063 = vadd.f32 %v3043, %v3062
    %3064 = vdwg.mxu0
    %3065 = vmatpush.msra.mxu0 %v2206
    %3066 = vmatpush.msra.mxu0 %v2198
    %3067 = vmatpush.msra.mxu0 %v2190
    %3068 = vmatpush.msra.mxu0 %v2182
    %3069 = vmatpush.msra.mxu0 %v2174
    %3070 = vmatpush.msra.mxu0 %v2166
    %3071 = vmatpush.msra.mxu0 %v2158
    %3072 = vmatpush.msra.mxu0 %v2150
    %3073 = vmatpush.msra.mxu0 %v2142
    %3074 = vmatpush.msra.mxu0 %v2134
    %3075 = vmatpush.msra.mxu0 %v2126
    %3076 = vmatpush.msra.mxu0 %v2118
    %3077 = vmatpush.msra.mxu0 %v2110
    %3078 = vmatpush.msra.mxu0 %v2102
    %3079 = vmatpush.msra.mxu0 %v2094
    %3080 = vmatpush.msra.mxu0 %v2086
    %3081 = vmatmul.f32.gmra.mxu0 %v1440
    %v3082 = vpop.f32.mrf.mxu0
    %v3083 = vadd.f32 %v3063, %v3082
    %3084 = vdwg.mxu0
    %3085 = vmatpush.msra.mxu0 %v2334
    %3086 = vmatpush.msra.mxu0 %v2326
    %3087 = vmatpush.msra.mxu0 %v2318
    %3088 = vmatpush.msra.mxu0 %v2310
    %3089 = vmatpush.msra.mxu0 %v2302
    %3090 = vmatpush.msra.mxu0 %v2294
    %3091 = vmatpush.msra.mxu0 %v2286
    %3092 = vmatpush.msra.mxu0 %v2278
    %3093 = vmatpush.msra.mxu0 %v2270
    %3094 = vmatpush.msra.mxu0 %v2262
    %3095 = vmatpush.msra.mxu0 %v2254
    %3096 = vmatpush.msra.mxu0 %v2246
    %3097 = vmatpush.msra.mxu0 %v2238
    %3098 = vmatpush.msra.mxu0 %v2230
    %3099 = vmatpush.msra.mxu0 %v2222
    %3100 = vmatpush.msra.mxu0 %v2214
    %3101 = vmatmul.f32.gmra.mxu0 %v1441
    %v3102 = vpop.f32.mrf.mxu0
    %v3103 = vadd.f32 %v3083, %v3102
    %3104 = vdwg.mxu0
    %3105 = vmatpush.msra.mxu0 %v2462
    %3106 = vmatpush.msra.mxu0 %v2454
    %3107 = vmatpush.msra.mxu0 %v2446
    %3108 = vmatpush.msra.mxu0 %v2438
    %3109 = vmatpush.msra.mxu0 %v2430
    %3110 = vmatpush.msra.mxu0 %v2422
    %3111 = vmatpush.msra.mxu0 %v2414
    %3112 = vmatpush.msra.mxu0 %v2406
    %3113 = vmatpush.msra.mxu0 %v2398
    %3114 = vmatpush.msra.mxu0 %v2390
    %3115 = vmatpush.msra.mxu0 %v2382
    %3116 = vmatpush.msra.mxu0 %v2374
    %3117 = vmatpush.msra.mxu0 %v2366
    %3118 = vmatpush.msra.mxu0 %v2358
    %3119 = vmatpush.msra.mxu0 %v2350
    %3120 = vmatpush.msra.mxu0 %v2342
    %3121 = vmatmul.f32.gmra.mxu0 %v1442
    %v3122 = vpop.f32.mrf.mxu0
    %v3123 = vadd.f32 %v3103, %v3122
    %3124 = vdwg.mxu0
    %3125 = vmatpush.msra.mxu0 %v1567
    %3126 = vmatpush.msra.mxu0 %v1559
    %3127 = vmatpush.msra.mxu0 %v1551
    %3128 = vmatpush.msra.mxu0 %v1543
    %3129 = vmatpush.msra.mxu0 %v1535
    %3130 = vmatpush.msra.mxu0 %v1527
    %3131 = vmatpush.msra.mxu0 %v1519
    %3132 = vmatpush.msra.mxu0 %v1511
    %3133 = vmatpush.msra.mxu0 %v1503
    %3134 = vmatpush.msra.mxu0 %v1495
    %3135 = vmatpush.msra.mxu0 %v1487
    %3136 = vmatpush.msra.mxu0 %v1479
    %3137 = vmatpush.msra.mxu0 %v1471
    %3138 = vmatpush.msra.mxu0 %v1463
    %3139 = vmatpush.msra.mxu0 %v1455
    %3140 = vmatpush.msra.mxu0 %v1447
    %3141 = vmatmul.f32.gmra.mxu0 %v1435
    %v3142 = vpop.f32.mrf.mxu0
    %v3143 = vadd.f32 %v2473, %v3142
    %3144 = vdwg.mxu0
    %3145 = vmatpush.msra.mxu0 %v1695
    %3146 = vmatpush.msra.mxu0 %v1687
    %3147 = vmatpush.msra.mxu0 %v1679
    %3148 = vmatpush.msra.mxu0 %v1671
    %3149 = vmatpush.msra.mxu0 %v1663
    %3150 = vmatpush.msra.mxu0 %v1655
    %3151 = vmatpush.msra.mxu0 %v1647
    %3152 = vmatpush.msra.mxu0 %v1639
    %3153 = vmatpush.msra.mxu0 %v1631
    %3154 = vmatpush.msra.mxu0 %v1623
    %3155 = vmatpush.msra.mxu0 %v1615
    %3156 = vmatpush.msra.mxu0 %v1607
    %3157 = vmatpush.msra.mxu0 %v1599
    %3158 = vmatpush.msra.mxu0 %v1591
    %3159 = vmatpush.msra.mxu0 %v1583
    %3160 = vmatpush.msra.mxu0 %v1575
    %3161 = vmatmul.f32.gmra.mxu0 %v1436
    %v3162 = vpop.f32.mrf.mxu0
    %v3163 = vadd.f32 %v3143, %v3162
    %3164 = vdwg.mxu0
    %3165 = vmatpush.msra.mxu0 %v1823
    %3166 = vmatpush.msra.mxu0 %v1815
    %3167 = vmatpush.msra.mxu0 %v1807
    %3168 = vmatpush.msra.mxu0 %v1799
    %3169 = vmatpush.msra.mxu0 %v1791
    %3170 = vmatpush.msra.mxu0 %v1783
    %3171 = vmatpush.msra.mxu0 %v1775
    %3172 = vmatpush.msra.mxu0 %v1767
    %3173 = vmatpush.msra.mxu0 %v1759
    %3174 = vmatpush.msra.mxu0 %v1751
    %3175 = vmatpush.msra.mxu0 %v1743
    %3176 = vmatpush.msra.mxu0 %v1735
    %3177 = vmatpush.msra.mxu0 %v1727
    %3178 = vmatpush.msra.mxu0 %v1719
    %3179 = vmatpush.msra.mxu0 %v1711
    %3180 = vmatpush.msra.mxu0 %v1703
    %3181 = vmatmul.f32.gmra.mxu0 %v1437
    %v3182 = vpop.f32.mrf.mxu0
    %v3183 = vadd.f32 %v3163, %v3182
    %3184 = vdwg.mxu0
    %3185 = vmatpush.msra.mxu0 %v1951
    %3186 = vmatpush.msra.mxu0 %v1943
    %3187 = vmatpush.msra.mxu0 %v1935
    %3188 = vmatpush.msra.mxu0 %v1927
    %3189 = vmatpush.msra.mxu0 %v1919
    %3190 = vmatpush.msra.mxu0 %v1911
    %3191 = vmatpush.msra.mxu0 %v1903
    %3192 = vmatpush.msra.mxu0 %v1895
    %3193 = vmatpush.msra.mxu0 %v1887
    %3194 = vmatpush.msra.mxu0 %v1879
    %3195 = vmatpush.msra.mxu0 %v1871
    %3196 = vmatpush.msra.mxu0 %v1863
    %3197 = vmatpush.msra.mxu0 %v1855
    %3198 = vmatpush.msra.mxu0 %v1847
    %3199 = vmatpush.msra.mxu0 %v1839
    %3200 = vmatpush.msra.mxu0 %v1831
    %3201 = vmatmul.f32.gmra.mxu0 %v1438
    %v3202 = vpop.f32.mrf.mxu0
    %v3203 = vadd.f32 %v3183, %v3202
    %3204 = vdwg.mxu0
    %3205 = vmatpush.msra.mxu0 %v2079
    %3206 = vmatpush.msra.mxu0 %v2071
    %3207 = vmatpush.msra.mxu0 %v2063
    %3208 = vmatpush.msra.mxu0 %v2055
    %3209 = vmatpush.msra.mxu0 %v2047
    %3210 = vmatpush.msra.mxu0 %v2039
    %3211 = vmatpush.msra.mxu0 %v2031
    %3212 = vmatpush.msra.mxu0 %v2023
    %3213 = vmatpush.msra.mxu0 %v2015
    %3214 = vmatpush.msra.mxu0 %v2007
    %3215 = vmatpush.msra.mxu0 %v1999
    %3216 = vmatpush.msra.mxu0 %v1991
    %3217 = vmatpush.msra.mxu0 %v1983
    %3218 = vmatpush.msra.mxu0 %v1975
    %3219 = vmatpush.msra.mxu0 %v1967
    %3220 = vmatpush.msra.mxu0 %v1959
    %3221 = vmatmul.f32.gmra.mxu0 %v1439
    %v3222 = vpop.f32.mrf.mxu0
    %v3223 = vadd.f32 %v3203, %v3222
    %3224 = vdwg.mxu0
    %3225 = vmatpush.msra.mxu0 %v2207
    %3226 = vmatpush.msra.mxu0 %v2199
    %3227 = vmatpush.msra.mxu0 %v2191
    %3228 = vmatpush.msra.mxu0 %v2183
    %3229 = vmatpush.msra.mxu0 %v2175
    %3230 = vmatpush.msra.mxu0 %v2167
    %3231 = vmatpush.msra.mxu0 %v2159
    %3232 = vmatpush.msra.mxu0 %v2151
    %3233 = vmatpush.msra.mxu0 %v2143
    %3234 = vmatpush.msra.mxu0 %v2135
    %3235 = vmatpush.msra.mxu0 %v2127
    %3236 = vmatpush.msra.mxu0 %v2119
    %3237 = vmatpush.msra.mxu0 %v2111
    %3238 = vmatpush.msra.mxu0 %v2103
    %3239 = vmatpush.msra.mxu0 %v2095
    %3240 = vmatpush.msra.mxu0 %v2087
    %3241 = vmatmul.f32.gmra.mxu0 %v1440
    %v3242 = vpop.f32.mrf.mxu0
    %v3243 = vadd.f32 %v3223, %v3242
    %3244 = vdwg.mxu0
    %3245 = vmatpush.msra.mxu0 %v2335
    %3246 = vmatpush.msra.mxu0 %v2327
    %3247 = vmatpush.msra.mxu0 %v2319
    %3248 = vmatpush.msra.mxu0 %v2311
    %3249 = vmatpush.msra.mxu0 %v2303
    %3250 = vmatpush.msra.mxu0 %v2295
    %3251 = vmatpush.msra.mxu0 %v2287
    %3252 = vmatpush.msra.mxu0 %v2279
    %3253 = vmatpush.msra.mxu0 %v2271
    %3254 = vmatpush.msra.mxu0 %v2263
    %3255 = vmatpush.msra.mxu0 %v2255
    %3256 = vmatpush.msra.mxu0 %v2247
    %3257 = vmatpush.msra.mxu0 %v2239
    %3258 = vmatpush.msra.mxu0 %v2231
    %3259 = vmatpush.msra.mxu0 %v2223
    %3260 = vmatpush.msra.mxu0 %v2215
    %3261 = vmatmul.f32.gmra.mxu0 %v1441
    %v3262 = vpop.f32.mrf.mxu0
    %v3263 = vadd.f32 %v3243, %v3262
    %3264 = vdwg.mxu0
    %3265 = vmatpush.msra.mxu0 %v2463
    %3266 = vmatpush.msra.mxu0 %v2455
    %3267 = vmatpush.msra.mxu0 %v2447
    %3268 = vmatpush.msra.mxu0 %v2439
    %3269 = vmatpush.msra.mxu0 %v2431
    %3270 = vmatpush.msra.mxu0 %v2423
    %3271 = vmatpush.msra.mxu0 %v2415
    %3272 = vmatpush.msra.mxu0 %v2407
    %3273 = vmatpush.msra.mxu0 %v2399
    %3274 = vmatpush.msra.mxu0 %v2391
    %3275 = vmatpush.msra.mxu0 %v2383
    %3276 = vmatpush.msra.mxu0 %v2375
    %3277 = vmatpush.msra.mxu0 %v2367
    %3278 = vmatpush.msra.mxu0 %v2359
    %3279 = vmatpush.msra.mxu0 %v2351
    %3280 = vmatpush.msra.mxu0 %v2343
    %3281 = vmatmul.f32.gmra.mxu0 %v1442
    %v3282 = vpop.f32.mrf.mxu0
    %v3283 = vadd.f32 %v3263, %v3282
    %3284 = vdwg.mxu0
    %3285 = vmatpush.msra.mxu0 %v1568
    %3286 = vmatpush.msra.mxu0 %v1560
    %3287 = vmatpush.msra.mxu0 %v1552
    %3288 = vmatpush.msra.mxu0 %v1544
    %3289 = vmatpush.msra.mxu0 %v1536
    %3290 = vmatpush.msra.mxu0 %v1528
    %3291 = vmatpush.msra.mxu0 %v1520
    %3292 = vmatpush.msra.mxu0 %v1512
    %3293 = vmatpush.msra.mxu0 %v1504
    %3294 = vmatpush.msra.mxu0 %v1496
    %3295 = vmatpush.msra.mxu0 %v1488
    %3296 = vmatpush.msra.mxu0 %v1480
    %3297 = vmatpush.msra.mxu0 %v1472
    %3298 = vmatpush.msra.mxu0 %v1464
    %3299 = vmatpush.msra.mxu0 %v1456
    %3300 = vmatpush.msra.mxu0 %v1448
    %3301 = vmatmul.f32.gmra.mxu0 %v1435
    %v3302 = vpop.f32.mrf.mxu0
    %v3303 = vadd.f32 %v2474, %v3302
    %3304 = vdwg.mxu0
    %3305 = vmatpush.msra.mxu0 %v1696
    %3306 = vmatpush.msra.mxu0 %v1688
    %3307 = vmatpush.msra.mxu0 %v1680
    %3308 = vmatpush.msra.mxu0 %v1672
    %3309 = vmatpush.msra.mxu0 %v1664
    %3310 = vmatpush.msra.mxu0 %v1656
    %3311 = vmatpush.msra.mxu0 %v1648
    %3312 = vmatpush.msra.mxu0 %v1640
    %3313 = vmatpush.msra.mxu0 %v1632
    %3314 = vmatpush.msra.mxu0 %v1624
    %3315 = vmatpush.msra.mxu0 %v1616
    %3316 = vmatpush.msra.mxu0 %v1608
    %3317 = vmatpush.msra.mxu0 %v1600
    %3318 = vmatpush.msra.mxu0 %v1592
    %3319 = vmatpush.msra.mxu0 %v1584
    %3320 = vmatpush.msra.mxu0 %v1576
    %3321 = vmatmul.f32.gmra.mxu0 %v1436
    %v3322 = vpop.f32.mrf.mxu0
    %v3323 = vadd.f32 %v3303, %v3322
    %3324 = vdwg.mxu0
    %3325 = vmatpush.msra.mxu0 %v1824
    %3326 = vmatpush.msra.mxu0 %v1816
    %3327 = vmatpush.msra.mxu0 %v1808
    %3328 = vmatpush.msra.mxu0 %v1800
    %3329 = vmatpush.msra.mxu0 %v1792
    %3330 = vmatpush.msra.mxu0 %v1784
    %3331 = vmatpush.msra.mxu0 %v1776
    %3332 = vmatpush.msra.mxu0 %v1768
    %3333 = vmatpush.msra.mxu0 %v1760
    %3334 = vmatpush.msra.mxu0 %v1752
    %3335 = vmatpush.msra.mxu0 %v1744
    %3336 = vmatpush.msra.mxu0 %v1736
    %3337 = vmatpush.msra.mxu0 %v1728
    %3338 = vmatpush.msra.mxu0 %v1720
    %3339 = vmatpush.msra.mxu0 %v1712
    %3340 = vmatpush.msra.mxu0 %v1704
    %3341 = vmatmul.f32.gmra.mxu0 %v1437
    %v3342 = vpop.f32.mrf.mxu0
    %v3343 = vadd.f32 %v3323, %v3342
    %3344 = vdwg.mxu0
    %3345 = vmatpush.msra.mxu0 %v1952
    %3346 = vmatpush.msra.mxu0 %v1944
    %3347 = vmatpush.msra.mxu0 %v1936
    %3348 = vmatpush.msra.mxu0 %v1928
    %3349 = vmatpush.msra.mxu0 %v1920
    %3350 = vmatpush.msra.mxu0 %v1912
    %3351 = vmatpush.msra.mxu0 %v1904
    %3352 = vmatpush.msra.mxu0 %v1896
    %3353 = vmatpush.msra.mxu0 %v1888
    %3354 = vmatpush.msra.mxu0 %v1880
    %3355 = vmatpush.msra.mxu0 %v1872
    %3356 = vmatpush.msra.mxu0 %v1864
    %3357 = vmatpush.msra.mxu0 %v1856
    %3358 = vmatpush.msra.mxu0 %v1848
    %3359 = vmatpush.msra.mxu0 %v1840
    %3360 = vmatpush.msra.mxu0 %v1832
    %3361 = vmatmul.f32.gmra.mxu0 %v1438
    %v3362 = vpop.f32.mrf.mxu0
    %v3363 = vadd.f32 %v3343, %v3362
    %3364 = vdwg.mxu0
    %3365 = vmatpush.msra.mxu0 %v2080
    %3366 = vmatpush.msra.mxu0 %v2072
    %3367 = vmatpush.msra.mxu0 %v2064
    %3368 = vmatpush.msra.mxu0 %v2056
    %3369 = vmatpush.msra.mxu0 %v2048
    %3370 = vmatpush.msra.mxu0 %v2040
    %3371 = vmatpush.msra.mxu0 %v2032
    %3372 = vmatpush.msra.mxu0 %v2024
    %3373 = vmatpush.msra.mxu0 %v2016
    %3374 = vmatpush.msra.mxu0 %v2008
    %3375 = vmatpush.msra.mxu0 %v2000
    %3376 = vmatpush.msra.mxu0 %v1992
    %3377 = vmatpush.msra.mxu0 %v1984
    %3378 = vmatpush.msra.mxu0 %v1976
    %3379 = vmatpush.msra.mxu0 %v1968
    %3380 = vmatpush.msra.mxu0 %v1960
    %3381 = vmatmul.f32.gmra.mxu0 %v1439
    %v3382 = vpop.f32.mrf.mxu0
    %v3383 = vadd.f32 %v3363, %v3382
    %3384 = vdwg.mxu0
    %3385 = vmatpush.msra.mxu0 %v2208
    %3386 = vmatpush.msra.mxu0 %v2200
    %3387 = vmatpush.msra.mxu0 %v2192
    %3388 = vmatpush.msra.mxu0 %v2184
    %3389 = vmatpush.msra.mxu0 %v2176
    %3390 = vmatpush.msra.mxu0 %v2168
    %3391 = vmatpush.msra.mxu0 %v2160
    %3392 = vmatpush.msra.mxu0 %v2152
    %3393 = vmatpush.msra.mxu0 %v2144
    %3394 = vmatpush.msra.mxu0 %v2136
    %3395 = vmatpush.msra.mxu0 %v2128
    %3396 = vmatpush.msra.mxu0 %v2120
    %3397 = vmatpush.msra.mxu0 %v2112
    %3398 = vmatpush.msra.mxu0 %v2104
    %3399 = vmatpush.msra.mxu0 %v2096
    %3400 = vmatpush.msra.mxu0 %v2088
    %3401 = vmatmul.f32.gmra.mxu0 %v1440
    %v3402 = vpop.f32.mrf.mxu0
    %v3403 = vadd.f32 %v3383, %v3402
    %3404 = vdwg.mxu0
    %3405 = vmatpush.msra.mxu0 %v2336
    %3406 = vmatpush.msra.mxu0 %v2328
    %3407 = vmatpush.msra.mxu0 %v2320
    %3408 = vmatpush.msra.mxu0 %v2312
    %3409 = vmatpush.msra.mxu0 %v2304
    %3410 = vmatpush.msra.mxu0 %v2296
    %3411 = vmatpush.msra.mxu0 %v2288
    %3412 = vmatpush.msra.mxu0 %v2280
    %3413 = vmatpush.msra.mxu0 %v2272
    %3414 = vmatpush.msra.mxu0 %v2264
    %3415 = vmatpush.msra.mxu0 %v2256
    %3416 = vmatpush.msra.mxu0 %v2248
    %3417 = vmatpush.msra.mxu0 %v2240
    %3418 = vmatpush.msra.mxu0 %v2232
    %3419 = vmatpush.msra.mxu0 %v2224
    %3420 = vmatpush.msra.mxu0 %v2216
    %3421 = vmatmul.f32.gmra.mxu0 %v1441
    %v3422 = vpop.f32.mrf.mxu0
    %v3423 = vadd.f32 %v3403, %v3422
    %3424 = vdwg.mxu0
    %3425 = vmatpush.msra.mxu0 %v2464
    %3426 = vmatpush.msra.mxu0 %v2456
    %3427 = vmatpush.msra.mxu0 %v2448
    %3428 = vmatpush.msra.mxu0 %v2440
    %3429 = vmatpush.msra.mxu0 %v2432
    %3430 = vmatpush.msra.mxu0 %v2424
    %3431 = vmatpush.msra.mxu0 %v2416
    %3432 = vmatpush.msra.mxu0 %v2408
    %3433 = vmatpush.msra.mxu0 %v2400
    %3434 = vmatpush.msra.mxu0 %v2392
    %3435 = vmatpush.msra.mxu0 %v2384
    %3436 = vmatpush.msra.mxu0 %v2376
    %3437 = vmatpush.msra.mxu0 %v2368
    %3438 = vmatpush.msra.mxu0 %v2360
    %3439 = vmatpush.msra.mxu0 %v2352
    %3440 = vmatpush.msra.mxu0 %v2344
    %3441 = vmatmul.f32.gmra.mxu0 %v1442
    %v3442 = vpop.f32.mrf.mxu0
    %v3443 = vadd.f32 %v3423, %v3442
    %3444 = vdwg.mxu0
    %3445 = vmatpush.msra.mxu0 %v1569
    %3446 = vmatpush.msra.mxu0 %v1561
    %3447 = vmatpush.msra.mxu0 %v1553
    %3448 = vmatpush.msra.mxu0 %v1545
    %3449 = vmatpush.msra.mxu0 %v1537
    %3450 = vmatpush.msra.mxu0 %v1529
    %3451 = vmatpush.msra.mxu0 %v1521
    %3452 = vmatpush.msra.mxu0 %v1513
    %3453 = vmatpush.msra.mxu0 %v1505
    %3454 = vmatpush.msra.mxu0 %v1497
    %3455 = vmatpush.msra.mxu0 %v1489
    %3456 = vmatpush.msra.mxu0 %v1481
    %3457 = vmatpush.msra.mxu0 %v1473
    %3458 = vmatpush.msra.mxu0 %v1465
    %3459 = vmatpush.msra.mxu0 %v1457
    %3460 = vmatpush.msra.mxu0 %v1449
    %3461 = vmatmul.f32.gmra.mxu0 %v1435
    %v3462 = vpop.f32.mrf.mxu0
    %v3463 = vadd.f32 %v2475, %v3462
    %3464 = vdwg.mxu0
    %3465 = vmatpush.msra.mxu0 %v1697
    %3466 = vmatpush.msra.mxu0 %v1689
    %3467 = vmatpush.msra.mxu0 %v1681
    %3468 = vmatpush.msra.mxu0 %v1673
    %3469 = vmatpush.msra.mxu0 %v1665
    %3470 = vmatpush.msra.mxu0 %v1657
    %3471 = vmatpush.msra.mxu0 %v1649
    %3472 = vmatpush.msra.mxu0 %v1641
    %3473 = vmatpush.msra.mxu0 %v1633
    %3474 = vmatpush.msra.mxu0 %v1625
    %3475 = vmatpush.msra.mxu0 %v1617
    %3476 = vmatpush.msra.mxu0 %v1609
    %3477 = vmatpush.msra.mxu0 %v1601
    %3478 = vmatpush.msra.mxu0 %v1593
    %3479 = vmatpush.msra.mxu0 %v1585
    %3480 = vmatpush.msra.mxu0 %v1577
    %3481 = vmatmul.f32.gmra.mxu0 %v1436
    %v3482 = vpop.f32.mrf.mxu0
    %v3483 = vadd.f32 %v3463, %v3482
    %3484 = vdwg.mxu0
    %3485 = vmatpush.msra.mxu0 %v1825
    %3486 = vmatpush.msra.mxu0 %v1817
    %3487 = vmatpush.msra.mxu0 %v1809
    %3488 = vmatpush.msra.mxu0 %v1801
    %3489 = vmatpush.msra.mxu0 %v1793
    %3490 = vmatpush.msra.mxu0 %v1785
    %3491 = vmatpush.msra.mxu0 %v1777
    %3492 = vmatpush.msra.mxu0 %v1769
    %3493 = vmatpush.msra.mxu0 %v1761
    %3494 = vmatpush.msra.mxu0 %v1753
    %3495 = vmatpush.msra.mxu0 %v1745
    %3496 = vmatpush.msra.mxu0 %v1737
    %3497 = vmatpush.msra.mxu0 %v1729
    %3498 = vmatpush.msra.mxu0 %v1721
    %3499 = vmatpush.msra.mxu0 %v1713
    %3500 = vmatpush.msra.mxu0 %v1705
    %3501 = vmatmul.f32.gmra.mxu0 %v1437
    %v3502 = vpop.f32.mrf.mxu0
    %v3503 = vadd.f32 %v3483, %v3502
    %3504 = vdwg.mxu0
    %3505 = vmatpush.msra.mxu0 %v1953
    %3506 = vmatpush.msra.mxu0 %v1945
    %3507 = vmatpush.msra.mxu0 %v1937
    %3508 = vmatpush.msra.mxu0 %v1929
    %3509 = vmatpush.msra.mxu0 %v1921
    %3510 = vmatpush.msra.mxu0 %v1913
    %3511 = vmatpush.msra.mxu0 %v1905
    %3512 = vmatpush.msra.mxu0 %v1897
    %3513 = vmatpush.msra.mxu0 %v1889
    %3514 = vmatpush.msra.mxu0 %v1881
    %3515 = vmatpush.msra.mxu0 %v1873
    %3516 = vmatpush.msra.mxu0 %v1865
    %3517 = vmatpush.msra.mxu0 %v1857
    %3518 = vmatpush.msra.mxu0 %v1849
    %3519 = vmatpush.msra.mxu0 %v1841
    %3520 = vmatpush.msra.mxu0 %v1833
    %3521 = vmatmul.f32.gmra.mxu0 %v1438
    %v3522 = vpop.f32.mrf.mxu0
    %v3523 = vadd.f32 %v3503, %v3522
    %3524 = vdwg.mxu0
    %3525 = vmatpush.msra.mxu0 %v2081
    %3526 = vmatpush.msra.mxu0 %v2073
    %3527 = vmatpush.msra.mxu0 %v2065
    %3528 = vmatpush.msra.mxu0 %v2057
    %3529 = vmatpush.msra.mxu0 %v2049
    %3530 = vmatpush.msra.mxu0 %v2041
    %3531 = vmatpush.msra.mxu0 %v2033
    %3532 = vmatpush.msra.mxu0 %v2025
    %3533 = vmatpush.msra.mxu0 %v2017
    %3534 = vmatpush.msra.mxu0 %v2009
    %3535 = vmatpush.msra.mxu0 %v2001
    %3536 = vmatpush.msra.mxu0 %v1993
    %3537 = vmatpush.msra.mxu0 %v1985
    %3538 = vmatpush.msra.mxu0 %v1977
    %3539 = vmatpush.msra.mxu0 %v1969
    %3540 = vmatpush.msra.mxu0 %v1961
    %3541 = vmatmul.f32.gmra.mxu0 %v1439
    %v3542 = vpop.f32.mrf.mxu0
    %v3543 = vadd.f32 %v3523, %v3542
    %3544 = vdwg.mxu0
    %3545 = vmatpush.msra.mxu0 %v2209
    %3546 = vmatpush.msra.mxu0 %v2201
    %3547 = vmatpush.msra.mxu0 %v2193
    %3548 = vmatpush.msra.mxu0 %v2185
    %3549 = vmatpush.msra.mxu0 %v2177
    %3550 = vmatpush.msra.mxu0 %v2169
    %3551 = vmatpush.msra.mxu0 %v2161
    %3552 = vmatpush.msra.mxu0 %v2153
    %3553 = vmatpush.msra.mxu0 %v2145
    %3554 = vmatpush.msra.mxu0 %v2137
    %3555 = vmatpush.msra.mxu0 %v2129
    %3556 = vmatpush.msra.mxu0 %v2121
    %3557 = vmatpush.msra.mxu0 %v2113
    %3558 = vmatpush.msra.mxu0 %v2105
    %3559 = vmatpush.msra.mxu0 %v2097
    %3560 = vmatpush.msra.mxu0 %v2089
    %3561 = vmatmul.f32.gmra.mxu0 %v1440
    %v3562 = vpop.f32.mrf.mxu0
    %v3563 = vadd.f32 %v3543, %v3562
    %3564 = vdwg.mxu0
    %3565 = vmatpush.msra.mxu0 %v2337
    %3566 = vmatpush.msra.mxu0 %v2329
    %3567 = vmatpush.msra.mxu0 %v2321
    %3568 = vmatpush.msra.mxu0 %v2313
    %3569 = vmatpush.msra.mxu0 %v2305
    %3570 = vmatpush.msra.mxu0 %v2297
    %3571 = vmatpush.msra.mxu0 %v2289
    %3572 = vmatpush.msra.mxu0 %v2281
    %3573 = vmatpush.msra.mxu0 %v2273
    %3574 = vmatpush.msra.mxu0 %v2265
    %3575 = vmatpush.msra.mxu0 %v2257
    %3576 = vmatpush.msra.mxu0 %v2249
    %3577 = vmatpush.msra.mxu0 %v2241
    %3578 = vmatpush.msra.mxu0 %v2233
    %3579 = vmatpush.msra.mxu0 %v2225
    %3580 = vmatpush.msra.mxu0 %v2217
    %3581 = vmatmul.f32.gmra.mxu0 %v1441
    %v3582 = vpop.f32.mrf.mxu0
    %v3583 = vadd.f32 %v3563, %v3582
    %3584 = vdwg.mxu0
    %3585 = vmatpush.msra.mxu0 %v2465
    %3586 = vmatpush.msra.mxu0 %v2457
    %3587 = vmatpush.msra.mxu0 %v2449
    %3588 = vmatpush.msra.mxu0 %v2441
    %3589 = vmatpush.msra.mxu0 %v2433
    %3590 = vmatpush.msra.mxu0 %v2425
    %3591 = vmatpush.msra.mxu0 %v2417
    %3592 = vmatpush.msra.mxu0 %v2409
    %3593 = vmatpush.msra.mxu0 %v2401
    %3594 = vmatpush.msra.mxu0 %v2393
    %3595 = vmatpush.msra.mxu0 %v2385
    %3596 = vmatpush.msra.mxu0 %v2377
    %3597 = vmatpush.msra.mxu0 %v2369
    %3598 = vmatpush.msra.mxu0 %v2361
    %3599 = vmatpush.msra.mxu0 %v2353
    %3600 = vmatpush.msra.mxu0 %v2345
    %3601 = vmatmul.f32.gmra.mxu0 %v1442
    %v3602 = vpop.f32.mrf.mxu0
    %v3603 = vadd.f32 %v3583, %v3602
    %3604 = vdwg.mxu0
    %3605 = vmatpush.msra.mxu0 %v1570
    %3606 = vmatpush.msra.mxu0 %v1562
    %3607 = vmatpush.msra.mxu0 %v1554
    %3608 = vmatpush.msra.mxu0 %v1546
    %3609 = vmatpush.msra.mxu0 %v1538
    %3610 = vmatpush.msra.mxu0 %v1530
    %3611 = vmatpush.msra.mxu0 %v1522
    %3612 = vmatpush.msra.mxu0 %v1514
    %3613 = vmatpush.msra.mxu0 %v1506
    %3614 = vmatpush.msra.mxu0 %v1498
    %3615 = vmatpush.msra.mxu0 %v1490
    %3616 = vmatpush.msra.mxu0 %v1482
    %3617 = vmatpush.msra.mxu0 %v1474
    %3618 = vmatpush.msra.mxu0 %v1466
    %3619 = vmatpush.msra.mxu0 %v1458
    %3620 = vmatpush.msra.mxu0 %v1450
    %3621 = vmatmul.f32.gmra.mxu0 %v1435
    %v3622 = vpop.f32.mrf.mxu0
    %v3623 = vadd.f32 %v2476, %v3622
    %3624 = vdwg.mxu0
    %3625 = vmatpush.msra.mxu0 %v1698
    %3626 = vmatpush.msra.mxu0 %v1690
    %3627 = vmatpush.msra.mxu0 %v1682
    %3628 = vmatpush.msra.mxu0 %v1674
    %3629 = vmatpush.msra.mxu0 %v1666
    %3630 = vmatpush.msra.mxu0 %v1658
    %3631 = vmatpush.msra.mxu0 %v1650
    %3632 = vmatpush.msra.mxu0 %v1642
    %3633 = vmatpush.msra.mxu0 %v1634
    %3634 = vmatpush.msra.mxu0 %v1626
    %3635 = vmatpush.msra.mxu0 %v1618
    %3636 = vmatpush.msra.mxu0 %v1610
    %3637 = vmatpush.msra.mxu0 %v1602
    %3638 = vmatpush.msra.mxu0 %v1594
    %3639 = vmatpush.msra.mxu0 %v1586
    %3640 = vmatpush.msra.mxu0 %v1578
    %3641 = vmatmul.f32.gmra.mxu0 %v1436
    %v3642 = vpop.f32.mrf.mxu0
    %v3643 = vadd.f32 %v3623, %v3642
    %3644 = vdwg.mxu0
    %3645 = vmatpush.msra.mxu0 %v1826
    %3646 = vmatpush.msra.mxu0 %v1818
    %3647 = vmatpush.msra.mxu0 %v1810
    %3648 = vmatpush.msra.mxu0 %v1802
    %3649 = vmatpush.msra.mxu0 %v1794
    %3650 = vmatpush.msra.mxu0 %v1786
    %3651 = vmatpush.msra.mxu0 %v1778
    %3652 = vmatpush.msra.mxu0 %v1770
    %3653 = vmatpush.msra.mxu0 %v1762
    %3654 = vmatpush.msra.mxu0 %v1754
    %3655 = vmatpush.msra.mxu0 %v1746
    %3656 = vmatpush.msra.mxu0 %v1738
    %3657 = vmatpush.msra.mxu0 %v1730
    %3658 = vmatpush.msra.mxu0 %v1722
    %3659 = vmatpush.msra.mxu0 %v1714
    %3660 = vmatpush.msra.mxu0 %v1706
    %3661 = vmatmul.f32.gmra.mxu0 %v1437
    %v3662 = vpop.f32.mrf.mxu0
    %v3663 = vadd.f32 %v3643, %v3662
    %3664 = vdwg.mxu0
    %3665 = vmatpush.msra.mxu0 %v1954
    %3666 = vmatpush.msra.mxu0 %v1946
    %3667 = vmatpush.msra.mxu0 %v1938
    %3668 = vmatpush.msra.mxu0 %v1930
    %3669 = vmatpush.msra.mxu0 %v1922
    %3670 = vmatpush.msra.mxu0 %v1914
    %3671 = vmatpush.msra.mxu0 %v1906
    %3672 = vmatpush.msra.mxu0 %v1898
    %3673 = vmatpush.msra.mxu0 %v1890
    %3674 = vmatpush.msra.mxu0 %v1882
    %3675 = vmatpush.msra.mxu0 %v1874
    %3676 = vmatpush.msra.mxu0 %v1866
    %3677 = vmatpush.msra.mxu0 %v1858
    %3678 = vmatpush.msra.mxu0 %v1850
    %3679 = vmatpush.msra.mxu0 %v1842
    %3680 = vmatpush.msra.mxu0 %v1834
    %3681 = vmatmul.f32.gmra.mxu0 %v1438
    %v3682 = vpop.f32.mrf.mxu0
    %v3683 = vadd.f32 %v3663, %v3682
    %3684 = vdwg.mxu0
    %3685 = vmatpush.msra.mxu0 %v2082
    %3686 = vmatpush.msra.mxu0 %v2074
    %3687 = vmatpush.msra.mxu0 %v2066
    %3688 = vmatpush.msra.mxu0 %v2058
    %3689 = vmatpush.msra.mxu0 %v2050
    %3690 = vmatpush.msra.mxu0 %v2042
    %3691 = vmatpush.msra.mxu0 %v2034
    %3692 = vmatpush.msra.mxu0 %v2026
    %3693 = vmatpush.msra.mxu0 %v2018
    %3694 = vmatpush.msra.mxu0 %v2010
    %3695 = vmatpush.msra.mxu0 %v2002
    %3696 = vmatpush.msra.mxu0 %v1994
    %3697 = vmatpush.msra.mxu0 %v1986
    %3698 = vmatpush.msra.mxu0 %v1978
    %3699 = vmatpush.msra.mxu0 %v1970
    %3700 = vmatpush.msra.mxu0 %v1962
    %3701 = vmatmul.f32.gmra.mxu0 %v1439
    %v3702 = vpop.f32.mrf.mxu0
    %v3703 = vadd.f32 %v3683, %v3702
    %3704 = vdwg.mxu0
    %3705 = vmatpush.msra.mxu0 %v2210
    %3706 = vmatpush.msra.mxu0 %v2202
    %3707 = vmatpush.msra.mxu0 %v2194
    %3708 = vmatpush.msra.mxu0 %v2186
    %3709 = vmatpush.msra.mxu0 %v2178
    %3710 = vmatpush.msra.mxu0 %v2170
    %3711 = vmatpush.msra.mxu0 %v2162
    %3712 = vmatpush.msra.mxu0 %v2154
    %3713 = vmatpush.msra.mxu0 %v2146
    %3714 = vmatpush.msra.mxu0 %v2138
    %3715 = vmatpush.msra.mxu0 %v2130
    %3716 = vmatpush.msra.mxu0 %v2122
    %3717 = vmatpush.msra.mxu0 %v2114
    %3718 = vmatpush.msra.mxu0 %v2106
    %3719 = vmatpush.msra.mxu0 %v2098
    %3720 = vmatpush.msra.mxu0 %v2090
    %3721 = vmatmul.f32.gmra.mxu0 %v1440
    %v3722 = vpop.f32.mrf.mxu0
    %v3723 = vadd.f32 %v3703, %v3722
    %3724 = vdwg.mxu0
    %3725 = vmatpush.msra.mxu0 %v2338
    %3726 = vmatpush.msra.mxu0 %v2330
    %3727 = vmatpush.msra.mxu0 %v2322
    %3728 = vmatpush.msra.mxu0 %v2314
    %3729 = vmatpush.msra.mxu0 %v2306
    %3730 = vmatpush.msra.mxu0 %v2298
    %3731 = vmatpush.msra.mxu0 %v2290
    %3732 = vmatpush.msra.mxu0 %v2282
    %3733 = vmatpush.msra.mxu0 %v2274
    %3734 = vmatpush.msra.mxu0 %v2266
    %3735 = vmatpush.msra.mxu0 %v2258
    %3736 = vmatpush.msra.mxu0 %v2250
    %3737 = vmatpush.msra.mxu0 %v2242
    %3738 = vmatpush.msra.mxu0 %v2234
    %3739 = vmatpush.msra.mxu0 %v2226
    %3740 = vmatpush.msra.mxu0 %v2218
    %3741 = vmatmul.f32.gmra.mxu0 %v1441
    %v3742 = vpop.f32.mrf.mxu0
    %v3743 = vadd.f32 %v3723, %v3742
    %3744 = vdwg.mxu0
    %3745 = vmatpush.msra.mxu0 %v2466
    %3746 = vmatpush.msra.mxu0 %v2458
    %3747 = vmatpush.msra.mxu0 %v2450
    %3748 = vmatpush.msra.mxu0 %v2442
    %3749 = vmatpush.msra.mxu0 %v2434
    %3750 = vmatpush.msra.mxu0 %v2426
    %3751 = vmatpush.msra.mxu0 %v2418
    %3752 = vmatpush.msra.mxu0 %v2410
    %3753 = vmatpush.msra.mxu0 %v2402
    %3754 = vmatpush.msra.mxu0 %v2394
    %3755 = vmatpush.msra.mxu0 %v2386
    %3756 = vmatpush.msra.mxu0 %v2378
    %3757 = vmatpush.msra.mxu0 %v2370
    %3758 = vmatpush.msra.mxu0 %v2362
    %3759 = vmatpush.msra.mxu0 %v2354
    %3760 = vmatpush.msra.mxu0 %v2346
    %3761 = vmatmul.f32.gmra.mxu0 %v1442
    %v3762 = vpop.f32.mrf.mxu0
    %v3763 = vadd.f32 %v3743, %v3762
    %3764 = vdwg.mxu0
    %vm3765 = vcmp.ge.f32.partialorder %v2643, 0.0
    %vm3766 = vcmp.ge.f32.partialorder %v2803, 0.0
    %vm3767 = vcmp.ge.f32.partialorder %v2963, 0.0
    %vm3768 = vcmp.ge.f32.partialorder %v3123, 0.0
    %vm3769 = vcmp.ge.f32.partialorder %v3283, 0.0
    %vm3770 = vcmp.ge.f32.partialorder %v3443, 0.0
    %vm3771 = vcmp.ge.f32.partialorder %v3603, 0.0
    %vm3772 = vcmp.ge.f32.partialorder %v3763, 0.0
    %v3773 = vmul.f32 %v2643, 0.1
    %v3774 = vmul.f32 %v2803, 0.1
    %v3775 = vmul.f32 %v2963, 0.1
    %v3776 = vmul.f32 %v3123, 0.1
    %v3777 = vmul.f32 %v3283, 0.1
    %v3778 = vmul.f32 %v3443, 0.1
    %v3779 = vmul.f32 %v3603, 0.1
    %v3780 = vmul.f32 %v3763, 0.1
    %v3781 = vsel %vm3765, %v2643, %v3773
    %v3782 = vsel %vm3766, %v2803, %v3774
    %v3783 = vsel %vm3767, %v2963, %v3775
    %v3784 = vsel %vm3768, %v3123, %v3776
    %v3785 = vsel %vm3769, %v3283, %v3777
    %v3786 = vsel %vm3770, %v3443, %v3778
    %v3787 = vsel %vm3771, %v3603, %v3779
    %v3788 = vsel %vm3772, %v3763, %v3780
    %v3789 = vld [vmem:[#allocation15] sm:$0xff]
    %v3790 = vld [vmem:[#allocation15 + $0x8] sm:$0xff]
    %v3791 = vld [vmem:[#allocation15 + $0x10] sm:$0xff]
    %v3792 = vld [vmem:[#allocation15 + $0x18] sm:$0xff]
    %v3793 = vld [vmem:[#allocation15 + $0x20] sm:$0xff]
    %v3794 = vld [vmem:[#allocation15 + $0x28] sm:$0xff]
    %v3795 = vld [vmem:[#allocation15 + $0x30] sm:$0xff]
    %v3796 = vld [vmem:[#allocation15 + $0x38] sm:$0xff]
    %v3797 = vld [vmem:[#allocation15 + $0x40] sm:$0xff]
    %v3798 = vld [vmem:[#allocation15 + $0x48] sm:$0xff]
    %v3799 = vld [vmem:[#allocation15 + $0x50] sm:$0xff]
    %v3800 = vld [vmem:[#allocation15 + $0x58] sm:$0xff]
    %v3801 = vld [vmem:[#allocation15 + $0x60] sm:$0xff]
    %v3802 = vld [vmem:[#allocation15 + $0x68] sm:$0xff]
    %v3803 = vld [vmem:[#allocation15 + $0x70] sm:$0xff]
    %v3804 = vld [vmem:[#allocation15 + $0x78] sm:$0xff]
    %v3805 = vld [vmem:[#allocation15 + $0x80] sm:$0xff]
    %v3806 = vld [vmem:[#allocation15 + $0x88] sm:$0xff]
    %v3807 = vld [vmem:[#allocation15 + $0x90] sm:$0xff]
    %v3808 = vld [vmem:[#allocation15 + $0x98] sm:$0xff]
    %v3809 = vld [vmem:[#allocation15 + $0xa0] sm:$0xff]
    %v3810 = vld [vmem:[#allocation15 + $0xa8] sm:$0xff]
    %v3811 = vld [vmem:[#allocation15 + $0xb0] sm:$0xff]
    %v3812 = vld [vmem:[#allocation15 + $0xb8] sm:$0xff]
    %v3813 = vld [vmem:[#allocation15 + $0xc0] sm:$0xff]
    %v3814 = vld [vmem:[#allocation15 + $0xc8] sm:$0xff]
    %v3815 = vld [vmem:[#allocation15 + $0xd0] sm:$0xff]
    %v3816 = vld [vmem:[#allocation15 + $0xd8] sm:$0xff]
    %v3817 = vld [vmem:[#allocation15 + $0xe0] sm:$0xff]
    %v3818 = vld [vmem:[#allocation15 + $0xe8] sm:$0xff]
    %v3819 = vld [vmem:[#allocation15 + $0xf0] sm:$0xff]
    %v3820 = vld [vmem:[#allocation15 + $0xf8] sm:$0xff]
    %v3821 = vld [vmem:[#allocation15 + $0x100] sm:$0xff]
    %v3822 = vld [vmem:[#allocation15 + $0x108] sm:$0xff]
    %v3823 = vld [vmem:[#allocation15 + $0x110] sm:$0xff]
    %v3824 = vld [vmem:[#allocation15 + $0x118] sm:$0xff]
    %v3825 = vld [vmem:[#allocation15 + $0x120] sm:$0xff]
    %v3826 = vld [vmem:[#allocation15 + $0x128] sm:$0xff]
    %v3827 = vld [vmem:[#allocation15 + $0x130] sm:$0xff]
    %v3828 = vld [vmem:[#allocation15 + $0x138] sm:$0xff]
    %v3829 = vld [vmem:[#allocation15 + $0x140] sm:$0xff]
    %v3830 = vld [vmem:[#allocation15 + $0x148] sm:$0xff]
    %v3831 = vld [vmem:[#allocation15 + $0x150] sm:$0xff]
    %v3832 = vld [vmem:[#allocation15 + $0x158] sm:$0xff]
    %v3833 = vld [vmem:[#allocation15 + $0x160] sm:$0xff]
    %v3834 = vld [vmem:[#allocation15 + $0x168] sm:$0xff]
    %v3835 = vld [vmem:[#allocation15 + $0x170] sm:$0xff]
    %v3836 = vld [vmem:[#allocation15 + $0x178] sm:$0xff]
    %v3837 = vld [vmem:[#allocation15 + $0x180] sm:$0xff]
    %v3838 = vld [vmem:[#allocation15 + $0x188] sm:$0xff]
    %v3839 = vld [vmem:[#allocation15 + $0x190] sm:$0xff]
    %v3840 = vld [vmem:[#allocation15 + $0x198] sm:$0xff]
    %v3841 = vld [vmem:[#allocation15 + $0x1a0] sm:$0xff]
    %v3842 = vld [vmem:[#allocation15 + $0x1a8] sm:$0xff]
    %v3843 = vld [vmem:[#allocation15 + $0x1b0] sm:$0xff]
    %v3844 = vld [vmem:[#allocation15 + $0x1b8] sm:$0xff]
    %v3845 = vld [vmem:[#allocation15 + $0x1c0] sm:$0xff]
    %v3846 = vld [vmem:[#allocation15 + $0x1c8] sm:$0xff]
    %v3847 = vld [vmem:[#allocation15 + $0x1d0] sm:$0xff]
    %v3848 = vld [vmem:[#allocation15 + $0x1d8] sm:$0xff]
    %v3849 = vld [vmem:[#allocation15 + $0x1e0] sm:$0xff]
    %v3850 = vld [vmem:[#allocation15 + $0x1e8] sm:$0xff]
    %v3851 = vld [vmem:[#allocation15 + $0x1f0] sm:$0xff]
    %v3852 = vld [vmem:[#allocation15 + $0x1f8] sm:$0xff]
    %v3853 = vld [vmem:[#allocation15 + $0x200] sm:$0xff]
    %v3854 = vld [vmem:[#allocation15 + $0x208] sm:$0xff]
    %v3855 = vld [vmem:[#allocation15 + $0x210] sm:$0xff]
    %v3856 = vld [vmem:[#allocation15 + $0x218] sm:$0xff]
    %v3857 = vld [vmem:[#allocation15 + $0x220] sm:$0xff]
    %v3858 = vld [vmem:[#allocation15 + $0x228] sm:$0xff]
    %v3859 = vld [vmem:[#allocation15 + $0x230] sm:$0xff]
    %v3860 = vld [vmem:[#allocation15 + $0x238] sm:$0xff]
    %v3861 = vld [vmem:[#allocation15 + $0x240] sm:$0xff]
    %v3862 = vld [vmem:[#allocation15 + $0x248] sm:$0xff]
    %v3863 = vld [vmem:[#allocation15 + $0x250] sm:$0xff]
    %v3864 = vld [vmem:[#allocation15 + $0x258] sm:$0xff]
    %v3865 = vld [vmem:[#allocation15 + $0x260] sm:$0xff]
    %v3866 = vld [vmem:[#allocation15 + $0x268] sm:$0xff]
    %v3867 = vld [vmem:[#allocation15 + $0x270] sm:$0xff]
    %v3868 = vld [vmem:[#allocation15 + $0x278] sm:$0xff]
    %v3869 = vld [vmem:[#allocation15 + $0x280] sm:$0xff]
    %v3870 = vld [vmem:[#allocation15 + $0x288] sm:$0xff]
    %v3871 = vld [vmem:[#allocation15 + $0x290] sm:$0xff]
    %v3872 = vld [vmem:[#allocation15 + $0x298] sm:$0xff]
    %v3873 = vld [vmem:[#allocation15 + $0x2a0] sm:$0xff]
    %v3874 = vld [vmem:[#allocation15 + $0x2a8] sm:$0xff]
    %v3875 = vld [vmem:[#allocation15 + $0x2b0] sm:$0xff]
    %v3876 = vld [vmem:[#allocation15 + $0x2b8] sm:$0xff]
    %v3877 = vld [vmem:[#allocation15 + $0x2c0] sm:$0xff]
    %v3878 = vld [vmem:[#allocation15 + $0x2c8] sm:$0xff]
    %v3879 = vld [vmem:[#allocation15 + $0x2d0] sm:$0xff]
    %v3880 = vld [vmem:[#allocation15 + $0x2d8] sm:$0xff]
    %v3881 = vld [vmem:[#allocation15 + $0x2e0] sm:$0xff]
    %v3882 = vld [vmem:[#allocation15 + $0x2e8] sm:$0xff]
    %v3883 = vld [vmem:[#allocation15 + $0x2f0] sm:$0xff]
    %v3884 = vld [vmem:[#allocation15 + $0x2f8] sm:$0xff]
    %v3885 = vld [vmem:[#allocation15 + $0x300] sm:$0xff]
    %v3886 = vld [vmem:[#allocation15 + $0x308] sm:$0xff]
    %v3887 = vld [vmem:[#allocation15 + $0x310] sm:$0xff]
    %v3888 = vld [vmem:[#allocation15 + $0x318] sm:$0xff]
    %v3889 = vld [vmem:[#allocation15 + $0x320] sm:$0xff]
    %v3890 = vld [vmem:[#allocation15 + $0x328] sm:$0xff]
    %v3891 = vld [vmem:[#allocation15 + $0x330] sm:$0xff]
    %v3892 = vld [vmem:[#allocation15 + $0x338] sm:$0xff]
    %v3893 = vld [vmem:[#allocation15 + $0x340] sm:$0xff]
    %v3894 = vld [vmem:[#allocation15 + $0x348] sm:$0xff]
    %v3895 = vld [vmem:[#allocation15 + $0x350] sm:$0xff]
    %v3896 = vld [vmem:[#allocation15 + $0x358] sm:$0xff]
    %v3897 = vld [vmem:[#allocation15 + $0x360] sm:$0xff]
    %v3898 = vld [vmem:[#allocation15 + $0x368] sm:$0xff]
    %v3899 = vld [vmem:[#allocation15 + $0x370] sm:$0xff]
    %v3900 = vld [vmem:[#allocation15 + $0x378] sm:$0xff]
    %v3901 = vld [vmem:[#allocation15 + $0x380] sm:$0xff]
    %v3902 = vld [vmem:[#allocation15 + $0x388] sm:$0xff]
    %v3903 = vld [vmem:[#allocation15 + $0x390] sm:$0xff]
    %v3904 = vld [vmem:[#allocation15 + $0x398] sm:$0xff]
    %v3905 = vld [vmem:[#allocation15 + $0x3a0] sm:$0xff]
    %v3906 = vld [vmem:[#allocation15 + $0x3a8] sm:$0xff]
    %v3907 = vld [vmem:[#allocation15 + $0x3b0] sm:$0xff]
    %v3908 = vld [vmem:[#allocation15 + $0x3b8] sm:$0xff]
    %v3909 = vld [vmem:[#allocation15 + $0x3c0] sm:$0xff]
    %v3910 = vld [vmem:[#allocation15 + $0x3c8] sm:$0xff]
    %v3911 = vld [vmem:[#allocation15 + $0x3d0] sm:$0xff]
    %v3912 = vld [vmem:[#allocation15 + $0x3d8] sm:$0xff]
    %v3913 = vld [vmem:[#allocation15 + $0x3e0] sm:$0xff]
    %v3914 = vld [vmem:[#allocation15 + $0x3e8] sm:$0xff]
    %v3915 = vld [vmem:[#allocation15 + $0x3f0] sm:$0xff]
    %v3916 = vld [vmem:[#allocation15 + $0x3f8] sm:$0xff]
    %v3917 = vld [vmem:[#allocation15 + $0x400] sm:$0xff]
    %v3918 = vld [vmem:[#allocation15 + $0x408] sm:$0xff]
    %v3919 = vld [vmem:[#allocation15 + $0x410] sm:$0xff]
    %v3920 = vld [vmem:[#allocation15 + $0x418] sm:$0xff]
    %v3921 = vld [vmem:[#allocation15 + $0x420] sm:$0xff]
    %v3922 = vld [vmem:[#allocation15 + $0x428] sm:$0xff]
    %v3923 = vld [vmem:[#allocation15 + $0x430] sm:$0xff]
    %v3924 = vld [vmem:[#allocation15 + $0x438] sm:$0xff]
    %v3925 = vld [vmem:[#allocation15 + $0x440] sm:$0xff]
    %v3926 = vld [vmem:[#allocation15 + $0x448] sm:$0xff]
    %v3927 = vld [vmem:[#allocation15 + $0x450] sm:$0xff]
    %v3928 = vld [vmem:[#allocation15 + $0x458] sm:$0xff]
    %v3929 = vld [vmem:[#allocation15 + $0x460] sm:$0xff]
    %v3930 = vld [vmem:[#allocation15 + $0x468] sm:$0xff]
    %v3931 = vld [vmem:[#allocation15 + $0x470] sm:$0xff]
    %v3932 = vld [vmem:[#allocation15 + $0x478] sm:$0xff]
    %v3933 = vld [vmem:[#allocation15 + $0x480] sm:$0xff]
    %v3934 = vld [vmem:[#allocation15 + $0x488] sm:$0xff]
    %v3935 = vld [vmem:[#allocation15 + $0x490] sm:$0xff]
    %v3936 = vld [vmem:[#allocation15 + $0x498] sm:$0xff]
    %v3937 = vld [vmem:[#allocation15 + $0x4a0] sm:$0xff]
    %v3938 = vld [vmem:[#allocation15 + $0x4a8] sm:$0xff]
    %v3939 = vld [vmem:[#allocation15 + $0x4b0] sm:$0xff]
    %v3940 = vld [vmem:[#allocation15 + $0x4b8] sm:$0xff]
    %v3941 = vld [vmem:[#allocation15 + $0x4c0] sm:$0xff]
    %v3942 = vld [vmem:[#allocation15 + $0x4c8] sm:$0xff]
    %v3943 = vld [vmem:[#allocation15 + $0x4d0] sm:$0xff]
    %v3944 = vld [vmem:[#allocation15 + $0x4d8] sm:$0xff]
    %v3945 = vld [vmem:[#allocation15 + $0x4e0] sm:$0xff]
    %v3946 = vld [vmem:[#allocation15 + $0x4e8] sm:$0xff]
    %v3947 = vld [vmem:[#allocation15 + $0x4f0] sm:$0xff]
    %v3948 = vld [vmem:[#allocation15 + $0x4f8] sm:$0xff]
    %v3949 = vld [vmem:[#allocation15 + $0x500] sm:$0xff]
    %v3950 = vld [vmem:[#allocation15 + $0x508] sm:$0xff]
    %v3951 = vld [vmem:[#allocation15 + $0x510] sm:$0xff]
    %v3952 = vld [vmem:[#allocation15 + $0x518] sm:$0xff]
    %v3953 = vld [vmem:[#allocation15 + $0x520] sm:$0xff]
    %v3954 = vld [vmem:[#allocation15 + $0x528] sm:$0xff]
    %v3955 = vld [vmem:[#allocation15 + $0x530] sm:$0xff]
    %v3956 = vld [vmem:[#allocation15 + $0x538] sm:$0xff]
    %v3957 = vld [vmem:[#allocation15 + $0x540] sm:$0xff]
    %v3958 = vld [vmem:[#allocation15 + $0x548] sm:$0xff]
    %v3959 = vld [vmem:[#allocation15 + $0x550] sm:$0xff]
    %v3960 = vld [vmem:[#allocation15 + $0x558] sm:$0xff]
    %v3961 = vld [vmem:[#allocation15 + $0x560] sm:$0xff]
    %v3962 = vld [vmem:[#allocation15 + $0x568] sm:$0xff]
    %v3963 = vld [vmem:[#allocation15 + $0x570] sm:$0xff]
    %v3964 = vld [vmem:[#allocation15 + $0x578] sm:$0xff]
    %v3965 = vld [vmem:[#allocation15 + $0x580] sm:$0xff]
    %v3966 = vld [vmem:[#allocation15 + $0x588] sm:$0xff]
    %v3967 = vld [vmem:[#allocation15 + $0x590] sm:$0xff]
    %v3968 = vld [vmem:[#allocation15 + $0x598] sm:$0xff]
    %v3969 = vld [vmem:[#allocation15 + $0x5a0] sm:$0xff]
    %v3970 = vld [vmem:[#allocation15 + $0x5a8] sm:$0xff]
    %v3971 = vld [vmem:[#allocation15 + $0x5b0] sm:$0xff]
    %v3972 = vld [vmem:[#allocation15 + $0x5b8] sm:$0xff]
    %v3973 = vld [vmem:[#allocation15 + $0x5c0] sm:$0xff]
    %v3974 = vld [vmem:[#allocation15 + $0x5c8] sm:$0xff]
    %v3975 = vld [vmem:[#allocation15 + $0x5d0] sm:$0xff]
    %v3976 = vld [vmem:[#allocation15 + $0x5d8] sm:$0xff]
    %v3977 = vld [vmem:[#allocation15 + $0x5e0] sm:$0xff]
    %v3978 = vld [vmem:[#allocation15 + $0x5e8] sm:$0xff]
    %v3979 = vld [vmem:[#allocation15 + $0x5f0] sm:$0xff]
    %v3980 = vld [vmem:[#allocation15 + $0x5f8] sm:$0xff]
    %v3981 = vld [vmem:[#allocation15 + $0x600] sm:$0xff]
    %v3982 = vld [vmem:[#allocation15 + $0x608] sm:$0xff]
    %v3983 = vld [vmem:[#allocation15 + $0x610] sm:$0xff]
    %v3984 = vld [vmem:[#allocation15 + $0x618] sm:$0xff]
    %v3985 = vld [vmem:[#allocation15 + $0x620] sm:$0xff]
    %v3986 = vld [vmem:[#allocation15 + $0x628] sm:$0xff]
    %v3987 = vld [vmem:[#allocation15 + $0x630] sm:$0xff]
    %v3988 = vld [vmem:[#allocation15 + $0x638] sm:$0xff]
    %v3989 = vld [vmem:[#allocation15 + $0x640] sm:$0xff]
    %v3990 = vld [vmem:[#allocation15 + $0x648] sm:$0xff]
    %v3991 = vld [vmem:[#allocation15 + $0x650] sm:$0xff]
    %v3992 = vld [vmem:[#allocation15 + $0x658] sm:$0xff]
    %v3993 = vld [vmem:[#allocation15 + $0x660] sm:$0xff]
    %v3994 = vld [vmem:[#allocation15 + $0x668] sm:$0xff]
    %v3995 = vld [vmem:[#allocation15 + $0x670] sm:$0xff]
    %v3996 = vld [vmem:[#allocation15 + $0x678] sm:$0xff]
    %v3997 = vld [vmem:[#allocation15 + $0x680] sm:$0xff]
    %v3998 = vld [vmem:[#allocation15 + $0x688] sm:$0xff]
    %v3999 = vld [vmem:[#allocation15 + $0x690] sm:$0xff]
    %v4000 = vld [vmem:[#allocation15 + $0x698] sm:$0xff]
    %v4001 = vld [vmem:[#allocation15 + $0x6a0] sm:$0xff]
    %v4002 = vld [vmem:[#allocation15 + $0x6a8] sm:$0xff]
    %v4003 = vld [vmem:[#allocation15 + $0x6b0] sm:$0xff]
    %v4004 = vld [vmem:[#allocation15 + $0x6b8] sm:$0xff]
    %v4005 = vld [vmem:[#allocation15 + $0x6c0] sm:$0xff]
    %v4006 = vld [vmem:[#allocation15 + $0x6c8] sm:$0xff]
    %v4007 = vld [vmem:[#allocation15 + $0x6d0] sm:$0xff]
    %v4008 = vld [vmem:[#allocation15 + $0x6d8] sm:$0xff]
    %v4009 = vld [vmem:[#allocation15 + $0x6e0] sm:$0xff]
    %v4010 = vld [vmem:[#allocation15 + $0x6e8] sm:$0xff]
    %v4011 = vld [vmem:[#allocation15 + $0x6f0] sm:$0xff]
    %v4012 = vld [vmem:[#allocation15 + $0x6f8] sm:$0xff]
    %v4013 = vld [vmem:[#allocation15 + $0x700] sm:$0xff]
    %v4014 = vld [vmem:[#allocation15 + $0x708] sm:$0xff]
    %v4015 = vld [vmem:[#allocation15 + $0x710] sm:$0xff]
    %v4016 = vld [vmem:[#allocation15 + $0x718] sm:$0xff]
    %v4017 = vld [vmem:[#allocation15 + $0x720] sm:$0xff]
    %v4018 = vld [vmem:[#allocation15 + $0x728] sm:$0xff]
    %v4019 = vld [vmem:[#allocation15 + $0x730] sm:$0xff]
    %v4020 = vld [vmem:[#allocation15 + $0x738] sm:$0xff]
    %v4021 = vld [vmem:[#allocation15 + $0x740] sm:$0xff]
    %v4022 = vld [vmem:[#allocation15 + $0x748] sm:$0xff]
    %v4023 = vld [vmem:[#allocation15 + $0x750] sm:$0xff]
    %v4024 = vld [vmem:[#allocation15 + $0x758] sm:$0xff]
    %v4025 = vld [vmem:[#allocation15 + $0x760] sm:$0xff]
    %v4026 = vld [vmem:[#allocation15 + $0x768] sm:$0xff]
    %v4027 = vld [vmem:[#allocation15 + $0x770] sm:$0xff]
    %v4028 = vld [vmem:[#allocation15 + $0x778] sm:$0xff]
    %v4029 = vld [vmem:[#allocation15 + $0x780] sm:$0xff]
    %v4030 = vld [vmem:[#allocation15 + $0x788] sm:$0xff]
    %v4031 = vld [vmem:[#allocation15 + $0x790] sm:$0xff]
    %v4032 = vld [vmem:[#allocation15 + $0x798] sm:$0xff]
    %v4033 = vld [vmem:[#allocation15 + $0x7a0] sm:$0xff]
    %v4034 = vld [vmem:[#allocation15 + $0x7a8] sm:$0xff]
    %v4035 = vld [vmem:[#allocation15 + $0x7b0] sm:$0xff]
    %v4036 = vld [vmem:[#allocation15 + $0x7b8] sm:$0xff]
    %v4037 = vld [vmem:[#allocation15 + $0x7c0] sm:$0xff]
    %v4038 = vld [vmem:[#allocation15 + $0x7c8] sm:$0xff]
    %v4039 = vld [vmem:[#allocation15 + $0x7d0] sm:$0xff]
    %v4040 = vld [vmem:[#allocation15 + $0x7d8] sm:$0xff]
    %v4041 = vld [vmem:[#allocation15 + $0x7e0] sm:$0xff]
    %v4042 = vld [vmem:[#allocation15 + $0x7e8] sm:$0xff]
    %v4043 = vld [vmem:[#allocation15 + $0x7f0] sm:$0xff]
    %v4044 = vld [vmem:[#allocation15 + $0x7f8] sm:$0xff]
    %v4045 = vld [vmem:[#allocation15 + $0x800] sm:$0xff]
    %v4046 = vld [vmem:[#allocation15 + $0x808] sm:$0xff]
    %v4047 = vld [vmem:[#allocation15 + $0x810] sm:$0xff]
    %v4048 = vld [vmem:[#allocation15 + $0x818] sm:$0xff]
    %v4049 = vld [vmem:[#allocation15 + $0x820] sm:$0xff]
    %v4050 = vld [vmem:[#allocation15 + $0x828] sm:$0xff]
    %v4051 = vld [vmem:[#allocation15 + $0x830] sm:$0xff]
    %v4052 = vld [vmem:[#allocation15 + $0x838] sm:$0xff]
    %v4053 = vld [vmem:[#allocation15 + $0x840] sm:$0xff]
    %v4054 = vld [vmem:[#allocation15 + $0x848] sm:$0xff]
    %v4055 = vld [vmem:[#allocation15 + $0x850] sm:$0xff]
    %v4056 = vld [vmem:[#allocation15 + $0x858] sm:$0xff]
    %v4057 = vld [vmem:[#allocation15 + $0x860] sm:$0xff]
    %v4058 = vld [vmem:[#allocation15 + $0x868] sm:$0xff]
    %v4059 = vld [vmem:[#allocation15 + $0x870] sm:$0xff]
    %v4060 = vld [vmem:[#allocation15 + $0x878] sm:$0xff]
    %v4061 = vld [vmem:[#allocation15 + $0x880] sm:$0xff]
    %v4062 = vld [vmem:[#allocation15 + $0x888] sm:$0xff]
    %v4063 = vld [vmem:[#allocation15 + $0x890] sm:$0xff]
    %v4064 = vld [vmem:[#allocation15 + $0x898] sm:$0xff]
    %v4065 = vld [vmem:[#allocation15 + $0x8a0] sm:$0xff]
    %v4066 = vld [vmem:[#allocation15 + $0x8a8] sm:$0xff]
    %v4067 = vld [vmem:[#allocation15 + $0x8b0] sm:$0xff]
    %v4068 = vld [vmem:[#allocation15 + $0x8b8] sm:$0xff]
    %v4069 = vld [vmem:[#allocation15 + $0x8c0] sm:$0xff]
    %v4070 = vld [vmem:[#allocation15 + $0x8c8] sm:$0xff]
    %v4071 = vld [vmem:[#allocation15 + $0x8d0] sm:$0xff]
    %v4072 = vld [vmem:[#allocation15 + $0x8d8] sm:$0xff]
    %v4073 = vld [vmem:[#allocation15 + $0x8e0] sm:$0xff]
    %v4074 = vld [vmem:[#allocation15 + $0x8e8] sm:$0xff]
    %v4075 = vld [vmem:[#allocation15 + $0x8f0] sm:$0xff]
    %v4076 = vld [vmem:[#allocation15 + $0x8f8] sm:$0xff]
    %v4077 = vld [vmem:[#allocation15 + $0x900] sm:$0xff]
    %v4078 = vld [vmem:[#allocation15 + $0x908] sm:$0xff]
    %v4079 = vld [vmem:[#allocation15 + $0x910] sm:$0xff]
    %v4080 = vld [vmem:[#allocation15 + $0x918] sm:$0xff]
    %v4081 = vld [vmem:[#allocation15 + $0x920] sm:$0xff]
    %v4082 = vld [vmem:[#allocation15 + $0x928] sm:$0xff]
    %v4083 = vld [vmem:[#allocation15 + $0x930] sm:$0xff]
    %v4084 = vld [vmem:[#allocation15 + $0x938] sm:$0xff]
    %v4085 = vld [vmem:[#allocation15 + $0x940] sm:$0xff]
    %v4086 = vld [vmem:[#allocation15 + $0x948] sm:$0xff]
    %v4087 = vld [vmem:[#allocation15 + $0x950] sm:$0xff]
    %v4088 = vld [vmem:[#allocation15 + $0x958] sm:$0xff]
    %v4089 = vld [vmem:[#allocation15 + $0x960] sm:$0xff]
    %v4090 = vld [vmem:[#allocation15 + $0x968] sm:$0xff]
    %v4091 = vld [vmem:[#allocation15 + $0x970] sm:$0xff]
    %v4092 = vld [vmem:[#allocation15 + $0x978] sm:$0xff]
    %v4093 = vld [vmem:[#allocation15 + $0x980] sm:$0xff]
    %v4094 = vld [vmem:[#allocation15 + $0x988] sm:$0xff]
    %v4095 = vld [vmem:[#allocation15 + $0x990] sm:$0xff]
    %v4096 = vld [vmem:[#allocation15 + $0x998] sm:$0xff]
    %v4097 = vld [vmem:[#allocation15 + $0x9a0] sm:$0xff]
    %v4098 = vld [vmem:[#allocation15 + $0x9a8] sm:$0xff]
    %v4099 = vld [vmem:[#allocation15 + $0x9b0] sm:$0xff]
    %v4100 = vld [vmem:[#allocation15 + $0x9b8] sm:$0xff]
    %v4101 = vld [vmem:[#allocation15 + $0x9c0] sm:$0xff]
    %v4102 = vld [vmem:[#allocation15 + $0x9c8] sm:$0xff]
    %v4103 = vld [vmem:[#allocation15 + $0x9d0] sm:$0xff]
    %v4104 = vld [vmem:[#allocation15 + $0x9d8] sm:$0xff]
    %v4105 = vld [vmem:[#allocation15 + $0x9e0] sm:$0xff]
    %v4106 = vld [vmem:[#allocation15 + $0x9e8] sm:$0xff]
    %v4107 = vld [vmem:[#allocation15 + $0x9f0] sm:$0xff]
    %v4108 = vld [vmem:[#allocation15 + $0x9f8] sm:$0xff]
    %v4109 = vld [vmem:[#allocation15 + $0xa00] sm:$0xff]
    %v4110 = vld [vmem:[#allocation15 + $0xa08] sm:$0xff]
    %v4111 = vld [vmem:[#allocation15 + $0xa10] sm:$0xff]
    %v4112 = vld [vmem:[#allocation15 + $0xa18] sm:$0xff]
    %v4113 = vld [vmem:[#allocation15 + $0xa20] sm:$0xff]
    %v4114 = vld [vmem:[#allocation15 + $0xa28] sm:$0xff]
    %v4115 = vld [vmem:[#allocation15 + $0xa30] sm:$0xff]
    %v4116 = vld [vmem:[#allocation15 + $0xa38] sm:$0xff]
    %v4117 = vld [vmem:[#allocation15 + $0xa40] sm:$0xff]
    %v4118 = vld [vmem:[#allocation15 + $0xa48] sm:$0xff]
    %v4119 = vld [vmem:[#allocation15 + $0xa50] sm:$0xff]
    %v4120 = vld [vmem:[#allocation15 + $0xa58] sm:$0xff]
    %v4121 = vld [vmem:[#allocation15 + $0xa60] sm:$0xff]
    %v4122 = vld [vmem:[#allocation15 + $0xa68] sm:$0xff]
    %v4123 = vld [vmem:[#allocation15 + $0xa70] sm:$0xff]
    %v4124 = vld [vmem:[#allocation15 + $0xa78] sm:$0xff]
    %v4125 = vld [vmem:[#allocation15 + $0xa80] sm:$0xff]
    %v4126 = vld [vmem:[#allocation15 + $0xa88] sm:$0xff]
    %v4127 = vld [vmem:[#allocation15 + $0xa90] sm:$0xff]
    %v4128 = vld [vmem:[#allocation15 + $0xa98] sm:$0xff]
    %v4129 = vld [vmem:[#allocation15 + $0xaa0] sm:$0xff]
    %v4130 = vld [vmem:[#allocation15 + $0xaa8] sm:$0xff]
    %v4131 = vld [vmem:[#allocation15 + $0xab0] sm:$0xff]
    %v4132 = vld [vmem:[#allocation15 + $0xab8] sm:$0xff]
    %v4133 = vld [vmem:[#allocation15 + $0xac0] sm:$0xff]
    %v4134 = vld [vmem:[#allocation15 + $0xac8] sm:$0xff]
    %v4135 = vld [vmem:[#allocation15 + $0xad0] sm:$0xff]
    %v4136 = vld [vmem:[#allocation15 + $0xad8] sm:$0xff]
    %v4137 = vld [vmem:[#allocation15 + $0xae0] sm:$0xff]
    %v4138 = vld [vmem:[#allocation15 + $0xae8] sm:$0xff]
    %v4139 = vld [vmem:[#allocation15 + $0xaf0] sm:$0xff]
    %v4140 = vld [vmem:[#allocation15 + $0xaf8] sm:$0xff]
    %v4141 = vld [vmem:[#allocation15 + $0xb00] sm:$0xff]
    %v4142 = vld [vmem:[#allocation15 + $0xb08] sm:$0xff]
    %v4143 = vld [vmem:[#allocation15 + $0xb10] sm:$0xff]
    %v4144 = vld [vmem:[#allocation15 + $0xb18] sm:$0xff]
    %v4145 = vld [vmem:[#allocation15 + $0xb20] sm:$0xff]
    %v4146 = vld [vmem:[#allocation15 + $0xb28] sm:$0xff]
    %v4147 = vld [vmem:[#allocation15 + $0xb30] sm:$0xff]
    %v4148 = vld [vmem:[#allocation15 + $0xb38] sm:$0xff]
    %v4149 = vld [vmem:[#allocation15 + $0xb40] sm:$0xff]
    %v4150 = vld [vmem:[#allocation15 + $0xb48] sm:$0xff]
    %v4151 = vld [vmem:[#allocation15 + $0xb50] sm:$0xff]
    %v4152 = vld [vmem:[#allocation15 + $0xb58] sm:$0xff]
    %v4153 = vld [vmem:[#allocation15 + $0xb60] sm:$0xff]
    %v4154 = vld [vmem:[#allocation15 + $0xb68] sm:$0xff]
    %v4155 = vld [vmem:[#allocation15 + $0xb70] sm:$0xff]
    %v4156 = vld [vmem:[#allocation15 + $0xb78] sm:$0xff]
    %v4157 = vld [vmem:[#allocation15 + $0xb80] sm:$0xff]
    %v4158 = vld [vmem:[#allocation15 + $0xb88] sm:$0xff]
    %v4159 = vld [vmem:[#allocation15 + $0xb90] sm:$0xff]
    %v4160 = vld [vmem:[#allocation15 + $0xb98] sm:$0xff]
    %v4161 = vld [vmem:[#allocation15 + $0xba0] sm:$0xff]
    %v4162 = vld [vmem:[#allocation15 + $0xba8] sm:$0xff]
    %v4163 = vld [vmem:[#allocation15 + $0xbb0] sm:$0xff]
    %v4164 = vld [vmem:[#allocation15 + $0xbb8] sm:$0xff]
    %v4165 = vld [vmem:[#allocation15 + $0xbc0] sm:$0xff]
    %v4166 = vld [vmem:[#allocation15 + $0xbc8] sm:$0xff]
    %v4167 = vld [vmem:[#allocation15 + $0xbd0] sm:$0xff]
    %v4168 = vld [vmem:[#allocation15 + $0xbd8] sm:$0xff]
    %v4169 = vld [vmem:[#allocation15 + $0xbe0] sm:$0xff]
    %v4170 = vld [vmem:[#allocation15 + $0xbe8] sm:$0xff]
    %v4171 = vld [vmem:[#allocation15 + $0xbf0] sm:$0xff]
    %v4172 = vld [vmem:[#allocation15 + $0xbf8] sm:$0xff]
    %v4173 = vld [vmem:[#allocation15 + $0xc00] sm:$0xff]
    %v4174 = vld [vmem:[#allocation15 + $0xc08] sm:$0xff]
    %v4175 = vld [vmem:[#allocation15 + $0xc10] sm:$0xff]
    %v4176 = vld [vmem:[#allocation15 + $0xc18] sm:$0xff]
    %v4177 = vld [vmem:[#allocation15 + $0xc20] sm:$0xff]
    %v4178 = vld [vmem:[#allocation15 + $0xc28] sm:$0xff]
    %v4179 = vld [vmem:[#allocation15 + $0xc30] sm:$0xff]
    %v4180 = vld [vmem:[#allocation15 + $0xc38] sm:$0xff]
    %v4181 = vld [vmem:[#allocation15 + $0xc40] sm:$0xff]
    %v4182 = vld [vmem:[#allocation15 + $0xc48] sm:$0xff]
    %v4183 = vld [vmem:[#allocation15 + $0xc50] sm:$0xff]
    %v4184 = vld [vmem:[#allocation15 + $0xc58] sm:$0xff]
    %v4185 = vld [vmem:[#allocation15 + $0xc60] sm:$0xff]
    %v4186 = vld [vmem:[#allocation15 + $0xc68] sm:$0xff]
    %v4187 = vld [vmem:[#allocation15 + $0xc70] sm:$0xff]
    %v4188 = vld [vmem:[#allocation15 + $0xc78] sm:$0xff]
    %v4189 = vld [vmem:[#allocation15 + $0xc80] sm:$0xff]
    %v4190 = vld [vmem:[#allocation15 + $0xc88] sm:$0xff]
    %v4191 = vld [vmem:[#allocation15 + $0xc90] sm:$0xff]
    %v4192 = vld [vmem:[#allocation15 + $0xc98] sm:$0xff]
    %v4193 = vld [vmem:[#allocation15 + $0xca0] sm:$0xff]
    %v4194 = vld [vmem:[#allocation15 + $0xca8] sm:$0xff]
    %v4195 = vld [vmem:[#allocation15 + $0xcb0] sm:$0xff]
    %v4196 = vld [vmem:[#allocation15 + $0xcb8] sm:$0xff]
    %v4197 = vld [vmem:[#allocation15 + $0xcc0] sm:$0xff]
    %v4198 = vld [vmem:[#allocation15 + $0xcc8] sm:$0xff]
    %v4199 = vld [vmem:[#allocation15 + $0xcd0] sm:$0xff]
    %v4200 = vld [vmem:[#allocation15 + $0xcd8] sm:$0xff]
    %v4201 = vld [vmem:[#allocation15 + $0xce0] sm:$0xff]
    %v4202 = vld [vmem:[#allocation15 + $0xce8] sm:$0xff]
    %v4203 = vld [vmem:[#allocation15 + $0xcf0] sm:$0xff]
    %v4204 = vld [vmem:[#allocation15 + $0xcf8] sm:$0xff]
    %v4205 = vld [vmem:[#allocation15 + $0xd00] sm:$0xff]
    %v4206 = vld [vmem:[#allocation15 + $0xd08] sm:$0xff]
    %v4207 = vld [vmem:[#allocation15 + $0xd10] sm:$0xff]
    %v4208 = vld [vmem:[#allocation15 + $0xd18] sm:$0xff]
    %v4209 = vld [vmem:[#allocation15 + $0xd20] sm:$0xff]
    %v4210 = vld [vmem:[#allocation15 + $0xd28] sm:$0xff]
    %v4211 = vld [vmem:[#allocation15 + $0xd30] sm:$0xff]
    %v4212 = vld [vmem:[#allocation15 + $0xd38] sm:$0xff]
    %v4213 = vld [vmem:[#allocation15 + $0xd40] sm:$0xff]
    %v4214 = vld [vmem:[#allocation15 + $0xd48] sm:$0xff]
    %v4215 = vld [vmem:[#allocation15 + $0xd50] sm:$0xff]
    %v4216 = vld [vmem:[#allocation15 + $0xd58] sm:$0xff]
    %v4217 = vld [vmem:[#allocation15 + $0xd60] sm:$0xff]
    %v4218 = vld [vmem:[#allocation15 + $0xd68] sm:$0xff]
    %v4219 = vld [vmem:[#allocation15 + $0xd70] sm:$0xff]
    %v4220 = vld [vmem:[#allocation15 + $0xd78] sm:$0xff]
    %v4221 = vld [vmem:[#allocation15 + $0xd80] sm:$0xff]
    %v4222 = vld [vmem:[#allocation15 + $0xd88] sm:$0xff]
    %v4223 = vld [vmem:[#allocation15 + $0xd90] sm:$0xff]
    %v4224 = vld [vmem:[#allocation15 + $0xd98] sm:$0xff]
    %v4225 = vld [vmem:[#allocation15 + $0xda0] sm:$0xff]
    %v4226 = vld [vmem:[#allocation15 + $0xda8] sm:$0xff]
    %v4227 = vld [vmem:[#allocation15 + $0xdb0] sm:$0xff]
    %v4228 = vld [vmem:[#allocation15 + $0xdb8] sm:$0xff]
    %v4229 = vld [vmem:[#allocation15 + $0xdc0] sm:$0xff]
    %v4230 = vld [vmem:[#allocation15 + $0xdc8] sm:$0xff]
    %v4231 = vld [vmem:[#allocation15 + $0xdd0] sm:$0xff]
    %v4232 = vld [vmem:[#allocation15 + $0xdd8] sm:$0xff]
    %v4233 = vld [vmem:[#allocation15 + $0xde0] sm:$0xff]
    %v4234 = vld [vmem:[#allocation15 + $0xde8] sm:$0xff]
    %v4235 = vld [vmem:[#allocation15 + $0xdf0] sm:$0xff]
    %v4236 = vld [vmem:[#allocation15 + $0xdf8] sm:$0xff]
    %v4237 = vld [vmem:[#allocation15 + $0xe00] sm:$0xff]
    %v4238 = vld [vmem:[#allocation15 + $0xe08] sm:$0xff]
    %v4239 = vld [vmem:[#allocation15 + $0xe10] sm:$0xff]
    %v4240 = vld [vmem:[#allocation15 + $0xe18] sm:$0xff]
    %v4241 = vld [vmem:[#allocation15 + $0xe20] sm:$0xff]
    %v4242 = vld [vmem:[#allocation15 + $0xe28] sm:$0xff]
    %v4243 = vld [vmem:[#allocation15 + $0xe30] sm:$0xff]
    %v4244 = vld [vmem:[#allocation15 + $0xe38] sm:$0xff]
    %v4245 = vld [vmem:[#allocation15 + $0xe40] sm:$0xff]
    %v4246 = vld [vmem:[#allocation15 + $0xe48] sm:$0xff]
    %v4247 = vld [vmem:[#allocation15 + $0xe50] sm:$0xff]
    %v4248 = vld [vmem:[#allocation15 + $0xe58] sm:$0xff]
    %v4249 = vld [vmem:[#allocation15 + $0xe60] sm:$0xff]
    %v4250 = vld [vmem:[#allocation15 + $0xe68] sm:$0xff]
    %v4251 = vld [vmem:[#allocation15 + $0xe70] sm:$0xff]
    %v4252 = vld [vmem:[#allocation15 + $0xe78] sm:$0xff]
    %v4253 = vld [vmem:[#allocation15 + $0xe80] sm:$0xff]
    %v4254 = vld [vmem:[#allocation15 + $0xe88] sm:$0xff]
    %v4255 = vld [vmem:[#allocation15 + $0xe90] sm:$0xff]
    %v4256 = vld [vmem:[#allocation15 + $0xe98] sm:$0xff]
    %v4257 = vld [vmem:[#allocation15 + $0xea0] sm:$0xff]
    %v4258 = vld [vmem:[#allocation15 + $0xea8] sm:$0xff]
    %v4259 = vld [vmem:[#allocation15 + $0xeb0] sm:$0xff]
    %v4260 = vld [vmem:[#allocation15 + $0xeb8] sm:$0xff]
    %v4261 = vld [vmem:[#allocation15 + $0xec0] sm:$0xff]
    %v4262 = vld [vmem:[#allocation15 + $0xec8] sm:$0xff]
    %v4263 = vld [vmem:[#allocation15 + $0xed0] sm:$0xff]
    %v4264 = vld [vmem:[#allocation15 + $0xed8] sm:$0xff]
    %v4265 = vld [vmem:[#allocation15 + $0xee0] sm:$0xff]
    %v4266 = vld [vmem:[#allocation15 + $0xee8] sm:$0xff]
    %v4267 = vld [vmem:[#allocation15 + $0xef0] sm:$0xff]
    %v4268 = vld [vmem:[#allocation15 + $0xef8] sm:$0xff]
    %v4269 = vld [vmem:[#allocation15 + $0xf00] sm:$0xff]
    %v4270 = vld [vmem:[#allocation15 + $0xf08] sm:$0xff]
    %v4271 = vld [vmem:[#allocation15 + $0xf10] sm:$0xff]
    %v4272 = vld [vmem:[#allocation15 + $0xf18] sm:$0xff]
    %v4273 = vld [vmem:[#allocation15 + $0xf20] sm:$0xff]
    %v4274 = vld [vmem:[#allocation15 + $0xf28] sm:$0xff]
    %v4275 = vld [vmem:[#allocation15 + $0xf30] sm:$0xff]
    %v4276 = vld [vmem:[#allocation15 + $0xf38] sm:$0xff]
    %v4277 = vld [vmem:[#allocation15 + $0xf40] sm:$0xff]
    %v4278 = vld [vmem:[#allocation15 + $0xf48] sm:$0xff]
    %v4279 = vld [vmem:[#allocation15 + $0xf50] sm:$0xff]
    %v4280 = vld [vmem:[#allocation15 + $0xf58] sm:$0xff]
    %v4281 = vld [vmem:[#allocation15 + $0xf60] sm:$0xff]
    %v4282 = vld [vmem:[#allocation15 + $0xf68] sm:$0xff]
    %v4283 = vld [vmem:[#allocation15 + $0xf70] sm:$0xff]
    %v4284 = vld [vmem:[#allocation15 + $0xf78] sm:$0xff]
    %v4285 = vld [vmem:[#allocation15 + $0xf80] sm:$0xff]
    %v4286 = vld [vmem:[#allocation15 + $0xf88] sm:$0xff]
    %v4287 = vld [vmem:[#allocation15 + $0xf90] sm:$0xff]
    %v4288 = vld [vmem:[#allocation15 + $0xf98] sm:$0xff]
    %v4289 = vld [vmem:[#allocation15 + $0xfa0] sm:$0xff]
    %v4290 = vld [vmem:[#allocation15 + $0xfa8] sm:$0xff]
    %v4291 = vld [vmem:[#allocation15 + $0xfb0] sm:$0xff]
    %v4292 = vld [vmem:[#allocation15 + $0xfb8] sm:$0xff]
    %v4293 = vld [vmem:[#allocation15 + $0xfc0] sm:$0xff]
    %v4294 = vld [vmem:[#allocation15 + $0xfc8] sm:$0xff]
    %v4295 = vld [vmem:[#allocation15 + $0xfd0] sm:$0xff]
    %v4296 = vld [vmem:[#allocation15 + $0xfd8] sm:$0xff]
    %v4297 = vld [vmem:[#allocation15 + $0xfe0] sm:$0xff]
    %v4298 = vld [vmem:[#allocation15 + $0xfe8] sm:$0xff]
    %v4299 = vld [vmem:[#allocation15 + $0xff0] sm:$0xff]
    %v4300 = vld [vmem:[#allocation15 + $0xff8] sm:$0xff]
    %v4301 = vld [vmem:[#allocation15 + $0x1000] sm:$0xff]
    %v4302 = vld [vmem:[#allocation15 + $0x1008] sm:$0xff]
    %v4303 = vld [vmem:[#allocation15 + $0x1010] sm:$0xff]
    %v4304 = vld [vmem:[#allocation15 + $0x1018] sm:$0xff]
    %v4305 = vld [vmem:[#allocation15 + $0x1020] sm:$0xff]
    %v4306 = vld [vmem:[#allocation15 + $0x1028] sm:$0xff]
    %v4307 = vld [vmem:[#allocation15 + $0x1030] sm:$0xff]
    %v4308 = vld [vmem:[#allocation15 + $0x1038] sm:$0xff]
    %v4309 = vld [vmem:[#allocation15 + $0x1040] sm:$0xff]
    %v4310 = vld [vmem:[#allocation15 + $0x1048] sm:$0xff]
    %v4311 = vld [vmem:[#allocation15 + $0x1050] sm:$0xff]
    %v4312 = vld [vmem:[#allocation15 + $0x1058] sm:$0xff]
    %v4313 = vld [vmem:[#allocation15 + $0x1060] sm:$0xff]
    %v4314 = vld [vmem:[#allocation15 + $0x1068] sm:$0xff]
    %v4315 = vld [vmem:[#allocation15 + $0x1070] sm:$0xff]
    %v4316 = vld [vmem:[#allocation15 + $0x1078] sm:$0xff]
    %v4317 = vld [vmem:[#allocation15 + $0x1080] sm:$0xff]
    %v4318 = vld [vmem:[#allocation15 + $0x1088] sm:$0xff]
    %v4319 = vld [vmem:[#allocation15 + $0x1090] sm:$0xff]
    %v4320 = vld [vmem:[#allocation15 + $0x1098] sm:$0xff]
    %v4321 = vld [vmem:[#allocation15 + $0x10a0] sm:$0xff]
    %v4322 = vld [vmem:[#allocation15 + $0x10a8] sm:$0xff]
    %v4323 = vld [vmem:[#allocation15 + $0x10b0] sm:$0xff]
    %v4324 = vld [vmem:[#allocation15 + $0x10b8] sm:$0xff]
    %v4325 = vld [vmem:[#allocation15 + $0x10c0] sm:$0xff]
    %v4326 = vld [vmem:[#allocation15 + $0x10c8] sm:$0xff]
    %v4327 = vld [vmem:[#allocation15 + $0x10d0] sm:$0xff]
    %v4328 = vld [vmem:[#allocation15 + $0x10d8] sm:$0xff]
    %v4329 = vld [vmem:[#allocation15 + $0x10e0] sm:$0xff]
    %v4330 = vld [vmem:[#allocation15 + $0x10e8] sm:$0xff]
    %v4331 = vld [vmem:[#allocation15 + $0x10f0] sm:$0xff]
    %v4332 = vld [vmem:[#allocation15 + $0x10f8] sm:$0xff]
    %v4333 = vld [vmem:[#allocation15 + $0x1100] sm:$0xff]
    %v4334 = vld [vmem:[#allocation15 + $0x1108] sm:$0xff]
    %v4335 = vld [vmem:[#allocation15 + $0x1110] sm:$0xff]
    %v4336 = vld [vmem:[#allocation15 + $0x1118] sm:$0xff]
    %v4337 = vld [vmem:[#allocation15 + $0x1120] sm:$0xff]
    %v4338 = vld [vmem:[#allocation15 + $0x1128] sm:$0xff]
    %v4339 = vld [vmem:[#allocation15 + $0x1130] sm:$0xff]
    %v4340 = vld [vmem:[#allocation15 + $0x1138] sm:$0xff]
    %v4341 = vld [vmem:[#allocation15 + $0x1140] sm:$0xff]
    %v4342 = vld [vmem:[#allocation15 + $0x1148] sm:$0xff]
    %v4343 = vld [vmem:[#allocation15 + $0x1150] sm:$0xff]
    %v4344 = vld [vmem:[#allocation15 + $0x1158] sm:$0xff]
    %v4345 = vld [vmem:[#allocation15 + $0x1160] sm:$0xff]
    %v4346 = vld [vmem:[#allocation15 + $0x1168] sm:$0xff]
    %v4347 = vld [vmem:[#allocation15 + $0x1170] sm:$0xff]
    %v4348 = vld [vmem:[#allocation15 + $0x1178] sm:$0xff]
    %v4349 = vld [vmem:[#allocation15 + $0x1180] sm:$0xff]
    %v4350 = vld [vmem:[#allocation15 + $0x1188] sm:$0xff]
    %v4351 = vld [vmem:[#allocation15 + $0x1190] sm:$0xff]
    %v4352 = vld [vmem:[#allocation15 + $0x1198] sm:$0xff]
    %v4353 = vld [vmem:[#allocation15 + $0x11a0] sm:$0xff]
    %v4354 = vld [vmem:[#allocation15 + $0x11a8] sm:$0xff]
    %v4355 = vld [vmem:[#allocation15 + $0x11b0] sm:$0xff]
    %v4356 = vld [vmem:[#allocation15 + $0x11b8] sm:$0xff]
    %v4357 = vld [vmem:[#allocation15 + $0x11c0] sm:$0xff]
    %v4358 = vld [vmem:[#allocation15 + $0x11c8] sm:$0xff]
    %v4359 = vld [vmem:[#allocation15 + $0x11d0] sm:$0xff]
    %v4360 = vld [vmem:[#allocation15 + $0x11d8] sm:$0xff]
    %v4361 = vld [vmem:[#allocation15 + $0x11e0] sm:$0xff]
    %v4362 = vld [vmem:[#allocation15 + $0x11e8] sm:$0xff]
    %v4363 = vld [vmem:[#allocation15 + $0x11f0] sm:$0xff]
    %v4364 = vld [vmem:[#allocation15 + $0x11f8] sm:$0xff]
    %v4365 = vld [vmem:[#allocation15 + $0x1200] sm:$0xff]
    %v4366 = vld [vmem:[#allocation15 + $0x1208] sm:$0xff]
    %v4367 = vld [vmem:[#allocation15 + $0x1210] sm:$0xff]
    %v4368 = vld [vmem:[#allocation15 + $0x1218] sm:$0xff]
    %v4369 = vld [vmem:[#allocation15 + $0x1220] sm:$0xff]
    %v4370 = vld [vmem:[#allocation15 + $0x1228] sm:$0xff]
    %v4371 = vld [vmem:[#allocation15 + $0x1230] sm:$0xff]
    %v4372 = vld [vmem:[#allocation15 + $0x1238] sm:$0xff]
    %v4373 = vld [vmem:[#allocation15 + $0x1240] sm:$0xff]
    %v4374 = vld [vmem:[#allocation15 + $0x1248] sm:$0xff]
    %v4375 = vld [vmem:[#allocation15 + $0x1250] sm:$0xff]
    %v4376 = vld [vmem:[#allocation15 + $0x1258] sm:$0xff]
    %v4377 = vld [vmem:[#allocation15 + $0x1260] sm:$0xff]
    %v4378 = vld [vmem:[#allocation15 + $0x1268] sm:$0xff]
    %v4379 = vld [vmem:[#allocation15 + $0x1270] sm:$0xff]
    %v4380 = vld [vmem:[#allocation15 + $0x1278] sm:$0xff]
    %v4381 = vld [vmem:[#allocation15 + $0x1280] sm:$0xff]
    %v4382 = vld [vmem:[#allocation15 + $0x1288] sm:$0xff]
    %v4383 = vld [vmem:[#allocation15 + $0x1290] sm:$0xff]
    %v4384 = vld [vmem:[#allocation15 + $0x1298] sm:$0xff]
    %v4385 = vld [vmem:[#allocation15 + $0x12a0] sm:$0xff]
    %v4386 = vld [vmem:[#allocation15 + $0x12a8] sm:$0xff]
    %v4387 = vld [vmem:[#allocation15 + $0x12b0] sm:$0xff]
    %v4388 = vld [vmem:[#allocation15 + $0x12b8] sm:$0xff]
    %v4389 = vld [vmem:[#allocation15 + $0x12c0] sm:$0xff]
    %v4390 = vld [vmem:[#allocation15 + $0x12c8] sm:$0xff]
    %v4391 = vld [vmem:[#allocation15 + $0x12d0] sm:$0xff]
    %v4392 = vld [vmem:[#allocation15 + $0x12d8] sm:$0xff]
    %v4393 = vld [vmem:[#allocation15 + $0x12e0] sm:$0xff]
    %v4394 = vld [vmem:[#allocation15 + $0x12e8] sm:$0xff]
    %v4395 = vld [vmem:[#allocation15 + $0x12f0] sm:$0xff]
    %v4396 = vld [vmem:[#allocation15 + $0x12f8] sm:$0xff]
    %v4397 = vld [vmem:[#allocation15 + $0x1300] sm:$0xff]
    %v4398 = vld [vmem:[#allocation15 + $0x1308] sm:$0xff]
    %v4399 = vld [vmem:[#allocation15 + $0x1310] sm:$0xff]
    %v4400 = vld [vmem:[#allocation15 + $0x1318] sm:$0xff]
    %v4401 = vld [vmem:[#allocation15 + $0x1320] sm:$0xff]
    %v4402 = vld [vmem:[#allocation15 + $0x1328] sm:$0xff]
    %v4403 = vld [vmem:[#allocation15 + $0x1330] sm:$0xff]
    %v4404 = vld [vmem:[#allocation15 + $0x1338] sm:$0xff]
    %v4405 = vld [vmem:[#allocation15 + $0x1340] sm:$0xff]
    %v4406 = vld [vmem:[#allocation15 + $0x1348] sm:$0xff]
    %v4407 = vld [vmem:[#allocation15 + $0x1350] sm:$0xff]
    %v4408 = vld [vmem:[#allocation15 + $0x1358] sm:$0xff]
    %v4409 = vld [vmem:[#allocation15 + $0x1360] sm:$0xff]
    %v4410 = vld [vmem:[#allocation15 + $0x1368] sm:$0xff]
    %v4411 = vld [vmem:[#allocation15 + $0x1370] sm:$0xff]
    %v4412 = vld [vmem:[#allocation15 + $0x1378] sm:$0xff]
    %v4413 = vld [vmem:[#allocation15 + $0x1380] sm:$0xff]
    %v4414 = vld [vmem:[#allocation15 + $0x1388] sm:$0xff]
    %v4415 = vld [vmem:[#allocation15 + $0x1390] sm:$0xff]
    %v4416 = vld [vmem:[#allocation15 + $0x1398] sm:$0xff]
    %v4417 = vld [vmem:[#allocation15 + $0x13a0] sm:$0xff]
    %v4418 = vld [vmem:[#allocation15 + $0x13a8] sm:$0xff]
    %v4419 = vld [vmem:[#allocation15 + $0x13b0] sm:$0xff]
    %v4420 = vld [vmem:[#allocation15 + $0x13b8] sm:$0xff]
    %v4421 = vld [vmem:[#allocation15 + $0x13c0] sm:$0xff]
    %v4422 = vld [vmem:[#allocation15 + $0x13c8] sm:$0xff]
    %v4423 = vld [vmem:[#allocation15 + $0x13d0] sm:$0xff]
    %v4424 = vld [vmem:[#allocation15 + $0x13d8] sm:$0xff]
    %v4425 = vld [vmem:[#allocation15 + $0x13e0] sm:$0xff]
    %v4426 = vld [vmem:[#allocation15 + $0x13e8] sm:$0xff]
    %v4427 = vld [vmem:[#allocation15 + $0x13f0] sm:$0xff]
    %v4428 = vld [vmem:[#allocation15 + $0x13f8] sm:$0xff]
    %v4429 = vld [vmem:[#allocation15 + $0x1400] sm:$0xff]
    %v4430 = vld [vmem:[#allocation15 + $0x1408] sm:$0xff]
    %v4431 = vld [vmem:[#allocation15 + $0x1410] sm:$0xff]
    %v4432 = vld [vmem:[#allocation15 + $0x1418] sm:$0xff]
    %v4433 = vld [vmem:[#allocation15 + $0x1420] sm:$0xff]
    %v4434 = vld [vmem:[#allocation15 + $0x1428] sm:$0xff]
    %v4435 = vld [vmem:[#allocation15 + $0x1430] sm:$0xff]
    %v4436 = vld [vmem:[#allocation15 + $0x1438] sm:$0xff]
    %v4437 = vld [vmem:[#allocation15 + $0x1440] sm:$0xff]
    %v4438 = vld [vmem:[#allocation15 + $0x1448] sm:$0xff]
    %v4439 = vld [vmem:[#allocation15 + $0x1450] sm:$0xff]
    %v4440 = vld [vmem:[#allocation15 + $0x1458] sm:$0xff]
    %v4441 = vld [vmem:[#allocation15 + $0x1460] sm:$0xff]
    %v4442 = vld [vmem:[#allocation15 + $0x1468] sm:$0xff]
    %v4443 = vld [vmem:[#allocation15 + $0x1470] sm:$0xff]
    %v4444 = vld [vmem:[#allocation15 + $0x1478] sm:$0xff]
    %v4445 = vld [vmem:[#allocation15 + $0x1480] sm:$0xff]
    %v4446 = vld [vmem:[#allocation15 + $0x1488] sm:$0xff]
    %v4447 = vld [vmem:[#allocation15 + $0x1490] sm:$0xff]
    %v4448 = vld [vmem:[#allocation15 + $0x1498] sm:$0xff]
    %v4449 = vld [vmem:[#allocation15 + $0x14a0] sm:$0xff]
    %v4450 = vld [vmem:[#allocation15 + $0x14a8] sm:$0xff]
    %v4451 = vld [vmem:[#allocation15 + $0x14b0] sm:$0xff]
    %v4452 = vld [vmem:[#allocation15 + $0x14b8] sm:$0xff]
    %v4453 = vld [vmem:[#allocation15 + $0x14c0] sm:$0xff]
    %v4454 = vld [vmem:[#allocation15 + $0x14c8] sm:$0xff]
    %v4455 = vld [vmem:[#allocation15 + $0x14d0] sm:$0xff]
    %v4456 = vld [vmem:[#allocation15 + $0x14d8] sm:$0xff]
    %v4457 = vld [vmem:[#allocation15 + $0x14e0] sm:$0xff]
    %v4458 = vld [vmem:[#allocation15 + $0x14e8] sm:$0xff]
    %v4459 = vld [vmem:[#allocation15 + $0x14f0] sm:$0xff]
    %v4460 = vld [vmem:[#allocation15 + $0x14f8] sm:$0xff]
    %v4461 = vld [vmem:[#allocation15 + $0x1500] sm:$0xff]
    %v4462 = vld [vmem:[#allocation15 + $0x1508] sm:$0xff]
    %v4463 = vld [vmem:[#allocation15 + $0x1510] sm:$0xff]
    %v4464 = vld [vmem:[#allocation15 + $0x1518] sm:$0xff]
    %v4465 = vld [vmem:[#allocation15 + $0x1520] sm:$0xff]
    %v4466 = vld [vmem:[#allocation15 + $0x1528] sm:$0xff]
    %v4467 = vld [vmem:[#allocation15 + $0x1530] sm:$0xff]
    %v4468 = vld [vmem:[#allocation15 + $0x1538] sm:$0xff]
    %v4469 = vld [vmem:[#allocation15 + $0x1540] sm:$0xff]
    %v4470 = vld [vmem:[#allocation15 + $0x1548] sm:$0xff]
    %v4471 = vld [vmem:[#allocation15 + $0x1550] sm:$0xff]
    %v4472 = vld [vmem:[#allocation15 + $0x1558] sm:$0xff]
    %v4473 = vld [vmem:[#allocation15 + $0x1560] sm:$0xff]
    %v4474 = vld [vmem:[#allocation15 + $0x1568] sm:$0xff]
    %v4475 = vld [vmem:[#allocation15 + $0x1570] sm:$0xff]
    %v4476 = vld [vmem:[#allocation15 + $0x1578] sm:$0xff]
    %v4477 = vld [vmem:[#allocation15 + $0x1580] sm:$0xff]
    %v4478 = vld [vmem:[#allocation15 + $0x1588] sm:$0xff]
    %v4479 = vld [vmem:[#allocation15 + $0x1590] sm:$0xff]
    %v4480 = vld [vmem:[#allocation15 + $0x1598] sm:$0xff]
    %v4481 = vld [vmem:[#allocation15 + $0x15a0] sm:$0xff]
    %v4482 = vld [vmem:[#allocation15 + $0x15a8] sm:$0xff]
    %v4483 = vld [vmem:[#allocation15 + $0x15b0] sm:$0xff]
    %v4484 = vld [vmem:[#allocation15 + $0x15b8] sm:$0xff]
    %v4485 = vld [vmem:[#allocation15 + $0x15c0] sm:$0xff]
    %v4486 = vld [vmem:[#allocation15 + $0x15c8] sm:$0xff]
    %v4487 = vld [vmem:[#allocation15 + $0x15d0] sm:$0xff]
    %v4488 = vld [vmem:[#allocation15 + $0x15d8] sm:$0xff]
    %v4489 = vld [vmem:[#allocation15 + $0x15e0] sm:$0xff]
    %v4490 = vld [vmem:[#allocation15 + $0x15e8] sm:$0xff]
    %v4491 = vld [vmem:[#allocation15 + $0x15f0] sm:$0xff]
    %v4492 = vld [vmem:[#allocation15 + $0x15f8] sm:$0xff]
    %v4493 = vld [vmem:[#allocation15 + $0x1600] sm:$0xff]
    %v4494 = vld [vmem:[#allocation15 + $0x1608] sm:$0xff]
    %v4495 = vld [vmem:[#allocation15 + $0x1610] sm:$0xff]
    %v4496 = vld [vmem:[#allocation15 + $0x1618] sm:$0xff]
    %v4497 = vld [vmem:[#allocation15 + $0x1620] sm:$0xff]
    %v4498 = vld [vmem:[#allocation15 + $0x1628] sm:$0xff]
    %v4499 = vld [vmem:[#allocation15 + $0x1630] sm:$0xff]
    %v4500 = vld [vmem:[#allocation15 + $0x1638] sm:$0xff]
    %v4501 = vld [vmem:[#allocation15 + $0x1640] sm:$0xff]
    %v4502 = vld [vmem:[#allocation15 + $0x1648] sm:$0xff]
    %v4503 = vld [vmem:[#allocation15 + $0x1650] sm:$0xff]
    %v4504 = vld [vmem:[#allocation15 + $0x1658] sm:$0xff]
    %v4505 = vld [vmem:[#allocation15 + $0x1660] sm:$0xff]
    %v4506 = vld [vmem:[#allocation15 + $0x1668] sm:$0xff]
    %v4507 = vld [vmem:[#allocation15 + $0x1670] sm:$0xff]
    %v4508 = vld [vmem:[#allocation15 + $0x1678] sm:$0xff]
    %v4509 = vld [vmem:[#allocation15 + $0x1680] sm:$0xff]
    %v4510 = vld [vmem:[#allocation15 + $0x1688] sm:$0xff]
    %v4511 = vld [vmem:[#allocation15 + $0x1690] sm:$0xff]
    %v4512 = vld [vmem:[#allocation15 + $0x1698] sm:$0xff]
    %v4513 = vld [vmem:[#allocation15 + $0x16a0] sm:$0xff]
    %v4514 = vld [vmem:[#allocation15 + $0x16a8] sm:$0xff]
    %v4515 = vld [vmem:[#allocation15 + $0x16b0] sm:$0xff]
    %v4516 = vld [vmem:[#allocation15 + $0x16b8] sm:$0xff]
    %v4517 = vld [vmem:[#allocation15 + $0x16c0] sm:$0xff]
    %v4518 = vld [vmem:[#allocation15 + $0x16c8] sm:$0xff]
    %v4519 = vld [vmem:[#allocation15 + $0x16d0] sm:$0xff]
    %v4520 = vld [vmem:[#allocation15 + $0x16d8] sm:$0xff]
    %v4521 = vld [vmem:[#allocation15 + $0x16e0] sm:$0xff]
    %v4522 = vld [vmem:[#allocation15 + $0x16e8] sm:$0xff]
    %v4523 = vld [vmem:[#allocation15 + $0x16f0] sm:$0xff]
    %v4524 = vld [vmem:[#allocation15 + $0x16f8] sm:$0xff]
    %v4525 = vld [vmem:[#allocation15 + $0x1700] sm:$0xff]
    %v4526 = vld [vmem:[#allocation15 + $0x1708] sm:$0xff]
    %v4527 = vld [vmem:[#allocation15 + $0x1710] sm:$0xff]
    %v4528 = vld [vmem:[#allocation15 + $0x1718] sm:$0xff]
    %v4529 = vld [vmem:[#allocation15 + $0x1720] sm:$0xff]
    %v4530 = vld [vmem:[#allocation15 + $0x1728] sm:$0xff]
    %v4531 = vld [vmem:[#allocation15 + $0x1730] sm:$0xff]
    %v4532 = vld [vmem:[#allocation15 + $0x1738] sm:$0xff]
    %v4533 = vld [vmem:[#allocation15 + $0x1740] sm:$0xff]
    %v4534 = vld [vmem:[#allocation15 + $0x1748] sm:$0xff]
    %v4535 = vld [vmem:[#allocation15 + $0x1750] sm:$0xff]
    %v4536 = vld [vmem:[#allocation15 + $0x1758] sm:$0xff]
    %v4537 = vld [vmem:[#allocation15 + $0x1760] sm:$0xff]
    %v4538 = vld [vmem:[#allocation15 + $0x1768] sm:$0xff]
    %v4539 = vld [vmem:[#allocation15 + $0x1770] sm:$0xff]
    %v4540 = vld [vmem:[#allocation15 + $0x1778] sm:$0xff]
    %v4541 = vld [vmem:[#allocation15 + $0x1780] sm:$0xff]
    %v4542 = vld [vmem:[#allocation15 + $0x1788] sm:$0xff]
    %v4543 = vld [vmem:[#allocation15 + $0x1790] sm:$0xff]
    %v4544 = vld [vmem:[#allocation15 + $0x1798] sm:$0xff]
    %v4545 = vld [vmem:[#allocation15 + $0x17a0] sm:$0xff]
    %v4546 = vld [vmem:[#allocation15 + $0x17a8] sm:$0xff]
    %v4547 = vld [vmem:[#allocation15 + $0x17b0] sm:$0xff]
    %v4548 = vld [vmem:[#allocation15 + $0x17b8] sm:$0xff]
    %v4549 = vld [vmem:[#allocation15 + $0x17c0] sm:$0xff]
    %v4550 = vld [vmem:[#allocation15 + $0x17c8] sm:$0xff]
    %v4551 = vld [vmem:[#allocation15 + $0x17d0] sm:$0xff]
    %v4552 = vld [vmem:[#allocation15 + $0x17d8] sm:$0xff]
    %v4553 = vld [vmem:[#allocation15 + $0x17e0] sm:$0xff]
    %v4554 = vld [vmem:[#allocation15 + $0x17e8] sm:$0xff]
    %v4555 = vld [vmem:[#allocation15 + $0x17f0] sm:$0xff]
    %v4556 = vld [vmem:[#allocation15 + $0x17f8] sm:$0xff]
    %v4557 = vld [vmem:[#allocation15 + $0x1800] sm:$0xff]
    %v4558 = vld [vmem:[#allocation15 + $0x1808] sm:$0xff]
    %v4559 = vld [vmem:[#allocation15 + $0x1810] sm:$0xff]
    %v4560 = vld [vmem:[#allocation15 + $0x1818] sm:$0xff]
    %v4561 = vld [vmem:[#allocation15 + $0x1820] sm:$0xff]
    %v4562 = vld [vmem:[#allocation15 + $0x1828] sm:$0xff]
    %v4563 = vld [vmem:[#allocation15 + $0x1830] sm:$0xff]
    %v4564 = vld [vmem:[#allocation15 + $0x1838] sm:$0xff]
    %v4565 = vld [vmem:[#allocation15 + $0x1840] sm:$0xff]
    %v4566 = vld [vmem:[#allocation15 + $0x1848] sm:$0xff]
    %v4567 = vld [vmem:[#allocation15 + $0x1850] sm:$0xff]
    %v4568 = vld [vmem:[#allocation15 + $0x1858] sm:$0xff]
    %v4569 = vld [vmem:[#allocation15 + $0x1860] sm:$0xff]
    %v4570 = vld [vmem:[#allocation15 + $0x1868] sm:$0xff]
    %v4571 = vld [vmem:[#allocation15 + $0x1870] sm:$0xff]
    %v4572 = vld [vmem:[#allocation15 + $0x1878] sm:$0xff]
    %v4573 = vld [vmem:[#allocation15 + $0x1880] sm:$0xff]
    %v4574 = vld [vmem:[#allocation15 + $0x1888] sm:$0xff]
    %v4575 = vld [vmem:[#allocation15 + $0x1890] sm:$0xff]
    %v4576 = vld [vmem:[#allocation15 + $0x1898] sm:$0xff]
    %v4577 = vld [vmem:[#allocation15 + $0x18a0] sm:$0xff]
    %v4578 = vld [vmem:[#allocation15 + $0x18a8] sm:$0xff]
    %v4579 = vld [vmem:[#allocation15 + $0x18b0] sm:$0xff]
    %v4580 = vld [vmem:[#allocation15 + $0x18b8] sm:$0xff]
    %v4581 = vld [vmem:[#allocation15 + $0x18c0] sm:$0xff]
    %v4582 = vld [vmem:[#allocation15 + $0x18c8] sm:$0xff]
    %v4583 = vld [vmem:[#allocation15 + $0x18d0] sm:$0xff]
    %v4584 = vld [vmem:[#allocation15 + $0x18d8] sm:$0xff]
    %v4585 = vld [vmem:[#allocation15 + $0x18e0] sm:$0xff]
    %v4586 = vld [vmem:[#allocation15 + $0x18e8] sm:$0xff]
    %v4587 = vld [vmem:[#allocation15 + $0x18f0] sm:$0xff]
    %v4588 = vld [vmem:[#allocation15 + $0x18f8] sm:$0xff]
    %v4589 = vld [vmem:[#allocation15 + $0x1900] sm:$0xff]
    %v4590 = vld [vmem:[#allocation15 + $0x1908] sm:$0xff]
    %v4591 = vld [vmem:[#allocation15 + $0x1910] sm:$0xff]
    %v4592 = vld [vmem:[#allocation15 + $0x1918] sm:$0xff]
    %v4593 = vld [vmem:[#allocation15 + $0x1920] sm:$0xff]
    %v4594 = vld [vmem:[#allocation15 + $0x1928] sm:$0xff]
    %v4595 = vld [vmem:[#allocation15 + $0x1930] sm:$0xff]
    %v4596 = vld [vmem:[#allocation15 + $0x1938] sm:$0xff]
    %v4597 = vld [vmem:[#allocation15 + $0x1940] sm:$0xff]
    %v4598 = vld [vmem:[#allocation15 + $0x1948] sm:$0xff]
    %v4599 = vld [vmem:[#allocation15 + $0x1950] sm:$0xff]
    %v4600 = vld [vmem:[#allocation15 + $0x1958] sm:$0xff]
    %v4601 = vld [vmem:[#allocation15 + $0x1960] sm:$0xff]
    %v4602 = vld [vmem:[#allocation15 + $0x1968] sm:$0xff]
    %v4603 = vld [vmem:[#allocation15 + $0x1970] sm:$0xff]
    %v4604 = vld [vmem:[#allocation15 + $0x1978] sm:$0xff]
    %v4605 = vld [vmem:[#allocation15 + $0x1980] sm:$0xff]
    %v4606 = vld [vmem:[#allocation15 + $0x1988] sm:$0xff]
    %v4607 = vld [vmem:[#allocation15 + $0x1990] sm:$0xff]
    %v4608 = vld [vmem:[#allocation15 + $0x1998] sm:$0xff]
    %v4609 = vld [vmem:[#allocation15 + $0x19a0] sm:$0xff]
    %v4610 = vld [vmem:[#allocation15 + $0x19a8] sm:$0xff]
    %v4611 = vld [vmem:[#allocation15 + $0x19b0] sm:$0xff]
    %v4612 = vld [vmem:[#allocation15 + $0x19b8] sm:$0xff]
    %v4613 = vld [vmem:[#allocation15 + $0x19c0] sm:$0xff]
    %v4614 = vld [vmem:[#allocation15 + $0x19c8] sm:$0xff]
    %v4615 = vld [vmem:[#allocation15 + $0x19d0] sm:$0xff]
    %v4616 = vld [vmem:[#allocation15 + $0x19d8] sm:$0xff]
    %v4617 = vld [vmem:[#allocation15 + $0x19e0] sm:$0xff]
    %v4618 = vld [vmem:[#allocation15 + $0x19e8] sm:$0xff]
    %v4619 = vld [vmem:[#allocation15 + $0x19f0] sm:$0xff]
    %v4620 = vld [vmem:[#allocation15 + $0x19f8] sm:$0xff]
    %v4621 = vld [vmem:[#allocation15 + $0x1a00] sm:$0xff]
    %v4622 = vld [vmem:[#allocation15 + $0x1a08] sm:$0xff]
    %v4623 = vld [vmem:[#allocation15 + $0x1a10] sm:$0xff]
    %v4624 = vld [vmem:[#allocation15 + $0x1a18] sm:$0xff]
    %v4625 = vld [vmem:[#allocation15 + $0x1a20] sm:$0xff]
    %v4626 = vld [vmem:[#allocation15 + $0x1a28] sm:$0xff]
    %v4627 = vld [vmem:[#allocation15 + $0x1a30] sm:$0xff]
    %v4628 = vld [vmem:[#allocation15 + $0x1a38] sm:$0xff]
    %v4629 = vld [vmem:[#allocation15 + $0x1a40] sm:$0xff]
    %v4630 = vld [vmem:[#allocation15 + $0x1a48] sm:$0xff]
    %v4631 = vld [vmem:[#allocation15 + $0x1a50] sm:$0xff]
    %v4632 = vld [vmem:[#allocation15 + $0x1a58] sm:$0xff]
    %v4633 = vld [vmem:[#allocation15 + $0x1a60] sm:$0xff]
    %v4634 = vld [vmem:[#allocation15 + $0x1a68] sm:$0xff]
    %v4635 = vld [vmem:[#allocation15 + $0x1a70] sm:$0xff]
    %v4636 = vld [vmem:[#allocation15 + $0x1a78] sm:$0xff]
    %v4637 = vld [vmem:[#allocation15 + $0x1a80] sm:$0xff]
    %v4638 = vld [vmem:[#allocation15 + $0x1a88] sm:$0xff]
    %v4639 = vld [vmem:[#allocation15 + $0x1a90] sm:$0xff]
    %v4640 = vld [vmem:[#allocation15 + $0x1a98] sm:$0xff]
    %v4641 = vld [vmem:[#allocation15 + $0x1aa0] sm:$0xff]
    %v4642 = vld [vmem:[#allocation15 + $0x1aa8] sm:$0xff]
    %v4643 = vld [vmem:[#allocation15 + $0x1ab0] sm:$0xff]
    %v4644 = vld [vmem:[#allocation15 + $0x1ab8] sm:$0xff]
    %v4645 = vld [vmem:[#allocation15 + $0x1ac0] sm:$0xff]
    %v4646 = vld [vmem:[#allocation15 + $0x1ac8] sm:$0xff]
    %v4647 = vld [vmem:[#allocation15 + $0x1ad0] sm:$0xff]
    %v4648 = vld [vmem:[#allocation15 + $0x1ad8] sm:$0xff]
    %v4649 = vld [vmem:[#allocation15 + $0x1ae0] sm:$0xff]
    %v4650 = vld [vmem:[#allocation15 + $0x1ae8] sm:$0xff]
    %v4651 = vld [vmem:[#allocation15 + $0x1af0] sm:$0xff]
    %v4652 = vld [vmem:[#allocation15 + $0x1af8] sm:$0xff]
    %v4653 = vld [vmem:[#allocation15 + $0x1b00] sm:$0xff]
    %v4654 = vld [vmem:[#allocation15 + $0x1b08] sm:$0xff]
    %v4655 = vld [vmem:[#allocation15 + $0x1b10] sm:$0xff]
    %v4656 = vld [vmem:[#allocation15 + $0x1b18] sm:$0xff]
    %v4657 = vld [vmem:[#allocation15 + $0x1b20] sm:$0xff]
    %v4658 = vld [vmem:[#allocation15 + $0x1b28] sm:$0xff]
    %v4659 = vld [vmem:[#allocation15 + $0x1b30] sm:$0xff]
    %v4660 = vld [vmem:[#allocation15 + $0x1b38] sm:$0xff]
    %v4661 = vld [vmem:[#allocation15 + $0x1b40] sm:$0xff]
    %v4662 = vld [vmem:[#allocation15 + $0x1b48] sm:$0xff]
    %v4663 = vld [vmem:[#allocation15 + $0x1b50] sm:$0xff]
    %v4664 = vld [vmem:[#allocation15 + $0x1b58] sm:$0xff]
    %v4665 = vld [vmem:[#allocation15 + $0x1b60] sm:$0xff]
    %v4666 = vld [vmem:[#allocation15 + $0x1b68] sm:$0xff]
    %v4667 = vld [vmem:[#allocation15 + $0x1b70] sm:$0xff]
    %v4668 = vld [vmem:[#allocation15 + $0x1b78] sm:$0xff]
    %v4669 = vld [vmem:[#allocation15 + $0x1b80] sm:$0xff]
    %v4670 = vld [vmem:[#allocation15 + $0x1b88] sm:$0xff]
    %v4671 = vld [vmem:[#allocation15 + $0x1b90] sm:$0xff]
    %v4672 = vld [vmem:[#allocation15 + $0x1b98] sm:$0xff]
    %v4673 = vld [vmem:[#allocation15 + $0x1ba0] sm:$0xff]
    %v4674 = vld [vmem:[#allocation15 + $0x1ba8] sm:$0xff]
    %v4675 = vld [vmem:[#allocation15 + $0x1bb0] sm:$0xff]
    %v4676 = vld [vmem:[#allocation15 + $0x1bb8] sm:$0xff]
    %v4677 = vld [vmem:[#allocation15 + $0x1bc0] sm:$0xff]
    %v4678 = vld [vmem:[#allocation15 + $0x1bc8] sm:$0xff]
    %v4679 = vld [vmem:[#allocation15 + $0x1bd0] sm:$0xff]
    %v4680 = vld [vmem:[#allocation15 + $0x1bd8] sm:$0xff]
    %v4681 = vld [vmem:[#allocation15 + $0x1be0] sm:$0xff]
    %v4682 = vld [vmem:[#allocation15 + $0x1be8] sm:$0xff]
    %v4683 = vld [vmem:[#allocation15 + $0x1bf0] sm:$0xff]
    %v4684 = vld [vmem:[#allocation15 + $0x1bf8] sm:$0xff]
    %v4685 = vld [vmem:[#allocation15 + $0x1c00] sm:$0xff]
    %v4686 = vld [vmem:[#allocation15 + $0x1c08] sm:$0xff]
    %v4687 = vld [vmem:[#allocation15 + $0x1c10] sm:$0xff]
    %v4688 = vld [vmem:[#allocation15 + $0x1c18] sm:$0xff]
    %v4689 = vld [vmem:[#allocation15 + $0x1c20] sm:$0xff]
    %v4690 = vld [vmem:[#allocation15 + $0x1c28] sm:$0xff]
    %v4691 = vld [vmem:[#allocation15 + $0x1c30] sm:$0xff]
    %v4692 = vld [vmem:[#allocation15 + $0x1c38] sm:$0xff]
    %v4693 = vld [vmem:[#allocation15 + $0x1c40] sm:$0xff]
    %v4694 = vld [vmem:[#allocation15 + $0x1c48] sm:$0xff]
    %v4695 = vld [vmem:[#allocation15 + $0x1c50] sm:$0xff]
    %v4696 = vld [vmem:[#allocation15 + $0x1c58] sm:$0xff]
    %v4697 = vld [vmem:[#allocation15 + $0x1c60] sm:$0xff]
    %v4698 = vld [vmem:[#allocation15 + $0x1c68] sm:$0xff]
    %v4699 = vld [vmem:[#allocation15 + $0x1c70] sm:$0xff]
    %v4700 = vld [vmem:[#allocation15 + $0x1c78] sm:$0xff]
    %v4701 = vld [vmem:[#allocation15 + $0x1c80] sm:$0xff]
    %v4702 = vld [vmem:[#allocation15 + $0x1c88] sm:$0xff]
    %v4703 = vld [vmem:[#allocation15 + $0x1c90] sm:$0xff]
    %v4704 = vld [vmem:[#allocation15 + $0x1c98] sm:$0xff]
    %v4705 = vld [vmem:[#allocation15 + $0x1ca0] sm:$0xff]
    %v4706 = vld [vmem:[#allocation15 + $0x1ca8] sm:$0xff]
    %v4707 = vld [vmem:[#allocation15 + $0x1cb0] sm:$0xff]
    %v4708 = vld [vmem:[#allocation15 + $0x1cb8] sm:$0xff]
    %v4709 = vld [vmem:[#allocation15 + $0x1cc0] sm:$0xff]
    %v4710 = vld [vmem:[#allocation15 + $0x1cc8] sm:$0xff]
    %v4711 = vld [vmem:[#allocation15 + $0x1cd0] sm:$0xff]
    %v4712 = vld [vmem:[#allocation15 + $0x1cd8] sm:$0xff]
    %v4713 = vld [vmem:[#allocation15 + $0x1ce0] sm:$0xff]
    %v4714 = vld [vmem:[#allocation15 + $0x1ce8] sm:$0xff]
    %v4715 = vld [vmem:[#allocation15 + $0x1cf0] sm:$0xff]
    %v4716 = vld [vmem:[#allocation15 + $0x1cf8] sm:$0xff]
    %v4717 = vld [vmem:[#allocation15 + $0x1d00] sm:$0xff]
    %v4718 = vld [vmem:[#allocation15 + $0x1d08] sm:$0xff]
    %v4719 = vld [vmem:[#allocation15 + $0x1d10] sm:$0xff]
    %v4720 = vld [vmem:[#allocation15 + $0x1d18] sm:$0xff]
    %v4721 = vld [vmem:[#allocation15 + $0x1d20] sm:$0xff]
    %v4722 = vld [vmem:[#allocation15 + $0x1d28] sm:$0xff]
    %v4723 = vld [vmem:[#allocation15 + $0x1d30] sm:$0xff]
    %v4724 = vld [vmem:[#allocation15 + $0x1d38] sm:$0xff]
    %v4725 = vld [vmem:[#allocation15 + $0x1d40] sm:$0xff]
    %v4726 = vld [vmem:[#allocation15 + $0x1d48] sm:$0xff]
    %v4727 = vld [vmem:[#allocation15 + $0x1d50] sm:$0xff]
    %v4728 = vld [vmem:[#allocation15 + $0x1d58] sm:$0xff]
    %v4729 = vld [vmem:[#allocation15 + $0x1d60] sm:$0xff]
    %v4730 = vld [vmem:[#allocation15 + $0x1d68] sm:$0xff]
    %v4731 = vld [vmem:[#allocation15 + $0x1d70] sm:$0xff]
    %v4732 = vld [vmem:[#allocation15 + $0x1d78] sm:$0xff]
    %v4733 = vld [vmem:[#allocation15 + $0x1d80] sm:$0xff]
    %v4734 = vld [vmem:[#allocation15 + $0x1d88] sm:$0xff]
    %v4735 = vld [vmem:[#allocation15 + $0x1d90] sm:$0xff]
    %v4736 = vld [vmem:[#allocation15 + $0x1d98] sm:$0xff]
    %v4737 = vld [vmem:[#allocation15 + $0x1da0] sm:$0xff]
    %v4738 = vld [vmem:[#allocation15 + $0x1da8] sm:$0xff]
    %v4739 = vld [vmem:[#allocation15 + $0x1db0] sm:$0xff]
    %v4740 = vld [vmem:[#allocation15 + $0x1db8] sm:$0xff]
    %v4741 = vld [vmem:[#allocation15 + $0x1dc0] sm:$0xff]
    %v4742 = vld [vmem:[#allocation15 + $0x1dc8] sm:$0xff]
    %v4743 = vld [vmem:[#allocation15 + $0x1dd0] sm:$0xff]
    %v4744 = vld [vmem:[#allocation15 + $0x1dd8] sm:$0xff]
    %v4745 = vld [vmem:[#allocation15 + $0x1de0] sm:$0xff]
    %v4746 = vld [vmem:[#allocation15 + $0x1de8] sm:$0xff]
    %v4747 = vld [vmem:[#allocation15 + $0x1df0] sm:$0xff]
    %v4748 = vld [vmem:[#allocation15 + $0x1df8] sm:$0xff]
    %v4749 = vld [vmem:[#allocation15 + $0x1e00] sm:$0xff]
    %v4750 = vld [vmem:[#allocation15 + $0x1e08] sm:$0xff]
    %v4751 = vld [vmem:[#allocation15 + $0x1e10] sm:$0xff]
    %v4752 = vld [vmem:[#allocation15 + $0x1e18] sm:$0xff]
    %v4753 = vld [vmem:[#allocation15 + $0x1e20] sm:$0xff]
    %v4754 = vld [vmem:[#allocation15 + $0x1e28] sm:$0xff]
    %v4755 = vld [vmem:[#allocation15 + $0x1e30] sm:$0xff]
    %v4756 = vld [vmem:[#allocation15 + $0x1e38] sm:$0xff]
    %v4757 = vld [vmem:[#allocation15 + $0x1e40] sm:$0xff]
    %v4758 = vld [vmem:[#allocation15 + $0x1e48] sm:$0xff]
    %v4759 = vld [vmem:[#allocation15 + $0x1e50] sm:$0xff]
    %v4760 = vld [vmem:[#allocation15 + $0x1e58] sm:$0xff]
    %v4761 = vld [vmem:[#allocation15 + $0x1e60] sm:$0xff]
    %v4762 = vld [vmem:[#allocation15 + $0x1e68] sm:$0xff]
    %v4763 = vld [vmem:[#allocation15 + $0x1e70] sm:$0xff]
    %v4764 = vld [vmem:[#allocation15 + $0x1e78] sm:$0xff]
    %v4765 = vld [vmem:[#allocation15 + $0x1e80] sm:$0xff]
    %v4766 = vld [vmem:[#allocation15 + $0x1e88] sm:$0xff]
    %v4767 = vld [vmem:[#allocation15 + $0x1e90] sm:$0xff]
    %v4768 = vld [vmem:[#allocation15 + $0x1e98] sm:$0xff]
    %v4769 = vld [vmem:[#allocation15 + $0x1ea0] sm:$0xff]
    %v4770 = vld [vmem:[#allocation15 + $0x1ea8] sm:$0xff]
    %v4771 = vld [vmem:[#allocation15 + $0x1eb0] sm:$0xff]
    %v4772 = vld [vmem:[#allocation15 + $0x1eb8] sm:$0xff]
    %v4773 = vld [vmem:[#allocation15 + $0x1ec0] sm:$0xff]
    %v4774 = vld [vmem:[#allocation15 + $0x1ec8] sm:$0xff]
    %v4775 = vld [vmem:[#allocation15 + $0x1ed0] sm:$0xff]
    %v4776 = vld [vmem:[#allocation15 + $0x1ed8] sm:$0xff]
    %v4777 = vld [vmem:[#allocation15 + $0x1ee0] sm:$0xff]
    %v4778 = vld [vmem:[#allocation15 + $0x1ee8] sm:$0xff]
    %v4779 = vld [vmem:[#allocation15 + $0x1ef0] sm:$0xff]
    %v4780 = vld [vmem:[#allocation15 + $0x1ef8] sm:$0xff]
    %v4781 = vld [vmem:[#allocation15 + $0x1f00] sm:$0xff]
    %v4782 = vld [vmem:[#allocation15 + $0x1f08] sm:$0xff]
    %v4783 = vld [vmem:[#allocation15 + $0x1f10] sm:$0xff]
    %v4784 = vld [vmem:[#allocation15 + $0x1f18] sm:$0xff]
    %v4785 = vld [vmem:[#allocation15 + $0x1f20] sm:$0xff]
    %v4786 = vld [vmem:[#allocation15 + $0x1f28] sm:$0xff]
    %v4787 = vld [vmem:[#allocation15 + $0x1f30] sm:$0xff]
    %v4788 = vld [vmem:[#allocation15 + $0x1f38] sm:$0xff]
    %v4789 = vld [vmem:[#allocation15 + $0x1f40] sm:$0xff]
    %v4790 = vld [vmem:[#allocation15 + $0x1f48] sm:$0xff]
    %v4791 = vld [vmem:[#allocation15 + $0x1f50] sm:$0xff]
    %v4792 = vld [vmem:[#allocation15 + $0x1f58] sm:$0xff]
    %v4793 = vld [vmem:[#allocation15 + $0x1f60] sm:$0xff]
    %v4794 = vld [vmem:[#allocation15 + $0x1f68] sm:$0xff]
    %v4795 = vld [vmem:[#allocation15 + $0x1f70] sm:$0xff]
    %v4796 = vld [vmem:[#allocation15 + $0x1f78] sm:$0xff]
    %v4797 = vld [vmem:[#allocation15 + $0x1f80] sm:$0xff]
    %v4798 = vld [vmem:[#allocation15 + $0x1f88] sm:$0xff]
    %v4799 = vld [vmem:[#allocation15 + $0x1f90] sm:$0xff]
    %v4800 = vld [vmem:[#allocation15 + $0x1f98] sm:$0xff]
    %v4801 = vld [vmem:[#allocation15 + $0x1fa0] sm:$0xff]
    %v4802 = vld [vmem:[#allocation15 + $0x1fa8] sm:$0xff]
    %v4803 = vld [vmem:[#allocation15 + $0x1fb0] sm:$0xff]
    %v4804 = vld [vmem:[#allocation15 + $0x1fb8] sm:$0xff]
    %v4805 = vld [vmem:[#allocation15 + $0x1fc0] sm:$0xff]
    %v4806 = vld [vmem:[#allocation15 + $0x1fc8] sm:$0xff]
    %v4807 = vld [vmem:[#allocation15 + $0x1fd0] sm:$0xff]
    %v4808 = vld [vmem:[#allocation15 + $0x1fd8] sm:$0xff]
    %v4809 = vld [vmem:[#allocation15 + $0x1fe0] sm:$0xff]
    %v4810 = vld [vmem:[#allocation15 + $0x1fe8] sm:$0xff]
    %v4811 = vld [vmem:[#allocation15 + $0x1ff0] sm:$0xff]
    %v4812 = vld [vmem:[#allocation15 + $0x1ff8] sm:$0xff]
    %v4813 = vld [vmem:[#allocation17] sm:$0xff]
    %v4815 = vperm.slane %v4813, 0
    %v4816 = vperm.slane %v4813, 1
    %v4817 = vperm.slane %v4813, 2
    %v4818 = vperm.slane %v4813, 3
    %v4819 = vperm.slane %v4813, 4
    %v4820 = vperm.slane %v4813, 5
    %v4821 = vperm.slane %v4813, 6
    %v4822 = vperm.slane %v4813, 7
    %4831 = vmatpush.msra.mxu0 %v3909
    %4832 = vmatpush.msra.mxu0 %v3901
    %4833 = vmatpush.msra.mxu0 %v3893
    %4834 = vmatpush.msra.mxu0 %v3885
    %4835 = vmatpush.msra.mxu0 %v3877
    %4836 = vmatpush.msra.mxu0 %v3869
    %4837 = vmatpush.msra.mxu0 %v3861
    %4838 = vmatpush.msra.mxu0 %v3853
    %4839 = vmatpush.msra.mxu0 %v3845
    %4840 = vmatpush.msra.mxu0 %v3837
    %4841 = vmatpush.msra.mxu0 %v3829
    %4842 = vmatpush.msra.mxu0 %v3821
    %4843 = vmatpush.msra.mxu0 %v3813
    %4844 = vmatpush.msra.mxu0 %v3805
    %4845 = vmatpush.msra.mxu0 %v3797
    %4846 = vmatpush.msra.mxu0 %v3789
    %4847 = vmatmul.f32.gmra.mxu0 %v3781
    %v4848 = vpop.f32.mrf.mxu0
    %v4849 = vadd.f32 %v4815, %v4848
    %4850 = vdwg.mxu0
    %4851 = vmatpush.msra.mxu0 %v4037
    %4852 = vmatpush.msra.mxu0 %v4029
    %4853 = vmatpush.msra.mxu0 %v4021
    %4854 = vmatpush.msra.mxu0 %v4013
    %4855 = vmatpush.msra.mxu0 %v4005
    %4856 = vmatpush.msra.mxu0 %v3997
    %4857 = vmatpush.msra.mxu0 %v3989
    %4858 = vmatpush.msra.mxu0 %v3981
    %4859 = vmatpush.msra.mxu0 %v3973
    %4860 = vmatpush.msra.mxu0 %v3965
    %4861 = vmatpush.msra.mxu0 %v3957
    %4862 = vmatpush.msra.mxu0 %v3949
    %4863 = vmatpush.msra.mxu0 %v3941
    %4864 = vmatpush.msra.mxu0 %v3933
    %4865 = vmatpush.msra.mxu0 %v3925
    %4866 = vmatpush.msra.mxu0 %v3917
    %4867 = vmatmul.f32.gmra.mxu0 %v3782
    %v4868 = vpop.f32.mrf.mxu0
    %v4869 = vadd.f32 %v4849, %v4868
    %4870 = vdwg.mxu0
    %4871 = vmatpush.msra.mxu0 %v4165
    %4872 = vmatpush.msra.mxu0 %v4157
    %4873 = vmatpush.msra.mxu0 %v4149
    %4874 = vmatpush.msra.mxu0 %v4141
    %4875 = vmatpush.msra.mxu0 %v4133
    %4876 = vmatpush.msra.mxu0 %v4125
    %4877 = vmatpush.msra.mxu0 %v4117
    %4878 = vmatpush.msra.mxu0 %v4109
    %4879 = vmatpush.msra.mxu0 %v4101
    %4880 = vmatpush.msra.mxu0 %v4093
    %4881 = vmatpush.msra.mxu0 %v4085
    %4882 = vmatpush.msra.mxu0 %v4077
    %4883 = vmatpush.msra.mxu0 %v4069
    %4884 = vmatpush.msra.mxu0 %v4061
    %4885 = vmatpush.msra.mxu0 %v4053
    %4886 = vmatpush.msra.mxu0 %v4045
    %4887 = vmatmul.f32.gmra.mxu0 %v3783
    %v4888 = vpop.f32.mrf.mxu0
    %v4889 = vadd.f32 %v4869, %v4888
    %4890 = vdwg.mxu0
    %4891 = vmatpush.msra.mxu0 %v4293
    %4892 = vmatpush.msra.mxu0 %v4285
    %4893 = vmatpush.msra.mxu0 %v4277
    %4894 = vmatpush.msra.mxu0 %v4269
    %4895 = vmatpush.msra.mxu0 %v4261
    %4896 = vmatpush.msra.mxu0 %v4253
    %4897 = vmatpush.msra.mxu0 %v4245
    %4898 = vmatpush.msra.mxu0 %v4237
    %4899 = vmatpush.msra.mxu0 %v4229
    %4900 = vmatpush.msra.mxu0 %v4221
    %4901 = vmatpush.msra.mxu0 %v4213
    %4902 = vmatpush.msra.mxu0 %v4205
    %4903 = vmatpush.msra.mxu0 %v4197
    %4904 = vmatpush.msra.mxu0 %v4189
    %4905 = vmatpush.msra.mxu0 %v4181
    %4906 = vmatpush.msra.mxu0 %v4173
    %4907 = vmatmul.f32.gmra.mxu0 %v3784
    %v4908 = vpop.f32.mrf.mxu0
    %v4909 = vadd.f32 %v4889, %v4908
    %4910 = vdwg.mxu0
    %4911 = vmatpush.msra.mxu0 %v4421
    %4912 = vmatpush.msra.mxu0 %v4413
    %4913 = vmatpush.msra.mxu0 %v4405
    %4914 = vmatpush.msra.mxu0 %v4397
    %4915 = vmatpush.msra.mxu0 %v4389
    %4916 = vmatpush.msra.mxu0 %v4381
    %4917 = vmatpush.msra.mxu0 %v4373
    %4918 = vmatpush.msra.mxu0 %v4365
    %4919 = vmatpush.msra.mxu0 %v4357
    %4920 = vmatpush.msra.mxu0 %v4349
    %4921 = vmatpush.msra.mxu0 %v4341
    %4922 = vmatpush.msra.mxu0 %v4333
    %4923 = vmatpush.msra.mxu0 %v4325
    %4924 = vmatpush.msra.mxu0 %v4317
    %4925 = vmatpush.msra.mxu0 %v4309
    %4926 = vmatpush.msra.mxu0 %v4301
    %4927 = vmatmul.f32.gmra.mxu0 %v3785
    %v4928 = vpop.f32.mrf.mxu0
    %v4929 = vadd.f32 %v4909, %v4928
    %4930 = vdwg.mxu0
    %4931 = vmatpush.msra.mxu0 %v4549
    %4932 = vmatpush.msra.mxu0 %v4541
    %4933 = vmatpush.msra.mxu0 %v4533
    %4934 = vmatpush.msra.mxu0 %v4525
    %4935 = vmatpush.msra.mxu0 %v4517
    %4936 = vmatpush.msra.mxu0 %v4509
    %4937 = vmatpush.msra.mxu0 %v4501
    %4938 = vmatpush.msra.mxu0 %v4493
    %4939 = vmatpush.msra.mxu0 %v4485
    %4940 = vmatpush.msra.mxu0 %v4477
    %4941 = vmatpush.msra.mxu0 %v4469
    %4942 = vmatpush.msra.mxu0 %v4461
    %4943 = vmatpush.msra.mxu0 %v4453
    %4944 = vmatpush.msra.mxu0 %v4445
    %4945 = vmatpush.msra.mxu0 %v4437
    %4946 = vmatpush.msra.mxu0 %v4429
    %4947 = vmatmul.f32.gmra.mxu0 %v3786
    %v4948 = vpop.f32.mrf.mxu0
    %v4949 = vadd.f32 %v4929, %v4948
    %4950 = vdwg.mxu0
    %4951 = vmatpush.msra.mxu0 %v4677
    %4952 = vmatpush.msra.mxu0 %v4669
    %4953 = vmatpush.msra.mxu0 %v4661
    %4954 = vmatpush.msra.mxu0 %v4653
    %4955 = vmatpush.msra.mxu0 %v4645
    %4956 = vmatpush.msra.mxu0 %v4637
    %4957 = vmatpush.msra.mxu0 %v4629
    %4958 = vmatpush.msra.mxu0 %v4621
    %4959 = vmatpush.msra.mxu0 %v4613
    %4960 = vmatpush.msra.mxu0 %v4605
    %4961 = vmatpush.msra.mxu0 %v4597
    %4962 = vmatpush.msra.mxu0 %v4589
    %4963 = vmatpush.msra.mxu0 %v4581
    %4964 = vmatpush.msra.mxu0 %v4573
    %4965 = vmatpush.msra.mxu0 %v4565
    %4966 = vmatpush.msra.mxu0 %v4557
    %4967 = vmatmul.f32.gmra.mxu0 %v3787
    %v4968 = vpop.f32.mrf.mxu0
    %v4969 = vadd.f32 %v4949, %v4968
    %4970 = vdwg.mxu0
    %4971 = vmatpush.msra.mxu0 %v4805
    %4972 = vmatpush.msra.mxu0 %v4797
    %4973 = vmatpush.msra.mxu0 %v4789
    %4974 = vmatpush.msra.mxu0 %v4781
    %4975 = vmatpush.msra.mxu0 %v4773
    %4976 = vmatpush.msra.mxu0 %v4765
    %4977 = vmatpush.msra.mxu0 %v4757
    %4978 = vmatpush.msra.mxu0 %v4749
    %4979 = vmatpush.msra.mxu0 %v4741
    %4980 = vmatpush.msra.mxu0 %v4733
    %4981 = vmatpush.msra.mxu0 %v4725
    %4982 = vmatpush.msra.mxu0 %v4717
    %4983 = vmatpush.msra.mxu0 %v4709
    %4984 = vmatpush.msra.mxu0 %v4701
    %4985 = vmatpush.msra.mxu0 %v4693
    %4986 = vmatpush.msra.mxu0 %v4685
    %4987 = vmatmul.f32.gmra.mxu0 %v3788
    %v4988 = vpop.f32.mrf.mxu0
    %v4989 = vadd.f32 %v4969, %v4988
    %4990 = vdwg.mxu0
    %4991 = vmatpush.msra.mxu0 %v3910
    %4992 = vmatpush.msra.mxu0 %v3902
    %4993 = vmatpush.msra.mxu0 %v3894
    %4994 = vmatpush.msra.mxu0 %v3886
    %4995 = vmatpush.msra.mxu0 %v3878
    %4996 = vmatpush.msra.mxu0 %v3870
    %4997 = vmatpush.msra.mxu0 %v3862
    %4998 = vmatpush.msra.mxu0 %v3854
    %4999 = vmatpush.msra.mxu0 %v3846
    %5000 = vmatpush.msra.mxu0 %v3838
    %5001 = vmatpush.msra.mxu0 %v3830
    %5002 = vmatpush.msra.mxu0 %v3822
    %5003 = vmatpush.msra.mxu0 %v3814
    %5004 = vmatpush.msra.mxu0 %v3806
    %5005 = vmatpush.msra.mxu0 %v3798
    %5006 = vmatpush.msra.mxu0 %v3790
    %5007 = vmatmul.f32.gmra.mxu0 %v3781
    %v5008 = vpop.f32.mrf.mxu0
    %v5009 = vadd.f32 %v4816, %v5008
    %5010 = vdwg.mxu0
    %5011 = vmatpush.msra.mxu0 %v4038
    %5012 = vmatpush.msra.mxu0 %v4030
    %5013 = vmatpush.msra.mxu0 %v4022
    %5014 = vmatpush.msra.mxu0 %v4014
    %5015 = vmatpush.msra.mxu0 %v4006
    %5016 = vmatpush.msra.mxu0 %v3998
    %5017 = vmatpush.msra.mxu0 %v3990
    %5018 = vmatpush.msra.mxu0 %v3982
    %5019 = vmatpush.msra.mxu0 %v3974
    %5020 = vmatpush.msra.mxu0 %v3966
    %5021 = vmatpush.msra.mxu0 %v3958
    %5022 = vmatpush.msra.mxu0 %v3950
    %5023 = vmatpush.msra.mxu0 %v3942
    %5024 = vmatpush.msra.mxu0 %v3934
    %5025 = vmatpush.msra.mxu0 %v3926
    %5026 = vmatpush.msra.mxu0 %v3918
    %5027 = vmatmul.f32.gmra.mxu0 %v3782
    %v5028 = vpop.f32.mrf.mxu0
    %v5029 = vadd.f32 %v5009, %v5028
    %5030 = vdwg.mxu0
    %5031 = vmatpush.msra.mxu0 %v4166
    %5032 = vmatpush.msra.mxu0 %v4158
    %5033 = vmatpush.msra.mxu0 %v4150
    %5034 = vmatpush.msra.mxu0 %v4142
    %5035 = vmatpush.msra.mxu0 %v4134
    %5036 = vmatpush.msra.mxu0 %v4126
    %5037 = vmatpush.msra.mxu0 %v4118
    %5038 = vmatpush.msra.mxu0 %v4110
    %5039 = vmatpush.msra.mxu0 %v4102
    %5040 = vmatpush.msra.mxu0 %v4094
    %5041 = vmatpush.msra.mxu0 %v4086
    %5042 = vmatpush.msra.mxu0 %v4078
    %5043 = vmatpush.msra.mxu0 %v4070
    %5044 = vmatpush.msra.mxu0 %v4062
    %5045 = vmatpush.msra.mxu0 %v4054
    %5046 = vmatpush.msra.mxu0 %v4046
    %5047 = vmatmul.f32.gmra.mxu0 %v3783
    %v5048 = vpop.f32.mrf.mxu0
    %v5049 = vadd.f32 %v5029, %v5048
    %5050 = vdwg.mxu0
    %5051 = vmatpush.msra.mxu0 %v4294
    %5052 = vmatpush.msra.mxu0 %v4286
    %5053 = vmatpush.msra.mxu0 %v4278
    %5054 = vmatpush.msra.mxu0 %v4270
    %5055 = vmatpush.msra.mxu0 %v4262
    %5056 = vmatpush.msra.mxu0 %v4254
    %5057 = vmatpush.msra.mxu0 %v4246
    %5058 = vmatpush.msra.mxu0 %v4238
    %5059 = vmatpush.msra.mxu0 %v4230
    %5060 = vmatpush.msra.mxu0 %v4222
    %5061 = vmatpush.msra.mxu0 %v4214
    %5062 = vmatpush.msra.mxu0 %v4206
    %5063 = vmatpush.msra.mxu0 %v4198
    %5064 = vmatpush.msra.mxu0 %v4190
    %5065 = vmatpush.msra.mxu0 %v4182
    %5066 = vmatpush.msra.mxu0 %v4174
    %5067 = vmatmul.f32.gmra.mxu0 %v3784
    %v5068 = vpop.f32.mrf.mxu0
    %v5069 = vadd.f32 %v5049, %v5068
    %5070 = vdwg.mxu0
    %5071 = vmatpush.msra.mxu0 %v4422
    %5072 = vmatpush.msra.mxu0 %v4414
    %5073 = vmatpush.msra.mxu0 %v4406
    %5074 = vmatpush.msra.mxu0 %v4398
    %5075 = vmatpush.msra.mxu0 %v4390
    %5076 = vmatpush.msra.mxu0 %v4382
    %5077 = vmatpush.msra.mxu0 %v4374
    %5078 = vmatpush.msra.mxu0 %v4366
    %5079 = vmatpush.msra.mxu0 %v4358
    %5080 = vmatpush.msra.mxu0 %v4350
    %5081 = vmatpush.msra.mxu0 %v4342
    %5082 = vmatpush.msra.mxu0 %v4334
    %5083 = vmatpush.msra.mxu0 %v4326
    %5084 = vmatpush.msra.mxu0 %v4318
    %5085 = vmatpush.msra.mxu0 %v4310
    %5086 = vmatpush.msra.mxu0 %v4302
    %5087 = vmatmul.f32.gmra.mxu0 %v3785
    %v5088 = vpop.f32.mrf.mxu0
    %v5089 = vadd.f32 %v5069, %v5088
    %5090 = vdwg.mxu0
    %5091 = vmatpush.msra.mxu0 %v4550
    %5092 = vmatpush.msra.mxu0 %v4542
    %5093 = vmatpush.msra.mxu0 %v4534
    %5094 = vmatpush.msra.mxu0 %v4526
    %5095 = vmatpush.msra.mxu0 %v4518
    %5096 = vmatpush.msra.mxu0 %v4510
    %5097 = vmatpush.msra.mxu0 %v4502
    %5098 = vmatpush.msra.mxu0 %v4494
    %5099 = vmatpush.msra.mxu0 %v4486
    %5100 = vmatpush.msra.mxu0 %v4478
    %5101 = vmatpush.msra.mxu0 %v4470
    %5102 = vmatpush.msra.mxu0 %v4462
    %5103 = vmatpush.msra.mxu0 %v4454
    %5104 = vmatpush.msra.mxu0 %v4446
    %5105 = vmatpush.msra.mxu0 %v4438
    %5106 = vmatpush.msra.mxu0 %v4430
    %5107 = vmatmul.f32.gmra.mxu0 %v3786
    %v5108 = vpop.f32.mrf.mxu0
    %v5109 = vadd.f32 %v5089, %v5108
    %5110 = vdwg.mxu0
    %5111 = vmatpush.msra.mxu0 %v4678
    %5112 = vmatpush.msra.mxu0 %v4670
    %5113 = vmatpush.msra.mxu0 %v4662
    %5114 = vmatpush.msra.mxu0 %v4654
    %5115 = vmatpush.msra.mxu0 %v4646
    %5116 = vmatpush.msra.mxu0 %v4638
    %5117 = vmatpush.msra.mxu0 %v4630
    %5118 = vmatpush.msra.mxu0 %v4622
    %5119 = vmatpush.msra.mxu0 %v4614
    %5120 = vmatpush.msra.mxu0 %v4606
    %5121 = vmatpush.msra.mxu0 %v4598
    %5122 = vmatpush.msra.mxu0 %v4590
    %5123 = vmatpush.msra.mxu0 %v4582
    %5124 = vmatpush.msra.mxu0 %v4574
    %5125 = vmatpush.msra.mxu0 %v4566
    %5126 = vmatpush.msra.mxu0 %v4558
    %5127 = vmatmul.f32.gmra.mxu0 %v3787
    %v5128 = vpop.f32.mrf.mxu0
    %v5129 = vadd.f32 %v5109, %v5128
    %5130 = vdwg.mxu0
    %5131 = vmatpush.msra.mxu0 %v4806
    %5132 = vmatpush.msra.mxu0 %v4798
    %5133 = vmatpush.msra.mxu0 %v4790
    %5134 = vmatpush.msra.mxu0 %v4782
    %5135 = vmatpush.msra.mxu0 %v4774
    %5136 = vmatpush.msra.mxu0 %v4766
    %5137 = vmatpush.msra.mxu0 %v4758
    %5138 = vmatpush.msra.mxu0 %v4750
    %5139 = vmatpush.msra.mxu0 %v4742
    %5140 = vmatpush.msra.mxu0 %v4734
    %5141 = vmatpush.msra.mxu0 %v4726
    %5142 = vmatpush.msra.mxu0 %v4718
    %5143 = vmatpush.msra.mxu0 %v4710
    %5144 = vmatpush.msra.mxu0 %v4702
    %5145 = vmatpush.msra.mxu0 %v4694
    %5146 = vmatpush.msra.mxu0 %v4686
    %5147 = vmatmul.f32.gmra.mxu0 %v3788
    %v5148 = vpop.f32.mrf.mxu0
    %v5149 = vadd.f32 %v5129, %v5148
    %5150 = vdwg.mxu0
    %5151 = vmatpush.msra.mxu0 %v3911
    %5152 = vmatpush.msra.mxu0 %v3903
    %5153 = vmatpush.msra.mxu0 %v3895
    %5154 = vmatpush.msra.mxu0 %v3887
    %5155 = vmatpush.msra.mxu0 %v3879
    %5156 = vmatpush.msra.mxu0 %v3871
    %5157 = vmatpush.msra.mxu0 %v3863
    %5158 = vmatpush.msra.mxu0 %v3855
    %5159 = vmatpush.msra.mxu0 %v3847
    %5160 = vmatpush.msra.mxu0 %v3839
    %5161 = vmatpush.msra.mxu0 %v3831
    %5162 = vmatpush.msra.mxu0 %v3823
    %5163 = vmatpush.msra.mxu0 %v3815
    %5164 = vmatpush.msra.mxu0 %v3807
    %5165 = vmatpush.msra.mxu0 %v3799
    %5166 = vmatpush.msra.mxu0 %v3791
    %5167 = vmatmul.f32.gmra.mxu0 %v3781
    %v5168 = vpop.f32.mrf.mxu0
    %v5169 = vadd.f32 %v4817, %v5168
    %5170 = vdwg.mxu0
    %5171 = vmatpush.msra.mxu0 %v4039
    %5172 = vmatpush.msra.mxu0 %v4031
    %5173 = vmatpush.msra.mxu0 %v4023
    %5174 = vmatpush.msra.mxu0 %v4015
    %5175 = vmatpush.msra.mxu0 %v4007
    %5176 = vmatpush.msra.mxu0 %v3999
    %5177 = vmatpush.msra.mxu0 %v3991
    %5178 = vmatpush.msra.mxu0 %v3983
    %5179 = vmatpush.msra.mxu0 %v3975
    %5180 = vmatpush.msra.mxu0 %v3967
    %5181 = vmatpush.msra.mxu0 %v3959
    %5182 = vmatpush.msra.mxu0 %v3951
    %5183 = vmatpush.msra.mxu0 %v3943
    %5184 = vmatpush.msra.mxu0 %v3935
    %5185 = vmatpush.msra.mxu0 %v3927
    %5186 = vmatpush.msra.mxu0 %v3919
    %5187 = vmatmul.f32.gmra.mxu0 %v3782
    %v5188 = vpop.f32.mrf.mxu0
    %v5189 = vadd.f32 %v5169, %v5188
    %5190 = vdwg.mxu0
    %5191 = vmatpush.msra.mxu0 %v4167
    %5192 = vmatpush.msra.mxu0 %v4159
    %5193 = vmatpush.msra.mxu0 %v4151
    %5194 = vmatpush.msra.mxu0 %v4143
    %5195 = vmatpush.msra.mxu0 %v4135
    %5196 = vmatpush.msra.mxu0 %v4127
    %5197 = vmatpush.msra.mxu0 %v4119
    %5198 = vmatpush.msra.mxu0 %v4111
    %5199 = vmatpush.msra.mxu0 %v4103
    %5200 = vmatpush.msra.mxu0 %v4095
    %5201 = vmatpush.msra.mxu0 %v4087
    %5202 = vmatpush.msra.mxu0 %v4079
    %5203 = vmatpush.msra.mxu0 %v4071
    %5204 = vmatpush.msra.mxu0 %v4063
    %5205 = vmatpush.msra.mxu0 %v4055
    %5206 = vmatpush.msra.mxu0 %v4047
    %5207 = vmatmul.f32.gmra.mxu0 %v3783
    %v5208 = vpop.f32.mrf.mxu0
    %v5209 = vadd.f32 %v5189, %v5208
    %5210 = vdwg.mxu0
    %5211 = vmatpush.msra.mxu0 %v4295
    %5212 = vmatpush.msra.mxu0 %v4287
    %5213 = vmatpush.msra.mxu0 %v4279
    %5214 = vmatpush.msra.mxu0 %v4271
    %5215 = vmatpush.msra.mxu0 %v4263
    %5216 = vmatpush.msra.mxu0 %v4255
    %5217 = vmatpush.msra.mxu0 %v4247
    %5218 = vmatpush.msra.mxu0 %v4239
    %5219 = vmatpush.msra.mxu0 %v4231
    %5220 = vmatpush.msra.mxu0 %v4223
    %5221 = vmatpush.msra.mxu0 %v4215
    %5222 = vmatpush.msra.mxu0 %v4207
    %5223 = vmatpush.msra.mxu0 %v4199
    %5224 = vmatpush.msra.mxu0 %v4191
    %5225 = vmatpush.msra.mxu0 %v4183
    %5226 = vmatpush.msra.mxu0 %v4175
    %5227 = vmatmul.f32.gmra.mxu0 %v3784
    %v5228 = vpop.f32.mrf.mxu0
    %v5229 = vadd.f32 %v5209, %v5228
    %5230 = vdwg.mxu0
    %5231 = vmatpush.msra.mxu0 %v4423
    %5232 = vmatpush.msra.mxu0 %v4415
    %5233 = vmatpush.msra.mxu0 %v4407
    %5234 = vmatpush.msra.mxu0 %v4399
    %5235 = vmatpush.msra.mxu0 %v4391
    %5236 = vmatpush.msra.mxu0 %v4383
    %5237 = vmatpush.msra.mxu0 %v4375
    %5238 = vmatpush.msra.mxu0 %v4367
    %5239 = vmatpush.msra.mxu0 %v4359
    %5240 = vmatpush.msra.mxu0 %v4351
    %5241 = vmatpush.msra.mxu0 %v4343
    %5242 = vmatpush.msra.mxu0 %v4335
    %5243 = vmatpush.msra.mxu0 %v4327
    %5244 = vmatpush.msra.mxu0 %v4319
    %5245 = vmatpush.msra.mxu0 %v4311
    %5246 = vmatpush.msra.mxu0 %v4303
    %5247 = vmatmul.f32.gmra.mxu0 %v3785
    %v5248 = vpop.f32.mrf.mxu0
    %v5249 = vadd.f32 %v5229, %v5248
    %5250 = vdwg.mxu0
    %5251 = vmatpush.msra.mxu0 %v4551
    %5252 = vmatpush.msra.mxu0 %v4543
    %5253 = vmatpush.msra.mxu0 %v4535
    %5254 = vmatpush.msra.mxu0 %v4527
    %5255 = vmatpush.msra.mxu0 %v4519
    %5256 = vmatpush.msra.mxu0 %v4511
    %5257 = vmatpush.msra.mxu0 %v4503
    %5258 = vmatpush.msra.mxu0 %v4495
    %5259 = vmatpush.msra.mxu0 %v4487
    %5260 = vmatpush.msra.mxu0 %v4479
    %5261 = vmatpush.msra.mxu0 %v4471
    %5262 = vmatpush.msra.mxu0 %v4463
    %5263 = vmatpush.msra.mxu0 %v4455
    %5264 = vmatpush.msra.mxu0 %v4447
    %5265 = vmatpush.msra.mxu0 %v4439
    %5266 = vmatpush.msra.mxu0 %v4431
    %5267 = vmatmul.f32.gmra.mxu0 %v3786
    %v5268 = vpop.f32.mrf.mxu0
    %v5269 = vadd.f32 %v5249, %v5268
    %5270 = vdwg.mxu0
    %5271 = vmatpush.msra.mxu0 %v4679
    %5272 = vmatpush.msra.mxu0 %v4671
    %5273 = vmatpush.msra.mxu0 %v4663
    %5274 = vmatpush.msra.mxu0 %v4655
    %5275 = vmatpush.msra.mxu0 %v4647
    %5276 = vmatpush.msra.mxu0 %v4639
    %5277 = vmatpush.msra.mxu0 %v4631
    %5278 = vmatpush.msra.mxu0 %v4623
    %5279 = vmatpush.msra.mxu0 %v4615
    %5280 = vmatpush.msra.mxu0 %v4607
    %5281 = vmatpush.msra.mxu0 %v4599
    %5282 = vmatpush.msra.mxu0 %v4591
    %5283 = vmatpush.msra.mxu0 %v4583
    %5284 = vmatpush.msra.mxu0 %v4575
    %5285 = vmatpush.msra.mxu0 %v4567
    %5286 = vmatpush.msra.mxu0 %v4559
    %5287 = vmatmul.f32.gmra.mxu0 %v3787
    %v5288 = vpop.f32.mrf.mxu0
    %v5289 = vadd.f32 %v5269, %v5288
    %5290 = vdwg.mxu0
    %5291 = vmatpush.msra.mxu0 %v4807
    %5292 = vmatpush.msra.mxu0 %v4799
    %5293 = vmatpush.msra.mxu0 %v4791
    %5294 = vmatpush.msra.mxu0 %v4783
    %5295 = vmatpush.msra.mxu0 %v4775
    %5296 = vmatpush.msra.mxu0 %v4767
    %5297 = vmatpush.msra.mxu0 %v4759
    %5298 = vmatpush.msra.mxu0 %v4751
    %5299 = vmatpush.msra.mxu0 %v4743
    %5300 = vmatpush.msra.mxu0 %v4735
    %5301 = vmatpush.msra.mxu0 %v4727
    %5302 = vmatpush.msra.mxu0 %v4719
    %5303 = vmatpush.msra.mxu0 %v4711
    %5304 = vmatpush.msra.mxu0 %v4703
    %5305 = vmatpush.msra.mxu0 %v4695
    %5306 = vmatpush.msra.mxu0 %v4687
    %5307 = vmatmul.f32.gmra.mxu0 %v3788
    %v5308 = vpop.f32.mrf.mxu0
    %v5309 = vadd.f32 %v5289, %v5308
    %5310 = vdwg.mxu0
    %5311 = vmatpush.msra.mxu0 %v3912
    %5312 = vmatpush.msra.mxu0 %v3904
    %5313 = vmatpush.msra.mxu0 %v3896
    %5314 = vmatpush.msra.mxu0 %v3888
    %5315 = vmatpush.msra.mxu0 %v3880
    %5316 = vmatpush.msra.mxu0 %v3872
    %5317 = vmatpush.msra.mxu0 %v3864
    %5318 = vmatpush.msra.mxu0 %v3856
    %5319 = vmatpush.msra.mxu0 %v3848
    %5320 = vmatpush.msra.mxu0 %v3840
    %5321 = vmatpush.msra.mxu0 %v3832
    %5322 = vmatpush.msra.mxu0 %v3824
    %5323 = vmatpush.msra.mxu0 %v3816
    %5324 = vmatpush.msra.mxu0 %v3808
    %5325 = vmatpush.msra.mxu0 %v3800
    %5326 = vmatpush.msra.mxu0 %v3792
    %5327 = vmatmul.f32.gmra.mxu0 %v3781
    %v5328 = vpop.f32.mrf.mxu0
    %v5329 = vadd.f32 %v4818, %v5328
    %5330 = vdwg.mxu0
    %5331 = vmatpush.msra.mxu0 %v4040
    %5332 = vmatpush.msra.mxu0 %v4032
    %5333 = vmatpush.msra.mxu0 %v4024
    %5334 = vmatpush.msra.mxu0 %v4016
    %5335 = vmatpush.msra.mxu0 %v4008
    %5336 = vmatpush.msra.mxu0 %v4000
    %5337 = vmatpush.msra.mxu0 %v3992
    %5338 = vmatpush.msra.mxu0 %v3984
    %5339 = vmatpush.msra.mxu0 %v3976
    %5340 = vmatpush.msra.mxu0 %v3968
    %5341 = vmatpush.msra.mxu0 %v3960
    %5342 = vmatpush.msra.mxu0 %v3952
    %5343 = vmatpush.msra.mxu0 %v3944
    %5344 = vmatpush.msra.mxu0 %v3936
    %5345 = vmatpush.msra.mxu0 %v3928
    %5346 = vmatpush.msra.mxu0 %v3920
    %5347 = vmatmul.f32.gmra.mxu0 %v3782
    %v5348 = vpop.f32.mrf.mxu0
    %v5349 = vadd.f32 %v5329, %v5348
    %5350 = vdwg.mxu0
    %5351 = vmatpush.msra.mxu0 %v4168
    %5352 = vmatpush.msra.mxu0 %v4160
    %5353 = vmatpush.msra.mxu0 %v4152
    %5354 = vmatpush.msra.mxu0 %v4144
    %5355 = vmatpush.msra.mxu0 %v4136
    %5356 = vmatpush.msra.mxu0 %v4128
    %5357 = vmatpush.msra.mxu0 %v4120
    %5358 = vmatpush.msra.mxu0 %v4112
    %5359 = vmatpush.msra.mxu0 %v4104
    %5360 = vmatpush.msra.mxu0 %v4096
    %5361 = vmatpush.msra.mxu0 %v4088
    %5362 = vmatpush.msra.mxu0 %v4080
    %5363 = vmatpush.msra.mxu0 %v4072
    %5364 = vmatpush.msra.mxu0 %v4064
    %5365 = vmatpush.msra.mxu0 %v4056
    %5366 = vmatpush.msra.mxu0 %v4048
    %5367 = vmatmul.f32.gmra.mxu0 %v3783
    %v5368 = vpop.f32.mrf.mxu0
    %v5369 = vadd.f32 %v5349, %v5368
    %5370 = vdwg.mxu0
    %5371 = vmatpush.msra.mxu0 %v4296
    %5372 = vmatpush.msra.mxu0 %v4288
    %5373 = vmatpush.msra.mxu0 %v4280
    %5374 = vmatpush.msra.mxu0 %v4272
    %5375 = vmatpush.msra.mxu0 %v4264
    %5376 = vmatpush.msra.mxu0 %v4256
    %5377 = vmatpush.msra.mxu0 %v4248
    %5378 = vmatpush.msra.mxu0 %v4240
    %5379 = vmatpush.msra.mxu0 %v4232
    %5380 = vmatpush.msra.mxu0 %v4224
    %5381 = vmatpush.msra.mxu0 %v4216
    %5382 = vmatpush.msra.mxu0 %v4208
    %5383 = vmatpush.msra.mxu0 %v4200
    %5384 = vmatpush.msra.mxu0 %v4192
    %5385 = vmatpush.msra.mxu0 %v4184
    %5386 = vmatpush.msra.mxu0 %v4176
    %5387 = vmatmul.f32.gmra.mxu0 %v3784
    %v5388 = vpop.f32.mrf.mxu0
    %v5389 = vadd.f32 %v5369, %v5388
    %5390 = vdwg.mxu0
    %5391 = vmatpush.msra.mxu0 %v4424
    %5392 = vmatpush.msra.mxu0 %v4416
    %5393 = vmatpush.msra.mxu0 %v4408
    %5394 = vmatpush.msra.mxu0 %v4400
    %5395 = vmatpush.msra.mxu0 %v4392
    %5396 = vmatpush.msra.mxu0 %v4384
    %5397 = vmatpush.msra.mxu0 %v4376
    %5398 = vmatpush.msra.mxu0 %v4368
    %5399 = vmatpush.msra.mxu0 %v4360
    %5400 = vmatpush.msra.mxu0 %v4352
    %5401 = vmatpush.msra.mxu0 %v4344
    %5402 = vmatpush.msra.mxu0 %v4336
    %5403 = vmatpush.msra.mxu0 %v4328
    %5404 = vmatpush.msra.mxu0 %v4320
    %5405 = vmatpush.msra.mxu0 %v4312
    %5406 = vmatpush.msra.mxu0 %v4304
    %5407 = vmatmul.f32.gmra.mxu0 %v3785
    %v5408 = vpop.f32.mrf.mxu0
    %v5409 = vadd.f32 %v5389, %v5408
    %5410 = vdwg.mxu0
    %5411 = vmatpush.msra.mxu0 %v4552
    %5412 = vmatpush.msra.mxu0 %v4544
    %5413 = vmatpush.msra.mxu0 %v4536
    %5414 = vmatpush.msra.mxu0 %v4528
    %5415 = vmatpush.msra.mxu0 %v4520
    %5416 = vmatpush.msra.mxu0 %v4512
    %5417 = vmatpush.msra.mxu0 %v4504
    %5418 = vmatpush.msra.mxu0 %v4496
    %5419 = vmatpush.msra.mxu0 %v4488
    %5420 = vmatpush.msra.mxu0 %v4480
    %5421 = vmatpush.msra.mxu0 %v4472
    %5422 = vmatpush.msra.mxu0 %v4464
    %5423 = vmatpush.msra.mxu0 %v4456
    %5424 = vmatpush.msra.mxu0 %v4448
    %5425 = vmatpush.msra.mxu0 %v4440
    %5426 = vmatpush.msra.mxu0 %v4432
    %5427 = vmatmul.f32.gmra.mxu0 %v3786
    %v5428 = vpop.f32.mrf.mxu0
    %v5429 = vadd.f32 %v5409, %v5428
    %5430 = vdwg.mxu0
    %5431 = vmatpush.msra.mxu0 %v4680
    %5432 = vmatpush.msra.mxu0 %v4672
    %5433 = vmatpush.msra.mxu0 %v4664
    %5434 = vmatpush.msra.mxu0 %v4656
    %5435 = vmatpush.msra.mxu0 %v4648
    %5436 = vmatpush.msra.mxu0 %v4640
    %5437 = vmatpush.msra.mxu0 %v4632
    %5438 = vmatpush.msra.mxu0 %v4624
    %5439 = vmatpush.msra.mxu0 %v4616
    %5440 = vmatpush.msra.mxu0 %v4608
    %5441 = vmatpush.msra.mxu0 %v4600
    %5442 = vmatpush.msra.mxu0 %v4592
    %5443 = vmatpush.msra.mxu0 %v4584
    %5444 = vmatpush.msra.mxu0 %v4576
    %5445 = vmatpush.msra.mxu0 %v4568
    %5446 = vmatpush.msra.mxu0 %v4560
    %5447 = vmatmul.f32.gmra.mxu0 %v3787
    %v5448 = vpop.f32.mrf.mxu0
    %v5449 = vadd.f32 %v5429, %v5448
    %5450 = vdwg.mxu0
    %5451 = vmatpush.msra.mxu0 %v4808
    %5452 = vmatpush.msra.mxu0 %v4800
    %5453 = vmatpush.msra.mxu0 %v4792
    %5454 = vmatpush.msra.mxu0 %v4784
    %5455 = vmatpush.msra.mxu0 %v4776
    %5456 = vmatpush.msra.mxu0 %v4768
    %5457 = vmatpush.msra.mxu0 %v4760
    %5458 = vmatpush.msra.mxu0 %v4752
    %5459 = vmatpush.msra.mxu0 %v4744
    %5460 = vmatpush.msra.mxu0 %v4736
    %5461 = vmatpush.msra.mxu0 %v4728
    %5462 = vmatpush.msra.mxu0 %v4720
    %5463 = vmatpush.msra.mxu0 %v4712
    %5464 = vmatpush.msra.mxu0 %v4704
    %5465 = vmatpush.msra.mxu0 %v4696
    %5466 = vmatpush.msra.mxu0 %v4688
    %5467 = vmatmul.f32.gmra.mxu0 %v3788
    %v5468 = vpop.f32.mrf.mxu0
    %v5469 = vadd.f32 %v5449, %v5468
    %5470 = vdwg.mxu0
    %5471 = vmatpush.msra.mxu0 %v3913
    %5472 = vmatpush.msra.mxu0 %v3905
    %5473 = vmatpush.msra.mxu0 %v3897
    %5474 = vmatpush.msra.mxu0 %v3889
    %5475 = vmatpush.msra.mxu0 %v3881
    %5476 = vmatpush.msra.mxu0 %v3873
    %5477 = vmatpush.msra.mxu0 %v3865
    %5478 = vmatpush.msra.mxu0 %v3857
    %5479 = vmatpush.msra.mxu0 %v3849
    %5480 = vmatpush.msra.mxu0 %v3841
    %5481 = vmatpush.msra.mxu0 %v3833
    %5482 = vmatpush.msra.mxu0 %v3825
    %5483 = vmatpush.msra.mxu0 %v3817
    %5484 = vmatpush.msra.mxu0 %v3809
    %5485 = vmatpush.msra.mxu0 %v3801
    %5486 = vmatpush.msra.mxu0 %v3793
    %5487 = vmatmul.f32.gmra.mxu0 %v3781
    %v5488 = vpop.f32.mrf.mxu0
    %v5489 = vadd.f32 %v4819, %v5488
    %5490 = vdwg.mxu0
    %5491 = vmatpush.msra.mxu0 %v4041
    %5492 = vmatpush.msra.mxu0 %v4033
    %5493 = vmatpush.msra.mxu0 %v4025
    %5494 = vmatpush.msra.mxu0 %v4017
    %5495 = vmatpush.msra.mxu0 %v4009
    %5496 = vmatpush.msra.mxu0 %v4001
    %5497 = vmatpush.msra.mxu0 %v3993
    %5498 = vmatpush.msra.mxu0 %v3985
    %5499 = vmatpush.msra.mxu0 %v3977
    %5500 = vmatpush.msra.mxu0 %v3969
    %5501 = vmatpush.msra.mxu0 %v3961
    %5502 = vmatpush.msra.mxu0 %v3953
    %5503 = vmatpush.msra.mxu0 %v3945
    %5504 = vmatpush.msra.mxu0 %v3937
    %5505 = vmatpush.msra.mxu0 %v3929
    %5506 = vmatpush.msra.mxu0 %v3921
    %5507 = vmatmul.f32.gmra.mxu0 %v3782
    %v5508 = vpop.f32.mrf.mxu0
    %v5509 = vadd.f32 %v5489, %v5508
    %5510 = vdwg.mxu0
    %5511 = vmatpush.msra.mxu0 %v4169
    %5512 = vmatpush.msra.mxu0 %v4161
    %5513 = vmatpush.msra.mxu0 %v4153
    %5514 = vmatpush.msra.mxu0 %v4145
    %5515 = vmatpush.msra.mxu0 %v4137
    %5516 = vmatpush.msra.mxu0 %v4129
    %5517 = vmatpush.msra.mxu0 %v4121
    %5518 = vmatpush.msra.mxu0 %v4113
    %5519 = vmatpush.msra.mxu0 %v4105
    %5520 = vmatpush.msra.mxu0 %v4097
    %5521 = vmatpush.msra.mxu0 %v4089
    %5522 = vmatpush.msra.mxu0 %v4081
    %5523 = vmatpush.msra.mxu0 %v4073
    %5524 = vmatpush.msra.mxu0 %v4065
    %5525 = vmatpush.msra.mxu0 %v4057
    %5526 = vmatpush.msra.mxu0 %v4049
    %5527 = vmatmul.f32.gmra.mxu0 %v3783
    %v5528 = vpop.f32.mrf.mxu0
    %v5529 = vadd.f32 %v5509, %v5528
    %5530 = vdwg.mxu0
    %5531 = vmatpush.msra.mxu0 %v4297
    %5532 = vmatpush.msra.mxu0 %v4289
    %5533 = vmatpush.msra.mxu0 %v4281
    %5534 = vmatpush.msra.mxu0 %v4273
    %5535 = vmatpush.msra.mxu0 %v4265
    %5536 = vmatpush.msra.mxu0 %v4257
    %5537 = vmatpush.msra.mxu0 %v4249
    %5538 = vmatpush.msra.mxu0 %v4241
    %5539 = vmatpush.msra.mxu0 %v4233
    %5540 = vmatpush.msra.mxu0 %v4225
    %5541 = vmatpush.msra.mxu0 %v4217
    %5542 = vmatpush.msra.mxu0 %v4209
    %5543 = vmatpush.msra.mxu0 %v4201
    %5544 = vmatpush.msra.mxu0 %v4193
    %5545 = vmatpush.msra.mxu0 %v4185
    %5546 = vmatpush.msra.mxu0 %v4177
    %5547 = vmatmul.f32.gmra.mxu0 %v3784
    %v5548 = vpop.f32.mrf.mxu0
    %v5549 = vadd.f32 %v5529, %v5548
    %5550 = vdwg.mxu0
    %5551 = vmatpush.msra.mxu0 %v4425
    %5552 = vmatpush.msra.mxu0 %v4417
    %5553 = vmatpush.msra.mxu0 %v4409
    %5554 = vmatpush.msra.mxu0 %v4401
    %5555 = vmatpush.msra.mxu0 %v4393
    %5556 = vmatpush.msra.mxu0 %v4385
    %5557 = vmatpush.msra.mxu0 %v4377
    %5558 = vmatpush.msra.mxu0 %v4369
    %5559 = vmatpush.msra.mxu0 %v4361
    %5560 = vmatpush.msra.mxu0 %v4353
    %5561 = vmatpush.msra.mxu0 %v4345
    %5562 = vmatpush.msra.mxu0 %v4337
    %5563 = vmatpush.msra.mxu0 %v4329
    %5564 = vmatpush.msra.mxu0 %v4321
    %5565 = vmatpush.msra.mxu0 %v4313
    %5566 = vmatpush.msra.mxu0 %v4305
    %5567 = vmatmul.f32.gmra.mxu0 %v3785
    %v5568 = vpop.f32.mrf.mxu0
    %v5569 = vadd.f32 %v5549, %v5568
    %5570 = vdwg.mxu0
    %5571 = vmatpush.msra.mxu0 %v4553
    %5572 = vmatpush.msra.mxu0 %v4545
    %5573 = vmatpush.msra.mxu0 %v4537
    %5574 = vmatpush.msra.mxu0 %v4529
    %5575 = vmatpush.msra.mxu0 %v4521
    %5576 = vmatpush.msra.mxu0 %v4513
    %5577 = vmatpush.msra.mxu0 %v4505
    %5578 = vmatpush.msra.mxu0 %v4497
    %5579 = vmatpush.msra.mxu0 %v4489
    %5580 = vmatpush.msra.mxu0 %v4481
    %5581 = vmatpush.msra.mxu0 %v4473
    %5582 = vmatpush.msra.mxu0 %v4465
    %5583 = vmatpush.msra.mxu0 %v4457
    %5584 = vmatpush.msra.mxu0 %v4449
    %5585 = vmatpush.msra.mxu0 %v4441
    %5586 = vmatpush.msra.mxu0 %v4433
    %5587 = vmatmul.f32.gmra.mxu0 %v3786
    %v5588 = vpop.f32.mrf.mxu0
    %v5589 = vadd.f32 %v5569, %v5588
    %5590 = vdwg.mxu0
    %5591 = vmatpush.msra.mxu0 %v4681
    %5592 = vmatpush.msra.mxu0 %v4673
    %5593 = vmatpush.msra.mxu0 %v4665
    %5594 = vmatpush.msra.mxu0 %v4657
    %5595 = vmatpush.msra.mxu0 %v4649
    %5596 = vmatpush.msra.mxu0 %v4641
    %5597 = vmatpush.msra.mxu0 %v4633
    %5598 = vmatpush.msra.mxu0 %v4625
    %5599 = vmatpush.msra.mxu0 %v4617
    %5600 = vmatpush.msra.mxu0 %v4609
    %5601 = vmatpush.msra.mxu0 %v4601
    %5602 = vmatpush.msra.mxu0 %v4593
    %5603 = vmatpush.msra.mxu0 %v4585
    %5604 = vmatpush.msra.mxu0 %v4577
    %5605 = vmatpush.msra.mxu0 %v4569
    %5606 = vmatpush.msra.mxu0 %v4561
    %5607 = vmatmul.f32.gmra.mxu0 %v3787
    %v5608 = vpop.f32.mrf.mxu0
    %v5609 = vadd.f32 %v5589, %v5608
    %5610 = vdwg.mxu0
    %5611 = vmatpush.msra.mxu0 %v4809
    %5612 = vmatpush.msra.mxu0 %v4801
    %5613 = vmatpush.msra.mxu0 %v4793
    %5614 = vmatpush.msra.mxu0 %v4785
    %5615 = vmatpush.msra.mxu0 %v4777
    %5616 = vmatpush.msra.mxu0 %v4769
    %5617 = vmatpush.msra.mxu0 %v4761
    %5618 = vmatpush.msra.mxu0 %v4753
    %5619 = vmatpush.msra.mxu0 %v4745
    %5620 = vmatpush.msra.mxu0 %v4737
    %5621 = vmatpush.msra.mxu0 %v4729
    %5622 = vmatpush.msra.mxu0 %v4721
    %5623 = vmatpush.msra.mxu0 %v4713
    %5624 = vmatpush.msra.mxu0 %v4705
    %5625 = vmatpush.msra.mxu0 %v4697
    %5626 = vmatpush.msra.mxu0 %v4689
    %5627 = vmatmul.f32.gmra.mxu0 %v3788
    %v5628 = vpop.f32.mrf.mxu0
    %v5629 = vadd.f32 %v5609, %v5628
    %5630 = vdwg.mxu0
    %5631 = vmatpush.msra.mxu0 %v3914
    %5632 = vmatpush.msra.mxu0 %v3906
    %5633 = vmatpush.msra.mxu0 %v3898
    %5634 = vmatpush.msra.mxu0 %v3890
    %5635 = vmatpush.msra.mxu0 %v3882
    %5636 = vmatpush.msra.mxu0 %v3874
    %5637 = vmatpush.msra.mxu0 %v3866
    %5638 = vmatpush.msra.mxu0 %v3858
    %5639 = vmatpush.msra.mxu0 %v3850
    %5640 = vmatpush.msra.mxu0 %v3842
    %5641 = vmatpush.msra.mxu0 %v3834
    %5642 = vmatpush.msra.mxu0 %v3826
    %5643 = vmatpush.msra.mxu0 %v3818
    %5644 = vmatpush.msra.mxu0 %v3810
    %5645 = vmatpush.msra.mxu0 %v3802
    %5646 = vmatpush.msra.mxu0 %v3794
    %5647 = vmatmul.f32.gmra.mxu0 %v3781
    %v5648 = vpop.f32.mrf.mxu0
    %v5649 = vadd.f32 %v4820, %v5648
    %5650 = vdwg.mxu0
    %5651 = vmatpush.msra.mxu0 %v4042
    %5652 = vmatpush.msra.mxu0 %v4034
    %5653 = vmatpush.msra.mxu0 %v4026
    %5654 = vmatpush.msra.mxu0 %v4018
    %5655 = vmatpush.msra.mxu0 %v4010
    %5656 = vmatpush.msra.mxu0 %v4002
    %5657 = vmatpush.msra.mxu0 %v3994
    %5658 = vmatpush.msra.mxu0 %v3986
    %5659 = vmatpush.msra.mxu0 %v3978
    %5660 = vmatpush.msra.mxu0 %v3970
    %5661 = vmatpush.msra.mxu0 %v3962
    %5662 = vmatpush.msra.mxu0 %v3954
    %5663 = vmatpush.msra.mxu0 %v3946
    %5664 = vmatpush.msra.mxu0 %v3938
    %5665 = vmatpush.msra.mxu0 %v3930
    %5666 = vmatpush.msra.mxu0 %v3922
    %5667 = vmatmul.f32.gmra.mxu0 %v3782
    %v5668 = vpop.f32.mrf.mxu0
    %v5669 = vadd.f32 %v5649, %v5668
    %5670 = vdwg.mxu0
    %5671 = vmatpush.msra.mxu0 %v4170
    %5672 = vmatpush.msra.mxu0 %v4162
    %5673 = vmatpush.msra.mxu0 %v4154
    %5674 = vmatpush.msra.mxu0 %v4146
    %5675 = vmatpush.msra.mxu0 %v4138
    %5676 = vmatpush.msra.mxu0 %v4130
    %5677 = vmatpush.msra.mxu0 %v4122
    %5678 = vmatpush.msra.mxu0 %v4114
    %5679 = vmatpush.msra.mxu0 %v4106
    %5680 = vmatpush.msra.mxu0 %v4098
    %5681 = vmatpush.msra.mxu0 %v4090
    %5682 = vmatpush.msra.mxu0 %v4082
    %5683 = vmatpush.msra.mxu0 %v4074
    %5684 = vmatpush.msra.mxu0 %v4066
    %5685 = vmatpush.msra.mxu0 %v4058
    %5686 = vmatpush.msra.mxu0 %v4050
    %5687 = vmatmul.f32.gmra.mxu0 %v3783
    %v5688 = vpop.f32.mrf.mxu0
    %v5689 = vadd.f32 %v5669, %v5688
    %5690 = vdwg.mxu0
    %5691 = vmatpush.msra.mxu0 %v4298
    %5692 = vmatpush.msra.mxu0 %v4290
    %5693 = vmatpush.msra.mxu0 %v4282
    %5694 = vmatpush.msra.mxu0 %v4274
    %5695 = vmatpush.msra.mxu0 %v4266
    %5696 = vmatpush.msra.mxu0 %v4258
    %5697 = vmatpush.msra.mxu0 %v4250
    %5698 = vmatpush.msra.mxu0 %v4242
    %5699 = vmatpush.msra.mxu0 %v4234
    %5700 = vmatpush.msra.mxu0 %v4226
    %5701 = vmatpush.msra.mxu0 %v4218
    %5702 = vmatpush.msra.mxu0 %v4210
    %5703 = vmatpush.msra.mxu0 %v4202
    %5704 = vmatpush.msra.mxu0 %v4194
    %5705 = vmatpush.msra.mxu0 %v4186
    %5706 = vmatpush.msra.mxu0 %v4178
    %5707 = vmatmul.f32.gmra.mxu0 %v3784
    %v5708 = vpop.f32.mrf.mxu0
    %v5709 = vadd.f32 %v5689, %v5708
    %5710 = vdwg.mxu0
    %5711 = vmatpush.msra.mxu0 %v4426
    %5712 = vmatpush.msra.mxu0 %v4418
    %5713 = vmatpush.msra.mxu0 %v4410
    %5714 = vmatpush.msra.mxu0 %v4402
    %5715 = vmatpush.msra.mxu0 %v4394
    %5716 = vmatpush.msra.mxu0 %v4386
    %5717 = vmatpush.msra.mxu0 %v4378
    %5718 = vmatpush.msra.mxu0 %v4370
    %5719 = vmatpush.msra.mxu0 %v4362
    %5720 = vmatpush.msra.mxu0 %v4354
    %5721 = vmatpush.msra.mxu0 %v4346
    %5722 = vmatpush.msra.mxu0 %v4338
    %5723 = vmatpush.msra.mxu0 %v4330
    %5724 = vmatpush.msra.mxu0 %v4322
    %5725 = vmatpush.msra.mxu0 %v4314
    %5726 = vmatpush.msra.mxu0 %v4306
    %5727 = vmatmul.f32.gmra.mxu0 %v3785
    %v5728 = vpop.f32.mrf.mxu0
    %v5729 = vadd.f32 %v5709, %v5728
    %5730 = vdwg.mxu0
    %5731 = vmatpush.msra.mxu0 %v4554
    %5732 = vmatpush.msra.mxu0 %v4546
    %5733 = vmatpush.msra.mxu0 %v4538
    %5734 = vmatpush.msra.mxu0 %v4530
    %5735 = vmatpush.msra.mxu0 %v4522
    %5736 = vmatpush.msra.mxu0 %v4514
    %5737 = vmatpush.msra.mxu0 %v4506
    %5738 = vmatpush.msra.mxu0 %v4498
    %5739 = vmatpush.msra.mxu0 %v4490
    %5740 = vmatpush.msra.mxu0 %v4482
    %5741 = vmatpush.msra.mxu0 %v4474
    %5742 = vmatpush.msra.mxu0 %v4466
    %5743 = vmatpush.msra.mxu0 %v4458
    %5744 = vmatpush.msra.mxu0 %v4450
    %5745 = vmatpush.msra.mxu0 %v4442
    %5746 = vmatpush.msra.mxu0 %v4434
    %5747 = vmatmul.f32.gmra.mxu0 %v3786
    %v5748 = vpop.f32.mrf.mxu0
    %v5749 = vadd.f32 %v5729, %v5748
    %5750 = vdwg.mxu0
    %5751 = vmatpush.msra.mxu0 %v4682
    %5752 = vmatpush.msra.mxu0 %v4674
    %5753 = vmatpush.msra.mxu0 %v4666
    %5754 = vmatpush.msra.mxu0 %v4658
    %5755 = vmatpush.msra.mxu0 %v4650
    %5756 = vmatpush.msra.mxu0 %v4642
    %5757 = vmatpush.msra.mxu0 %v4634
    %5758 = vmatpush.msra.mxu0 %v4626
    %5759 = vmatpush.msra.mxu0 %v4618
    %5760 = vmatpush.msra.mxu0 %v4610
    %5761 = vmatpush.msra.mxu0 %v4602
    %5762 = vmatpush.msra.mxu0 %v4594
    %5763 = vmatpush.msra.mxu0 %v4586
    %5764 = vmatpush.msra.mxu0 %v4578
    %5765 = vmatpush.msra.mxu0 %v4570
    %5766 = vmatpush.msra.mxu0 %v4562
    %5767 = vmatmul.f32.gmra.mxu0 %v3787
    %v5768 = vpop.f32.mrf.mxu0
    %v5769 = vadd.f32 %v5749, %v5768
    %5770 = vdwg.mxu0
    %5771 = vmatpush.msra.mxu0 %v4810
    %5772 = vmatpush.msra.mxu0 %v4802
    %5773 = vmatpush.msra.mxu0 %v4794
    %5774 = vmatpush.msra.mxu0 %v4786
    %5775 = vmatpush.msra.mxu0 %v4778
    %5776 = vmatpush.msra.mxu0 %v4770
    %5777 = vmatpush.msra.mxu0 %v4762
    %5778 = vmatpush.msra.mxu0 %v4754
    %5779 = vmatpush.msra.mxu0 %v4746
    %5780 = vmatpush.msra.mxu0 %v4738
    %5781 = vmatpush.msra.mxu0 %v4730
    %5782 = vmatpush.msra.mxu0 %v4722
    %5783 = vmatpush.msra.mxu0 %v4714
    %5784 = vmatpush.msra.mxu0 %v4706
    %5785 = vmatpush.msra.mxu0 %v4698
    %5786 = vmatpush.msra.mxu0 %v4690
    %5787 = vmatmul.f32.gmra.mxu0 %v3788
    %v5788 = vpop.f32.mrf.mxu0
    %v5789 = vadd.f32 %v5769, %v5788
    %5790 = vdwg.mxu0
    %5791 = vmatpush.msra.mxu0 %v3915
    %5792 = vmatpush.msra.mxu0 %v3907
    %5793 = vmatpush.msra.mxu0 %v3899
    %5794 = vmatpush.msra.mxu0 %v3891
    %5795 = vmatpush.msra.mxu0 %v3883
    %5796 = vmatpush.msra.mxu0 %v3875
    %5797 = vmatpush.msra.mxu0 %v3867
    %5798 = vmatpush.msra.mxu0 %v3859
    %5799 = vmatpush.msra.mxu0 %v3851
    %5800 = vmatpush.msra.mxu0 %v3843
    %5801 = vmatpush.msra.mxu0 %v3835
    %5802 = vmatpush.msra.mxu0 %v3827
    %5803 = vmatpush.msra.mxu0 %v3819
    %5804 = vmatpush.msra.mxu0 %v3811
    %5805 = vmatpush.msra.mxu0 %v3803
    %5806 = vmatpush.msra.mxu0 %v3795
    %5807 = vmatmul.f32.gmra.mxu0 %v3781
    %v5808 = vpop.f32.mrf.mxu0
    %v5809 = vadd.f32 %v4821, %v5808
    %5810 = vdwg.mxu0
    %5811 = vmatpush.msra.mxu0 %v4043
    %5812 = vmatpush.msra.mxu0 %v4035
    %5813 = vmatpush.msra.mxu0 %v4027
    %5814 = vmatpush.msra.mxu0 %v4019
    %5815 = vmatpush.msra.mxu0 %v4011
    %5816 = vmatpush.msra.mxu0 %v4003
    %5817 = vmatpush.msra.mxu0 %v3995
    %5818 = vmatpush.msra.mxu0 %v3987
    %5819 = vmatpush.msra.mxu0 %v3979
    %5820 = vmatpush.msra.mxu0 %v3971
    %5821 = vmatpush.msra.mxu0 %v3963
    %5822 = vmatpush.msra.mxu0 %v3955
    %5823 = vmatpush.msra.mxu0 %v3947
    %5824 = vmatpush.msra.mxu0 %v3939
    %5825 = vmatpush.msra.mxu0 %v3931
    %5826 = vmatpush.msra.mxu0 %v3923
    %5827 = vmatmul.f32.gmra.mxu0 %v3782
    %v5828 = vpop.f32.mrf.mxu0
    %v5829 = vadd.f32 %v5809, %v5828
    %5830 = vdwg.mxu0
    %5831 = vmatpush.msra.mxu0 %v4171
    %5832 = vmatpush.msra.mxu0 %v4163
    %5833 = vmatpush.msra.mxu0 %v4155
    %5834 = vmatpush.msra.mxu0 %v4147
    %5835 = vmatpush.msra.mxu0 %v4139
    %5836 = vmatpush.msra.mxu0 %v4131
    %5837 = vmatpush.msra.mxu0 %v4123
    %5838 = vmatpush.msra.mxu0 %v4115
    %5839 = vmatpush.msra.mxu0 %v4107
    %5840 = vmatpush.msra.mxu0 %v4099
    %5841 = vmatpush.msra.mxu0 %v4091
    %5842 = vmatpush.msra.mxu0 %v4083
    %5843 = vmatpush.msra.mxu0 %v4075
    %5844 = vmatpush.msra.mxu0 %v4067
    %5845 = vmatpush.msra.mxu0 %v4059
    %5846 = vmatpush.msra.mxu0 %v4051
    %5847 = vmatmul.f32.gmra.mxu0 %v3783
    %v5848 = vpop.f32.mrf.mxu0
    %v5849 = vadd.f32 %v5829, %v5848
    %5850 = vdwg.mxu0
    %5851 = vmatpush.msra.mxu0 %v4299
    %5852 = vmatpush.msra.mxu0 %v4291
    %5853 = vmatpush.msra.mxu0 %v4283
    %5854 = vmatpush.msra.mxu0 %v4275
    %5855 = vmatpush.msra.mxu0 %v4267
    %5856 = vmatpush.msra.mxu0 %v4259
    %5857 = vmatpush.msra.mxu0 %v4251
    %5858 = vmatpush.msra.mxu0 %v4243
    %5859 = vmatpush.msra.mxu0 %v4235
    %5860 = vmatpush.msra.mxu0 %v4227
    %5861 = vmatpush.msra.mxu0 %v4219
    %5862 = vmatpush.msra.mxu0 %v4211
    %5863 = vmatpush.msra.mxu0 %v4203
    %5864 = vmatpush.msra.mxu0 %v4195
    %5865 = vmatpush.msra.mxu0 %v4187
    %5866 = vmatpush.msra.mxu0 %v4179
    %5867 = vmatmul.f32.gmra.mxu0 %v3784
    %v5868 = vpop.f32.mrf.mxu0
    %v5869 = vadd.f32 %v5849, %v5868
    %5870 = vdwg.mxu0
    %5871 = vmatpush.msra.mxu0 %v4427
    %5872 = vmatpush.msra.mxu0 %v4419
    %5873 = vmatpush.msra.mxu0 %v4411
    %5874 = vmatpush.msra.mxu0 %v4403
    %5875 = vmatpush.msra.mxu0 %v4395
    %5876 = vmatpush.msra.mxu0 %v4387
    %5877 = vmatpush.msra.mxu0 %v4379
    %5878 = vmatpush.msra.mxu0 %v4371
    %5879 = vmatpush.msra.mxu0 %v4363
    %5880 = vmatpush.msra.mxu0 %v4355
    %5881 = vmatpush.msra.mxu0 %v4347
    %5882 = vmatpush.msra.mxu0 %v4339
    %5883 = vmatpush.msra.mxu0 %v4331
    %5884 = vmatpush.msra.mxu0 %v4323
    %5885 = vmatpush.msra.mxu0 %v4315
    %5886 = vmatpush.msra.mxu0 %v4307
    %5887 = vmatmul.f32.gmra.mxu0 %v3785
    %v5888 = vpop.f32.mrf.mxu0
    %v5889 = vadd.f32 %v5869, %v5888
    %5890 = vdwg.mxu0
    %5891 = vmatpush.msra.mxu0 %v4555
    %5892 = vmatpush.msra.mxu0 %v4547
    %5893 = vmatpush.msra.mxu0 %v4539
    %5894 = vmatpush.msra.mxu0 %v4531
    %5895 = vmatpush.msra.mxu0 %v4523
    %5896 = vmatpush.msra.mxu0 %v4515
    %5897 = vmatpush.msra.mxu0 %v4507
    %5898 = vmatpush.msra.mxu0 %v4499
    %5899 = vmatpush.msra.mxu0 %v4491
    %5900 = vmatpush.msra.mxu0 %v4483
    %5901 = vmatpush.msra.mxu0 %v4475
    %5902 = vmatpush.msra.mxu0 %v4467
    %5903 = vmatpush.msra.mxu0 %v4459
    %5904 = vmatpush.msra.mxu0 %v4451
    %5905 = vmatpush.msra.mxu0 %v4443
    %5906 = vmatpush.msra.mxu0 %v4435
    %5907 = vmatmul.f32.gmra.mxu0 %v3786
    %v5908 = vpop.f32.mrf.mxu0
    %v5909 = vadd.f32 %v5889, %v5908
    %5910 = vdwg.mxu0
    %5911 = vmatpush.msra.mxu0 %v4683
    %5912 = vmatpush.msra.mxu0 %v4675
    %5913 = vmatpush.msra.mxu0 %v4667
    %5914 = vmatpush.msra.mxu0 %v4659
    %5915 = vmatpush.msra.mxu0 %v4651
    %5916 = vmatpush.msra.mxu0 %v4643
    %5917 = vmatpush.msra.mxu0 %v4635
    %5918 = vmatpush.msra.mxu0 %v4627
    %5919 = vmatpush.msra.mxu0 %v4619
    %5920 = vmatpush.msra.mxu0 %v4611
    %5921 = vmatpush.msra.mxu0 %v4603
    %5922 = vmatpush.msra.mxu0 %v4595
    %5923 = vmatpush.msra.mxu0 %v4587
    %5924 = vmatpush.msra.mxu0 %v4579
    %5925 = vmatpush.msra.mxu0 %v4571
    %5926 = vmatpush.msra.mxu0 %v4563
    %5927 = vmatmul.f32.gmra.mxu0 %v3787
    %v5928 = vpop.f32.mrf.mxu0
    %v5929 = vadd.f32 %v5909, %v5928
    %5930 = vdwg.mxu0
    %5931 = vmatpush.msra.mxu0 %v4811
    %5932 = vmatpush.msra.mxu0 %v4803
    %5933 = vmatpush.msra.mxu0 %v4795
    %5934 = vmatpush.msra.mxu0 %v4787
    %5935 = vmatpush.msra.mxu0 %v4779
    %5936 = vmatpush.msra.mxu0 %v4771
    %5937 = vmatpush.msra.mxu0 %v4763
    %5938 = vmatpush.msra.mxu0 %v4755
    %5939 = vmatpush.msra.mxu0 %v4747
    %5940 = vmatpush.msra.mxu0 %v4739
    %5941 = vmatpush.msra.mxu0 %v4731
    %5942 = vmatpush.msra.mxu0 %v4723
    %5943 = vmatpush.msra.mxu0 %v4715
    %5944 = vmatpush.msra.mxu0 %v4707
    %5945 = vmatpush.msra.mxu0 %v4699
    %5946 = vmatpush.msra.mxu0 %v4691
    %5947 = vmatmul.f32.gmra.mxu0 %v3788
    %v5948 = vpop.f32.mrf.mxu0
    %v5949 = vadd.f32 %v5929, %v5948
    %5950 = vdwg.mxu0
    %5951 = vmatpush.msra.mxu0 %v3916
    %5952 = vmatpush.msra.mxu0 %v3908
    %5953 = vmatpush.msra.mxu0 %v3900
    %5954 = vmatpush.msra.mxu0 %v3892
    %5955 = vmatpush.msra.mxu0 %v3884
    %5956 = vmatpush.msra.mxu0 %v3876
    %5957 = vmatpush.msra.mxu0 %v3868
    %5958 = vmatpush.msra.mxu0 %v3860
    %5959 = vmatpush.msra.mxu0 %v3852
    %5960 = vmatpush.msra.mxu0 %v3844
    %5961 = vmatpush.msra.mxu0 %v3836
    %5962 = vmatpush.msra.mxu0 %v3828
    %5963 = vmatpush.msra.mxu0 %v3820
    %5964 = vmatpush.msra.mxu0 %v3812
    %5965 = vmatpush.msra.mxu0 %v3804
    %5966 = vmatpush.msra.mxu0 %v3796
    %5967 = vmatmul.f32.gmra.mxu0 %v3781
    %v5968 = vpop.f32.mrf.mxu0
    %v5969 = vadd.f32 %v4822, %v5968
    %5970 = vdwg.mxu0
    %5971 = vmatpush.msra.mxu0 %v4044
    %5972 = vmatpush.msra.mxu0 %v4036
    %5973 = vmatpush.msra.mxu0 %v4028
    %5974 = vmatpush.msra.mxu0 %v4020
    %5975 = vmatpush.msra.mxu0 %v4012
    %5976 = vmatpush.msra.mxu0 %v4004
    %5977 = vmatpush.msra.mxu0 %v3996
    %5978 = vmatpush.msra.mxu0 %v3988
    %5979 = vmatpush.msra.mxu0 %v3980
    %5980 = vmatpush.msra.mxu0 %v3972
    %5981 = vmatpush.msra.mxu0 %v3964
    %5982 = vmatpush.msra.mxu0 %v3956
    %5983 = vmatpush.msra.mxu0 %v3948
    %5984 = vmatpush.msra.mxu0 %v3940
    %5985 = vmatpush.msra.mxu0 %v3932
    %5986 = vmatpush.msra.mxu0 %v3924
    %5987 = vmatmul.f32.gmra.mxu0 %v3782
    %v5988 = vpop.f32.mrf.mxu0
    %v5989 = vadd.f32 %v5969, %v5988
    %5990 = vdwg.mxu0
    %5991 = vmatpush.msra.mxu0 %v4172
    %5992 = vmatpush.msra.mxu0 %v4164
    %5993 = vmatpush.msra.mxu0 %v4156
    %5994 = vmatpush.msra.mxu0 %v4148
    %5995 = vmatpush.msra.mxu0 %v4140
    %5996 = vmatpush.msra.mxu0 %v4132
    %5997 = vmatpush.msra.mxu0 %v4124
    %5998 = vmatpush.msra.mxu0 %v4116
    %5999 = vmatpush.msra.mxu0 %v4108
    %6000 = vmatpush.msra.mxu0 %v4100
    %6001 = vmatpush.msra.mxu0 %v4092
    %6002 = vmatpush.msra.mxu0 %v4084
    %6003 = vmatpush.msra.mxu0 %v4076
    %6004 = vmatpush.msra.mxu0 %v4068
    %6005 = vmatpush.msra.mxu0 %v4060
    %6006 = vmatpush.msra.mxu0 %v4052
    %6007 = vmatmul.f32.gmra.mxu0 %v3783
    %v6008 = vpop.f32.mrf.mxu0
    %v6009 = vadd.f32 %v5989, %v6008
    %6010 = vdwg.mxu0
    %6011 = vmatpush.msra.mxu0 %v4300
    %6012 = vmatpush.msra.mxu0 %v4292
    %6013 = vmatpush.msra.mxu0 %v4284
    %6014 = vmatpush.msra.mxu0 %v4276
    %6015 = vmatpush.msra.mxu0 %v4268
    %6016 = vmatpush.msra.mxu0 %v4260
    %6017 = vmatpush.msra.mxu0 %v4252
    %6018 = vmatpush.msra.mxu0 %v4244
    %6019 = vmatpush.msra.mxu0 %v4236
    %6020 = vmatpush.msra.mxu0 %v4228
    %6021 = vmatpush.msra.mxu0 %v4220
    %6022 = vmatpush.msra.mxu0 %v4212
    %6023 = vmatpush.msra.mxu0 %v4204
    %6024 = vmatpush.msra.mxu0 %v4196
    %6025 = vmatpush.msra.mxu0 %v4188
    %6026 = vmatpush.msra.mxu0 %v4180
    %6027 = vmatmul.f32.gmra.mxu0 %v3784
    %v6028 = vpop.f32.mrf.mxu0
    %v6029 = vadd.f32 %v6009, %v6028
    %6030 = vdwg.mxu0
    %6031 = vmatpush.msra.mxu0 %v4428
    %6032 = vmatpush.msra.mxu0 %v4420
    %6033 = vmatpush.msra.mxu0 %v4412
    %6034 = vmatpush.msra.mxu0 %v4404
    %6035 = vmatpush.msra.mxu0 %v4396
    %6036 = vmatpush.msra.mxu0 %v4388
    %6037 = vmatpush.msra.mxu0 %v4380
    %6038 = vmatpush.msra.mxu0 %v4372
    %6039 = vmatpush.msra.mxu0 %v4364
    %6040 = vmatpush.msra.mxu0 %v4356
    %6041 = vmatpush.msra.mxu0 %v4348
    %6042 = vmatpush.msra.mxu0 %v4340
    %6043 = vmatpush.msra.mxu0 %v4332
    %6044 = vmatpush.msra.mxu0 %v4324
    %6045 = vmatpush.msra.mxu0 %v4316
    %6046 = vmatpush.msra.mxu0 %v4308
    %6047 = vmatmul.f32.gmra.mxu0 %v3785
    %v6048 = vpop.f32.mrf.mxu0
    %v6049 = vadd.f32 %v6029, %v6048
    %6050 = vdwg.mxu0
    %6051 = vmatpush.msra.mxu0 %v4556
    %6052 = vmatpush.msra.mxu0 %v4548
    %6053 = vmatpush.msra.mxu0 %v4540
    %6054 = vmatpush.msra.mxu0 %v4532
    %6055 = vmatpush.msra.mxu0 %v4524
    %6056 = vmatpush.msra.mxu0 %v4516
    %6057 = vmatpush.msra.mxu0 %v4508
    %6058 = vmatpush.msra.mxu0 %v4500
    %6059 = vmatpush.msra.mxu0 %v4492
    %6060 = vmatpush.msra.mxu0 %v4484
    %6061 = vmatpush.msra.mxu0 %v4476
    %6062 = vmatpush.msra.mxu0 %v4468
    %6063 = vmatpush.msra.mxu0 %v4460
    %6064 = vmatpush.msra.mxu0 %v4452
    %6065 = vmatpush.msra.mxu0 %v4444
    %6066 = vmatpush.msra.mxu0 %v4436
    %6067 = vmatmul.f32.gmra.mxu0 %v3786
    %v6068 = vpop.f32.mrf.mxu0
    %v6069 = vadd.f32 %v6049, %v6068
    %6070 = vdwg.mxu0
    %6071 = vmatpush.msra.mxu0 %v4684
    %6072 = vmatpush.msra.mxu0 %v4676
    %6073 = vmatpush.msra.mxu0 %v4668
    %6074 = vmatpush.msra.mxu0 %v4660
    %6075 = vmatpush.msra.mxu0 %v4652
    %6076 = vmatpush.msra.mxu0 %v4644
    %6077 = vmatpush.msra.mxu0 %v4636
    %6078 = vmatpush.msra.mxu0 %v4628
    %6079 = vmatpush.msra.mxu0 %v4620
    %6080 = vmatpush.msra.mxu0 %v4612
    %6081 = vmatpush.msra.mxu0 %v4604
    %6082 = vmatpush.msra.mxu0 %v4596
    %6083 = vmatpush.msra.mxu0 %v4588
    %6084 = vmatpush.msra.mxu0 %v4580
    %6085 = vmatpush.msra.mxu0 %v4572
    %6086 = vmatpush.msra.mxu0 %v4564
    %6087 = vmatmul.f32.gmra.mxu0 %v3787
    %v6088 = vpop.f32.mrf.mxu0
    %v6089 = vadd.f32 %v6069, %v6088
    %6090 = vdwg.mxu0
    %6091 = vmatpush.msra.mxu0 %v4812
    %6092 = vmatpush.msra.mxu0 %v4804
    %6093 = vmatpush.msra.mxu0 %v4796
    %6094 = vmatpush.msra.mxu0 %v4788
    %6095 = vmatpush.msra.mxu0 %v4780
    %6096 = vmatpush.msra.mxu0 %v4772
    %6097 = vmatpush.msra.mxu0 %v4764
    %6098 = vmatpush.msra.mxu0 %v4756
    %6099 = vmatpush.msra.mxu0 %v4748
    %6100 = vmatpush.msra.mxu0 %v4740
    %6101 = vmatpush.msra.mxu0 %v4732
    %6102 = vmatpush.msra.mxu0 %v4724
    %6103 = vmatpush.msra.mxu0 %v4716
    %6104 = vmatpush.msra.mxu0 %v4708
    %6105 = vmatpush.msra.mxu0 %v4700
    %6106 = vmatpush.msra.mxu0 %v4692
    %6107 = vmatmul.f32.gmra.mxu0 %v3788
    %v6108 = vpop.f32.mrf.mxu0
    %v6109 = vadd.f32 %v6089, %v6108
    %6110 = vdwg.mxu0
    %vm6111 = vcmp.ge.f32.partialorder %v4989, 0.0
    %vm6112 = vcmp.ge.f32.partialorder %v5149, 0.0
    %vm6113 = vcmp.ge.f32.partialorder %v5309, 0.0
    %vm6114 = vcmp.ge.f32.partialorder %v5469, 0.0
    %vm6115 = vcmp.ge.f32.partialorder %v5629, 0.0
    %vm6116 = vcmp.ge.f32.partialorder %v5789, 0.0
    %vm6117 = vcmp.ge.f32.partialorder %v5949, 0.0
    %vm6118 = vcmp.ge.f32.partialorder %v6109, 0.0
    %v6119 = vmul.f32 %v4989, 0.1
    %v6120 = vmul.f32 %v5149, 0.1
    %v6121 = vmul.f32 %v5309, 0.1
    %v6122 = vmul.f32 %v5469, 0.1
    %v6123 = vmul.f32 %v5629, 0.1
    %v6124 = vmul.f32 %v5789, 0.1
    %v6125 = vmul.f32 %v5949, 0.1
    %v6126 = vmul.f32 %v6109, 0.1
    %v6127 = vsel %vm6111, %v4989, %v6119
    %v6128 = vsel %vm6112, %v5149, %v6120
    %v6129 = vsel %vm6113, %v5309, %v6121
    %v6130 = vsel %vm6114, %v5469, %v6122
    %v6131 = vsel %vm6115, %v5629, %v6123
    %v6132 = vsel %vm6116, %v5789, %v6124
    %v6133 = vsel %vm6117, %v5949, %v6125
    %v6134 = vsel %vm6118, %v6109, %v6126
    %v6143 = vrot.slane %v6128, 6
    %v6144 = vrot.slane %v6129, 4
    %v6145 = vrot.slane %v6130, 2
    %v6146 = vrot.slane %v6132, 6
    %v6147 = vrot.slane %v6133, 4
    %v6148 = vrot.slane %v6134, 2
    %vm6149 = vcmask 1041408
    %v6150 = vsel %vm6149, %v6127, %v6143
    %vm6151 = vcmask 1045508
    %v6152 = vsel %vm6151, %v6144, %v6145
    %v6153 = vsel %vm204, %v6150, %v6152
    %v6154 = vsel %vm6149, %v6131, %v6146
    %v6155 = vsel %vm6151, %v6147, %v6148
    %v6156 = vsel %vm204, %v6154, %v6155
    %6159 = vst [vmem:[#allocation18] sm:$0xff] %v6153
    %6160 = vst [vmem:[#allocation18 + $0x8] sm:$0xff] %v6156
    %v6161 = vld [vmem:[%s9] sm:$0xff]
    %v6162 = vld [vmem:[%s9 + $0x8] sm:$0xff]
    %v6163 = vld [vmem:[%s9 + $0x10] sm:$0xff]
    %v6164 = vld [vmem:[%s9 + $0x18] sm:$0xff]
    %v6165 = vld [vmem:[%s9 + $0x20] sm:$0xff]
    %v6166 = vld [vmem:[%s9 + $0x28] sm:$0xff]
    %v6167 = vld [vmem:[%s9 + $0x30] sm:$0xff]
    %v6168 = vld [vmem:[%s9 + $0x38] sm:$0xff]
    %v6169 = vld [vmem:[%s9 + $0x40] sm:$0xff]
    %v6170 = vld [vmem:[%s9 + $0x48] sm:$0xff]
    %v6171 = vld [vmem:[%s9 + $0x50] sm:$0xff]
    %v6172 = vld [vmem:[%s9 + $0x58] sm:$0xff]
    %v6173 = vld [vmem:[%s9 + $0x60] sm:$0xff]
    %v6174 = vld [vmem:[%s9 + $0x68] sm:$0xff]
    %v6175 = vld [vmem:[%s9 + $0x70] sm:$0xff]
    %v6176 = vld [vmem:[%s9 + $0x78] sm:$0xff]
    %v6177 = vld [vmem:[%s9 + $0x80] sm:$0xff]
    %v6178 = vld [vmem:[%s9 + $0x88] sm:$0xff]
    %v6179 = vld [vmem:[%s9 + $0x90] sm:$0xff]
    %v6180 = vld [vmem:[%s9 + $0x98] sm:$0xff]
    %v6181 = vld [vmem:[%s9 + $0xa0] sm:$0xff]
    %v6182 = vld [vmem:[%s9 + $0xa8] sm:$0xff]
    %v6183 = vld [vmem:[%s9 + $0xb0] sm:$0xff]
    %v6184 = vld [vmem:[%s9 + $0xb8] sm:$0xff]
    %v6185 = vld [vmem:[%s9 + $0xc0] sm:$0xff]
    %v6186 = vld [vmem:[%s9 + $0xc8] sm:$0xff]
    %v6187 = vld [vmem:[%s9 + $0xd0] sm:$0xff]
    %v6188 = vld [vmem:[%s9 + $0xd8] sm:$0xff]
    %v6189 = vld [vmem:[%s9 + $0xe0] sm:$0xff]
    %v6190 = vld [vmem:[%s9 + $0xe8] sm:$0xff]
    %v6191 = vld [vmem:[%s9 + $0xf0] sm:$0xff]
    %v6192 = vld [vmem:[%s9 + $0xf8] sm:$0xff]
    %v6193 = vld [vmem:[%s9 + $0x100] sm:$0xff]
    %v6194 = vld [vmem:[%s9 + $0x108] sm:$0xff]
    %v6195 = vld [vmem:[%s9 + $0x110] sm:$0xff]
    %v6196 = vld [vmem:[%s9 + $0x118] sm:$0xff]
    %v6197 = vld [vmem:[%s9 + $0x120] sm:$0xff]
    %v6198 = vld [vmem:[%s9 + $0x128] sm:$0xff]
    %v6199 = vld [vmem:[%s9 + $0x130] sm:$0xff]
    %v6200 = vld [vmem:[%s9 + $0x138] sm:$0xff]
    %v6201 = vld [vmem:[%s9 + $0x140] sm:$0xff]
    %v6202 = vld [vmem:[%s9 + $0x148] sm:$0xff]
    %v6203 = vld [vmem:[%s9 + $0x150] sm:$0xff]
    %v6204 = vld [vmem:[%s9 + $0x158] sm:$0xff]
    %v6205 = vld [vmem:[%s9 + $0x160] sm:$0xff]
    %v6206 = vld [vmem:[%s9 + $0x168] sm:$0xff]
    %v6207 = vld [vmem:[%s9 + $0x170] sm:$0xff]
    %v6208 = vld [vmem:[%s9 + $0x178] sm:$0xff]
    %v6209 = vld [vmem:[%s9 + $0x180] sm:$0xff]
    %v6210 = vld [vmem:[%s9 + $0x188] sm:$0xff]
    %v6211 = vld [vmem:[%s9 + $0x190] sm:$0xff]
    %v6212 = vld [vmem:[%s9 + $0x198] sm:$0xff]
    %v6213 = vld [vmem:[%s9 + $0x1a0] sm:$0xff]
    %v6214 = vld [vmem:[%s9 + $0x1a8] sm:$0xff]
    %v6215 = vld [vmem:[%s9 + $0x1b0] sm:$0xff]
    %v6216 = vld [vmem:[%s9 + $0x1b8] sm:$0xff]
    %v6217 = vld [vmem:[%s9 + $0x1c0] sm:$0xff]
    %v6218 = vld [vmem:[%s9 + $0x1c8] sm:$0xff]
    %v6219 = vld [vmem:[%s9 + $0x1d0] sm:$0xff]
    %v6220 = vld [vmem:[%s9 + $0x1d8] sm:$0xff]
    %v6221 = vld [vmem:[%s9 + $0x1e0] sm:$0xff]
    %v6222 = vld [vmem:[%s9 + $0x1e8] sm:$0xff]
    %v6223 = vld [vmem:[%s9 + $0x1f0] sm:$0xff]
    %v6224 = vld [vmem:[%s9 + $0x1f8] sm:$0xff]
    %v6225 = vld [vmem:[%s9 + $0x200] sm:$0xff]
    %v6226 = vld [vmem:[%s9 + $0x208] sm:$0xff]
    %v6227 = vld [vmem:[%s9 + $0x210] sm:$0xff]
    %v6228 = vld [vmem:[%s9 + $0x218] sm:$0xff]
    %v6229 = vld [vmem:[%s9 + $0x220] sm:$0xff]
    %v6230 = vld [vmem:[%s9 + $0x228] sm:$0xff]
    %v6231 = vld [vmem:[%s9 + $0x230] sm:$0xff]
    %v6232 = vld [vmem:[%s9 + $0x238] sm:$0xff]
    %v6233 = vld [vmem:[%s9 + $0x240] sm:$0xff]
    %v6234 = vld [vmem:[%s9 + $0x248] sm:$0xff]
    %v6235 = vld [vmem:[%s9 + $0x250] sm:$0xff]
    %v6236 = vld [vmem:[%s9 + $0x258] sm:$0xff]
    %v6237 = vld [vmem:[%s9 + $0x260] sm:$0xff]
    %v6238 = vld [vmem:[%s9 + $0x268] sm:$0xff]
    %v6239 = vld [vmem:[%s9 + $0x270] sm:$0xff]
    %v6240 = vld [vmem:[%s9 + $0x278] sm:$0xff]
    %v6241 = vld [vmem:[%s9 + $0x280] sm:$0xff]
    %v6242 = vld [vmem:[%s9 + $0x288] sm:$0xff]
    %v6243 = vld [vmem:[%s9 + $0x290] sm:$0xff]
    %v6244 = vld [vmem:[%s9 + $0x298] sm:$0xff]
    %v6245 = vld [vmem:[%s9 + $0x2a0] sm:$0xff]
    %v6246 = vld [vmem:[%s9 + $0x2a8] sm:$0xff]
    %v6247 = vld [vmem:[%s9 + $0x2b0] sm:$0xff]
    %v6248 = vld [vmem:[%s9 + $0x2b8] sm:$0xff]
    %v6249 = vld [vmem:[%s9 + $0x2c0] sm:$0xff]
    %v6250 = vld [vmem:[%s9 + $0x2c8] sm:$0xff]
    %v6251 = vld [vmem:[%s9 + $0x2d0] sm:$0xff]
    %v6252 = vld [vmem:[%s9 + $0x2d8] sm:$0xff]
    %v6253 = vld [vmem:[%s9 + $0x2e0] sm:$0xff]
    %v6254 = vld [vmem:[%s9 + $0x2e8] sm:$0xff]
    %v6255 = vld [vmem:[%s9 + $0x2f0] sm:$0xff]
    %v6256 = vld [vmem:[%s9 + $0x2f8] sm:$0xff]
    %v6257 = vld [vmem:[%s9 + $0x300] sm:$0xff]
    %v6258 = vld [vmem:[%s9 + $0x308] sm:$0xff]
    %v6259 = vld [vmem:[%s9 + $0x310] sm:$0xff]
    %v6260 = vld [vmem:[%s9 + $0x318] sm:$0xff]
    %v6261 = vld [vmem:[%s9 + $0x320] sm:$0xff]
    %v6262 = vld [vmem:[%s9 + $0x328] sm:$0xff]
    %v6263 = vld [vmem:[%s9 + $0x330] sm:$0xff]
    %v6264 = vld [vmem:[%s9 + $0x338] sm:$0xff]
    %v6265 = vld [vmem:[%s9 + $0x340] sm:$0xff]
    %v6266 = vld [vmem:[%s9 + $0x348] sm:$0xff]
    %v6267 = vld [vmem:[%s9 + $0x350] sm:$0xff]
    %v6268 = vld [vmem:[%s9 + $0x358] sm:$0xff]
    %v6269 = vld [vmem:[%s9 + $0x360] sm:$0xff]
    %v6270 = vld [vmem:[%s9 + $0x368] sm:$0xff]
    %v6271 = vld [vmem:[%s9 + $0x370] sm:$0xff]
    %v6272 = vld [vmem:[%s9 + $0x378] sm:$0xff]
    %v6273 = vld [vmem:[%s9 + $0x380] sm:$0xff]
    %v6274 = vld [vmem:[%s9 + $0x388] sm:$0xff]
    %v6275 = vld [vmem:[%s9 + $0x390] sm:$0xff]
    %v6276 = vld [vmem:[%s9 + $0x398] sm:$0xff]
    %v6277 = vld [vmem:[%s9 + $0x3a0] sm:$0xff]
    %v6278 = vld [vmem:[%s9 + $0x3a8] sm:$0xff]
    %v6279 = vld [vmem:[%s9 + $0x3b0] sm:$0xff]
    %v6280 = vld [vmem:[%s9 + $0x3b8] sm:$0xff]
    %v6281 = vld [vmem:[%s9 + $0x3c0] sm:$0xff]
    %v6282 = vld [vmem:[%s9 + $0x3c8] sm:$0xff]
    %v6283 = vld [vmem:[%s9 + $0x3d0] sm:$0xff]
    %v6284 = vld [vmem:[%s9 + $0x3d8] sm:$0xff]
    %v6285 = vld [vmem:[%s9 + $0x3e0] sm:$0xff]
    %v6286 = vld [vmem:[%s9 + $0x3e8] sm:$0xff]
    %v6287 = vld [vmem:[%s9 + $0x3f0] sm:$0xff]
    %v6288 = vld [vmem:[%s9 + $0x3f8] sm:$0xff]
    %v6289 = vld [vmem:[#allocation2] sm:$0x1]
    %v6291 = vperm.slane %v6289, 0
    %6293 = vmatpush.msra.mxu0 %v6176
    %6294 = vmatpush.msra.mxu0 %v6175
    %6295 = vmatpush.msra.mxu0 %v6174
    %6296 = vmatpush.msra.mxu0 %v6173
    %6297 = vmatpush.msra.mxu0 %v6172
    %6298 = vmatpush.msra.mxu0 %v6171
    %6299 = vmatpush.msra.mxu0 %v6170
    %6300 = vmatpush.msra.mxu0 %v6169
    %6301 = vmatpush.msra.mxu0 %v6168
    %6302 = vmatpush.msra.mxu0 %v6167
    %6303 = vmatpush.msra.mxu0 %v6166
    %6304 = vmatpush.msra.mxu0 %v6165
    %6305 = vmatpush.msra.mxu0 %v6164
    %6306 = vmatpush.msra.mxu0 %v6163
    %6307 = vmatpush.msra.mxu0 %v6162
    %6308 = vmatpush.msra.mxu0 %v6161
    %6309 = vmatmul.f32.gmra.mxu0 %v6127
    %v6310 = vpop.f32.mrf.mxu0
    %v6311 = vadd.f32 %v6291, %v6310
    %6312 = vdwg.mxu0
    %6313 = vmatpush.msra.mxu0 %v6192
    %6314 = vmatpush.msra.mxu0 %v6191
    %6315 = vmatpush.msra.mxu0 %v6190
    %6316 = vmatpush.msra.mxu0 %v6189
    %6317 = vmatpush.msra.mxu0 %v6188
    %6318 = vmatpush.msra.mxu0 %v6187
    %6319 = vmatpush.msra.mxu0 %v6186
    %6320 = vmatpush.msra.mxu0 %v6185
    %6321 = vmatpush.msra.mxu0 %v6184
    %6322 = vmatpush.msra.mxu0 %v6183
    %6323 = vmatpush.msra.mxu0 %v6182
    %6324 = vmatpush.msra.mxu0 %v6181
    %6325 = vmatpush.msra.mxu0 %v6180
    %6326 = vmatpush.msra.mxu0 %v6179
    %6327 = vmatpush.msra.mxu0 %v6178
    %6328 = vmatpush.msra.mxu0 %v6177
    %6329 = vmatmul.f32.gmra.mxu0 %v6128
    %v6330 = vpop.f32.mrf.mxu0
    %v6331 = vadd.f32 %v6311, %v6330
    %6332 = vdwg.mxu0
    %6333 = vmatpush.msra.mxu0 %v6208
    %6334 = vmatpush.msra.mxu0 %v6207
    %6335 = vmatpush.msra.mxu0 %v6206
    %6336 = vmatpush.msra.mxu0 %v6205
    %6337 = vmatpush.msra.mxu0 %v6204
    %6338 = vmatpush.msra.mxu0 %v6203
    %6339 = vmatpush.msra.mxu0 %v6202
    %6340 = vmatpush.msra.mxu0 %v6201
    %6341 = vmatpush.msra.mxu0 %v6200
    %6342 = vmatpush.msra.mxu0 %v6199
    %6343 = vmatpush.msra.mxu0 %v6198
    %6344 = vmatpush.msra.mxu0 %v6197
    %6345 = vmatpush.msra.mxu0 %v6196
    %6346 = vmatpush.msra.mxu0 %v6195
    %6347 = vmatpush.msra.mxu0 %v6194
    %6348 = vmatpush.msra.mxu0 %v6193
    %6349 = vmatmul.f32.gmra.mxu0 %v6129
    %v6350 = vpop.f32.mrf.mxu0
    %v6351 = vadd.f32 %v6331, %v6350
    %6352 = vdwg.mxu0
    %6353 = vmatpush.msra.mxu0 %v6224
    %6354 = vmatpush.msra.mxu0 %v6223
    %6355 = vmatpush.msra.mxu0 %v6222
    %6356 = vmatpush.msra.mxu0 %v6221
    %6357 = vmatpush.msra.mxu0 %v6220
    %6358 = vmatpush.msra.mxu0 %v6219
    %6359 = vmatpush.msra.mxu0 %v6218
    %6360 = vmatpush.msra.mxu0 %v6217
    %6361 = vmatpush.msra.mxu0 %v6216
    %6362 = vmatpush.msra.mxu0 %v6215
    %6363 = vmatpush.msra.mxu0 %v6214
    %6364 = vmatpush.msra.mxu0 %v6213
    %6365 = vmatpush.msra.mxu0 %v6212
    %6366 = vmatpush.msra.mxu0 %v6211
    %6367 = vmatpush.msra.mxu0 %v6210
    %6368 = vmatpush.msra.mxu0 %v6209
    %6369 = vmatmul.f32.gmra.mxu0 %v6130
    %v6370 = vpop.f32.mrf.mxu0
    %v6371 = vadd.f32 %v6351, %v6370
    %6372 = vdwg.mxu0
    %6373 = vmatpush.msra.mxu0 %v6240
    %6374 = vmatpush.msra.mxu0 %v6239
    %6375 = vmatpush.msra.mxu0 %v6238
    %6376 = vmatpush.msra.mxu0 %v6237
    %6377 = vmatpush.msra.mxu0 %v6236
    %6378 = vmatpush.msra.mxu0 %v6235
    %6379 = vmatpush.msra.mxu0 %v6234
    %6380 = vmatpush.msra.mxu0 %v6233
    %6381 = vmatpush.msra.mxu0 %v6232
    %6382 = vmatpush.msra.mxu0 %v6231
    %6383 = vmatpush.msra.mxu0 %v6230
    %6384 = vmatpush.msra.mxu0 %v6229
    %6385 = vmatpush.msra.mxu0 %v6228
    %6386 = vmatpush.msra.mxu0 %v6227
    %6387 = vmatpush.msra.mxu0 %v6226
    %6388 = vmatpush.msra.mxu0 %v6225
    %6389 = vmatmul.f32.gmra.mxu0 %v6131
    %v6390 = vpop.f32.mrf.mxu0
    %v6391 = vadd.f32 %v6371, %v6390
    %6392 = vdwg.mxu0
    %6393 = vmatpush.msra.mxu0 %v6256
    %6394 = vmatpush.msra.mxu0 %v6255
    %6395 = vmatpush.msra.mxu0 %v6254
    %6396 = vmatpush.msra.mxu0 %v6253
    %6397 = vmatpush.msra.mxu0 %v6252
    %6398 = vmatpush.msra.mxu0 %v6251
    %6399 = vmatpush.msra.mxu0 %v6250
    %6400 = vmatpush.msra.mxu0 %v6249
    %6401 = vmatpush.msra.mxu0 %v6248
    %6402 = vmatpush.msra.mxu0 %v6247
    %6403 = vmatpush.msra.mxu0 %v6246
    %6404 = vmatpush.msra.mxu0 %v6245
    %6405 = vmatpush.msra.mxu0 %v6244
    %6406 = vmatpush.msra.mxu0 %v6243
    %6407 = vmatpush.msra.mxu0 %v6242
    %6408 = vmatpush.msra.mxu0 %v6241
    %6409 = vmatmul.f32.gmra.mxu0 %v6132
    %v6410 = vpop.f32.mrf.mxu0
    %v6411 = vadd.f32 %v6391, %v6410
    %6412 = vdwg.mxu0
    %6413 = vmatpush.msra.mxu0 %v6272
    %6414 = vmatpush.msra.mxu0 %v6271
    %6415 = vmatpush.msra.mxu0 %v6270
    %6416 = vmatpush.msra.mxu0 %v6269
    %6417 = vmatpush.msra.mxu0 %v6268
    %6418 = vmatpush.msra.mxu0 %v6267
    %6419 = vmatpush.msra.mxu0 %v6266
    %6420 = vmatpush.msra.mxu0 %v6265
    %6421 = vmatpush.msra.mxu0 %v6264
    %6422 = vmatpush.msra.mxu0 %v6263
    %6423 = vmatpush.msra.mxu0 %v6262
    %6424 = vmatpush.msra.mxu0 %v6261
    %6425 = vmatpush.msra.mxu0 %v6260
    %6426 = vmatpush.msra.mxu0 %v6259
    %6427 = vmatpush.msra.mxu0 %v6258
    %6428 = vmatpush.msra.mxu0 %v6257
    %6429 = vmatmul.f32.gmra.mxu0 %v6133
    %v6430 = vpop.f32.mrf.mxu0
    %v6431 = vadd.f32 %v6411, %v6430
    %6432 = vdwg.mxu0
    %6433 = vmatpush.msra.mxu0 %v6288
    %6434 = vmatpush.msra.mxu0 %v6287
    %6435 = vmatpush.msra.mxu0 %v6286
    %6436 = vmatpush.msra.mxu0 %v6285
    %6437 = vmatpush.msra.mxu0 %v6284
    %6438 = vmatpush.msra.mxu0 %v6283
    %6439 = vmatpush.msra.mxu0 %v6282
    %6440 = vmatpush.msra.mxu0 %v6281
    %6441 = vmatpush.msra.mxu0 %v6280
    %6442 = vmatpush.msra.mxu0 %v6279
    %6443 = vmatpush.msra.mxu0 %v6278
    %6444 = vmatpush.msra.mxu0 %v6277
    %6445 = vmatpush.msra.mxu0 %v6276
    %6446 = vmatpush.msra.mxu0 %v6275
    %6447 = vmatpush.msra.mxu0 %v6274
    %6448 = vmatpush.msra.mxu0 %v6273
    %6449 = vmatmul.f32.gmra.mxu0 %v6134
    %v6450 = vpop.f32.mrf.mxu0
    %v6451 = vadd.f32 %v6431, %v6450
    %6452 = vdwg.mxu0
    %vm6453 = vcmask 1024
    %6454 = vst.msk [vmem:[%s11] sm:$0x3] %vm6453, %v6451
    // Predicated region
    $region82: #{discriminator_forward.1} parent=1 // pred_check
      _
    $region83: #{discriminator_forward.1} parent=1 // pred_check_branch
      %6456 = sbr.rel (0) target = $region85
    $region84: #{discriminator_forward.1} parent=1 // pred_region
      _
    $region85: #{discriminator_forward.1} parent=1 // pred_fallthru
      _
    // Predicated region
    $region86: #{discriminator_forward.1} parent=1 // pred_check
      _
    $region87: #{discriminator_forward.1} parent=1 // pred_check_branch
      %6458 = sbr.rel (0) target = $region89
    $region88: #{discriminator_forward.1} parent=1 // pred_region
      %6460 = vsyncadd [#allocation5], 0
      %s6462 = sshll.u32 [#allocation18], 4
      %s6463 = int_to_ptr.vmem [resolvable:$true] %s6462
      %s6464 = sshll.u32 %s12, 4
      %s6465 = int_to_ptr.hbm [resolvable:$true] %s6464
      %6467 = dma.vmem_to_hbm [thread:$0]  %s6463, 256, %s6465, [#allocation5]
    $region89: #{discriminator_forward.1} parent=1 // pred_fallthru
      _
    // Predicated region
    $region90: #{discriminator_forward.1} parent=1 // pred_check
      _
    $region91: #{discriminator_forward.1} parent=1 // pred_check_branch
      %6469 = sbr.rel (0) target = $region93
    $region92: #{discriminator_forward.1} parent=1 // pred_region
      _
    $region93: #{discriminator_forward.1} parent=1 // pred_fallthru
      _
    // Predicated region
    $region94: #{discriminator_forward.1} parent=1 // pred_check
      _
    $region95: #{discriminator_forward.1} parent=1 // pred_check_branch
      %6471 = sbr.rel (0) target = $region97
    $region96: #{discriminator_forward.1} parent=1 // pred_region
      %6473 = dma.done [#allocation5], 256
    $region97: #{discriminator_forward.1} parent=1 // pred_fallthru
      _
    %6474 = vsyncpa [#allocation4], 1
    %6475 = vsyncpa [#allocation7], 1
    %6476 = vsyncpa [#allocation10], 1
    %6477 = vsyncpa [#allocation13], 1
    %6478 = vsyncpa [#allocation16], 1
    %6479 = vsyncpa [#allocation5], 1

</llo_original>
